<compile_context>
chip_gen: v7x
topology: tpu7x:2x2x1
jax: 0.10.0
libtpu: 0.0.40
codegen_flags: <defaults>
</compile_context>

<pallas_src>
import functools

import jax
import jax.numpy as jnp
from jax.experimental import pallas as pl
from jax.experimental.pallas import tpu as pltpu

HEIGHT = 40960   # fc1 input dim (the hot reduction axis)
WIDTH = 128      # fc1 output dim
RELU_MIN = 0.0
RELU_MAX = 1.0


def _fc1_partial_kernel(x1_ref, x2_ref, w1_ref, o_ref):
    """Accumulate one K-chunk of fc1 for both x1 and x2 (native bf16 MXU).

    o_ref block is (1, 2, B, WIDTH): o_ref[0, 0] accumulates x1 @ w1 and
    o_ref[0, 1] accumulates x2 @ w1 for this core's half of K.  w1 stays bf16
    (no f32 upcast temp); the small x tiles are cast to bf16; the MXU
    accumulates in f32.
    """
    k = pl.program_id(1)

    @pl.when(k == 0)
    def _():
        o_ref[...] = jnp.zeros_like(o_ref)

    w1 = w1_ref[...]                               # (tk, WIDTH) bf16, as stored
    x1b = x1_ref[...].astype(jnp.bfloat16)         # (B, tk) tiny VALU cast
    x2b = x2_ref[...].astype(jnp.bfloat16)
    o_ref[0, 0] += jnp.dot(x1b, w1, preferred_element_type=jnp.float32)
    o_ref[0, 1] += jnp.dot(x2b, w1, preferred_element_type=jnp.float32)


def _epilogue_kernel(partial_ref, b1_ref, w2_ref, b2_ref, w3_ref, b3_ref,
                     w4_ref, b4_ref, o_ref):
    """Tiny fused epilogue: combine K-halves, +b1, clamp, fc2/fc3/fc4.

    All operands are a few KB and live as whole-array VMEM blocks; this
    replaces several small XLA ops with one kernel launch.
    """
    # Combine the two per-core K-half partial sums: (2, B, WIDTH) f32.
    hsum = partial_ref[0] + partial_ref[1]
    b1 = b1_ref[...]                                           # (1, WIDTH)
    h1 = jnp.clip(hsum[0] + b1, RELU_MIN, RELU_MAX)            # x1 half
    h2 = jnp.clip(hsum[1] + b1, RELU_MIN, RELU_MAX)            # x2 half

    # fc2 on concat([h1, h2], axis=1) via split weights (avoids lane concat):
    # [h1 h2] @ w2 == h1 @ w2[:WIDTH] + h2 @ w2[WIDTH:].
    w2a = w2_ref[:WIDTH, :]
    w2b = w2_ref[WIDTH:, :]
    h = (jnp.dot(h1, w2a, preferred_element_type=jnp.float32)
         + jnp.dot(h2, w2b, preferred_element_type=jnp.float32)
         + b2_ref[...])
    h = jnp.clip(h, RELU_MIN, RELU_MAX)

    h = jnp.dot(h, w3_ref[...], preferred_element_type=jnp.float32) + b3_ref[...]
    h = jnp.clip(h, RELU_MIN, RELU_MAX)

    o_ref[...] = (jnp.dot(h, w4_ref[...], preferred_element_type=jnp.float32)
                  + b4_ref[...])


@functools.partial(jax.jit, static_argnames=("tk",))
def net_forward(x1, x2, params, *, tk=10240):
    """Pallas implementation of Net.forward((x1, x2))."""
    w1, b1, w2, b2, w3, b3, w4, b4 = params
    B, H = x1.shape
    assert H % 2 == 0
    half = H // 2
    assert half % tk == 0, (half, tk)
    kt_half = half // tk                     # K-steps per core

    # NOTE(perf): on v7x one could set tk=20480 (grid (2, 1), one step per
    # core, ~13 MB double-buffered) — keep tk=10240 here so the same config
    # fits v5e's 16 MiB default scoped VMEM without a vmem_limit_bytes bump.
    grid_spec = pltpu.PrefetchScalarGridSpec(
        num_scalar_prefetch=0,
        grid=(2, kt_half),                   # (core split over K, K chunks)
        in_specs=[
            pl.BlockSpec((B, tk), lambda c, k: (0, c * kt_half + k)),      # x1
            pl.BlockSpec((B, tk), lambda c, k: (0, c * kt_half + k)),      # x2
            pl.BlockSpec((tk, WIDTH), lambda c, k: (c * kt_half + k, 0)),  # w1 bf16
        ],
        out_specs=pl.BlockSpec((1, 2, B, WIDTH), lambda c, k: (c, 0, 0, 0)),
    )

    # partial[c, 0] = x1 @ w1 over K-half c;  partial[c, 1] = x2 @ w1 over K-half c
    partial = pl.pallas_call(
        _fc1_partial_kernel,
        out_shape=jax.ShapeDtypeStruct((2, 2, B, WIDTH), jnp.float32),
        grid_spec=grid_spec,
        compiler_params=pltpu.CompilerParams(
            dimension_semantics=("parallel", "arbitrary")),
    )(x1, x2, w1)

    # Fused tiny epilogue kernel (everything fits as whole-array VMEM blocks).
    vmem = pl.BlockSpec(memory_space=pltpu.MemorySpace.VMEM)
    out = pl.pallas_call(
        _epilogue_kernel,
        out_shape=jax.ShapeDtypeStruct((B, 1), jnp.float32),
        in_specs=[vmem] * 8,
        out_specs=vmem,
    )(partial, b1, w2, b2, w3, b3, w4, b4)
    return out


def net_forward_ref(x1, x2, params):
    """Pure-JAX reference matching the PyTorch forward.

    fc1 uses the same bf16 inputs/weights with f32 accumulation as the kernel,
    so only K-chunk reassociation differences remain.
    """
    w1, b1, w2, b2, w3, b3, w4, b4 = params
    h1 = jnp.dot(x1.astype(jnp.bfloat16), w1,
                 preferred_element_type=jnp.float32) + b1
    h2 = jnp.dot(x2.astype(jnp.bfloat16), w1,
                 preferred_element_type=jnp.float32) + b1
    h = jnp.concatenate([h1, h2], axis=1)
    h = jnp.clip(h, RELU_MIN, RELU_MAX)
    h = jnp.clip(h @ w2 + b2, RELU_MIN, RELU_MAX)
    h = jnp.clip(h @ w3 + b3, RELU_MIN, RELU_MAX)
    return h @ w4 + b4


def init_params(key):
    """Deterministic params, PyTorch Linear-style uniform(-1/sqrt(fan_in), ...).

    w1 is stored in bfloat16 (it is ~90% of all HBM traffic); everything else
    stays f32.
    """
    ks = jax.random.split(key, 8)

    def lin(kw, kb, fan_in, fan_out, w_dtype=jnp.float32):
        bound = 1.0 / (fan_in ** 0.5)
        w = jax.random.uniform(kw, (fan_in, fan_out), jnp.float32, -bound, bound)
        b = jax.random.uniform(kb, (1, fan_out), jnp.float32, -bound, bound)
        return w.astype(w_dtype), b

    w1, b1 = lin(ks[0], ks[1], HEIGHT, WIDTH, w_dtype=jnp.bfloat16)
    w2, b2 = lin(ks[2], ks[3], 2 * WIDTH, 32)
    w3, b3 = lin(ks[4], ks[5], 32, 32)
    w4, b4 = lin(ks[6], ks[7], 32, 1)
    return (w1, b1, w2, b2, w3, b3, w4, b4)


if __name__ == "__main__":
    key = jax.random.PRNGKey(0)
    kp, kx1, kx2 = jax.random.split(key, 3)

    params = init_params(kp)
    B = 8
    x1 = jax.random.uniform(kx1, (B, HEIGHT), jnp.float32)
    x2 = jax.random.uniform(kx2, (B, HEIGHT), jnp.float32)

    out = net_forward(x1, x2, params)
    out = jax.block_until_ready(out)

    ref = net_forward_ref(x1, x2, params)
    assert out.shape == (B, 1)
    assert jnp.allclose(out, ref, atol=2e-3, rtol=2e-3), (out, ref)

    print("KERNEL_OK")
</pallas_src>

<mosaic_0001>
module attributes {stable_mosaic.version = 11 : i64} {
  func.func @_fc1_partial_kernel(%arg0: i32, %arg1: i32, %arg2: memref<8x10240xf32, #tpu.memory_space<vmem>>, %arg3: memref<8x10240xf32, #tpu.memory_space<vmem>>, %arg4: memref<10240x128xbf16, #tpu.memory_space<vmem>>, %arg5: memref<1x2x8x128xf32, #tpu.memory_space<vmem>>) attributes {dimension_semantics = [#tpu.dimension_semantics<parallel>, #tpu.dimension_semantics<arbitrary>], iteration_bounds = array<i64: 2, 2>, scalar_prefetch = 0 : i64, scratch_operands = 0 : i64, tpu.core_type = #tpu.core_type<tc>, window_params = [{transform_indices = @transform_0, window_bounds = array<i64: 8, 10240>}, {transform_indices = @transform_1, window_bounds = array<i64: 8, 10240>}, {transform_indices = @transform_2, window_bounds = array<i64: 10240, 128>}, {transform_indices = @transform_3, window_bounds = array<i64: 1, 2, 8, 128>}]} {
    %c0_i32 = arith.constant 0 : i32
    %0 = arith.cmpi eq, %arg1, %c0_i32 : i32
    %1 = arith.extui %0 : i1 to i32
    %c0_i32_0 = arith.constant 0 : i32
    %2 = arith.cmpi ne, %1, %c0_i32_0 : i32
    scf.if %2 {
      %cst_22 = arith.constant 0.000000e+00 : f32
      %22 = vector.broadcast %cst_22 : f32 to vector<1x2x8x128xf32>
      %c0_23 = arith.constant 0 : index
      %c0_24 = arith.constant 0 : index
      %c0_25 = arith.constant 0 : index
      %c0_26 = arith.constant 0 : index
      %23 = vector.load %arg5[%c0_23, %c0_24, %c0_25, %c0_26] : memref<1x2x8x128xf32, #tpu.memory_space<vmem>>, vector<1x2x8x128xf32>
      tpu.vector_store %arg5[%c0_23, %c0_24, %c0_25, %c0_26], %22 {strides = array<i32>} : memref<1x2x8x128xf32, #tpu.memory_space<vmem>>, vector<1x2x8x128xf32>,
    } else {
    }
    %c0 = arith.constant 0 : index
    %c0_1 = arith.constant 0 : index
    %3 = vector.load %arg4[%c0, %c0_1] : memref<10240x128xbf16, #tpu.memory_space<vmem>>, vector<10240x128xbf16>
    %c0_2 = arith.constant 0 : index
    %c0_3 = arith.constant 0 : index
    %4 = vector.load %arg2[%c0_2, %c0_3] : memref<8x10240xf32, #tpu.memory_space<vmem>>, vector<8x10240xf32>
    %5 = arith.truncf %4 : vector<8x10240xf32> to vector<8x10240xbf16>
    %c0_4 = arith.constant 0 : index
    %c0_5 = arith.constant 0 : index
    %6 = vector.load %arg3[%c0_4, %c0_5] : memref<8x10240xf32, #tpu.memory_space<vmem>>, vector<8x10240xf32>
    %7 = arith.truncf %6 : vector<8x10240xf32> to vector<8x10240xbf16>
    %c0_6 = arith.constant 0 : index
    %c0_7 = arith.constant 0 : index
    %c0_8 = arith.constant 0 : index
    %c0_9 = arith.constant 0 : index
    %8 = vector.load %arg5[%c0_6, %c0_7, %c0_8, %c0_9] : memref<1x2x8x128xf32, #tpu.memory_space<vmem>>, vector<1x1x8x128xf32>
    %9 = vector.shape_cast %8 : vector<1x1x8x128xf32> to vector<8x128xf32>
    %cst = arith.constant dense<0.000000e+00> : vector<8x128xf32>
    %10 = tpu.matmul %5, %3, %cst {dimension_numbers = #tpu.dot_dimension_numbers<[1], [0], [0], [1], [0, 0, 1, 1], [], []>} : vector<8x10240xbf16>, vector<10240x128xbf16>, vector<8x128xf32> -> vector<8x128xf32>
    %11 = arith.addf %9, %10 : vector<8x128xf32>
    %c0_10 = arith.constant 0 : index
    %c0_11 = arith.constant 0 : index
    %c0_12 = arith.constant 0 : index
    %c0_13 = arith.constant 0 : index
    %12 = vector.load %arg5[%c0_10, %c0_11, %c0_12, %c0_13] : memref<1x2x8x128xf32, #tpu.memory_space<vmem>>, vector<1x1x8x128xf32>
    %13 = vector.shape_cast %12 : vector<1x1x8x128xf32> to vector<8x128xf32>
    %14 = vector.shape_cast %11 : vector<8x128xf32> to vector<1x1x8x128xf32>
    tpu.vector_store %arg5[%c0_10, %c0_11, %c0_12, %c0_13], %14 {strides = array<i32>} : memref<1x2x8x128xf32, #tpu.memory_space<vmem>>, vector<1x1x8x128xf32>,
    %c0_14 = arith.constant 0 : index
    %c1 = arith.constant 1 : index
    %c0_15 = arith.constant 0 : index
    %c0_16 = arith.constant 0 : index
    %15 = vector.load %arg5[%c0_14, %c1, %c0_15, %c0_16] : memref<1x2x8x128xf32, #tpu.memory_space<vmem>>, vector<1x1x8x128xf32>
    %16 = vector.shape_cast %15 : vector<1x1x8x128xf32> to vector<8x128xf32>
    %cst_17 = arith.constant dense<0.000000e+00> : vector<8x128xf32>
    %17 = tpu.matmul %7, %3, %cst_17 {dimension_numbers = #tpu.dot_dimension_numbers<[1], [0], [0], [1], [0, 0, 1, 1], [], []>} : vector<8x10240xbf16>, vector<10240x128xbf16>, vector<8x128xf32> -> vector<8x128xf32>
    %18 = arith.addf %16, %17 : vector<8x128xf32>
    %c0_18 = arith.constant 0 : index
    %c1_19 = arith.constant 1 : index
    %c0_20 = arith.constant 0 : index
    %c0_21 = arith.constant 0 : index
    %19 = vector.load %arg5[%c0_18, %c1_19, %c0_20, %c0_21] : memref<1x2x8x128xf32, #tpu.memory_space<vmem>>, vector<1x1x8x128xf32>
    %20 = vector.shape_cast %19 : vector<1x1x8x128xf32> to vector<8x128xf32>
    %21 = vector.shape_cast %18 : vector<8x128xf32> to vector<1x1x8x128xf32>
    tpu.vector_store %arg5[%c0_18, %c1_19, %c0_20, %c0_21], %21 {strides = array<i32>} : memref<1x2x8x128xf32, #tpu.memory_space<vmem>>, vector<1x1x8x128xf32>,
    return
  }
  func.func @transform_0(%arg0: i32, %arg1: i32) -> (i32, i32) {
    %c2_i32 = arith.constant 2 : i32
    %0 = arith.muli %arg0, %c2_i32 : i32
    %1 = arith.addi %0, %arg1 : i32
    %c0_i32 = arith.constant 0 : i32
    %c0_i32_0 = arith.constant 0 : i32
    return %c0_i32, %1 : i32, i32
  }
  func.func @transform_1(%arg0: i32, %arg1: i32) -> (i32, i32) {
    %c2_i32 = arith.constant 2 : i32
    %0 = arith.muli %arg0, %c2_i32 : i32
    %1 = arith.addi %0, %arg1 : i32
    %c0_i32 = arith.constant 0 : i32
    %c0_i32_0 = arith.constant 0 : i32
    return %c0_i32, %1 : i32, i32
  }
  func.func @transform_2(%arg0: i32, %arg1: i32) -> (i32, i32) {
    %c2_i32 = arith.constant 2 : i32
    %0 = arith.muli %arg0, %c2_i32 : i32
    %1 = arith.addi %0, %arg1 : i32
    %c0_i32 = arith.constant 0 : i32
    %c0_i32_0 = arith.constant 0 : i32
    return %1, %c0_i32 : i32, i32
  }
  func.func @transform_3(%arg0: i32, %arg1: i32) -> (i32, i32, i32, i32) {
    %c0_i32 = arith.constant 0 : i32
    %c0_i32_0 = arith.constant 0 : i32
    %c0_i32_1 = arith.constant 0 : i32
    %c0_i32_2 = arith.constant 0 : i32
    return %arg0, %c0_i32, %c0_i32_0, %c0_i32_1 : i32, i32, i32, i32
  }
}

module attributes {stable_mosaic.version = 11 : i64} {
  func.func @_epilogue_kernel(%arg0: memref<2x2x8x128xf32, #tpu.memory_space<vmem>>, %arg1: memref<1x128xf32, #tpu.memory_space<vmem>>, %arg2: memref<256x32xf32, #tpu.memory_space<vmem>>, %arg3: memref<1x32xf32, #tpu.memory_space<vmem>>, %arg4: memref<32x32xf32, #tpu.memory_space<vmem>>, %arg5: memref<1x32xf32, #tpu.memory_space<vmem>>, %arg6: memref<32x1xf32, #tpu.memory_space<vmem>>, %arg7: memref<1x1xf32, #tpu.memory_space<vmem>>, %arg8: memref<8x1xf32, #tpu.memory_space<vmem>>) attributes {dimension_semantics = [], scalar_prefetch = 0 : i64, scratch_operands = 0 : i64, tpu.core_type = #tpu.core_type<tc>} {
    %c0 = arith.constant 0 : index
    %c0_0 = arith.constant 0 : index
    %c0_1 = arith.constant 0 : index
    %c0_2 = arith.constant 0 : index
    %0 = vector.load %arg0[%c0, %c0_0, %c0_1, %c0_2] : memref<2x2x8x128xf32, #tpu.memory_space<vmem>>, vector<1x2x8x128xf32>
    %1 = vector.shape_cast %0 : vector<1x2x8x128xf32> to vector<2x8x128xf32>
    %c1 = arith.constant 1 : index
    %c0_3 = arith.constant 0 : index
    %c0_4 = arith.constant 0 : index
    %c0_5 = arith.constant 0 : index
    %2 = vector.load %arg0[%c1, %c0_3, %c0_4, %c0_5] : memref<2x2x8x128xf32, #tpu.memory_space<vmem>>, vector<1x2x8x128xf32>
    %3 = vector.shape_cast %2 : vector<1x2x8x128xf32> to vector<2x8x128xf32>
    %4 = arith.addf %1, %3 : vector<2x8x128xf32>
    %c0_6 = arith.constant 0 : index
    %c0_7 = arith.constant 0 : index
    %5 = vector.load %arg1[%c0_6, %c0_7] : memref<1x128xf32, #tpu.memory_space<vmem>>, vector<1x128xf32>
    %6 = vector.extract_strided_slice %4 {offsets = [0, 0, 0], sizes = [1, 8, 128], strides = [1, 1, 1]} : vector<2x8x128xf32> to vector<1x8x128xf32>
    %7 = vector.shape_cast %6 : vector<1x8x128xf32> to vector<8x128xf32>
    %8 = vector.broadcast %5 : vector<1x128xf32> to vector<8x128xf32>
    %9 = arith.addf %7, %8 : vector<8x128xf32>
    %cst = arith.constant 0.000000e+00 : f32
    %cst_8 = arith.constant 1.000000e+00 : f32
    %10 = vector.broadcast %cst : f32 to vector<8x128xf32>
    %11 = arith.maximumf %10, %9 : vector<8x128xf32>
    %12 = vector.broadcast %cst_8 : f32 to vector<8x128xf32>
    %13 = arith.minimumf %12, %11 : vector<8x128xf32>
    %14 = vector.extract_strided_slice %4 {offsets = [1, 0, 0], sizes = [1, 8, 128], strides = [1, 1, 1]} : vector<2x8x128xf32> to vector<1x8x128xf32>
    %15 = vector.shape_cast %14 : vector<1x8x128xf32> to vector<8x128xf32>
    %16 = vector.broadcast %5 : vector<1x128xf32> to vector<8x128xf32>
    %17 = arith.addf %15, %16 : vector<8x128xf32>
    %cst_9 = arith.constant 0.000000e+00 : f32
    %cst_10 = arith.constant 1.000000e+00 : f32
    %18 = vector.broadcast %cst_9 : f32 to vector<8x128xf32>
    %19 = arith.maximumf %18, %17 : vector<8x128xf32>
    %20 = vector.broadcast %cst_10 : f32 to vector<8x128xf32>
    %21 = arith.minimumf %20, %19 : vector<8x128xf32>
    %c0_11 = arith.constant 0 : index
    %c0_12 = arith.constant 0 : index
    %22 = vector.load %arg2[%c0_11, %c0_12] : memref<256x32xf32, #tpu.memory_space<vmem>>, vector<128x32xf32>
    %c128 = arith.constant 128 : index
    %c0_13 = arith.constant 0 : index
    %23 = vector.load %arg2[%c128, %c0_13] : memref<256x32xf32, #tpu.memory_space<vmem>>, vector<128x32xf32>
    %cst_14 = arith.constant dense<0.000000e+00> : vector<8x32xf32>
    %24 = tpu.matmul %13, %22, %cst_14 {dimension_numbers = #tpu.dot_dimension_numbers<[1], [0], [0], [1], [0, 0, 1, 1], [], []>} : vector<8x128xf32>, vector<128x32xf32>, vector<8x32xf32> -> vector<8x32xf32>
    %cst_15 = arith.constant dense<0.000000e+00> : vector<8x32xf32>
    %25 = tpu.matmul %21, %23, %cst_15 {dimension_numbers = #tpu.dot_dimension_numbers<[1], [0], [0], [1], [0, 0, 1, 1], [], []>} : vector<8x128xf32>, vector<128x32xf32>, vector<8x32xf32> -> vector<8x32xf32>
    %26 = arith.addf %24, %25 : vector<8x32xf32>
    %c0_16 = arith.constant 0 : index
    %c0_17 = arith.constant 0 : index
    %27 = vector.load %arg3[%c0_16, %c0_17] : memref<1x32xf32, #tpu.memory_space<vmem>>, vector<1x32xf32>
    %28 = vector.broadcast %27 : vector<1x32xf32> to vector<8x32xf32>
    %29 = arith.addf %26, %28 : vector<8x32xf32>
    %cst_18 = arith.constant 0.000000e+00 : f32
    %cst_19 = arith.constant 1.000000e+00 : f32
    %30 = vector.broadcast %cst_18 : f32 to vector<8x32xf32>
    %31 = arith.maximumf %30, %29 : vector<8x32xf32>
    %32 = vector.broadcast %cst_19 : f32 to vector<8x32xf32>
    %33 = arith.minimumf %32, %31 : vector<8x32xf32>
    %c0_20 = arith.constant 0 : index
    %c0_21 = arith.constant 0 : index
    %34 = vector.load %arg4[%c0_20, %c0_21] : memref<32x32xf32, #tpu.memory_space<vmem>>, vector<32x32xf32>
    %cst_22 = arith.constant dense<0.000000e+00> : vector<8x32xf32>
    %35 = tpu.matmul %33, %34, %cst_22 {dimension_numbers = #tpu.dot_dimension_numbers<[1], [0], [0], [1], [0, 0, 1, 1], [], []>} : vector<8x32xf32>, vector<32x32xf32>, vector<8x32xf32> -> vector<8x32xf32>
    %c0_23 = arith.constant 0 : index
    %c0_24 = arith.constant 0 : index
    %36 = vector.load %arg5[%c0_23, %c0_24] : memref<1x32xf32, #tpu.memory_space<vmem>>, vector<1x32xf32>
    %37 = vector.broadcast %36 : vector<1x32xf32> to vector<8x32xf32>
    %38 = arith.addf %35, %37 : vector<8x32xf32>
    %cst_25 = arith.constant 0.000000e+00 : f32
    %cst_26 = arith.constant 1.000000e+00 : f32
    %39 = vector.broadcast %cst_25 : f32 to vector<8x32xf32>
    %40 = arith.maximumf %39, %38 : vector<8x32xf32>
    %41 = vector.broadcast %cst_26 : f32 to vector<8x32xf32>
    %42 = arith.minimumf %41, %40 : vector<8x32xf32>
    %c0_27 = arith.constant 0 : index
    %c0_28 = arith.constant 0 : index
    %43 = vector.load %arg6[%c0_27, %c0_28] : memref<32x1xf32, #tpu.memory_space<vmem>>, vector<32x1xf32>
    %cst_29 = arith.constant dense<0.000000e+00> : vector<8x1xf32>
    %44 = tpu.matmul %42, %43, %cst_29 {dimension_numbers = #tpu.dot_dimension_numbers<[1], [0], [0], [1], [0, 0, 1, 1], [], []>} : vector<8x32xf32>, vector<32x1xf32>, vector<8x1xf32> -> vector<8x1xf32>
    %c0_30 = arith.constant 0 : index
    %c0_31 = arith.constant 0 : index
    %45 = vector.load %arg7[%c0_30, %c0_31] : memref<1x1xf32, #tpu.memory_space<vmem>>, vector<1x1xf32>
    %46 = vector.broadcast %45 : vector<1x1xf32> to vector<8x1xf32>
    %47 = arith.addf %44, %46 : vector<8x1xf32>
    %c0_32 = arith.constant 0 : index
    %c0_33 = arith.constant 0 : index
    %48 = vector.load %arg8[%c0_32, %c0_33] : memref<8x1xf32, #tpu.memory_space<vmem>>, vector<8x1xf32>
    tpu.vector_store %arg8[%c0_32, %c0_33], %47 {strides = array<i32>} : memref<8x1xf32, #tpu.memory_space<vmem>>, vector<8x1xf32>,
    return
  }
}

</mosaic_0001>

<llo_original>
// kernel: net_forward.3
$region0: #{net_forward.3}
  #allocation0 [shape = 'u32[]', space=smem, size = 0x4, offset = 0x4, fixed_abs, tag = 'smem constant byte address 0x4 - core index']
  #allocation1 [shape = 'u32[144,128]{1,0:T(1,128)}', space=vmem, size = 0x12000, scoped, tag = 'internal scratch']
  #allocation2 [shape = 'f32[1,1]{1,0:T(1,128)S(1)}', space=vmem, size = 0x200, scoped, tag = 'scoped memory for net_forward.3']
  %s0 = inlined_call_operand.vmem [shape: f32[2,2,8,128], index: 0, kind: input, shape index: {}]
  %s1 = inlined_call_operand.vmem [shape: f32[1,128], index: 1, kind: input, shape index: {}]
  %s2 = inlined_call_operand.vmem [shape: f32[256,32], index: 2, kind: input, shape index: {}]
  %s3 = inlined_call_operand.vmem [shape: f32[1,32], index: 3, kind: input, shape index: {}]
  %s4 = inlined_call_operand.vmem [shape: f32[32,32], index: 4, kind: input, shape index: {}]
  %s5 = inlined_call_operand.vmem [shape: f32[1,32], index: 5, kind: input, shape index: {}]
  %s6 = inlined_call_operand.vmem [shape: f32[32,1], index: 6, kind: input, shape index: {}]
  %s7 = inlined_call_operand.<no memory space> [shape: f32[1,1], index: 7, kind: input, shape index: {}]
  %s8 = inlined_call_operand.vmem [shape: f32[8,1], index: 8, kind: output, shape index: {}]
  %s9 = sld [smem:[#allocation0]]
  $region42: #{net_forward.3} parent=0
    _
  %s11 = ssub.s32 1, %s9
  %s12 = scalar_select 0, %s11, %s9
  %v13 = vstv %s7
  %14 = vst [vmem:[#allocation2] sm:$0x1] %v13
  // Predicated region
  $region2: #{net_forward.3} parent=0 // pred_check
    _
  $region3: #{net_forward.3} parent=0 // pred_check_branch
    %16 = sbr.rel (0) target = $region5
  $region4: #{net_forward.3} parent=0 // pred_region
    _
  $region5: #{net_forward.3} parent=0 // pred_fallthru
    _
  // Predicated region
  $region6: #{net_forward.3} parent=0 // pred_check
    _
  $region7: #{net_forward.3} parent=0 // pred_check_branch
    %18 = sbr.rel (0) target = $region9
  $region8: #{net_forward.3} parent=0 // pred_region
    _
  $region9: #{net_forward.3} parent=0 // pred_fallthru
    _
  // Predicated region
  $region10: #{net_forward.3} parent=0 // pred_check
    _
  $region11: #{net_forward.3} parent=0 // pred_check_branch
    %20 = sbr.rel (0) target = $region13
  $region12: #{net_forward.3} parent=0 // pred_region
    _
  $region13: #{net_forward.3} parent=0 // pred_fallthru
    _
  // Predicated region
  $region14: #{net_forward.3} parent=0 // pred_check
    _
  $region15: #{net_forward.3} parent=0 // pred_check_branch
    %22 = sbr.rel (0) target = $region17
  $region16: #{net_forward.3} parent=0 // pred_region
    _
  $region17: #{net_forward.3} parent=0 // pred_fallthru
    _
  // Predicated region
  $region18: #{net_forward.3} parent=0 // pred_check
    _
  $region19: #{net_forward.3} parent=0 // pred_check_branch
    %24 = sbr.rel (0) target = $region21
  $region20: #{net_forward.3} parent=0 // pred_region
    _
  $region21: #{net_forward.3} parent=0 // pred_fallthru
    _
  // Predicated region
  $region22: #{net_forward.3} parent=0 // pred_check
    _
  $region23: #{net_forward.3} parent=0 // pred_check_branch
    %26 = sbr.rel (0) target = $region25
  $region24: #{net_forward.3} parent=0 // pred_region
    _
  $region25: #{net_forward.3} parent=0 // pred_fallthru
    _
  // Predicated region
  $region26: #{net_forward.3} parent=0 // pred_check
    _
  $region27: #{net_forward.3} parent=0 // pred_check_branch
    %28 = sbr.rel (0) target = $region29
  $region28: #{net_forward.3} parent=0 // pred_region
    _
  $region29: #{net_forward.3} parent=0 // pred_fallthru
    _
  // Predicated region
  $region30: #{net_forward.3} parent=0 // pred_check
    _
  $region31: #{net_forward.3} parent=0 // pred_check_branch
    %30 = sbr.rel (0) target = $region33
  $region32: #{net_forward.3} parent=0 // pred_region
    _
  $region33: #{net_forward.3} parent=0 // pred_fallthru
    _
  %v31 = vld [vmem:[%s0] sm:$0xff]
  %v32 = vld [vmem:[%s0 + $0x8] sm:$0xff]
  %s33 = scalar_lea.vmem %s0, 16
  %v34 = vld [vmem:[%s33] sm:$0xff]
  %v35 = vld [vmem:[%s33 + $0x8] sm:$0xff]
  %v36 = vadd.f32 %v31, %v34
  %v37 = vadd.f32 %v32, %v35
  %v38 = vld [vmem:[%s1] sm:$0x1]
  %v40 = vlaneseq
  %v41 = vshrl.u32 %v40, 7
  %v42 = vsub.s32 0, %v41
  %v43 = vrot.slane %v38, %v42
  %v45 = vadd.f32 %v36, %v43
  %v46 = vmax.f32 %v45, 0.0
  %v47 = vmin.f32 %v46, 1.0
  %v48 = vadd.f32 %v37, %v43
  %v49 = vmax.f32 %v48, 0.0
  %v50 = vmin.f32 %v49, 1.0
  %v51 = vld [vmem:[%s2] sm:$0xff]
  %v52 = vld [vmem:[%s2 + $0x8] sm:$0xff]
  %v53 = vld [vmem:[%s2 + $0x10] sm:$0xff]
  %v54 = vld [vmem:[%s2 + $0x18] sm:$0xff]
  %v55 = vld [vmem:[%s2 + $0x20] sm:$0xff]
  %v56 = vld [vmem:[%s2 + $0x28] sm:$0xff]
  %v57 = vld [vmem:[%s2 + $0x30] sm:$0xff]
  %v58 = vld [vmem:[%s2 + $0x38] sm:$0xff]
  %v59 = vld [vmem:[%s2 + $0x40] sm:$0xff]
  %v60 = vld [vmem:[%s2 + $0x48] sm:$0xff]
  %v61 = vld [vmem:[%s2 + $0x50] sm:$0xff]
  %v62 = vld [vmem:[%s2 + $0x58] sm:$0xff]
  %v63 = vld [vmem:[%s2 + $0x60] sm:$0xff]
  %v64 = vld [vmem:[%s2 + $0x68] sm:$0xff]
  %v65 = vld [vmem:[%s2 + $0x70] sm:$0xff]
  %v66 = vld [vmem:[%s2 + $0x78] sm:$0xff]
  %v67 = vld [vmem:[%s2 + $0x80] sm:$0xff]
  %v68 = vld [vmem:[%s2 + $0x88] sm:$0xff]
  %v69 = vld [vmem:[%s2 + $0x90] sm:$0xff]
  %v70 = vld [vmem:[%s2 + $0x98] sm:$0xff]
  %v71 = vld [vmem:[%s2 + $0xa0] sm:$0xff]
  %v72 = vld [vmem:[%s2 + $0xa8] sm:$0xff]
  %v73 = vld [vmem:[%s2 + $0xb0] sm:$0xff]
  %v74 = vld [vmem:[%s2 + $0xb8] sm:$0xff]
  %v75 = vld [vmem:[%s2 + $0xc0] sm:$0xff]
  %v76 = vld [vmem:[%s2 + $0xc8] sm:$0xff]
  %v77 = vld [vmem:[%s2 + $0xd0] sm:$0xff]
  %v78 = vld [vmem:[%s2 + $0xd8] sm:$0xff]
  %v79 = vld [vmem:[%s2 + $0xe0] sm:$0xff]
  %v80 = vld [vmem:[%s2 + $0xe8] sm:$0xff]
  %v81 = vld [vmem:[%s2 + $0xf0] sm:$0xff]
  %v82 = vld [vmem:[%s2 + $0xf8] sm:$0xff]
  %83 = vmatprep.subr.mxu0 0.0
  %84 = vmatpush1.msra.mxu0 %v67
  %85 = vmatprep.subr.mxu0 0.0
  %86 = vmatpush1.msra.mxu0 %v68
  %87 = vmatprep.subr.mxu0 0.0
  %88 = vmatpush1.msra.mxu0 %v69
  %89 = vmatprep.subr.mxu0 0.0
  %90 = vmatpush1.msra.mxu0 %v70
  %91 = vmatprep.subr.mxu0 0.0
  %92 = vmatpush1.msra.mxu0 %v71
  %93 = vmatprep.subr.mxu0 0.0
  %94 = vmatpush1.msra.mxu0 %v72
  %95 = vmatprep.subr.mxu0 0.0
  %96 = vmatpush1.msra.mxu0 %v73
  %97 = vmatprep.subr.mxu0 0.0
  %98 = vmatpush1.msra.mxu0 %v74
  %99 = vmatprep.subr.mxu0 0.0
  %100 = vmatpush1.msra.mxu0 %v75
  %101 = vmatprep.subr.mxu0 0.0
  %102 = vmatpush1.msra.mxu0 %v76
  %103 = vmatprep.subr.mxu0 0.0
  %104 = vmatpush1.msra.mxu0 %v77
  %105 = vmatprep.subr.mxu0 0.0
  %106 = vmatpush1.msra.mxu0 %v78
  %107 = vmatprep.subr.mxu0 0.0
  %108 = vmatpush1.msra.mxu0 %v79
  %109 = vmatprep.subr.mxu0 0.0
  %110 = vmatpush1.msra.mxu0 %v80
  %111 = vmatprep.subr.mxu0 0.0
  %112 = vmatpush1.msra.mxu0 %v81
  %113 = vmatprep.subr.mxu0 0.0
  %114 = vmatpush1.msra.mxu0 %v82
  %115 = vmatprep.subr.mxu0 0.0
  %116 = vmatpush1.msra.mxu0 0.0
  %117 = vmatprep.subr.mxu0 0.0
  %118 = vmatpush1.msra.mxu0 0.0
  %119 = vmatprep.subr.mxu0 0.0
  %120 = vmatpush1.msra.mxu0 0.0
  %121 = vmatprep.subr.mxu0 0.0
  %122 = vmatpush1.msra.mxu0 0.0
  %123 = vmatprep.subr.mxu0 0.0
  %124 = vmatpush1.msra.mxu0 0.0
  %125 = vmatprep.subr.mxu0 0.0
  %126 = vmatpush1.msra.mxu0 0.0
  %127 = vmatprep.subr.mxu0 0.0
  %128 = vmatpush1.msra.mxu0 0.0
  %129 = vmatprep.subr.mxu0 0.0
  %130 = vmatpush1.msra.mxu0 0.0
  %131 = vmatprep.subr.mxu0 0.0
  %132 = vmatpush1.msra.mxu0 0.0
  %133 = vmatprep.subr.mxu0 0.0
  %134 = vmatpush1.msra.mxu0 0.0
  %135 = vmatprep.subr.mxu0 0.0
  %136 = vmatpush1.msra.mxu0 0.0
  %137 = vmatprep.subr.mxu0 0.0
  %138 = vmatpush1.msra.mxu0 0.0
  %139 = vmatprep.subr.mxu0 0.0
  %140 = vmatpush1.msra.mxu0 0.0
  %141 = vmatprep.subr.mxu0 0.0
  %142 = vmatpush1.msra.mxu0 0.0
  %143 = vmatprep.subr.mxu0 0.0
  %144 = vmatpush1.msra.mxu0 0.0
  %145 = vmatprep.subr.mxu0 0.0
  %146 = vmatpush1.msra.mxu0 0.0
  %147 = vmatprep.mubr.f32.mxu0 0.0
  %148 = vmatmul.mubr.f32.gmra.mrb[0].mxu0 %v50
  %v149 = vpop.f32.mrb[0].mxu0
  %v150 = vadd.f32 0.0, %v149
  %v151 = vpop.f32.mrb[0].mxu0
  %152 = vdwg.mxu0
  %153 = vmatprep.subr.mxu0 0.0
  %154 = vmatpush1.msra.mxu0 %v51
  %155 = vmatprep.subr.mxu0 0.0
  %156 = vmatpush1.msra.mxu0 %v52
  %157 = vmatprep.subr.mxu0 0.0
  %158 = vmatpush1.msra.mxu0 %v53
  %159 = vmatprep.subr.mxu0 0.0
  %160 = vmatpush1.msra.mxu0 %v54
  %161 = vmatprep.subr.mxu0 0.0
  %162 = vmatpush1.msra.mxu0 %v55
  %163 = vmatprep.subr.mxu0 0.0
  %164 = vmatpush1.msra.mxu0 %v56
  %165 = vmatprep.subr.mxu0 0.0
  %166 = vmatpush1.msra.mxu0 %v57
  %167 = vmatprep.subr.mxu0 0.0
  %168 = vmatpush1.msra.mxu0 %v58
  %169 = vmatprep.subr.mxu0 0.0
  %170 = vmatpush1.msra.mxu0 %v59
  %171 = vmatprep.subr.mxu0 0.0
  %172 = vmatpush1.msra.mxu0 %v60
  %173 = vmatprep.subr.mxu0 0.0
  %174 = vmatpush1.msra.mxu0 %v61
  %175 = vmatprep.subr.mxu0 0.0
  %176 = vmatpush1.msra.mxu0 %v62
  %177 = vmatprep.subr.mxu0 0.0
  %178 = vmatpush1.msra.mxu0 %v63
  %179 = vmatprep.subr.mxu0 0.0
  %180 = vmatpush1.msra.mxu0 %v64
  %181 = vmatprep.subr.mxu0 0.0
  %182 = vmatpush1.msra.mxu0 %v65
  %183 = vmatprep.subr.mxu0 0.0
  %184 = vmatpush1.msra.mxu0 %v66
  %185 = vmatprep.subr.mxu0 0.0
  %186 = vmatpush1.msra.mxu0 0.0
  %187 = vmatprep.subr.mxu0 0.0
  %188 = vmatpush1.msra.mxu0 0.0
  %189 = vmatprep.subr.mxu0 0.0
  %190 = vmatpush1.msra.mxu0 0.0
  %191 = vmatprep.subr.mxu0 0.0
  %192 = vmatpush1.msra.mxu0 0.0
  %193 = vmatprep.subr.mxu0 0.0
  %194 = vmatpush1.msra.mxu0 0.0
  %195 = vmatprep.subr.mxu0 0.0
  %196 = vmatpush1.msra.mxu0 0.0
  %197 = vmatprep.subr.mxu0 0.0
  %198 = vmatpush1.msra.mxu0 0.0
  %199 = vmatprep.subr.mxu0 0.0
  %200 = vmatpush1.msra.mxu0 0.0
  %201 = vmatprep.subr.mxu0 0.0
  %202 = vmatpush1.msra.mxu0 0.0
  %203 = vmatprep.subr.mxu0 0.0
  %204 = vmatpush1.msra.mxu0 0.0
  %205 = vmatprep.subr.mxu0 0.0
  %206 = vmatpush1.msra.mxu0 0.0
  %207 = vmatprep.subr.mxu0 0.0
  %208 = vmatpush1.msra.mxu0 0.0
  %209 = vmatprep.subr.mxu0 0.0
  %210 = vmatpush1.msra.mxu0 0.0
  %211 = vmatprep.subr.mxu0 0.0
  %212 = vmatpush1.msra.mxu0 0.0
  %213 = vmatprep.subr.mxu0 0.0
  %214 = vmatpush1.msra.mxu0 0.0
  %215 = vmatprep.subr.mxu0 0.0
  %216 = vmatpush1.msra.mxu0 0.0
  %217 = vmatprep.mubr.f32.mxu0 0.0
  %218 = vmatmul.mubr.f32.gmra.mrb[0].mxu0 %v47
  %v219 = vpop.f32.mrb[0].mxu0
  %v220 = vadd.f32 %v150, %v219
  %v221 = vpop.f32.mrb[0].mxu0
  %222 = vdwg.mxu0
  %v223 = vld [vmem:[%s3] sm:$0x1]
  %v225 = vlaneseq
  %v226 = vshrl.u32 %v225, 7
  %v227 = vsub.s32 0, %v226
  %v228 = vrot.slane %v223, %v227
  %v230 = vadd.f32 %v220, %v228
  %v231 = vmax.f32 %v230, 0.0
  %v232 = vmin.f32 %v231, 1.0
  %v233 = vld [vmem:[%s4] sm:$0xff]
  %v234 = vld [vmem:[%s4 + $0x8] sm:$0xff]
  %v235 = vld [vmem:[%s4 + $0x10] sm:$0xff]
  %v236 = vld [vmem:[%s4 + $0x18] sm:$0xff]
  %v237 = vld [vmem:[%s5] sm:$0x1]
  %v239 = vlaneseq
  %v240 = vshrl.u32 %v239, 7
  %v241 = vsub.s32 0, %v240
  %v242 = vrot.slane %v237, %v241
  %vm244 = vcmask 261120
  %v246 = vsel %vm244, %v232, 0
  %248 = vmatprep.subr.mxu0 0.0
  %249 = vmatpush1.msra.mxu0 %v233
  %250 = vmatprep.subr.mxu0 0.0
  %251 = vmatpush1.msra.mxu0 %v234
  %252 = vmatprep.subr.mxu0 0.0
  %253 = vmatpush1.msra.mxu0 %v235
  %254 = vmatprep.subr.mxu0 0.0
  %255 = vmatpush1.msra.mxu0 %v236
  %256 = vmatprep.subr.mxu0 0.0
  %257 = vmatpush1.msra.mxu0 0.0
  %258 = vmatprep.subr.mxu0 0.0
  %259 = vmatpush1.msra.mxu0 0.0
  %260 = vmatprep.subr.mxu0 0.0
  %261 = vmatpush1.msra.mxu0 0.0
  %262 = vmatprep.subr.mxu0 0.0
  %263 = vmatpush1.msra.mxu0 0.0
  %264 = vmatprep.subr.mxu0 0.0
  %265 = vmatpush1.msra.mxu0 0.0
  %266 = vmatprep.subr.mxu0 0.0
  %267 = vmatpush1.msra.mxu0 0.0
  %268 = vmatprep.subr.mxu0 0.0
  %269 = vmatpush1.msra.mxu0 0.0
  %270 = vmatprep.subr.mxu0 0.0
  %271 = vmatpush1.msra.mxu0 0.0
  %272 = vmatprep.subr.mxu0 0.0
  %273 = vmatpush1.msra.mxu0 0.0
  %274 = vmatprep.subr.mxu0 0.0
  %275 = vmatpush1.msra.mxu0 0.0
  %276 = vmatprep.subr.mxu0 0.0
  %277 = vmatpush1.msra.mxu0 0.0
  %278 = vmatprep.subr.mxu0 0.0
  %279 = vmatpush1.msra.mxu0 0.0
  %280 = vmatprep.subr.mxu0 0.0
  %281 = vmatpush1.msra.mxu0 0.0
  %282 = vmatprep.subr.mxu0 0.0
  %283 = vmatpush1.msra.mxu0 0.0
  %284 = vmatprep.subr.mxu0 0.0
  %285 = vmatpush1.msra.mxu0 0.0
  %286 = vmatprep.subr.mxu0 0.0
  %287 = vmatpush1.msra.mxu0 0.0
  %288 = vmatprep.subr.mxu0 0.0
  %289 = vmatpush1.msra.mxu0 0.0
  %290 = vmatprep.subr.mxu0 0.0
  %291 = vmatpush1.msra.mxu0 0.0
  %292 = vmatprep.subr.mxu0 0.0
  %293 = vmatpush1.msra.mxu0 0.0
  %294 = vmatprep.subr.mxu0 0.0
  %295 = vmatpush1.msra.mxu0 0.0
  %296 = vmatprep.subr.mxu0 0.0
  %297 = vmatpush1.msra.mxu0 0.0
  %298 = vmatprep.subr.mxu0 0.0
  %299 = vmatpush1.msra.mxu0 0.0
  %300 = vmatprep.subr.mxu0 0.0
  %301 = vmatpush1.msra.mxu0 0.0
  %302 = vmatprep.subr.mxu0 0.0
  %303 = vmatpush1.msra.mxu0 0.0
  %304 = vmatprep.subr.mxu0 0.0
  %305 = vmatpush1.msra.mxu0 0.0
  %306 = vmatprep.subr.mxu0 0.0
  %307 = vmatpush1.msra.mxu0 0.0
  %308 = vmatprep.subr.mxu0 0.0
  %309 = vmatpush1.msra.mxu0 0.0
  %310 = vmatprep.subr.mxu0 0.0
  %311 = vmatpush1.msra.mxu0 0.0
  %312 = vmatprep.mubr.f32.mxu0 0.0
  %313 = vmatmul.mubr.f32.gmra.mrb[0].mxu0 %v246
  %v314 = vpop.f32.mrb[0].mxu0
  %v315 = vadd.f32 %v242, %v314
  %v316 = vpop.f32.mrb[0].mxu0
  %317 = vdwg.mxu0
  %v318 = vmax.f32 %v315, 0.0
  %v319 = vmin.f32 %v318, 1.0
  %v320 = vld [vmem:[%s6] sm:$0xff]
  %v321 = vld [vmem:[%s6 + $0x8] sm:$0xff]
  %v322 = vld [vmem:[%s6 + $0x10] sm:$0xff]
  %v323 = vld [vmem:[%s6 + $0x18] sm:$0xff]
  %v324 = vld [vmem:[#allocation2] sm:$0x1]
  %v326 = vlaneseq
  %v327 = vshrl.u32 %v326, 7
  %v328 = vsub.s32 0, %v327
  %v329 = vrot.slane %v324, %v328
  %v332 = vsel %vm244, %v319, 0
  %334 = vmatprep.subr.mxu0 0.0
  %335 = vmatpush1.msra.mxu0 %v320
  %336 = vmatprep.subr.mxu0 0.0
  %337 = vmatpush1.msra.mxu0 %v321
  %338 = vmatprep.subr.mxu0 0.0
  %339 = vmatpush1.msra.mxu0 %v322
  %340 = vmatprep.subr.mxu0 0.0
  %341 = vmatpush1.msra.mxu0 %v323
  %342 = vmatprep.subr.mxu0 0.0
  %343 = vmatpush1.msra.mxu0 0.0
  %344 = vmatprep.subr.mxu0 0.0
  %345 = vmatpush1.msra.mxu0 0.0
  %346 = vmatprep.subr.mxu0 0.0
  %347 = vmatpush1.msra.mxu0 0.0
  %348 = vmatprep.subr.mxu0 0.0
  %349 = vmatpush1.msra.mxu0 0.0
  %350 = vmatprep.subr.mxu0 0.0
  %351 = vmatpush1.msra.mxu0 0.0
  %352 = vmatprep.subr.mxu0 0.0
  %353 = vmatpush1.msra.mxu0 0.0
  %354 = vmatprep.subr.mxu0 0.0
  %355 = vmatpush1.msra.mxu0 0.0
  %356 = vmatprep.subr.mxu0 0.0
  %357 = vmatpush1.msra.mxu0 0.0
  %358 = vmatprep.subr.mxu0 0.0
  %359 = vmatpush1.msra.mxu0 0.0
  %360 = vmatprep.subr.mxu0 0.0
  %361 = vmatpush1.msra.mxu0 0.0
  %362 = vmatprep.subr.mxu0 0.0
  %363 = vmatpush1.msra.mxu0 0.0
  %364 = vmatprep.subr.mxu0 0.0
  %365 = vmatpush1.msra.mxu0 0.0
  %366 = vmatprep.subr.mxu0 0.0
  %367 = vmatpush1.msra.mxu0 0.0
  %368 = vmatprep.subr.mxu0 0.0
  %369 = vmatpush1.msra.mxu0 0.0
  %370 = vmatprep.subr.mxu0 0.0
  %371 = vmatpush1.msra.mxu0 0.0
  %372 = vmatprep.subr.mxu0 0.0
  %373 = vmatpush1.msra.mxu0 0.0
  %374 = vmatprep.subr.mxu0 0.0
  %375 = vmatpush1.msra.mxu0 0.0
  %376 = vmatprep.subr.mxu0 0.0
  %377 = vmatpush1.msra.mxu0 0.0
  %378 = vmatprep.subr.mxu0 0.0
  %379 = vmatpush1.msra.mxu0 0.0
  %380 = vmatprep.subr.mxu0 0.0
  %381 = vmatpush1.msra.mxu0 0.0
  %382 = vmatprep.subr.mxu0 0.0
  %383 = vmatpush1.msra.mxu0 0.0
  %384 = vmatprep.subr.mxu0 0.0
  %385 = vmatpush1.msra.mxu0 0.0
  %386 = vmatprep.subr.mxu0 0.0
  %387 = vmatpush1.msra.mxu0 0.0
  %388 = vmatprep.subr.mxu0 0.0
  %389 = vmatpush1.msra.mxu0 0.0
  %390 = vmatprep.subr.mxu0 0.0
  %391 = vmatpush1.msra.mxu0 0.0
  %392 = vmatprep.subr.mxu0 0.0
  %393 = vmatpush1.msra.mxu0 0.0
  %394 = vmatprep.subr.mxu0 0.0
  %395 = vmatpush1.msra.mxu0 0.0
  %396 = vmatprep.subr.mxu0 0.0
  %397 = vmatpush1.msra.mxu0 0.0
  %398 = vmatprep.mubr.f32.mxu0 0.0
  %399 = vmatmul.mubr.f32.gmra.mrb[0].mxu0 %v332
  %v400 = vpop.f32.mrb[0].mxu0
  %v401 = vadd.f32 %v329, %v400
  %v402 = vpop.f32.mrb[0].mxu0
  %403 = vdwg.mxu0
  %vm404 = vcmask 7168
  %405 = vst.msk [vmem:[%s8] sm:$0xff] %vm404, %v401
  // Predicated region
  $region34: #{net_forward.3} parent=0 // pred_check
    _
  $region35: #{net_forward.3} parent=0 // pred_check_branch
    %407 = sbr.rel (0) target = $region37
  $region36: #{net_forward.3} parent=0 // pred_region
    _
  $region37: #{net_forward.3} parent=0 // pred_fallthru
    _
  // Predicated region
  $region38: #{net_forward.3} parent=0 // pred_check
    _
  $region39: #{net_forward.3} parent=0 // pred_check_branch
    %409 = sbr.rel (0) target = $region41
  $region40: #{net_forward.3} parent=0 // pred_region
    _
  $region41: #{net_forward.3} parent=0 // pred_fallthru
    _

// kernel: net_forward.2
$region0: #{net_forward.2}
  #allocation0 [shape = 'u32[]', space=smem, size = 0x4, offset = 0x4, fixed_abs, tag = 'smem constant byte address 0x4 - core index']
  #allocation1 [shape = 'u32[144,128]{1,0:T(1,128)}', space=vmem, size = 0x12000, scoped, tag = 'internal scratch']
  %s0 = inlined_call_operand.hbm [shape: f32[8,40960], index: 0, kind: input, shape index: {}]
  %s1 = inlined_call_operand.hbm [shape: f32[8,40960], index: 1, kind: input, shape index: {}]
  %s2 = inlined_call_operand.hbm [shape: bf16[40960,128], index: 2, kind: input, shape index: {}]
  %s3 = inlined_call_operand.vmem [shape: f32[2,2,8,128], index: 3, kind: output, shape index: {}]
  %s4 = sld [smem:[#allocation0]]
  $region61: #{net_forward.2} parent=0
    _
  %s6 = ssub.s32 1, %s4
  %s7 = scalar_select 0, %s6, %s4
  $region1: #{net_forward.2} parent=0
    #allocation2 [shape = 'u8[655360]{0}', space=vmem, size = 0xa0000, scoped, tag = 'input window, operand 0']
    #allocation3 [shape = 's32[2]{0}', space=sflag, size = 0x8, scoped, tag = 'scoped memory for net_forward.2']
    #allocation4 [shape = 'u8[655360]{0}', space=vmem, size = 0xa0000, scoped, tag = 'input window, operand 1']
    #allocation5 [shape = 's32[2]{0}', space=sflag, size = 0x8, scoped, tag = 'scoped memory for net_forward.2']
    #allocation6 [shape = 'u8[5242880]{0}', space=vmem, size = 0x500000, scoped, tag = 'input window, operand 2']
    %8 = vsyncpa [#allocation3], 0
    %s9 = scalar_lea.sflag [#allocation3], 1
    %10 = vsyncpa %s9, 0
    %11 = vsyncpa [#allocation5], 0
    %s12 = scalar_lea.sflag [#allocation5], 1
    %13 = vsyncpa %s12, 0
    loop: start=0, step=1, limit=6
    $region2: #{net_forward.2} parent=1 // loop_pre_header
      _
    $region3: #{net_forward.2} parent=1 // loop_header
      %s15 = sphi 0, %s19
      %p16 = scmp.ge.s32.totalorder %s15, 6
      %s22 = sphi 0, %s34
      %s23 = sphi 0, %s30
      %s24 = sphi 0, %s22
      %s25 = sphi 0, %s23
      %s26 = sphi 0, %s24
      %s27 = sphi 0, %s25
      %s41 = sphi 0, %s43
      %s44 = sphi 0, %s41
      %s45 = sphi 0, %s44
      %s61 = sphi 0, %s45
      %s71 = sphi 0, %s73
      %s74 = sphi 0, %s71
      %s75 = sphi 0, %s74
      %s91 = sphi 0, %s75
      %s101 = sphi 0, %s103
      %s104 = sphi 0, %s101
      %s105 = sphi 0, %s104
      %s121 = sphi 0, %s105
      %s127 = sphi 0, %s129
      %s130 = sphi 0, %s127
      %s131 = sphi 0, %s130
      %s147 = sphi 0, %s131
    $region4: #{net_forward.2} parent=1 // loop_header_branch
      %18 = sbr.rel (%p16) target = $region8
    $region5: #{net_forward.2} parent=1 // loop_body
      %s20 = ssub.s32 %s15, 1
      %s21 = ssub.s32 %s15, 2
      %s28 = sadd.s32 1, %s23
      %p29 = scmp.ge.s32.totalorder %s28, 2
      %s30 = scalar_select %p29, 0, %s28
      %s31 = sadd.s32 1, %s22
      %s32 = scalar_select %p29, %s31, %s22
      %p33 = scmp.ge.s32.totalorder %s32, 2
      %s34 = scalar_select %p33, 0, %s32
      %s35 = smul.u32 %s22, 2
      %s36 = sadd.s32 %s35, %s23
      %s37 = smul.u32 %s34, 2
      %s38 = sadd.s32 %s37, %s30
      %s39 = ssub.s32 %s36, %s38
      %p40 = scmp.eq.s32.totalorder %s39, 0
      %s42 = sadd.s32 %s41, 1
      %s43 = scalar_select %p40, %s41, %s42
      %p46 = pneg %p40
      %p47 = scmp.eq.s32.totalorder %s15, 3
      %p48 = por %p46, %p47
      %p49 = scmp.ne.s32.totalorder %s41, %s44
      %p50 = scmp.eq.s32.totalorder %s15, 0
      %p51 = por %p49, %p50
      %p52 = scmp.ne.s32.totalorder %s41, %s44
      %p53 = scmp.eq.s32.totalorder %s20, 3
      %p54 = por %p52, %p53
      %p55 = scmp.ne.s32.totalorder %s44, %s45
      %p56 = scmp.eq.s32.totalorder %s20, 0
      %p57 = por %p55, %p56
      %p58 = scmp.ne.s32.totalorder %s44, %s45
      %p59 = scmp.eq.s32.totalorder %s21, 3
      %p60 = por %p58, %p59
      %p62 = scmp.ne.s32.totalorder %s45, %s61
      %p63 = scmp.eq.s32.totalorder %s21, 0
      %p64 = por %p62, %p63
      %s65 = smul.u32 %s22, 2
      %s66 = sadd.s32 %s65, %s23
      %s67 = smul.u32 %s34, 2
      %s68 = sadd.s32 %s67, %s30
      %s69 = ssub.s32 %s66, %s68
      %p70 = scmp.eq.s32.totalorder %s69, 0
      %s72 = sadd.s32 %s71, 1
      %s73 = scalar_select %p70, %s71, %s72
      %p76 = pneg %p70
      %p77 = scmp.eq.s32.totalorder %s15, 3
      %p78 = por %p76, %p77
      %p79 = scmp.ne.s32.totalorder %s71, %s74
      %p80 = scmp.eq.s32.totalorder %s15, 0
      %p81 = por %p79, %p80
      %p82 = scmp.ne.s32.totalorder %s71, %s74
      %p83 = scmp.eq.s32.totalorder %s20, 3
      %p84 = por %p82, %p83
      %p85 = scmp.ne.s32.totalorder %s74, %s75
      %p86 = scmp.eq.s32.totalorder %s20, 0
      %p87 = por %p85, %p86
      %p88 = scmp.ne.s32.totalorder %s74, %s75
      %p89 = scmp.eq.s32.totalorder %s21, 3
      %p90 = por %p88, %p89
      %p92 = scmp.ne.s32.totalorder %s75, %s91
      %p93 = scmp.eq.s32.totalorder %s21, 0
      %p94 = por %p92, %p93
      %s95 = smul.u32 %s22, 2
      %s96 = sadd.s32 %s95, %s23
      %s97 = smul.u32 %s34, 2
      %s98 = sadd.s32 %s97, %s30
      %s99 = ssub.s32 %s96, %s98
      %p100 = scmp.eq.s32.totalorder %s99, 0
      %s102 = sadd.s32 %s101, 1
      %s103 = scalar_select %p100, %s101, %s102
      %p106 = pneg %p100
      %p107 = scmp.eq.s32.totalorder %s15, 3
      %p108 = por %p106, %p107
      %p109 = scmp.ne.s32.totalorder %s101, %s104
      %p110 = scmp.eq.s32.totalorder %s15, 0
      %p111 = por %p109, %p110
      %p112 = scmp.ne.s32.totalorder %s101, %s104
      %p113 = scmp.eq.s32.totalorder %s20, 3
      %p114 = por %p112, %p113
      %p115 = scmp.ne.s32.totalorder %s104, %s105
      %p116 = scmp.eq.s32.totalorder %s20, 0
      %p117 = por %p115, %p116
      %p118 = scmp.ne.s32.totalorder %s104, %s105
      %p119 = scmp.eq.s32.totalorder %s21, 3
      %p120 = por %p118, %p119
      %p122 = scmp.ne.s32.totalorder %s105, %s121
      %p123 = scmp.eq.s32.totalorder %s21, 0
      %p124 = por %p122, %p123
      %s125 = ssub.s32 %s22, %s34
      %p126 = scmp.eq.s32.totalorder %s125, 0
      %s128 = sadd.s32 %s127, 1
      %s129 = scalar_select %p126, %s127, %s128
      %p132 = pneg %p126
      %p133 = scmp.eq.s32.totalorder %s15, 3
      %p134 = por %p132, %p133
      %p135 = scmp.ne.s32.totalorder %s127, %s130
      %p136 = scmp.eq.s32.totalorder %s15, 0
      %p137 = por %p135, %p136
      %p138 = scmp.ne.s32.totalorder %s127, %s130
      %p139 = scmp.eq.s32.totalorder %s20, 3
      %p140 = por %p138, %p139
      %p141 = scmp.ne.s32.totalorder %s130, %s131
      %p142 = scmp.eq.s32.totalorder %s20, 0
      %p143 = por %p141, %p142
      %p144 = scmp.ne.s32.totalorder %s130, %s131
      %p145 = scmp.eq.s32.totalorder %s21, 3
      %p146 = por %p144, %p145
      %p148 = scmp.ne.s32.totalorder %s131, %s147
      %p149 = scmp.eq.s32.totalorder %s21, 0
      %p150 = por %p148, %p149
      %p151 = scmp.le.s32.totalorder 1, %s15
      %p152 = scmp.lt.s32.totalorder %s15, 5
      %p153 = pnand %p151, %p152
      %p154 = pneg %p153
      // Predicated region
      $region9: #{net_forward.2} parent=5 // pred_check
        _
      $region10: #{net_forward.2} parent=5 // pred_check_branch
        %156 = sbr.rel (%p153) target = $region12
      $region11: #{net_forward.2} parent=5 // pred_region
        %s157 = ssub.s32 %s15, 1
      $region12: #{net_forward.2} parent=5 // pred_fallthru
        _
      %p158 = scmp.lt.s32.totalorder %s15, 4
      // Predicated region
      $region13: #{net_forward.2} parent=5 // pred_check
        %p159 = pneg %p158
      $region14: #{net_forward.2} parent=5 // pred_check_branch
        %161 = sbr.rel (%p159) target = $region16
      $region15: #{net_forward.2} parent=5 // pred_region
        // Predicated region
        $region17: #{net_forward.2} parent=15 // pred_check
          %p162 = pneg %p51
        $region18: #{net_forward.2} parent=15 // pred_check_branch
          %164 = sbr.rel (%p162) target = $region20
        $region19: #{net_forward.2} parent=15 // pred_region
          %s165 = sand.u32 %s41, 1
          %s166 = scalar_lea.sflag [#allocation3], %s165
          %s167 = sand.u32 %s41, 1
          %s168 = smul.addr %s167, 640
          %s169 = scalar_lea.vmem [#allocation2], %s168
          %s170 = smul.u32 %s22, 2
          %s171 = sadd.s32 %s170, %s23
          %s172 = smul.u32 80, %s171
          %s174 = ssub.s32 10240, 10240
          %175 = vsyncadd %s166, %s174
          %s176 = smul.addr %s172, 128
          %s177 = scalar_lea.hbm %s0, %s176
          %s179 = sshll.u32 %s169, 4
          %s180 = int_to_ptr.vmem [resolvable:$true] %s179
          %182 = dma.hbm_to_vmem [thread:$0]  %s177, 10240, %s180, %s166
        $region20: #{net_forward.2} parent=15 // pred_fallthru
          _
        // Predicated region
        $region21: #{net_forward.2} parent=15 // pred_check
          %p183 = pneg %p81
        $region22: #{net_forward.2} parent=15 // pred_check_branch
          %185 = sbr.rel (%p183) target = $region24
        $region23: #{net_forward.2} parent=15 // pred_region
          %s186 = sand.u32 %s15, 1
          %s187 = scalar_lea.sflag [#allocation5], %s186
          %s188 = sand.u32 %s71, 1
          %s189 = smul.addr %s188, 640
          %s190 = scalar_lea.vmem [#allocation4], %s189
          %s191 = smul.u32 %s22, 2
          %s192 = sadd.s32 %s191, %s23
          %s193 = smul.u32 80, %s192
          %s195 = ssub.s32 10240, 10240
          %196 = vsyncadd %s187, %s195
          %s197 = smul.addr %s193, 128
          %s198 = scalar_lea.hbm %s1, %s197
          %s200 = sshll.u32 %s190, 4
          %s201 = int_to_ptr.vmem [resolvable:$true] %s200
          %203 = dma.hbm_to_vmem [thread:$0]  %s198, 10240, %s201, %s187
        $region24: #{net_forward.2} parent=15 // pred_fallthru
          _
        // Predicated region
        $region25: #{net_forward.2} parent=15 // pred_check
          %p204 = pneg %p111
        $region26: #{net_forward.2} parent=15 // pred_check_branch
          %206 = sbr.rel (%p204) target = $region28
        $region27: #{net_forward.2} parent=15 // pred_region
          %s207 = sand.u32 %s15, 1
          %s208 = scalar_lea.sflag [#allocation5], %s207
          %s209 = sand.u32 %s101, 1
          %s210 = smul.addr %s209, 5120
          %s211 = scalar_lea.vmem [#allocation6], %s210
          %s212 = smul.u32 %s22, 2
          %s213 = sadd.s32 %s212, %s23
          %s214 = smul.u32 1280, %s213
          %s216 = ssub.s32 81920, 81920
          %217 = vsyncadd %s208, %s216
          %s218 = smul.addr %s214, 64
          %s219 = scalar_lea.hbm %s2, %s218
          %s220 = sshll.u32 %s211, 4
          %s221 = int_to_ptr.vmem [resolvable:$true] %s220
          %226 = dma.hbm_to_vmem [thread:$0]  %s219, 81920, %s221, %s208, 64, 64, 4
        $region28: #{net_forward.2} parent=15 // pred_fallthru
          _
      $region16: #{net_forward.2} parent=5 // pred_fallthru
        _
      %p227 = scmp.le.s32.totalorder 1, %s15
      %p228 = scmp.lt.s32.totalorder %s15, 5
      %p229 = pnand %p227, %p228
      %p230 = pneg %p229
      // Predicated region
      $region29: #{net_forward.2} parent=5 // pred_check
        _
      $region30: #{net_forward.2} parent=5 // pred_check_branch
        %232 = sbr.rel (%p229) target = $region32
      $region31: #{net_forward.2} parent=5 // pred_region
        %s233 = ssub.s32 %s15, 1
        %s234 = sand.u32 %s44, 1
        %s235 = scalar_lea.sflag [#allocation3], %s234
        %s236 = sand.u32 %s44, 1
        %s237 = smul.addr %s236, 640
        %s238 = scalar_lea.vmem [#allocation2], %s237
        // Predicated region
        $region33: #{net_forward.2} parent=31 // pred_check
          %p239 = pneg %p57
        $region34: #{net_forward.2} parent=31 // pred_check_branch
          %241 = sbr.rel (%p239) target = $region36
        $region35: #{net_forward.2} parent=31 // pred_region
          %242 = dma.done %s235, 10240
        $region36: #{net_forward.2} parent=31 // pred_fallthru
          _
        %s243 = sand.u32 %s20, 1
        %s244 = scalar_lea.sflag [#allocation5], %s243
        %s245 = sand.u32 %s74, 1
        %s246 = smul.addr %s245, 640
        %s247 = scalar_lea.vmem [#allocation4], %s246
        // Predicated region
        $region37: #{net_forward.2} parent=31 // pred_check
          %p248 = pneg %p87
        $region38: #{net_forward.2} parent=31 // pred_check_branch
          %250 = sbr.rel (%p248) target = $region40
        $region39: #{net_forward.2} parent=31 // pred_region
          %251 = dma.done %s244, 10240
        $region40: #{net_forward.2} parent=31 // pred_fallthru
          _
        %s252 = sand.u32 %s20, 1
        %s253 = scalar_lea.sflag [#allocation5], %s252
        %s254 = sand.u32 %s104, 1
        %s255 = smul.addr %s254, 5120
        %s256 = scalar_lea.vmem [#allocation6], %s255
        // Predicated region
        $region41: #{net_forward.2} parent=31 // pred_check
          %p257 = pneg %p117
        $region42: #{net_forward.2} parent=31 // pred_check_branch
          %259 = sbr.rel (%p257) target = $region44
        $region43: #{net_forward.2} parent=31 // pred_region
          %260 = dma.done %s253, 81920
        $region44: #{net_forward.2} parent=31 // pred_fallthru
          _
        %s261 = sand.u32 %s44, 1
        %s262 = scalar_lea.sflag [#allocation3], %s261
        %s263 = sand.u32 %s44, 1
        %s264 = smul.addr %s263, 640
        %s265 = scalar_lea.vmem [#allocation2], %s264
        %p266 = pneg %p57
        %p267 = pneg %p54
        %s268 = sand.u32 %s20, 1
        %s269 = scalar_lea.sflag [#allocation5], %s268
        %s270 = sand.u32 %s74, 1
        %s271 = smul.addr %s270, 640
        %s272 = scalar_lea.vmem [#allocation4], %s271
        %p273 = pneg %p87
        %p274 = pneg %p84
        %s275 = sand.u32 %s20, 1
        %s276 = scalar_lea.sflag [#allocation5], %s275
        %s277 = sand.u32 %s104, 1
        %s278 = smul.addr %s277, 5120
        %s279 = scalar_lea.vmem [#allocation6], %s278
        %p280 = pneg %p117
        %p281 = pneg %p114
        %p282 = pneg %p143
        %p283 = pneg %p140
        %p284 = scmp.lt.s32.totalorder %s24, 1
        %s285 = scalar_select %p284, %s24, 1
        %s286 = smul.addr %s285, 2
        %s287 = smul.addr %s286, 8
        %s288 = scalar_lea.vmem %s3, %s287
        %s289 = smul.u32 %s24, 2
        %s290 = sadd.s32 %s289, %s25
        %s291 = smul.u32 80, %s290
        %s292 = smul.u32 %s24, 2
        %s293 = sadd.s32 %s292, %s25
        %s294 = smul.u32 80, %s293
        %s295 = smul.u32 %s24, 2
        %s296 = sadd.s32 %s295, %s25
        %s297 = smul.u32 1280, %s296
        %p298 = scmp.lt.s32.totalorder %s24, 1
        %s299 = scalar_select %p298, %s24, 1
        %s300 = smul.addr %s299, 2
        %s301 = smul.addr %s300, 8
        %s302 = scalar_lea.vmem %s3, %s301
        %p304 = scmp.eq.s32.totalorder %s25, 0
        // Predicated region
        $region45: #{net_forward.2} parent=31 // pred_check
          %p305 = pneg %p304
        $region46: #{net_forward.2} parent=31 // pred_check_branch
          %307 = sbr.rel (%p305) target = $region48
        $region47: #{net_forward.2} parent=31 // pred_region
          %308 = vst [vmem:[%s302] sm:$0xff] 0.0
          %309 = vst [vmem:[%s302 + $0x8] sm:$0xff] 0.0
        $region48: #{net_forward.2} parent=31 // pred_fallthru
          _
        %v310 = vld [vmem:[%s256] sm:$0xf]
        %v311 = vld [vmem:[%s256 + $0x4] sm:$0xf]
        %v312 = vld [vmem:[%s256 + $0x8] sm:$0xf]
        %v313 = vld [vmem:[%s256 + $0xc] sm:$0xf]
        %v314 = vld [vmem:[%s256 + $0x10] sm:$0xf]
        %v315 = vld [vmem:[%s256 + $0x14] sm:$0xf]
        %v316 = vld [vmem:[%s256 + $0x18] sm:$0xf]
        %v317 = vld [vmem:[%s256 + $0x1c] sm:$0xf]
        %v318 = vld [vmem:[%s256 + $0x20] sm:$0xf]
        %v319 = vld [vmem:[%s256 + $0x24] sm:$0xf]
        %v320 = vld [vmem:[%s256 + $0x28] sm:$0xf]
        %v321 = vld [vmem:[%s256 + $0x2c] sm:$0xf]
        %v322 = vld [vmem:[%s256 + $0x30] sm:$0xf]
        %v323 = vld [vmem:[%s256 + $0x34] sm:$0xf]
        %v324 = vld [vmem:[%s256 + $0x38] sm:$0xf]
        %v325 = vld [vmem:[%s256 + $0x3c] sm:$0xf]
        %v326 = vld [vmem:[%s256 + $0x40] sm:$0xf]
        %v327 = vld [vmem:[%s256 + $0x44] sm:$0xf]
        %v328 = vld [vmem:[%s256 + $0x48] sm:$0xf]
        %v329 = vld [vmem:[%s256 + $0x4c] sm:$0xf]
        %v330 = vld [vmem:[%s256 + $0x50] sm:$0xf]
        %v331 = vld [vmem:[%s256 + $0x54] sm:$0xf]
        %v332 = vld [vmem:[%s256 + $0x58] sm:$0xf]
        %v333 = vld [vmem:[%s256 + $0x5c] sm:$0xf]
        %v334 = vld [vmem:[%s256 + $0x60] sm:$0xf]
        %v335 = vld [vmem:[%s256 + $0x64] sm:$0xf]
        %v336 = vld [vmem:[%s256 + $0x68] sm:$0xf]
        %v337 = vld [vmem:[%s256 + $0x6c] sm:$0xf]
        %v338 = vld [vmem:[%s256 + $0x70] sm:$0xf]
        %v339 = vld [vmem:[%s256 + $0x74] sm:$0xf]
        %v340 = vld [vmem:[%s256 + $0x78] sm:$0xf]
        %v341 = vld [vmem:[%s256 + $0x7c] sm:$0xf]
        %v342 = vld [vmem:[%s256 + $0x80] sm:$0xf]
        %v343 = vld [vmem:[%s256 + $0x84] sm:$0xf]
        %v344 = vld [vmem:[%s256 + $0x88] sm:$0xf]
        %v345 = vld [vmem:[%s256 + $0x8c] sm:$0xf]
        %v346 = vld [vmem:[%s256 + $0x90] sm:$0xf]
        %v347 = vld [vmem:[%s256 + $0x94] sm:$0xf]
        %v348 = vld [vmem:[%s256 + $0x98] sm:$0xf]
        %v349 = vld [vmem:[%s256 + $0x9c] sm:$0xf]
        %v350 = vld [vmem:[%s256 + $0xa0] sm:$0xf]
        %v351 = vld [vmem:[%s256 + $0xa4] sm:$0xf]
        %v352 = vld [vmem:[%s256 + $0xa8] sm:$0xf]
        %v353 = vld [vmem:[%s256 + $0xac] sm:$0xf]
        %v354 = vld [vmem:[%s256 + $0xb0] sm:$0xf]
        %v355 = vld [vmem:[%s256 + $0xb4] sm:$0xf]
        %v356 = vld [vmem:[%s256 + $0xb8] sm:$0xf]
        %v357 = vld [vmem:[%s256 + $0xbc] sm:$0xf]
        %v358 = vld [vmem:[%s256 + $0xc0] sm:$0xf]
        %v359 = vld [vmem:[%s256 + $0xc4] sm:$0xf]
        %v360 = vld [vmem:[%s256 + $0xc8] sm:$0xf]
        %v361 = vld [vmem:[%s256 + $0xcc] sm:$0xf]
        %v362 = vld [vmem:[%s256 + $0xd0] sm:$0xf]
        %v363 = vld [vmem:[%s256 + $0xd4] sm:$0xf]
        %v364 = vld [vmem:[%s256 + $0xd8] sm:$0xf]
        %v365 = vld [vmem:[%s256 + $0xdc] sm:$0xf]
        %v366 = vld [vmem:[%s256 + $0xe0] sm:$0xf]
        %v367 = vld [vmem:[%s256 + $0xe4] sm:$0xf]
        %v368 = vld [vmem:[%s256 + $0xe8] sm:$0xf]
        %v369 = vld [vmem:[%s256 + $0xec] sm:$0xf]
        %v370 = vld [vmem:[%s256 + $0xf0] sm:$0xf]
        %v371 = vld [vmem:[%s256 + $0xf4] sm:$0xf]
        %v372 = vld [vmem:[%s256 + $0xf8] sm:$0xf]
        %v373 = vld [vmem:[%s256 + $0xfc] sm:$0xf]
        %v374 = vld [vmem:[%s256 + $0x100] sm:$0xf]
        %v375 = vld [vmem:[%s256 + $0x104] sm:$0xf]
        %v376 = vld [vmem:[%s256 + $0x108] sm:$0xf]
        %v377 = vld [vmem:[%s256 + $0x10c] sm:$0xf]
        %v378 = vld [vmem:[%s256 + $0x110] sm:$0xf]
        %v379 = vld [vmem:[%s256 + $0x114] sm:$0xf]
        %v380 = vld [vmem:[%s256 + $0x118] sm:$0xf]
        %v381 = vld [vmem:[%s256 + $0x11c] sm:$0xf]
        %v382 = vld [vmem:[%s256 + $0x120] sm:$0xf]
        %v383 = vld [vmem:[%s256 + $0x124] sm:$0xf]
        %v384 = vld [vmem:[%s256 + $0x128] sm:$0xf]
        %v385 = vld [vmem:[%s256 + $0x12c] sm:$0xf]
        %v386 = vld [vmem:[%s256 + $0x130] sm:$0xf]
        %v387 = vld [vmem:[%s256 + $0x134] sm:$0xf]
        %v388 = vld [vmem:[%s256 + $0x138] sm:$0xf]
        %v389 = vld [vmem:[%s256 + $0x13c] sm:$0xf]
        %v390 = vld [vmem:[%s256 + $0x140] sm:$0xf]
        %v391 = vld [vmem:[%s256 + $0x144] sm:$0xf]
        %v392 = vld [vmem:[%s256 + $0x148] sm:$0xf]
        %v393 = vld [vmem:[%s256 + $0x14c] sm:$0xf]
        %v394 = vld [vmem:[%s256 + $0x150] sm:$0xf]
        %v395 = vld [vmem:[%s256 + $0x154] sm:$0xf]
        %v396 = vld [vmem:[%s256 + $0x158] sm:$0xf]
        %v397 = vld [vmem:[%s256 + $0x15c] sm:$0xf]
        %v398 = vld [vmem:[%s256 + $0x160] sm:$0xf]
        %v399 = vld [vmem:[%s256 + $0x164] sm:$0xf]
        %v400 = vld [vmem:[%s256 + $0x168] sm:$0xf]
        %v401 = vld [vmem:[%s256 + $0x16c] sm:$0xf]
        %v402 = vld [vmem:[%s256 + $0x170] sm:$0xf]
        %v403 = vld [vmem:[%s256 + $0x174] sm:$0xf]
        %v404 = vld [vmem:[%s256 + $0x178] sm:$0xf]
        %v405 = vld [vmem:[%s256 + $0x17c] sm:$0xf]
        %v406 = vld [vmem:[%s256 + $0x180] sm:$0xf]
        %v407 = vld [vmem:[%s256 + $0x184] sm:$0xf]
        %v408 = vld [vmem:[%s256 + $0x188] sm:$0xf]
        %v409 = vld [vmem:[%s256 + $0x18c] sm:$0xf]
        %v410 = vld [vmem:[%s256 + $0x190] sm:$0xf]
        %v411 = vld [vmem:[%s256 + $0x194] sm:$0xf]
        %v412 = vld [vmem:[%s256 + $0x198] sm:$0xf]
        %v413 = vld [vmem:[%s256 + $0x19c] sm:$0xf]
        %v414 = vld [vmem:[%s256 + $0x1a0] sm:$0xf]
        %v415 = vld [vmem:[%s256 + $0x1a4] sm:$0xf]
        %v416 = vld [vmem:[%s256 + $0x1a8] sm:$0xf]
        %v417 = vld [vmem:[%s256 + $0x1ac] sm:$0xf]
        %v418 = vld [vmem:[%s256 + $0x1b0] sm:$0xf]
        %v419 = vld [vmem:[%s256 + $0x1b4] sm:$0xf]
        %v420 = vld [vmem:[%s256 + $0x1b8] sm:$0xf]
        %v421 = vld [vmem:[%s256 + $0x1bc] sm:$0xf]
        %v422 = vld [vmem:[%s256 + $0x1c0] sm:$0xf]
        %v423 = vld [vmem:[%s256 + $0x1c4] sm:$0xf]
        %v424 = vld [vmem:[%s256 + $0x1c8] sm:$0xf]
        %v425 = vld [vmem:[%s256 + $0x1cc] sm:$0xf]
        %v426 = vld [vmem:[%s256 + $0x1d0] sm:$0xf]
        %v427 = vld [vmem:[%s256 + $0x1d4] sm:$0xf]
        %v428 = vld [vmem:[%s256 + $0x1d8] sm:$0xf]
        %v429 = vld [vmem:[%s256 + $0x1dc] sm:$0xf]
        %v430 = vld [vmem:[%s256 + $0x1e0] sm:$0xf]
        %v431 = vld [vmem:[%s256 + $0x1e4] sm:$0xf]
        %v432 = vld [vmem:[%s256 + $0x1e8] sm:$0xf]
        %v433 = vld [vmem:[%s256 + $0x1ec] sm:$0xf]
        %v434 = vld [vmem:[%s256 + $0x1f0] sm:$0xf]
        %v435 = vld [vmem:[%s256 + $0x1f4] sm:$0xf]
        %v436 = vld [vmem:[%s256 + $0x1f8] sm:$0xf]
        %v437 = vld [vmem:[%s256 + $0x1fc] sm:$0xf]
        %v438 = vld [vmem:[%s256 + $0x200] sm:$0xf]
        %v439 = vld [vmem:[%s256 + $0x204] sm:$0xf]
        %v440 = vld [vmem:[%s256 + $0x208] sm:$0xf]
        %v441 = vld [vmem:[%s256 + $0x20c] sm:$0xf]
        %v442 = vld [vmem:[%s256 + $0x210] sm:$0xf]
        %v443 = vld [vmem:[%s256 + $0x214] sm:$0xf]
        %v444 = vld [vmem:[%s256 + $0x218] sm:$0xf]
        %v445 = vld [vmem:[%s256 + $0x21c] sm:$0xf]
        %v446 = vld [vmem:[%s256 + $0x220] sm:$0xf]
        %v447 = vld [vmem:[%s256 + $0x224] sm:$0xf]
        %v448 = vld [vmem:[%s256 + $0x228] sm:$0xf]
        %v449 = vld [vmem:[%s256 + $0x22c] sm:$0xf]
        %v450 = vld [vmem:[%s256 + $0x230] sm:$0xf]
        %v451 = vld [vmem:[%s256 + $0x234] sm:$0xf]
        %v452 = vld [vmem:[%s256 + $0x238] sm:$0xf]
        %v453 = vld [vmem:[%s256 + $0x23c] sm:$0xf]
        %v454 = vld [vmem:[%s256 + $0x240] sm:$0xf]
        %v455 = vld [vmem:[%s256 + $0x244] sm:$0xf]
        %v456 = vld [vmem:[%s256 + $0x248] sm:$0xf]
        %v457 = vld [vmem:[%s256 + $0x24c] sm:$0xf]
        %v458 = vld [vmem:[%s256 + $0x250] sm:$0xf]
        %v459 = vld [vmem:[%s256 + $0x254] sm:$0xf]
        %v460 = vld [vmem:[%s256 + $0x258] sm:$0xf]
        %v461 = vld [vmem:[%s256 + $0x25c] sm:$0xf]
        %v462 = vld [vmem:[%s256 + $0x260] sm:$0xf]
        %v463 = vld [vmem:[%s256 + $0x264] sm:$0xf]
        %v464 = vld [vmem:[%s256 + $0x268] sm:$0xf]
        %v465 = vld [vmem:[%s256 + $0x26c] sm:$0xf]
        %v466 = vld [vmem:[%s256 + $0x270] sm:$0xf]
        %v467 = vld [vmem:[%s256 + $0x274] sm:$0xf]
        %v468 = vld [vmem:[%s256 + $0x278] sm:$0xf]
        %v469 = vld [vmem:[%s256 + $0x27c] sm:$0xf]
        %v470 = vld [vmem:[%s256 + $0x280] sm:$0xf]
        %v471 = vld [vmem:[%s256 + $0x284] sm:$0xf]
        %v472 = vld [vmem:[%s256 + $0x288] sm:$0xf]
        %v473 = vld [vmem:[%s256 + $0x28c] sm:$0xf]
        %v474 = vld [vmem:[%s256 + $0x290] sm:$0xf]
        %v475 = vld [vmem:[%s256 + $0x294] sm:$0xf]
        %v476 = vld [vmem:[%s256 + $0x298] sm:$0xf]
        %v477 = vld [vmem:[%s256 + $0x29c] sm:$0xf]
        %v478 = vld [vmem:[%s256 + $0x2a0] sm:$0xf]
        %v479 = vld [vmem:[%s256 + $0x2a4] sm:$0xf]
        %v480 = vld [vmem:[%s256 + $0x2a8] sm:$0xf]
        %v481 = vld [vmem:[%s256 + $0x2ac] sm:$0xf]
        %v482 = vld [vmem:[%s256 + $0x2b0] sm:$0xf]
        %v483 = vld [vmem:[%s256 + $0x2b4] sm:$0xf]
        %v484 = vld [vmem:[%s256 + $0x2b8] sm:$0xf]
        %v485 = vld [vmem:[%s256 + $0x2bc] sm:$0xf]
        %v486 = vld [vmem:[%s256 + $0x2c0] sm:$0xf]
        %v487 = vld [vmem:[%s256 + $0x2c4] sm:$0xf]
        %v488 = vld [vmem:[%s256 + $0x2c8] sm:$0xf]
        %v489 = vld [vmem:[%s256 + $0x2cc] sm:$0xf]
        %v490 = vld [vmem:[%s256 + $0x2d0] sm:$0xf]
        %v491 = vld [vmem:[%s256 + $0x2d4] sm:$0xf]
        %v492 = vld [vmem:[%s256 + $0x2d8] sm:$0xf]
        %v493 = vld [vmem:[%s256 + $0x2dc] sm:$0xf]
        %v494 = vld [vmem:[%s256 + $0x2e0] sm:$0xf]
        %v495 = vld [vmem:[%s256 + $0x2e4] sm:$0xf]
        %v496 = vld [vmem:[%s256 + $0x2e8] sm:$0xf]
        %v497 = vld [vmem:[%s256 + $0x2ec] sm:$0xf]
        %v498 = vld [vmem:[%s256 + $0x2f0] sm:$0xf]
        %v499 = vld [vmem:[%s256 + $0x2f4] sm:$0xf]
        %v500 = vld [vmem:[%s256 + $0x2f8] sm:$0xf]
        %v501 = vld [vmem:[%s256 + $0x2fc] sm:$0xf]
        %v502 = vld [vmem:[%s256 + $0x300] sm:$0xf]
        %v503 = vld [vmem:[%s256 + $0x304] sm:$0xf]
        %v504 = vld [vmem:[%s256 + $0x308] sm:$0xf]
        %v505 = vld [vmem:[%s256 + $0x30c] sm:$0xf]
        %v506 = vld [vmem:[%s256 + $0x310] sm:$0xf]
        %v507 = vld [vmem:[%s256 + $0x314] sm:$0xf]
        %v508 = vld [vmem:[%s256 + $0x318] sm:$0xf]
        %v509 = vld [vmem:[%s256 + $0x31c] sm:$0xf]
        %v510 = vld [vmem:[%s256 + $0x320] sm:$0xf]
        %v511 = vld [vmem:[%s256 + $0x324] sm:$0xf]
        %v512 = vld [vmem:[%s256 + $0x328] sm:$0xf]
        %v513 = vld [vmem:[%s256 + $0x32c] sm:$0xf]
        %v514 = vld [vmem:[%s256 + $0x330] sm:$0xf]
        %v515 = vld [vmem:[%s256 + $0x334] sm:$0xf]
        %v516 = vld [vmem:[%s256 + $0x338] sm:$0xf]
        %v517 = vld [vmem:[%s256 + $0x33c] sm:$0xf]
        %v518 = vld [vmem:[%s256 + $0x340] sm:$0xf]
        %v519 = vld [vmem:[%s256 + $0x344] sm:$0xf]
        %v520 = vld [vmem:[%s256 + $0x348] sm:$0xf]
        %v521 = vld [vmem:[%s256 + $0x34c] sm:$0xf]
        %v522 = vld [vmem:[%s256 + $0x350] sm:$0xf]
        %v523 = vld [vmem:[%s256 + $0x354] sm:$0xf]
        %v524 = vld [vmem:[%s256 + $0x358] sm:$0xf]
        %v525 = vld [vmem:[%s256 + $0x35c] sm:$0xf]
        %v526 = vld [vmem:[%s256 + $0x360] sm:$0xf]
        %v527 = vld [vmem:[%s256 + $0x364] sm:$0xf]
        %v528 = vld [vmem:[%s256 + $0x368] sm:$0xf]
        %v529 = vld [vmem:[%s256 + $0x36c] sm:$0xf]
        %v530 = vld [vmem:[%s256 + $0x370] sm:$0xf]
        %v531 = vld [vmem:[%s256 + $0x374] sm:$0xf]
        %v532 = vld [vmem:[%s256 + $0x378] sm:$0xf]
        %v533 = vld [vmem:[%s256 + $0x37c] sm:$0xf]
        %v534 = vld [vmem:[%s256 + $0x380] sm:$0xf]
        %v535 = vld [vmem:[%s256 + $0x384] sm:$0xf]
        %v536 = vld [vmem:[%s256 + $0x388] sm:$0xf]
        %v537 = vld [vmem:[%s256 + $0x38c] sm:$0xf]
        %v538 = vld [vmem:[%s256 + $0x390] sm:$0xf]
        %v539 = vld [vmem:[%s256 + $0x394] sm:$0xf]
        %v540 = vld [vmem:[%s256 + $0x398] sm:$0xf]
        %v541 = vld [vmem:[%s256 + $0x39c] sm:$0xf]
        %v542 = vld [vmem:[%s256 + $0x3a0] sm:$0xf]
        %v543 = vld [vmem:[%s256 + $0x3a4] sm:$0xf]
        %v544 = vld [vmem:[%s256 + $0x3a8] sm:$0xf]
        %v545 = vld [vmem:[%s256 + $0x3ac] sm:$0xf]
        %v546 = vld [vmem:[%s256 + $0x3b0] sm:$0xf]
        %v547 = vld [vmem:[%s256 + $0x3b4] sm:$0xf]
        %v548 = vld [vmem:[%s256 + $0x3b8] sm:$0xf]
        %v549 = vld [vmem:[%s256 + $0x3bc] sm:$0xf]
        %v550 = vld [vmem:[%s256 + $0x3c0] sm:$0xf]
        %v551 = vld [vmem:[%s256 + $0x3c4] sm:$0xf]
        %v552 = vld [vmem:[%s256 + $0x3c8] sm:$0xf]
        %v553 = vld [vmem:[%s256 + $0x3cc] sm:$0xf]
        %v554 = vld [vmem:[%s256 + $0x3d0] sm:$0xf]
        %v555 = vld [vmem:[%s256 + $0x3d4] sm:$0xf]
        %v556 = vld [vmem:[%s256 + $0x3d8] sm:$0xf]
        %v557 = vld [vmem:[%s256 + $0x3dc] sm:$0xf]
        %v558 = vld [vmem:[%s256 + $0x3e0] sm:$0xf]
        %v559 = vld [vmem:[%s256 + $0x3e4] sm:$0xf]
        %v560 = vld [vmem:[%s256 + $0x3e8] sm:$0xf]
        %v561 = vld [vmem:[%s256 + $0x3ec] sm:$0xf]
        %v562 = vld [vmem:[%s256 + $0x3f0] sm:$0xf]
        %v563 = vld [vmem:[%s256 + $0x3f4] sm:$0xf]
        %v564 = vld [vmem:[%s256 + $0x3f8] sm:$0xf]
        %v565 = vld [vmem:[%s256 + $0x3fc] sm:$0xf]
        %v566 = vld [vmem:[%s256 + $0x400] sm:$0xf]
        %v567 = vld [vmem:[%s256 + $0x404] sm:$0xf]
        %v568 = vld [vmem:[%s256 + $0x408] sm:$0xf]
        %v569 = vld [vmem:[%s256 + $0x40c] sm:$0xf]
        %v570 = vld [vmem:[%s256 + $0x410] sm:$0xf]
        %v571 = vld [vmem:[%s256 + $0x414] sm:$0xf]
        %v572 = vld [vmem:[%s256 + $0x418] sm:$0xf]
        %v573 = vld [vmem:[%s256 + $0x41c] sm:$0xf]
        %v574 = vld [vmem:[%s256 + $0x420] sm:$0xf]
        %v575 = vld [vmem:[%s256 + $0x424] sm:$0xf]
        %v576 = vld [vmem:[%s256 + $0x428] sm:$0xf]
        %v577 = vld [vmem:[%s256 + $0x42c] sm:$0xf]
        %v578 = vld [vmem:[%s256 + $0x430] sm:$0xf]
        %v579 = vld [vmem:[%s256 + $0x434] sm:$0xf]
        %v580 = vld [vmem:[%s256 + $0x438] sm:$0xf]
        %v581 = vld [vmem:[%s256 + $0x43c] sm:$0xf]
        %v582 = vld [vmem:[%s256 + $0x440] sm:$0xf]
        %v583 = vld [vmem:[%s256 + $0x444] sm:$0xf]
        %v584 = vld [vmem:[%s256 + $0x448] sm:$0xf]
        %v585 = vld [vmem:[%s256 + $0x44c] sm:$0xf]
        %v586 = vld [vmem:[%s256 + $0x450] sm:$0xf]
        %v587 = vld [vmem:[%s256 + $0x454] sm:$0xf]
        %v588 = vld [vmem:[%s256 + $0x458] sm:$0xf]
        %v589 = vld [vmem:[%s256 + $0x45c] sm:$0xf]
        %v590 = vld [vmem:[%s256 + $0x460] sm:$0xf]
        %v591 = vld [vmem:[%s256 + $0x464] sm:$0xf]
        %v592 = vld [vmem:[%s256 + $0x468] sm:$0xf]
        %v593 = vld [vmem:[%s256 + $0x46c] sm:$0xf]
        %v594 = vld [vmem:[%s256 + $0x470] sm:$0xf]
        %v595 = vld [vmem:[%s256 + $0x474] sm:$0xf]
        %v596 = vld [vmem:[%s256 + $0x478] sm:$0xf]
        %v597 = vld [vmem:[%s256 + $0x47c] sm:$0xf]
        %v598 = vld [vmem:[%s256 + $0x480] sm:$0xf]
        %v599 = vld [vmem:[%s256 + $0x484] sm:$0xf]
        %v600 = vld [vmem:[%s256 + $0x488] sm:$0xf]
        %v601 = vld [vmem:[%s256 + $0x48c] sm:$0xf]
        %v602 = vld [vmem:[%s256 + $0x490] sm:$0xf]
        %v603 = vld [vmem:[%s256 + $0x494] sm:$0xf]
        %v604 = vld [vmem:[%s256 + $0x498] sm:$0xf]
        %v605 = vld [vmem:[%s256 + $0x49c] sm:$0xf]
        %v606 = vld [vmem:[%s256 + $0x4a0] sm:$0xf]
        %v607 = vld [vmem:[%s256 + $0x4a4] sm:$0xf]
        %v608 = vld [vmem:[%s256 + $0x4a8] sm:$0xf]
        %v609 = vld [vmem:[%s256 + $0x4ac] sm:$0xf]
        %v610 = vld [vmem:[%s256 + $0x4b0] sm:$0xf]
        %v611 = vld [vmem:[%s256 + $0x4b4] sm:$0xf]
        %v612 = vld [vmem:[%s256 + $0x4b8] sm:$0xf]
        %v613 = vld [vmem:[%s256 + $0x4bc] sm:$0xf]
        %v614 = vld [vmem:[%s256 + $0x4c0] sm:$0xf]
        %v615 = vld [vmem:[%s256 + $0x4c4] sm:$0xf]
        %v616 = vld [vmem:[%s256 + $0x4c8] sm:$0xf]
        %v617 = vld [vmem:[%s256 + $0x4cc] sm:$0xf]
        %v618 = vld [vmem:[%s256 + $0x4d0] sm:$0xf]
        %v619 = vld [vmem:[%s256 + $0x4d4] sm:$0xf]
        %v620 = vld [vmem:[%s256 + $0x4d8] sm:$0xf]
        %v621 = vld [vmem:[%s256 + $0x4dc] sm:$0xf]
        %v622 = vld [vmem:[%s256 + $0x4e0] sm:$0xf]
        %v623 = vld [vmem:[%s256 + $0x4e4] sm:$0xf]
        %v624 = vld [vmem:[%s256 + $0x4e8] sm:$0xf]
        %v625 = vld [vmem:[%s256 + $0x4ec] sm:$0xf]
        %v626 = vld [vmem:[%s256 + $0x4f0] sm:$0xf]
        %v627 = vld [vmem:[%s256 + $0x4f4] sm:$0xf]
        %v628 = vld [vmem:[%s256 + $0x4f8] sm:$0xf]
        %v629 = vld [vmem:[%s256 + $0x4fc] sm:$0xf]
        %v630 = vld [vmem:[%s256 + $0x500] sm:$0xf]
        %v631 = vld [vmem:[%s256 + $0x504] sm:$0xf]
        %v632 = vld [vmem:[%s256 + $0x508] sm:$0xf]
        %v633 = vld [vmem:[%s256 + $0x50c] sm:$0xf]
        %v634 = vld [vmem:[%s256 + $0x510] sm:$0xf]
        %v635 = vld [vmem:[%s256 + $0x514] sm:$0xf]
        %v636 = vld [vmem:[%s256 + $0x518] sm:$0xf]
        %v637 = vld [vmem:[%s256 + $0x51c] sm:$0xf]
        %v638 = vld [vmem:[%s256 + $0x520] sm:$0xf]
        %v639 = vld [vmem:[%s256 + $0x524] sm:$0xf]
        %v640 = vld [vmem:[%s256 + $0x528] sm:$0xf]
        %v641 = vld [vmem:[%s256 + $0x52c] sm:$0xf]
        %v642 = vld [vmem:[%s256 + $0x530] sm:$0xf]
        %v643 = vld [vmem:[%s256 + $0x534] sm:$0xf]
        %v644 = vld [vmem:[%s256 + $0x538] sm:$0xf]
        %v645 = vld [vmem:[%s256 + $0x53c] sm:$0xf]
        %v646 = vld [vmem:[%s256 + $0x540] sm:$0xf]
        %v647 = vld [vmem:[%s256 + $0x544] sm:$0xf]
        %v648 = vld [vmem:[%s256 + $0x548] sm:$0xf]
        %v649 = vld [vmem:[%s256 + $0x54c] sm:$0xf]
        %v650 = vld [vmem:[%s256 + $0x550] sm:$0xf]
        %v651 = vld [vmem:[%s256 + $0x554] sm:$0xf]
        %v652 = vld [vmem:[%s256 + $0x558] sm:$0xf]
        %v653 = vld [vmem:[%s256 + $0x55c] sm:$0xf]
        %v654 = vld [vmem:[%s256 + $0x560] sm:$0xf]
        %v655 = vld [vmem:[%s256 + $0x564] sm:$0xf]
        %v656 = vld [vmem:[%s256 + $0x568] sm:$0xf]
        %v657 = vld [vmem:[%s256 + $0x56c] sm:$0xf]
        %v658 = vld [vmem:[%s256 + $0x570] sm:$0xf]
        %v659 = vld [vmem:[%s256 + $0x574] sm:$0xf]
        %v660 = vld [vmem:[%s256 + $0x578] sm:$0xf]
        %v661 = vld [vmem:[%s256 + $0x57c] sm:$0xf]
        %v662 = vld [vmem:[%s256 + $0x580] sm:$0xf]
        %v663 = vld [vmem:[%s256 + $0x584] sm:$0xf]
        %v664 = vld [vmem:[%s256 + $0x588] sm:$0xf]
        %v665 = vld [vmem:[%s256 + $0x58c] sm:$0xf]
        %v666 = vld [vmem:[%s256 + $0x590] sm:$0xf]
        %v667 = vld [vmem:[%s256 + $0x594] sm:$0xf]
        %v668 = vld [vmem:[%s256 + $0x598] sm:$0xf]
        %v669 = vld [vmem:[%s256 + $0x59c] sm:$0xf]
        %v670 = vld [vmem:[%s256 + $0x5a0] sm:$0xf]
        %v671 = vld [vmem:[%s256 + $0x5a4] sm:$0xf]
        %v672 = vld [vmem:[%s256 + $0x5a8] sm:$0xf]
        %v673 = vld [vmem:[%s256 + $0x5ac] sm:$0xf]
        %v674 = vld [vmem:[%s256 + $0x5b0] sm:$0xf]
        %v675 = vld [vmem:[%s256 + $0x5b4] sm:$0xf]
        %v676 = vld [vmem:[%s256 + $0x5b8] sm:$0xf]
        %v677 = vld [vmem:[%s256 + $0x5bc] sm:$0xf]
        %v678 = vld [vmem:[%s256 + $0x5c0] sm:$0xf]
        %v679 = vld [vmem:[%s256 + $0x5c4] sm:$0xf]
        %v680 = vld [vmem:[%s256 + $0x5c8] sm:$0xf]
        %v681 = vld [vmem:[%s256 + $0x5cc] sm:$0xf]
        %v682 = vld [vmem:[%s256 + $0x5d0] sm:$0xf]
        %v683 = vld [vmem:[%s256 + $0x5d4] sm:$0xf]
        %v684 = vld [vmem:[%s256 + $0x5d8] sm:$0xf]
        %v685 = vld [vmem:[%s256 + $0x5dc] sm:$0xf]
        %v686 = vld [vmem:[%s256 + $0x5e0] sm:$0xf]
        %v687 = vld [vmem:[%s256 + $0x5e4] sm:$0xf]
        %v688 = vld [vmem:[%s256 + $0x5e8] sm:$0xf]
        %v689 = vld [vmem:[%s256 + $0x5ec] sm:$0xf]
        %v690 = vld [vmem:[%s256 + $0x5f0] sm:$0xf]
        %v691 = vld [vmem:[%s256 + $0x5f4] sm:$0xf]
        %v692 = vld [vmem:[%s256 + $0x5f8] sm:$0xf]
        %v693 = vld [vmem:[%s256 + $0x5fc] sm:$0xf]
        %v694 = vld [vmem:[%s256 + $0x600] sm:$0xf]
        %v695 = vld [vmem:[%s256 + $0x604] sm:$0xf]
        %v696 = vld [vmem:[%s256 + $0x608] sm:$0xf]
        %v697 = vld [vmem:[%s256 + $0x60c] sm:$0xf]
        %v698 = vld [vmem:[%s256 + $0x610] sm:$0xf]
        %v699 = vld [vmem:[%s256 + $0x614] sm:$0xf]
        %v700 = vld [vmem:[%s256 + $0x618] sm:$0xf]
        %v701 = vld [vmem:[%s256 + $0x61c] sm:$0xf]
        %v702 = vld [vmem:[%s256 + $0x620] sm:$0xf]
        %v703 = vld [vmem:[%s256 + $0x624] sm:$0xf]
        %v704 = vld [vmem:[%s256 + $0x628] sm:$0xf]
        %v705 = vld [vmem:[%s256 + $0x62c] sm:$0xf]
        %v706 = vld [vmem:[%s256 + $0x630] sm:$0xf]
        %v707 = vld [vmem:[%s256 + $0x634] sm:$0xf]
        %v708 = vld [vmem:[%s256 + $0x638] sm:$0xf]
        %v709 = vld [vmem:[%s256 + $0x63c] sm:$0xf]
        %v710 = vld [vmem:[%s256 + $0x640] sm:$0xf]
        %v711 = vld [vmem:[%s256 + $0x644] sm:$0xf]
        %v712 = vld [vmem:[%s256 + $0x648] sm:$0xf]
        %v713 = vld [vmem:[%s256 + $0x64c] sm:$0xf]
        %v714 = vld [vmem:[%s256 + $0x650] sm:$0xf]
        %v715 = vld [vmem:[%s256 + $0x654] sm:$0xf]
        %v716 = vld [vmem:[%s256 + $0x658] sm:$0xf]
        %v717 = vld [vmem:[%s256 + $0x65c] sm:$0xf]
        %v718 = vld [vmem:[%s256 + $0x660] sm:$0xf]
        %v719 = vld [vmem:[%s256 + $0x664] sm:$0xf]
        %v720 = vld [vmem:[%s256 + $0x668] sm:$0xf]
        %v721 = vld [vmem:[%s256 + $0x66c] sm:$0xf]
        %v722 = vld [vmem:[%s256 + $0x670] sm:$0xf]
        %v723 = vld [vmem:[%s256 + $0x674] sm:$0xf]
        %v724 = vld [vmem:[%s256 + $0x678] sm:$0xf]
        %v725 = vld [vmem:[%s256 + $0x67c] sm:$0xf]
        %v726 = vld [vmem:[%s256 + $0x680] sm:$0xf]
        %v727 = vld [vmem:[%s256 + $0x684] sm:$0xf]
        %v728 = vld [vmem:[%s256 + $0x688] sm:$0xf]
        %v729 = vld [vmem:[%s256 + $0x68c] sm:$0xf]
        %v730 = vld [vmem:[%s256 + $0x690] sm:$0xf]
        %v731 = vld [vmem:[%s256 + $0x694] sm:$0xf]
        %v732 = vld [vmem:[%s256 + $0x698] sm:$0xf]
        %v733 = vld [vmem:[%s256 + $0x69c] sm:$0xf]
        %v734 = vld [vmem:[%s256 + $0x6a0] sm:$0xf]
        %v735 = vld [vmem:[%s256 + $0x6a4] sm:$0xf]
        %v736 = vld [vmem:[%s256 + $0x6a8] sm:$0xf]
        %v737 = vld [vmem:[%s256 + $0x6ac] sm:$0xf]
        %v738 = vld [vmem:[%s256 + $0x6b0] sm:$0xf]
        %v739 = vld [vmem:[%s256 + $0x6b4] sm:$0xf]
        %v740 = vld [vmem:[%s256 + $0x6b8] sm:$0xf]
        %v741 = vld [vmem:[%s256 + $0x6bc] sm:$0xf]
        %v742 = vld [vmem:[%s256 + $0x6c0] sm:$0xf]
        %v743 = vld [vmem:[%s256 + $0x6c4] sm:$0xf]
        %v744 = vld [vmem:[%s256 + $0x6c8] sm:$0xf]
        %v745 = vld [vmem:[%s256 + $0x6cc] sm:$0xf]
        %v746 = vld [vmem:[%s256 + $0x6d0] sm:$0xf]
        %v747 = vld [vmem:[%s256 + $0x6d4] sm:$0xf]
        %v748 = vld [vmem:[%s256 + $0x6d8] sm:$0xf]
        %v749 = vld [vmem:[%s256 + $0x6dc] sm:$0xf]
        %v750 = vld [vmem:[%s256 + $0x6e0] sm:$0xf]
        %v751 = vld [vmem:[%s256 + $0x6e4] sm:$0xf]
        %v752 = vld [vmem:[%s256 + $0x6e8] sm:$0xf]
        %v753 = vld [vmem:[%s256 + $0x6ec] sm:$0xf]
        %v754 = vld [vmem:[%s256 + $0x6f0] sm:$0xf]
        %v755 = vld [vmem:[%s256 + $0x6f4] sm:$0xf]
        %v756 = vld [vmem:[%s256 + $0x6f8] sm:$0xf]
        %v757 = vld [vmem:[%s256 + $0x6fc] sm:$0xf]
        %v758 = vld [vmem:[%s256 + $0x700] sm:$0xf]
        %v759 = vld [vmem:[%s256 + $0x704] sm:$0xf]
        %v760 = vld [vmem:[%s256 + $0x708] sm:$0xf]
        %v761 = vld [vmem:[%s256 + $0x70c] sm:$0xf]
        %v762 = vld [vmem:[%s256 + $0x710] sm:$0xf]
        %v763 = vld [vmem:[%s256 + $0x714] sm:$0xf]
        %v764 = vld [vmem:[%s256 + $0x718] sm:$0xf]
        %v765 = vld [vmem:[%s256 + $0x71c] sm:$0xf]
        %v766 = vld [vmem:[%s256 + $0x720] sm:$0xf]
        %v767 = vld [vmem:[%s256 + $0x724] sm:$0xf]
        %v768 = vld [vmem:[%s256 + $0x728] sm:$0xf]
        %v769 = vld [vmem:[%s256 + $0x72c] sm:$0xf]
        %v770 = vld [vmem:[%s256 + $0x730] sm:$0xf]
        %v771 = vld [vmem:[%s256 + $0x734] sm:$0xf]
        %v772 = vld [vmem:[%s256 + $0x738] sm:$0xf]
        %v773 = vld [vmem:[%s256 + $0x73c] sm:$0xf]
        %v774 = vld [vmem:[%s256 + $0x740] sm:$0xf]
        %v775 = vld [vmem:[%s256 + $0x744] sm:$0xf]
        %v776 = vld [vmem:[%s256 + $0x748] sm:$0xf]
        %v777 = vld [vmem:[%s256 + $0x74c] sm:$0xf]
        %v778 = vld [vmem:[%s256 + $0x750] sm:$0xf]
        %v779 = vld [vmem:[%s256 + $0x754] sm:$0xf]
        %v780 = vld [vmem:[%s256 + $0x758] sm:$0xf]
        %v781 = vld [vmem:[%s256 + $0x75c] sm:$0xf]
        %v782 = vld [vmem:[%s256 + $0x760] sm:$0xf]
        %v783 = vld [vmem:[%s256 + $0x764] sm:$0xf]
        %v784 = vld [vmem:[%s256 + $0x768] sm:$0xf]
        %v785 = vld [vmem:[%s256 + $0x76c] sm:$0xf]
        %v786 = vld [vmem:[%s256 + $0x770] sm:$0xf]
        %v787 = vld [vmem:[%s256 + $0x774] sm:$0xf]
        %v788 = vld [vmem:[%s256 + $0x778] sm:$0xf]
        %v789 = vld [vmem:[%s256 + $0x77c] sm:$0xf]
        %v790 = vld [vmem:[%s256 + $0x780] sm:$0xf]
        %v791 = vld [vmem:[%s256 + $0x784] sm:$0xf]
        %v792 = vld [vmem:[%s256 + $0x788] sm:$0xf]
        %v793 = vld [vmem:[%s256 + $0x78c] sm:$0xf]
        %v794 = vld [vmem:[%s256 + $0x790] sm:$0xf]
        %v795 = vld [vmem:[%s256 + $0x794] sm:$0xf]
        %v796 = vld [vmem:[%s256 + $0x798] sm:$0xf]
        %v797 = vld [vmem:[%s256 + $0x79c] sm:$0xf]
        %v798 = vld [vmem:[%s256 + $0x7a0] sm:$0xf]
        %v799 = vld [vmem:[%s256 + $0x7a4] sm:$0xf]
        %v800 = vld [vmem:[%s256 + $0x7a8] sm:$0xf]
        %v801 = vld [vmem:[%s256 + $0x7ac] sm:$0xf]
        %v802 = vld [vmem:[%s256 + $0x7b0] sm:$0xf]
        %v803 = vld [vmem:[%s256 + $0x7b4] sm:$0xf]
        %v804 = vld [vmem:[%s256 + $0x7b8] sm:$0xf]
        %v805 = vld [vmem:[%s256 + $0x7bc] sm:$0xf]
        %v806 = vld [vmem:[%s256 + $0x7c0] sm:$0xf]
        %v807 = vld [vmem:[%s256 + $0x7c4] sm:$0xf]
        %v808 = vld [vmem:[%s256 + $0x7c8] sm:$0xf]
        %v809 = vld [vmem:[%s256 + $0x7cc] sm:$0xf]
        %v810 = vld [vmem:[%s256 + $0x7d0] sm:$0xf]
        %v811 = vld [vmem:[%s256 + $0x7d4] sm:$0xf]
        %v812 = vld [vmem:[%s256 + $0x7d8] sm:$0xf]
        %v813 = vld [vmem:[%s256 + $0x7dc] sm:$0xf]
        %v814 = vld [vmem:[%s256 + $0x7e0] sm:$0xf]
        %v815 = vld [vmem:[%s256 + $0x7e4] sm:$0xf]
        %v816 = vld [vmem:[%s256 + $0x7e8] sm:$0xf]
        %v817 = vld [vmem:[%s256 + $0x7ec] sm:$0xf]
        %v818 = vld [vmem:[%s256 + $0x7f0] sm:$0xf]
        %v819 = vld [vmem:[%s256 + $0x7f4] sm:$0xf]
        %v820 = vld [vmem:[%s256 + $0x7f8] sm:$0xf]
        %v821 = vld [vmem:[%s256 + $0x7fc] sm:$0xf]
        %v822 = vld [vmem:[%s256 + $0x800] sm:$0xf]
        %v823 = vld [vmem:[%s256 + $0x804] sm:$0xf]
        %v824 = vld [vmem:[%s256 + $0x808] sm:$0xf]
        %v825 = vld [vmem:[%s256 + $0x80c] sm:$0xf]
        %v826 = vld [vmem:[%s256 + $0x810] sm:$0xf]
        %v827 = vld [vmem:[%s256 + $0x814] sm:$0xf]
        %v828 = vld [vmem:[%s256 + $0x818] sm:$0xf]
        %v829 = vld [vmem:[%s256 + $0x81c] sm:$0xf]
        %v830 = vld [vmem:[%s256 + $0x820] sm:$0xf]
        %v831 = vld [vmem:[%s256 + $0x824] sm:$0xf]
        %v832 = vld [vmem:[%s256 + $0x828] sm:$0xf]
        %v833 = vld [vmem:[%s256 + $0x82c] sm:$0xf]
        %v834 = vld [vmem:[%s256 + $0x830] sm:$0xf]
        %v835 = vld [vmem:[%s256 + $0x834] sm:$0xf]
        %v836 = vld [vmem:[%s256 + $0x838] sm:$0xf]
        %v837 = vld [vmem:[%s256 + $0x83c] sm:$0xf]
        %v838 = vld [vmem:[%s256 + $0x840] sm:$0xf]
        %v839 = vld [vmem:[%s256 + $0x844] sm:$0xf]
        %v840 = vld [vmem:[%s256 + $0x848] sm:$0xf]
        %v841 = vld [vmem:[%s256 + $0x84c] sm:$0xf]
        %v842 = vld [vmem:[%s256 + $0x850] sm:$0xf]
        %v843 = vld [vmem:[%s256 + $0x854] sm:$0xf]
        %v844 = vld [vmem:[%s256 + $0x858] sm:$0xf]
        %v845 = vld [vmem:[%s256 + $0x85c] sm:$0xf]
        %v846 = vld [vmem:[%s256 + $0x860] sm:$0xf]
        %v847 = vld [vmem:[%s256 + $0x864] sm:$0xf]
        %v848 = vld [vmem:[%s256 + $0x868] sm:$0xf]
        %v849 = vld [vmem:[%s256 + $0x86c] sm:$0xf]
        %v850 = vld [vmem:[%s256 + $0x870] sm:$0xf]
        %v851 = vld [vmem:[%s256 + $0x874] sm:$0xf]
        %v852 = vld [vmem:[%s256 + $0x878] sm:$0xf]
        %v853 = vld [vmem:[%s256 + $0x87c] sm:$0xf]
        %v854 = vld [vmem:[%s256 + $0x880] sm:$0xf]
        %v855 = vld [vmem:[%s256 + $0x884] sm:$0xf]
        %v856 = vld [vmem:[%s256 + $0x888] sm:$0xf]
        %v857 = vld [vmem:[%s256 + $0x88c] sm:$0xf]
        %v858 = vld [vmem:[%s256 + $0x890] sm:$0xf]
        %v859 = vld [vmem:[%s256 + $0x894] sm:$0xf]
        %v860 = vld [vmem:[%s256 + $0x898] sm:$0xf]
        %v861 = vld [vmem:[%s256 + $0x89c] sm:$0xf]
        %v862 = vld [vmem:[%s256 + $0x8a0] sm:$0xf]
        %v863 = vld [vmem:[%s256 + $0x8a4] sm:$0xf]
        %v864 = vld [vmem:[%s256 + $0x8a8] sm:$0xf]
        %v865 = vld [vmem:[%s256 + $0x8ac] sm:$0xf]
        %v866 = vld [vmem:[%s256 + $0x8b0] sm:$0xf]
        %v867 = vld [vmem:[%s256 + $0x8b4] sm:$0xf]
        %v868 = vld [vmem:[%s256 + $0x8b8] sm:$0xf]
        %v869 = vld [vmem:[%s256 + $0x8bc] sm:$0xf]
        %v870 = vld [vmem:[%s256 + $0x8c0] sm:$0xf]
        %v871 = vld [vmem:[%s256 + $0x8c4] sm:$0xf]
        %v872 = vld [vmem:[%s256 + $0x8c8] sm:$0xf]
        %v873 = vld [vmem:[%s256 + $0x8cc] sm:$0xf]
        %v874 = vld [vmem:[%s256 + $0x8d0] sm:$0xf]
        %v875 = vld [vmem:[%s256 + $0x8d4] sm:$0xf]
        %v876 = vld [vmem:[%s256 + $0x8d8] sm:$0xf]
        %v877 = vld [vmem:[%s256 + $0x8dc] sm:$0xf]
        %v878 = vld [vmem:[%s256 + $0x8e0] sm:$0xf]
        %v879 = vld [vmem:[%s256 + $0x8e4] sm:$0xf]
        %v880 = vld [vmem:[%s256 + $0x8e8] sm:$0xf]
        %v881 = vld [vmem:[%s256 + $0x8ec] sm:$0xf]
        %v882 = vld [vmem:[%s256 + $0x8f0] sm:$0xf]
        %v883 = vld [vmem:[%s256 + $0x8f4] sm:$0xf]
        %v884 = vld [vmem:[%s256 + $0x8f8] sm:$0xf]
        %v885 = vld [vmem:[%s256 + $0x8fc] sm:$0xf]
        %v886 = vld [vmem:[%s256 + $0x900] sm:$0xf]
        %v887 = vld [vmem:[%s256 + $0x904] sm:$0xf]
        %v888 = vld [vmem:[%s256 + $0x908] sm:$0xf]
        %v889 = vld [vmem:[%s256 + $0x90c] sm:$0xf]
        %v890 = vld [vmem:[%s256 + $0x910] sm:$0xf]
        %v891 = vld [vmem:[%s256 + $0x914] sm:$0xf]
        %v892 = vld [vmem:[%s256 + $0x918] sm:$0xf]
        %v893 = vld [vmem:[%s256 + $0x91c] sm:$0xf]
        %v894 = vld [vmem:[%s256 + $0x920] sm:$0xf]
        %v895 = vld [vmem:[%s256 + $0x924] sm:$0xf]
        %v896 = vld [vmem:[%s256 + $0x928] sm:$0xf]
        %v897 = vld [vmem:[%s256 + $0x92c] sm:$0xf]
        %v898 = vld [vmem:[%s256 + $0x930] sm:$0xf]
        %v899 = vld [vmem:[%s256 + $0x934] sm:$0xf]
        %v900 = vld [vmem:[%s256 + $0x938] sm:$0xf]
        %v901 = vld [vmem:[%s256 + $0x93c] sm:$0xf]
        %v902 = vld [vmem:[%s256 + $0x940] sm:$0xf]
        %v903 = vld [vmem:[%s256 + $0x944] sm:$0xf]
        %v904 = vld [vmem:[%s256 + $0x948] sm:$0xf]
        %v905 = vld [vmem:[%s256 + $0x94c] sm:$0xf]
        %v906 = vld [vmem:[%s256 + $0x950] sm:$0xf]
        %v907 = vld [vmem:[%s256 + $0x954] sm:$0xf]
        %v908 = vld [vmem:[%s256 + $0x958] sm:$0xf]
        %v909 = vld [vmem:[%s256 + $0x95c] sm:$0xf]
        %v910 = vld [vmem:[%s256 + $0x960] sm:$0xf]
        %v911 = vld [vmem:[%s256 + $0x964] sm:$0xf]
        %v912 = vld [vmem:[%s256 + $0x968] sm:$0xf]
        %v913 = vld [vmem:[%s256 + $0x96c] sm:$0xf]
        %v914 = vld [vmem:[%s256 + $0x970] sm:$0xf]
        %v915 = vld [vmem:[%s256 + $0x974] sm:$0xf]
        %v916 = vld [vmem:[%s256 + $0x978] sm:$0xf]
        %v917 = vld [vmem:[%s256 + $0x97c] sm:$0xf]
        %v918 = vld [vmem:[%s256 + $0x980] sm:$0xf]
        %v919 = vld [vmem:[%s256 + $0x984] sm:$0xf]
        %v920 = vld [vmem:[%s256 + $0x988] sm:$0xf]
        %v921 = vld [vmem:[%s256 + $0x98c] sm:$0xf]
        %v922 = vld [vmem:[%s256 + $0x990] sm:$0xf]
        %v923 = vld [vmem:[%s256 + $0x994] sm:$0xf]
        %v924 = vld [vmem:[%s256 + $0x998] sm:$0xf]
        %v925 = vld [vmem:[%s256 + $0x99c] sm:$0xf]
        %v926 = vld [vmem:[%s256 + $0x9a0] sm:$0xf]
        %v927 = vld [vmem:[%s256 + $0x9a4] sm:$0xf]
        %v928 = vld [vmem:[%s256 + $0x9a8] sm:$0xf]
        %v929 = vld [vmem:[%s256 + $0x9ac] sm:$0xf]
        %v930 = vld [vmem:[%s256 + $0x9b0] sm:$0xf]
        %v931 = vld [vmem:[%s256 + $0x9b4] sm:$0xf]
        %v932 = vld [vmem:[%s256 + $0x9b8] sm:$0xf]
        %v933 = vld [vmem:[%s256 + $0x9bc] sm:$0xf]
        %v934 = vld [vmem:[%s256 + $0x9c0] sm:$0xf]
        %v935 = vld [vmem:[%s256 + $0x9c4] sm:$0xf]
        %v936 = vld [vmem:[%s256 + $0x9c8] sm:$0xf]
        %v937 = vld [vmem:[%s256 + $0x9cc] sm:$0xf]
        %v938 = vld [vmem:[%s256 + $0x9d0] sm:$0xf]
        %v939 = vld [vmem:[%s256 + $0x9d4] sm:$0xf]
        %v940 = vld [vmem:[%s256 + $0x9d8] sm:$0xf]
        %v941 = vld [vmem:[%s256 + $0x9dc] sm:$0xf]
        %v942 = vld [vmem:[%s256 + $0x9e0] sm:$0xf]
        %v943 = vld [vmem:[%s256 + $0x9e4] sm:$0xf]
        %v944 = vld [vmem:[%s256 + $0x9e8] sm:$0xf]
        %v945 = vld [vmem:[%s256 + $0x9ec] sm:$0xf]
        %v946 = vld [vmem:[%s256 + $0x9f0] sm:$0xf]
        %v947 = vld [vmem:[%s256 + $0x9f4] sm:$0xf]
        %v948 = vld [vmem:[%s256 + $0x9f8] sm:$0xf]
        %v949 = vld [vmem:[%s256 + $0x9fc] sm:$0xf]
        %v950 = vld [vmem:[%s256 + $0xa00] sm:$0xf]
        %v951 = vld [vmem:[%s256 + $0xa04] sm:$0xf]
        %v952 = vld [vmem:[%s256 + $0xa08] sm:$0xf]
        %v953 = vld [vmem:[%s256 + $0xa0c] sm:$0xf]
        %v954 = vld [vmem:[%s256 + $0xa10] sm:$0xf]
        %v955 = vld [vmem:[%s256 + $0xa14] sm:$0xf]
        %v956 = vld [vmem:[%s256 + $0xa18] sm:$0xf]
        %v957 = vld [vmem:[%s256 + $0xa1c] sm:$0xf]
        %v958 = vld [vmem:[%s256 + $0xa20] sm:$0xf]
        %v959 = vld [vmem:[%s256 + $0xa24] sm:$0xf]
        %v960 = vld [vmem:[%s256 + $0xa28] sm:$0xf]
        %v961 = vld [vmem:[%s256 + $0xa2c] sm:$0xf]
        %v962 = vld [vmem:[%s256 + $0xa30] sm:$0xf]
        %v963 = vld [vmem:[%s256 + $0xa34] sm:$0xf]
        %v964 = vld [vmem:[%s256 + $0xa38] sm:$0xf]
        %v965 = vld [vmem:[%s256 + $0xa3c] sm:$0xf]
        %v966 = vld [vmem:[%s256 + $0xa40] sm:$0xf]
        %v967 = vld [vmem:[%s256 + $0xa44] sm:$0xf]
        %v968 = vld [vmem:[%s256 + $0xa48] sm:$0xf]
        %v969 = vld [vmem:[%s256 + $0xa4c] sm:$0xf]
        %v970 = vld [vmem:[%s256 + $0xa50] sm:$0xf]
        %v971 = vld [vmem:[%s256 + $0xa54] sm:$0xf]
        %v972 = vld [vmem:[%s256 + $0xa58] sm:$0xf]
        %v973 = vld [vmem:[%s256 + $0xa5c] sm:$0xf]
        %v974 = vld [vmem:[%s256 + $0xa60] sm:$0xf]
        %v975 = vld [vmem:[%s256 + $0xa64] sm:$0xf]
        %v976 = vld [vmem:[%s256 + $0xa68] sm:$0xf]
        %v977 = vld [vmem:[%s256 + $0xa6c] sm:$0xf]
        %v978 = vld [vmem:[%s256 + $0xa70] sm:$0xf]
        %v979 = vld [vmem:[%s256 + $0xa74] sm:$0xf]
        %v980 = vld [vmem:[%s256 + $0xa78] sm:$0xf]
        %v981 = vld [vmem:[%s256 + $0xa7c] sm:$0xf]
        %v982 = vld [vmem:[%s256 + $0xa80] sm:$0xf]
        %v983 = vld [vmem:[%s256 + $0xa84] sm:$0xf]
        %v984 = vld [vmem:[%s256 + $0xa88] sm:$0xf]
        %v985 = vld [vmem:[%s256 + $0xa8c] sm:$0xf]
        %v986 = vld [vmem:[%s256 + $0xa90] sm:$0xf]
        %v987 = vld [vmem:[%s256 + $0xa94] sm:$0xf]
        %v988 = vld [vmem:[%s256 + $0xa98] sm:$0xf]
        %v989 = vld [vmem:[%s256 + $0xa9c] sm:$0xf]
        %v990 = vld [vmem:[%s256 + $0xaa0] sm:$0xf]
        %v991 = vld [vmem:[%s256 + $0xaa4] sm:$0xf]
        %v992 = vld [vmem:[%s256 + $0xaa8] sm:$0xf]
        %v993 = vld [vmem:[%s256 + $0xaac] sm:$0xf]
        %v994 = vld [vmem:[%s256 + $0xab0] sm:$0xf]
        %v995 = vld [vmem:[%s256 + $0xab4] sm:$0xf]
        %v996 = vld [vmem:[%s256 + $0xab8] sm:$0xf]
        %v997 = vld [vmem:[%s256 + $0xabc] sm:$0xf]
        %v998 = vld [vmem:[%s256 + $0xac0] sm:$0xf]
        %v999 = vld [vmem:[%s256 + $0xac4] sm:$0xf]
        %v1000 = vld [vmem:[%s256 + $0xac8] sm:$0xf]
        %v1001 = vld [vmem:[%s256 + $0xacc] sm:$0xf]
        %v1002 = vld [vmem:[%s256 + $0xad0] sm:$0xf]
        %v1003 = vld [vmem:[%s256 + $0xad4] sm:$0xf]
        %v1004 = vld [vmem:[%s256 + $0xad8] sm:$0xf]
        %v1005 = vld [vmem:[%s256 + $0xadc] sm:$0xf]
        %v1006 = vld [vmem:[%s256 + $0xae0] sm:$0xf]
        %v1007 = vld [vmem:[%s256 + $0xae4] sm:$0xf]
        %v1008 = vld [vmem:[%s256 + $0xae8] sm:$0xf]
        %v1009 = vld [vmem:[%s256 + $0xaec] sm:$0xf]
        %v1010 = vld [vmem:[%s256 + $0xaf0] sm:$0xf]
        %v1011 = vld [vmem:[%s256 + $0xaf4] sm:$0xf]
        %v1012 = vld [vmem:[%s256 + $0xaf8] sm:$0xf]
        %v1013 = vld [vmem:[%s256 + $0xafc] sm:$0xf]
        %v1014 = vld [vmem:[%s256 + $0xb00] sm:$0xf]
        %v1015 = vld [vmem:[%s256 + $0xb04] sm:$0xf]
        %v1016 = vld [vmem:[%s256 + $0xb08] sm:$0xf]
        %v1017 = vld [vmem:[%s256 + $0xb0c] sm:$0xf]
        %v1018 = vld [vmem:[%s256 + $0xb10] sm:$0xf]
        %v1019 = vld [vmem:[%s256 + $0xb14] sm:$0xf]
        %v1020 = vld [vmem:[%s256 + $0xb18] sm:$0xf]
        %v1021 = vld [vmem:[%s256 + $0xb1c] sm:$0xf]
        %v1022 = vld [vmem:[%s256 + $0xb20] sm:$0xf]
        %v1023 = vld [vmem:[%s256 + $0xb24] sm:$0xf]
        %v1024 = vld [vmem:[%s256 + $0xb28] sm:$0xf]
        %v1025 = vld [vmem:[%s256 + $0xb2c] sm:$0xf]
        %v1026 = vld [vmem:[%s256 + $0xb30] sm:$0xf]
        %v1027 = vld [vmem:[%s256 + $0xb34] sm:$0xf]
        %v1028 = vld [vmem:[%s256 + $0xb38] sm:$0xf]
        %v1029 = vld [vmem:[%s256 + $0xb3c] sm:$0xf]
        %v1030 = vld [vmem:[%s256 + $0xb40] sm:$0xf]
        %v1031 = vld [vmem:[%s256 + $0xb44] sm:$0xf]
        %v1032 = vld [vmem:[%s256 + $0xb48] sm:$0xf]
        %v1033 = vld [vmem:[%s256 + $0xb4c] sm:$0xf]
        %v1034 = vld [vmem:[%s256 + $0xb50] sm:$0xf]
        %v1035 = vld [vmem:[%s256 + $0xb54] sm:$0xf]
        %v1036 = vld [vmem:[%s256 + $0xb58] sm:$0xf]
        %v1037 = vld [vmem:[%s256 + $0xb5c] sm:$0xf]
        %v1038 = vld [vmem:[%s256 + $0xb60] sm:$0xf]
        %v1039 = vld [vmem:[%s256 + $0xb64] sm:$0xf]
        %v1040 = vld [vmem:[%s256 + $0xb68] sm:$0xf]
        %v1041 = vld [vmem:[%s256 + $0xb6c] sm:$0xf]
        %v1042 = vld [vmem:[%s256 + $0xb70] sm:$0xf]
        %v1043 = vld [vmem:[%s256 + $0xb74] sm:$0xf]
        %v1044 = vld [vmem:[%s256 + $0xb78] sm:$0xf]
        %v1045 = vld [vmem:[%s256 + $0xb7c] sm:$0xf]
        %v1046 = vld [vmem:[%s256 + $0xb80] sm:$0xf]
        %v1047 = vld [vmem:[%s256 + $0xb84] sm:$0xf]
        %v1048 = vld [vmem:[%s256 + $0xb88] sm:$0xf]
        %v1049 = vld [vmem:[%s256 + $0xb8c] sm:$0xf]
        %v1050 = vld [vmem:[%s256 + $0xb90] sm:$0xf]
        %v1051 = vld [vmem:[%s256 + $0xb94] sm:$0xf]
        %v1052 = vld [vmem:[%s256 + $0xb98] sm:$0xf]
        %v1053 = vld [vmem:[%s256 + $0xb9c] sm:$0xf]
        %v1054 = vld [vmem:[%s256 + $0xba0] sm:$0xf]
        %v1055 = vld [vmem:[%s256 + $0xba4] sm:$0xf]
        %v1056 = vld [vmem:[%s256 + $0xba8] sm:$0xf]
        %v1057 = vld [vmem:[%s256 + $0xbac] sm:$0xf]
        %v1058 = vld [vmem:[%s256 + $0xbb0] sm:$0xf]
        %v1059 = vld [vmem:[%s256 + $0xbb4] sm:$0xf]
        %v1060 = vld [vmem:[%s256 + $0xbb8] sm:$0xf]
        %v1061 = vld [vmem:[%s256 + $0xbbc] sm:$0xf]
        %v1062 = vld [vmem:[%s256 + $0xbc0] sm:$0xf]
        %v1063 = vld [vmem:[%s256 + $0xbc4] sm:$0xf]
        %v1064 = vld [vmem:[%s256 + $0xbc8] sm:$0xf]
        %v1065 = vld [vmem:[%s256 + $0xbcc] sm:$0xf]
        %v1066 = vld [vmem:[%s256 + $0xbd0] sm:$0xf]
        %v1067 = vld [vmem:[%s256 + $0xbd4] sm:$0xf]
        %v1068 = vld [vmem:[%s256 + $0xbd8] sm:$0xf]
        %v1069 = vld [vmem:[%s256 + $0xbdc] sm:$0xf]
        %v1070 = vld [vmem:[%s256 + $0xbe0] sm:$0xf]
        %v1071 = vld [vmem:[%s256 + $0xbe4] sm:$0xf]
        %v1072 = vld [vmem:[%s256 + $0xbe8] sm:$0xf]
        %v1073 = vld [vmem:[%s256 + $0xbec] sm:$0xf]
        %v1074 = vld [vmem:[%s256 + $0xbf0] sm:$0xf]
        %v1075 = vld [vmem:[%s256 + $0xbf4] sm:$0xf]
        %v1076 = vld [vmem:[%s256 + $0xbf8] sm:$0xf]
        %v1077 = vld [vmem:[%s256 + $0xbfc] sm:$0xf]
        %v1078 = vld [vmem:[%s256 + $0xc00] sm:$0xf]
        %v1079 = vld [vmem:[%s256 + $0xc04] sm:$0xf]
        %v1080 = vld [vmem:[%s256 + $0xc08] sm:$0xf]
        %v1081 = vld [vmem:[%s256 + $0xc0c] sm:$0xf]
        %v1082 = vld [vmem:[%s256 + $0xc10] sm:$0xf]
        %v1083 = vld [vmem:[%s256 + $0xc14] sm:$0xf]
        %v1084 = vld [vmem:[%s256 + $0xc18] sm:$0xf]
        %v1085 = vld [vmem:[%s256 + $0xc1c] sm:$0xf]
        %v1086 = vld [vmem:[%s256 + $0xc20] sm:$0xf]
        %v1087 = vld [vmem:[%s256 + $0xc24] sm:$0xf]
        %v1088 = vld [vmem:[%s256 + $0xc28] sm:$0xf]
        %v1089 = vld [vmem:[%s256 + $0xc2c] sm:$0xf]
        %v1090 = vld [vmem:[%s256 + $0xc30] sm:$0xf]
        %v1091 = vld [vmem:[%s256 + $0xc34] sm:$0xf]
        %v1092 = vld [vmem:[%s256 + $0xc38] sm:$0xf]
        %v1093 = vld [vmem:[%s256 + $0xc3c] sm:$0xf]
        %v1094 = vld [vmem:[%s256 + $0xc40] sm:$0xf]
        %v1095 = vld [vmem:[%s256 + $0xc44] sm:$0xf]
        %v1096 = vld [vmem:[%s256 + $0xc48] sm:$0xf]
        %v1097 = vld [vmem:[%s256 + $0xc4c] sm:$0xf]
        %v1098 = vld [vmem:[%s256 + $0xc50] sm:$0xf]
        %v1099 = vld [vmem:[%s256 + $0xc54] sm:$0xf]
        %v1100 = vld [vmem:[%s256 + $0xc58] sm:$0xf]
        %v1101 = vld [vmem:[%s256 + $0xc5c] sm:$0xf]
        %v1102 = vld [vmem:[%s256 + $0xc60] sm:$0xf]
        %v1103 = vld [vmem:[%s256 + $0xc64] sm:$0xf]
        %v1104 = vld [vmem:[%s256 + $0xc68] sm:$0xf]
        %v1105 = vld [vmem:[%s256 + $0xc6c] sm:$0xf]
        %v1106 = vld [vmem:[%s256 + $0xc70] sm:$0xf]
        %v1107 = vld [vmem:[%s256 + $0xc74] sm:$0xf]
        %v1108 = vld [vmem:[%s256 + $0xc78] sm:$0xf]
        %v1109 = vld [vmem:[%s256 + $0xc7c] sm:$0xf]
        %v1110 = vld [vmem:[%s256 + $0xc80] sm:$0xf]
        %v1111 = vld [vmem:[%s256 + $0xc84] sm:$0xf]
        %v1112 = vld [vmem:[%s256 + $0xc88] sm:$0xf]
        %v1113 = vld [vmem:[%s256 + $0xc8c] sm:$0xf]
        %v1114 = vld [vmem:[%s256 + $0xc90] sm:$0xf]
        %v1115 = vld [vmem:[%s256 + $0xc94] sm:$0xf]
        %v1116 = vld [vmem:[%s256 + $0xc98] sm:$0xf]
        %v1117 = vld [vmem:[%s256 + $0xc9c] sm:$0xf]
        %v1118 = vld [vmem:[%s256 + $0xca0] sm:$0xf]
        %v1119 = vld [vmem:[%s256 + $0xca4] sm:$0xf]
        %v1120 = vld [vmem:[%s256 + $0xca8] sm:$0xf]
        %v1121 = vld [vmem:[%s256 + $0xcac] sm:$0xf]
        %v1122 = vld [vmem:[%s256 + $0xcb0] sm:$0xf]
        %v1123 = vld [vmem:[%s256 + $0xcb4] sm:$0xf]
        %v1124 = vld [vmem:[%s256 + $0xcb8] sm:$0xf]
        %v1125 = vld [vmem:[%s256 + $0xcbc] sm:$0xf]
        %v1126 = vld [vmem:[%s256 + $0xcc0] sm:$0xf]
        %v1127 = vld [vmem:[%s256 + $0xcc4] sm:$0xf]
        %v1128 = vld [vmem:[%s256 + $0xcc8] sm:$0xf]
        %v1129 = vld [vmem:[%s256 + $0xccc] sm:$0xf]
        %v1130 = vld [vmem:[%s256 + $0xcd0] sm:$0xf]
        %v1131 = vld [vmem:[%s256 + $0xcd4] sm:$0xf]
        %v1132 = vld [vmem:[%s256 + $0xcd8] sm:$0xf]
        %v1133 = vld [vmem:[%s256 + $0xcdc] sm:$0xf]
        %v1134 = vld [vmem:[%s256 + $0xce0] sm:$0xf]
        %v1135 = vld [vmem:[%s256 + $0xce4] sm:$0xf]
        %v1136 = vld [vmem:[%s256 + $0xce8] sm:$0xf]
        %v1137 = vld [vmem:[%s256 + $0xcec] sm:$0xf]
        %v1138 = vld [vmem:[%s256 + $0xcf0] sm:$0xf]
        %v1139 = vld [vmem:[%s256 + $0xcf4] sm:$0xf]
        %v1140 = vld [vmem:[%s256 + $0xcf8] sm:$0xf]
        %v1141 = vld [vmem:[%s256 + $0xcfc] sm:$0xf]
        %v1142 = vld [vmem:[%s256 + $0xd00] sm:$0xf]
        %v1143 = vld [vmem:[%s256 + $0xd04] sm:$0xf]
        %v1144 = vld [vmem:[%s256 + $0xd08] sm:$0xf]
        %v1145 = vld [vmem:[%s256 + $0xd0c] sm:$0xf]
        %v1146 = vld [vmem:[%s256 + $0xd10] sm:$0xf]
        %v1147 = vld [vmem:[%s256 + $0xd14] sm:$0xf]
        %v1148 = vld [vmem:[%s256 + $0xd18] sm:$0xf]
        %v1149 = vld [vmem:[%s256 + $0xd1c] sm:$0xf]
        %v1150 = vld [vmem:[%s256 + $0xd20] sm:$0xf]
        %v1151 = vld [vmem:[%s256 + $0xd24] sm:$0xf]
        %v1152 = vld [vmem:[%s256 + $0xd28] sm:$0xf]
        %v1153 = vld [vmem:[%s256 + $0xd2c] sm:$0xf]
        %v1154 = vld [vmem:[%s256 + $0xd30] sm:$0xf]
        %v1155 = vld [vmem:[%s256 + $0xd34] sm:$0xf]
        %v1156 = vld [vmem:[%s256 + $0xd38] sm:$0xf]
        %v1157 = vld [vmem:[%s256 + $0xd3c] sm:$0xf]
        %v1158 = vld [vmem:[%s256 + $0xd40] sm:$0xf]
        %v1159 = vld [vmem:[%s256 + $0xd44] sm:$0xf]
        %v1160 = vld [vmem:[%s256 + $0xd48] sm:$0xf]
        %v1161 = vld [vmem:[%s256 + $0xd4c] sm:$0xf]
        %v1162 = vld [vmem:[%s256 + $0xd50] sm:$0xf]
        %v1163 = vld [vmem:[%s256 + $0xd54] sm:$0xf]
        %v1164 = vld [vmem:[%s256 + $0xd58] sm:$0xf]
        %v1165 = vld [vmem:[%s256 + $0xd5c] sm:$0xf]
        %v1166 = vld [vmem:[%s256 + $0xd60] sm:$0xf]
        %v1167 = vld [vmem:[%s256 + $0xd64] sm:$0xf]
        %v1168 = vld [vmem:[%s256 + $0xd68] sm:$0xf]
        %v1169 = vld [vmem:[%s256 + $0xd6c] sm:$0xf]
        %v1170 = vld [vmem:[%s256 + $0xd70] sm:$0xf]
        %v1171 = vld [vmem:[%s256 + $0xd74] sm:$0xf]
        %v1172 = vld [vmem:[%s256 + $0xd78] sm:$0xf]
        %v1173 = vld [vmem:[%s256 + $0xd7c] sm:$0xf]
        %v1174 = vld [vmem:[%s256 + $0xd80] sm:$0xf]
        %v1175 = vld [vmem:[%s256 + $0xd84] sm:$0xf]
        %v1176 = vld [vmem:[%s256 + $0xd88] sm:$0xf]
        %v1177 = vld [vmem:[%s256 + $0xd8c] sm:$0xf]
        %v1178 = vld [vmem:[%s256 + $0xd90] sm:$0xf]
        %v1179 = vld [vmem:[%s256 + $0xd94] sm:$0xf]
        %v1180 = vld [vmem:[%s256 + $0xd98] sm:$0xf]
        %v1181 = vld [vmem:[%s256 + $0xd9c] sm:$0xf]
        %v1182 = vld [vmem:[%s256 + $0xda0] sm:$0xf]
        %v1183 = vld [vmem:[%s256 + $0xda4] sm:$0xf]
        %v1184 = vld [vmem:[%s256 + $0xda8] sm:$0xf]
        %v1185 = vld [vmem:[%s256 + $0xdac] sm:$0xf]
        %v1186 = vld [vmem:[%s256 + $0xdb0] sm:$0xf]
        %v1187 = vld [vmem:[%s256 + $0xdb4] sm:$0xf]
        %v1188 = vld [vmem:[%s256 + $0xdb8] sm:$0xf]
        %v1189 = vld [vmem:[%s256 + $0xdbc] sm:$0xf]
        %v1190 = vld [vmem:[%s256 + $0xdc0] sm:$0xf]
        %v1191 = vld [vmem:[%s256 + $0xdc4] sm:$0xf]
        %v1192 = vld [vmem:[%s256 + $0xdc8] sm:$0xf]
        %v1193 = vld [vmem:[%s256 + $0xdcc] sm:$0xf]
        %v1194 = vld [vmem:[%s256 + $0xdd0] sm:$0xf]
        %v1195 = vld [vmem:[%s256 + $0xdd4] sm:$0xf]
        %v1196 = vld [vmem:[%s256 + $0xdd8] sm:$0xf]
        %v1197 = vld [vmem:[%s256 + $0xddc] sm:$0xf]
        %v1198 = vld [vmem:[%s256 + $0xde0] sm:$0xf]
        %v1199 = vld [vmem:[%s256 + $0xde4] sm:$0xf]
        %v1200 = vld [vmem:[%s256 + $0xde8] sm:$0xf]
        %v1201 = vld [vmem:[%s256 + $0xdec] sm:$0xf]
        %v1202 = vld [vmem:[%s256 + $0xdf0] sm:$0xf]
        %v1203 = vld [vmem:[%s256 + $0xdf4] sm:$0xf]
        %v1204 = vld [vmem:[%s256 + $0xdf8] sm:$0xf]
        %v1205 = vld [vmem:[%s256 + $0xdfc] sm:$0xf]
        %v1206 = vld [vmem:[%s256 + $0xe00] sm:$0xf]
        %v1207 = vld [vmem:[%s256 + $0xe04] sm:$0xf]
        %v1208 = vld [vmem:[%s256 + $0xe08] sm:$0xf]
        %v1209 = vld [vmem:[%s256 + $0xe0c] sm:$0xf]
        %v1210 = vld [vmem:[%s256 + $0xe10] sm:$0xf]
        %v1211 = vld [vmem:[%s256 + $0xe14] sm:$0xf]
        %v1212 = vld [vmem:[%s256 + $0xe18] sm:$0xf]
        %v1213 = vld [vmem:[%s256 + $0xe1c] sm:$0xf]
        %v1214 = vld [vmem:[%s256 + $0xe20] sm:$0xf]
        %v1215 = vld [vmem:[%s256 + $0xe24] sm:$0xf]
        %v1216 = vld [vmem:[%s256 + $0xe28] sm:$0xf]
        %v1217 = vld [vmem:[%s256 + $0xe2c] sm:$0xf]
        %v1218 = vld [vmem:[%s256 + $0xe30] sm:$0xf]
        %v1219 = vld [vmem:[%s256 + $0xe34] sm:$0xf]
        %v1220 = vld [vmem:[%s256 + $0xe38] sm:$0xf]
        %v1221 = vld [vmem:[%s256 + $0xe3c] sm:$0xf]
        %v1222 = vld [vmem:[%s256 + $0xe40] sm:$0xf]
        %v1223 = vld [vmem:[%s256 + $0xe44] sm:$0xf]
        %v1224 = vld [vmem:[%s256 + $0xe48] sm:$0xf]
        %v1225 = vld [vmem:[%s256 + $0xe4c] sm:$0xf]
        %v1226 = vld [vmem:[%s256 + $0xe50] sm:$0xf]
        %v1227 = vld [vmem:[%s256 + $0xe54] sm:$0xf]
        %v1228 = vld [vmem:[%s256 + $0xe58] sm:$0xf]
        %v1229 = vld [vmem:[%s256 + $0xe5c] sm:$0xf]
        %v1230 = vld [vmem:[%s256 + $0xe60] sm:$0xf]
        %v1231 = vld [vmem:[%s256 + $0xe64] sm:$0xf]
        %v1232 = vld [vmem:[%s256 + $0xe68] sm:$0xf]
        %v1233 = vld [vmem:[%s256 + $0xe6c] sm:$0xf]
        %v1234 = vld [vmem:[%s256 + $0xe70] sm:$0xf]
        %v1235 = vld [vmem:[%s256 + $0xe74] sm:$0xf]
        %v1236 = vld [vmem:[%s256 + $0xe78] sm:$0xf]
        %v1237 = vld [vmem:[%s256 + $0xe7c] sm:$0xf]
        %v1238 = vld [vmem:[%s256 + $0xe80] sm:$0xf]
        %v1239 = vld [vmem:[%s256 + $0xe84] sm:$0xf]
        %v1240 = vld [vmem:[%s256 + $0xe88] sm:$0xf]
        %v1241 = vld [vmem:[%s256 + $0xe8c] sm:$0xf]
        %v1242 = vld [vmem:[%s256 + $0xe90] sm:$0xf]
        %v1243 = vld [vmem:[%s256 + $0xe94] sm:$0xf]
        %v1244 = vld [vmem:[%s256 + $0xe98] sm:$0xf]
        %v1245 = vld [vmem:[%s256 + $0xe9c] sm:$0xf]
        %v1246 = vld [vmem:[%s256 + $0xea0] sm:$0xf]
        %v1247 = vld [vmem:[%s256 + $0xea4] sm:$0xf]
        %v1248 = vld [vmem:[%s256 + $0xea8] sm:$0xf]
        %v1249 = vld [vmem:[%s256 + $0xeac] sm:$0xf]
        %v1250 = vld [vmem:[%s256 + $0xeb0] sm:$0xf]
        %v1251 = vld [vmem:[%s256 + $0xeb4] sm:$0xf]
        %v1252 = vld [vmem:[%s256 + $0xeb8] sm:$0xf]
        %v1253 = vld [vmem:[%s256 + $0xebc] sm:$0xf]
        %v1254 = vld [vmem:[%s256 + $0xec0] sm:$0xf]
        %v1255 = vld [vmem:[%s256 + $0xec4] sm:$0xf]
        %v1256 = vld [vmem:[%s256 + $0xec8] sm:$0xf]
        %v1257 = vld [vmem:[%s256 + $0xecc] sm:$0xf]
        %v1258 = vld [vmem:[%s256 + $0xed0] sm:$0xf]
        %v1259 = vld [vmem:[%s256 + $0xed4] sm:$0xf]
        %v1260 = vld [vmem:[%s256 + $0xed8] sm:$0xf]
        %v1261 = vld [vmem:[%s256 + $0xedc] sm:$0xf]
        %v1262 = vld [vmem:[%s256 + $0xee0] sm:$0xf]
        %v1263 = vld [vmem:[%s256 + $0xee4] sm:$0xf]
        %v1264 = vld [vmem:[%s256 + $0xee8] sm:$0xf]
        %v1265 = vld [vmem:[%s256 + $0xeec] sm:$0xf]
        %v1266 = vld [vmem:[%s256 + $0xef0] sm:$0xf]
        %v1267 = vld [vmem:[%s256 + $0xef4] sm:$0xf]
        %v1268 = vld [vmem:[%s256 + $0xef8] sm:$0xf]
        %v1269 = vld [vmem:[%s256 + $0xefc] sm:$0xf]
        %v1270 = vld [vmem:[%s256 + $0xf00] sm:$0xf]
        %v1271 = vld [vmem:[%s256 + $0xf04] sm:$0xf]
        %v1272 = vld [vmem:[%s256 + $0xf08] sm:$0xf]
        %v1273 = vld [vmem:[%s256 + $0xf0c] sm:$0xf]
        %v1274 = vld [vmem:[%s256 + $0xf10] sm:$0xf]
        %v1275 = vld [vmem:[%s256 + $0xf14] sm:$0xf]
        %v1276 = vld [vmem:[%s256 + $0xf18] sm:$0xf]
        %v1277 = vld [vmem:[%s256 + $0xf1c] sm:$0xf]
        %v1278 = vld [vmem:[%s256 + $0xf20] sm:$0xf]
        %v1279 = vld [vmem:[%s256 + $0xf24] sm:$0xf]
        %v1280 = vld [vmem:[%s256 + $0xf28] sm:$0xf]
        %v1281 = vld [vmem:[%s256 + $0xf2c] sm:$0xf]
        %v1282 = vld [vmem:[%s256 + $0xf30] sm:$0xf]
        %v1283 = vld [vmem:[%s256 + $0xf34] sm:$0xf]
        %v1284 = vld [vmem:[%s256 + $0xf38] sm:$0xf]
        %v1285 = vld [vmem:[%s256 + $0xf3c] sm:$0xf]
        %v1286 = vld [vmem:[%s256 + $0xf40] sm:$0xf]
        %v1287 = vld [vmem:[%s256 + $0xf44] sm:$0xf]
        %v1288 = vld [vmem:[%s256 + $0xf48] sm:$0xf]
        %v1289 = vld [vmem:[%s256 + $0xf4c] sm:$0xf]
        %v1290 = vld [vmem:[%s256 + $0xf50] sm:$0xf]
        %v1291 = vld [vmem:[%s256 + $0xf54] sm:$0xf]
        %v1292 = vld [vmem:[%s256 + $0xf58] sm:$0xf]
        %v1293 = vld [vmem:[%s256 + $0xf5c] sm:$0xf]
        %v1294 = vld [vmem:[%s256 + $0xf60] sm:$0xf]
        %v1295 = vld [vmem:[%s256 + $0xf64] sm:$0xf]
        %v1296 = vld [vmem:[%s256 + $0xf68] sm:$0xf]
        %v1297 = vld [vmem:[%s256 + $0xf6c] sm:$0xf]
        %v1298 = vld [vmem:[%s256 + $0xf70] sm:$0xf]
        %v1299 = vld [vmem:[%s256 + $0xf74] sm:$0xf]
        %v1300 = vld [vmem:[%s256 + $0xf78] sm:$0xf]
        %v1301 = vld [vmem:[%s256 + $0xf7c] sm:$0xf]
        %v1302 = vld [vmem:[%s256 + $0xf80] sm:$0xf]
        %v1303 = vld [vmem:[%s256 + $0xf84] sm:$0xf]
        %v1304 = vld [vmem:[%s256 + $0xf88] sm:$0xf]
        %v1305 = vld [vmem:[%s256 + $0xf8c] sm:$0xf]
        %v1306 = vld [vmem:[%s256 + $0xf90] sm:$0xf]
        %v1307 = vld [vmem:[%s256 + $0xf94] sm:$0xf]
        %v1308 = vld [vmem:[%s256 + $0xf98] sm:$0xf]
        %v1309 = vld [vmem:[%s256 + $0xf9c] sm:$0xf]
        %v1310 = vld [vmem:[%s256 + $0xfa0] sm:$0xf]
        %v1311 = vld [vmem:[%s256 + $0xfa4] sm:$0xf]
        %v1312 = vld [vmem:[%s256 + $0xfa8] sm:$0xf]
        %v1313 = vld [vmem:[%s256 + $0xfac] sm:$0xf]
        %v1314 = vld [vmem:[%s256 + $0xfb0] sm:$0xf]
        %v1315 = vld [vmem:[%s256 + $0xfb4] sm:$0xf]
        %v1316 = vld [vmem:[%s256 + $0xfb8] sm:$0xf]
        %v1317 = vld [vmem:[%s256 + $0xfbc] sm:$0xf]
        %v1318 = vld [vmem:[%s256 + $0xfc0] sm:$0xf]
        %v1319 = vld [vmem:[%s256 + $0xfc4] sm:$0xf]
        %v1320 = vld [vmem:[%s256 + $0xfc8] sm:$0xf]
        %v1321 = vld [vmem:[%s256 + $0xfcc] sm:$0xf]
        %v1322 = vld [vmem:[%s256 + $0xfd0] sm:$0xf]
        %v1323 = vld [vmem:[%s256 + $0xfd4] sm:$0xf]
        %v1324 = vld [vmem:[%s256 + $0xfd8] sm:$0xf]
        %v1325 = vld [vmem:[%s256 + $0xfdc] sm:$0xf]
        %v1326 = vld [vmem:[%s256 + $0xfe0] sm:$0xf]
        %v1327 = vld [vmem:[%s256 + $0xfe4] sm:$0xf]
        %v1328 = vld [vmem:[%s256 + $0xfe8] sm:$0xf]
        %v1329 = vld [vmem:[%s256 + $0xfec] sm:$0xf]
        %v1330 = vld [vmem:[%s256 + $0xff0] sm:$0xf]
        %v1331 = vld [vmem:[%s256 + $0xff4] sm:$0xf]
        %v1332 = vld [vmem:[%s256 + $0xff8] sm:$0xf]
        %v1333 = vld [vmem:[%s256 + $0xffc] sm:$0xf]
        %v1334 = vld [vmem:[%s256 + $0x1000] sm:$0xf]
        %v1335 = vld [vmem:[%s256 + $0x1004] sm:$0xf]
        %v1336 = vld [vmem:[%s256 + $0x1008] sm:$0xf]
        %v1337 = vld [vmem:[%s256 + $0x100c] sm:$0xf]
        %v1338 = vld [vmem:[%s256 + $0x1010] sm:$0xf]
        %v1339 = vld [vmem:[%s256 + $0x1014] sm:$0xf]
        %v1340 = vld [vmem:[%s256 + $0x1018] sm:$0xf]
        %v1341 = vld [vmem:[%s256 + $0x101c] sm:$0xf]
        %v1342 = vld [vmem:[%s256 + $0x1020] sm:$0xf]
        %v1343 = vld [vmem:[%s256 + $0x1024] sm:$0xf]
        %v1344 = vld [vmem:[%s256 + $0x1028] sm:$0xf]
        %v1345 = vld [vmem:[%s256 + $0x102c] sm:$0xf]
        %v1346 = vld [vmem:[%s256 + $0x1030] sm:$0xf]
        %v1347 = vld [vmem:[%s256 + $0x1034] sm:$0xf]
        %v1348 = vld [vmem:[%s256 + $0x1038] sm:$0xf]
        %v1349 = vld [vmem:[%s256 + $0x103c] sm:$0xf]
        %v1350 = vld [vmem:[%s256 + $0x1040] sm:$0xf]
        %v1351 = vld [vmem:[%s256 + $0x1044] sm:$0xf]
        %v1352 = vld [vmem:[%s256 + $0x1048] sm:$0xf]
        %v1353 = vld [vmem:[%s256 + $0x104c] sm:$0xf]
        %v1354 = vld [vmem:[%s256 + $0x1050] sm:$0xf]
        %v1355 = vld [vmem:[%s256 + $0x1054] sm:$0xf]
        %v1356 = vld [vmem:[%s256 + $0x1058] sm:$0xf]
        %v1357 = vld [vmem:[%s256 + $0x105c] sm:$0xf]
        %v1358 = vld [vmem:[%s256 + $0x1060] sm:$0xf]
        %v1359 = vld [vmem:[%s256 + $0x1064] sm:$0xf]
        %v1360 = vld [vmem:[%s256 + $0x1068] sm:$0xf]
        %v1361 = vld [vmem:[%s256 + $0x106c] sm:$0xf]
        %v1362 = vld [vmem:[%s256 + $0x1070] sm:$0xf]
        %v1363 = vld [vmem:[%s256 + $0x1074] sm:$0xf]
        %v1364 = vld [vmem:[%s256 + $0x1078] sm:$0xf]
        %v1365 = vld [vmem:[%s256 + $0x107c] sm:$0xf]
        %v1366 = vld [vmem:[%s256 + $0x1080] sm:$0xf]
        %v1367 = vld [vmem:[%s256 + $0x1084] sm:$0xf]
        %v1368 = vld [vmem:[%s256 + $0x1088] sm:$0xf]
        %v1369 = vld [vmem:[%s256 + $0x108c] sm:$0xf]
        %v1370 = vld [vmem:[%s256 + $0x1090] sm:$0xf]
        %v1371 = vld [vmem:[%s256 + $0x1094] sm:$0xf]
        %v1372 = vld [vmem:[%s256 + $0x1098] sm:$0xf]
        %v1373 = vld [vmem:[%s256 + $0x109c] sm:$0xf]
        %v1374 = vld [vmem:[%s256 + $0x10a0] sm:$0xf]
        %v1375 = vld [vmem:[%s256 + $0x10a4] sm:$0xf]
        %v1376 = vld [vmem:[%s256 + $0x10a8] sm:$0xf]
        %v1377 = vld [vmem:[%s256 + $0x10ac] sm:$0xf]
        %v1378 = vld [vmem:[%s256 + $0x10b0] sm:$0xf]
        %v1379 = vld [vmem:[%s256 + $0x10b4] sm:$0xf]
        %v1380 = vld [vmem:[%s256 + $0x10b8] sm:$0xf]
        %v1381 = vld [vmem:[%s256 + $0x10bc] sm:$0xf]
        %v1382 = vld [vmem:[%s256 + $0x10c0] sm:$0xf]
        %v1383 = vld [vmem:[%s256 + $0x10c4] sm:$0xf]
        %v1384 = vld [vmem:[%s256 + $0x10c8] sm:$0xf]
        %v1385 = vld [vmem:[%s256 + $0x10cc] sm:$0xf]
        %v1386 = vld [vmem:[%s256 + $0x10d0] sm:$0xf]
        %v1387 = vld [vmem:[%s256 + $0x10d4] sm:$0xf]
        %v1388 = vld [vmem:[%s256 + $0x10d8] sm:$0xf]
        %v1389 = vld [vmem:[%s256 + $0x10dc] sm:$0xf]
        %v1390 = vld [vmem:[%s256 + $0x10e0] sm:$0xf]
        %v1391 = vld [vmem:[%s256 + $0x10e4] sm:$0xf]
        %v1392 = vld [vmem:[%s256 + $0x10e8] sm:$0xf]
        %v1393 = vld [vmem:[%s256 + $0x10ec] sm:$0xf]
        %v1394 = vld [vmem:[%s256 + $0x10f0] sm:$0xf]
        %v1395 = vld [vmem:[%s256 + $0x10f4] sm:$0xf]
        %v1396 = vld [vmem:[%s256 + $0x10f8] sm:$0xf]
        %v1397 = vld [vmem:[%s256 + $0x10fc] sm:$0xf]
        %v1398 = vld [vmem:[%s256 + $0x1100] sm:$0xf]
        %v1399 = vld [vmem:[%s256 + $0x1104] sm:$0xf]
        %v1400 = vld [vmem:[%s256 + $0x1108] sm:$0xf]
        %v1401 = vld [vmem:[%s256 + $0x110c] sm:$0xf]
        %v1402 = vld [vmem:[%s256 + $0x1110] sm:$0xf]
        %v1403 = vld [vmem:[%s256 + $0x1114] sm:$0xf]
        %v1404 = vld [vmem:[%s256 + $0x1118] sm:$0xf]
        %v1405 = vld [vmem:[%s256 + $0x111c] sm:$0xf]
        %v1406 = vld [vmem:[%s256 + $0x1120] sm:$0xf]
        %v1407 = vld [vmem:[%s256 + $0x1124] sm:$0xf]
        %v1408 = vld [vmem:[%s256 + $0x1128] sm:$0xf]
        %v1409 = vld [vmem:[%s256 + $0x112c] sm:$0xf]
        %v1410 = vld [vmem:[%s256 + $0x1130] sm:$0xf]
        %v1411 = vld [vmem:[%s256 + $0x1134] sm:$0xf]
        %v1412 = vld [vmem:[%s256 + $0x1138] sm:$0xf]
        %v1413 = vld [vmem:[%s256 + $0x113c] sm:$0xf]
        %v1414 = vld [vmem:[%s256 + $0x1140] sm:$0xf]
        %v1415 = vld [vmem:[%s256 + $0x1144] sm:$0xf]
        %v1416 = vld [vmem:[%s256 + $0x1148] sm:$0xf]
        %v1417 = vld [vmem:[%s256 + $0x114c] sm:$0xf]
        %v1418 = vld [vmem:[%s256 + $0x1150] sm:$0xf]
        %v1419 = vld [vmem:[%s256 + $0x1154] sm:$0xf]
        %v1420 = vld [vmem:[%s256 + $0x1158] sm:$0xf]
        %v1421 = vld [vmem:[%s256 + $0x115c] sm:$0xf]
        %v1422 = vld [vmem:[%s256 + $0x1160] sm:$0xf]
        %v1423 = vld [vmem:[%s256 + $0x1164] sm:$0xf]
        %v1424 = vld [vmem:[%s256 + $0x1168] sm:$0xf]
        %v1425 = vld [vmem:[%s256 + $0x116c] sm:$0xf]
        %v1426 = vld [vmem:[%s256 + $0x1170] sm:$0xf]
        %v1427 = vld [vmem:[%s256 + $0x1174] sm:$0xf]
        %v1428 = vld [vmem:[%s256 + $0x1178] sm:$0xf]
        %v1429 = vld [vmem:[%s256 + $0x117c] sm:$0xf]
        %v1430 = vld [vmem:[%s256 + $0x1180] sm:$0xf]
        %v1431 = vld [vmem:[%s256 + $0x1184] sm:$0xf]
        %v1432 = vld [vmem:[%s256 + $0x1188] sm:$0xf]
        %v1433 = vld [vmem:[%s256 + $0x118c] sm:$0xf]
        %v1434 = vld [vmem:[%s256 + $0x1190] sm:$0xf]
        %v1435 = vld [vmem:[%s256 + $0x1194] sm:$0xf]
        %v1436 = vld [vmem:[%s256 + $0x1198] sm:$0xf]
        %v1437 = vld [vmem:[%s256 + $0x119c] sm:$0xf]
        %v1438 = vld [vmem:[%s256 + $0x11a0] sm:$0xf]
        %v1439 = vld [vmem:[%s256 + $0x11a4] sm:$0xf]
        %v1440 = vld [vmem:[%s256 + $0x11a8] sm:$0xf]
        %v1441 = vld [vmem:[%s256 + $0x11ac] sm:$0xf]
        %v1442 = vld [vmem:[%s256 + $0x11b0] sm:$0xf]
        %v1443 = vld [vmem:[%s256 + $0x11b4] sm:$0xf]
        %v1444 = vld [vmem:[%s256 + $0x11b8] sm:$0xf]
        %v1445 = vld [vmem:[%s256 + $0x11bc] sm:$0xf]
        %v1446 = vld [vmem:[%s256 + $0x11c0] sm:$0xf]
        %v1447 = vld [vmem:[%s256 + $0x11c4] sm:$0xf]
        %v1448 = vld [vmem:[%s256 + $0x11c8] sm:$0xf]
        %v1449 = vld [vmem:[%s256 + $0x11cc] sm:$0xf]
        %v1450 = vld [vmem:[%s256 + $0x11d0] sm:$0xf]
        %v1451 = vld [vmem:[%s256 + $0x11d4] sm:$0xf]
        %v1452 = vld [vmem:[%s256 + $0x11d8] sm:$0xf]
        %v1453 = vld [vmem:[%s256 + $0x11dc] sm:$0xf]
        %v1454 = vld [vmem:[%s256 + $0x11e0] sm:$0xf]
        %v1455 = vld [vmem:[%s256 + $0x11e4] sm:$0xf]
        %v1456 = vld [vmem:[%s256 + $0x11e8] sm:$0xf]
        %v1457 = vld [vmem:[%s256 + $0x11ec] sm:$0xf]
        %v1458 = vld [vmem:[%s256 + $0x11f0] sm:$0xf]
        %v1459 = vld [vmem:[%s256 + $0x11f4] sm:$0xf]
        %v1460 = vld [vmem:[%s256 + $0x11f8] sm:$0xf]
        %v1461 = vld [vmem:[%s256 + $0x11fc] sm:$0xf]
        %v1462 = vld [vmem:[%s256 + $0x1200] sm:$0xf]
        %v1463 = vld [vmem:[%s256 + $0x1204] sm:$0xf]
        %v1464 = vld [vmem:[%s256 + $0x1208] sm:$0xf]
        %v1465 = vld [vmem:[%s256 + $0x120c] sm:$0xf]
        %v1466 = vld [vmem:[%s256 + $0x1210] sm:$0xf]
        %v1467 = vld [vmem:[%s256 + $0x1214] sm:$0xf]
        %v1468 = vld [vmem:[%s256 + $0x1218] sm:$0xf]
        %v1469 = vld [vmem:[%s256 + $0x121c] sm:$0xf]
        %v1470 = vld [vmem:[%s256 + $0x1220] sm:$0xf]
        %v1471 = vld [vmem:[%s256 + $0x1224] sm:$0xf]
        %v1472 = vld [vmem:[%s256 + $0x1228] sm:$0xf]
        %v1473 = vld [vmem:[%s256 + $0x122c] sm:$0xf]
        %v1474 = vld [vmem:[%s256 + $0x1230] sm:$0xf]
        %v1475 = vld [vmem:[%s256 + $0x1234] sm:$0xf]
        %v1476 = vld [vmem:[%s256 + $0x1238] sm:$0xf]
        %v1477 = vld [vmem:[%s256 + $0x123c] sm:$0xf]
        %v1478 = vld [vmem:[%s256 + $0x1240] sm:$0xf]
        %v1479 = vld [vmem:[%s256 + $0x1244] sm:$0xf]
        %v1480 = vld [vmem:[%s256 + $0x1248] sm:$0xf]
        %v1481 = vld [vmem:[%s256 + $0x124c] sm:$0xf]
        %v1482 = vld [vmem:[%s256 + $0x1250] sm:$0xf]
        %v1483 = vld [vmem:[%s256 + $0x1254] sm:$0xf]
        %v1484 = vld [vmem:[%s256 + $0x1258] sm:$0xf]
        %v1485 = vld [vmem:[%s256 + $0x125c] sm:$0xf]
        %v1486 = vld [vmem:[%s256 + $0x1260] sm:$0xf]
        %v1487 = vld [vmem:[%s256 + $0x1264] sm:$0xf]
        %v1488 = vld [vmem:[%s256 + $0x1268] sm:$0xf]
        %v1489 = vld [vmem:[%s256 + $0x126c] sm:$0xf]
        %v1490 = vld [vmem:[%s256 + $0x1270] sm:$0xf]
        %v1491 = vld [vmem:[%s256 + $0x1274] sm:$0xf]
        %v1492 = vld [vmem:[%s256 + $0x1278] sm:$0xf]
        %v1493 = vld [vmem:[%s256 + $0x127c] sm:$0xf]
        %v1494 = vld [vmem:[%s256 + $0x1280] sm:$0xf]
        %v1495 = vld [vmem:[%s256 + $0x1284] sm:$0xf]
        %v1496 = vld [vmem:[%s256 + $0x1288] sm:$0xf]
        %v1497 = vld [vmem:[%s256 + $0x128c] sm:$0xf]
        %v1498 = vld [vmem:[%s256 + $0x1290] sm:$0xf]
        %v1499 = vld [vmem:[%s256 + $0x1294] sm:$0xf]
        %v1500 = vld [vmem:[%s256 + $0x1298] sm:$0xf]
        %v1501 = vld [vmem:[%s256 + $0x129c] sm:$0xf]
        %v1502 = vld [vmem:[%s256 + $0x12a0] sm:$0xf]
        %v1503 = vld [vmem:[%s256 + $0x12a4] sm:$0xf]
        %v1504 = vld [vmem:[%s256 + $0x12a8] sm:$0xf]
        %v1505 = vld [vmem:[%s256 + $0x12ac] sm:$0xf]
        %v1506 = vld [vmem:[%s256 + $0x12b0] sm:$0xf]
        %v1507 = vld [vmem:[%s256 + $0x12b4] sm:$0xf]
        %v1508 = vld [vmem:[%s256 + $0x12b8] sm:$0xf]
        %v1509 = vld [vmem:[%s256 + $0x12bc] sm:$0xf]
        %v1510 = vld [vmem:[%s256 + $0x12c0] sm:$0xf]
        %v1511 = vld [vmem:[%s256 + $0x12c4] sm:$0xf]
        %v1512 = vld [vmem:[%s256 + $0x12c8] sm:$0xf]
        %v1513 = vld [vmem:[%s256 + $0x12cc] sm:$0xf]
        %v1514 = vld [vmem:[%s256 + $0x12d0] sm:$0xf]
        %v1515 = vld [vmem:[%s256 + $0x12d4] sm:$0xf]
        %v1516 = vld [vmem:[%s256 + $0x12d8] sm:$0xf]
        %v1517 = vld [vmem:[%s256 + $0x12dc] sm:$0xf]
        %v1518 = vld [vmem:[%s256 + $0x12e0] sm:$0xf]
        %v1519 = vld [vmem:[%s256 + $0x12e4] sm:$0xf]
        %v1520 = vld [vmem:[%s256 + $0x12e8] sm:$0xf]
        %v1521 = vld [vmem:[%s256 + $0x12ec] sm:$0xf]
        %v1522 = vld [vmem:[%s256 + $0x12f0] sm:$0xf]
        %v1523 = vld [vmem:[%s256 + $0x12f4] sm:$0xf]
        %v1524 = vld [vmem:[%s256 + $0x12f8] sm:$0xf]
        %v1525 = vld [vmem:[%s256 + $0x12fc] sm:$0xf]
        %v1526 = vld [vmem:[%s256 + $0x1300] sm:$0xf]
        %v1527 = vld [vmem:[%s256 + $0x1304] sm:$0xf]
        %v1528 = vld [vmem:[%s256 + $0x1308] sm:$0xf]
        %v1529 = vld [vmem:[%s256 + $0x130c] sm:$0xf]
        %v1530 = vld [vmem:[%s256 + $0x1310] sm:$0xf]
        %v1531 = vld [vmem:[%s256 + $0x1314] sm:$0xf]
        %v1532 = vld [vmem:[%s256 + $0x1318] sm:$0xf]
        %v1533 = vld [vmem:[%s256 + $0x131c] sm:$0xf]
        %v1534 = vld [vmem:[%s256 + $0x1320] sm:$0xf]
        %v1535 = vld [vmem:[%s256 + $0x1324] sm:$0xf]
        %v1536 = vld [vmem:[%s256 + $0x1328] sm:$0xf]
        %v1537 = vld [vmem:[%s256 + $0x132c] sm:$0xf]
        %v1538 = vld [vmem:[%s256 + $0x1330] sm:$0xf]
        %v1539 = vld [vmem:[%s256 + $0x1334] sm:$0xf]
        %v1540 = vld [vmem:[%s256 + $0x1338] sm:$0xf]
        %v1541 = vld [vmem:[%s256 + $0x133c] sm:$0xf]
        %v1542 = vld [vmem:[%s256 + $0x1340] sm:$0xf]
        %v1543 = vld [vmem:[%s256 + $0x1344] sm:$0xf]
        %v1544 = vld [vmem:[%s256 + $0x1348] sm:$0xf]
        %v1545 = vld [vmem:[%s256 + $0x134c] sm:$0xf]
        %v1546 = vld [vmem:[%s256 + $0x1350] sm:$0xf]
        %v1547 = vld [vmem:[%s256 + $0x1354] sm:$0xf]
        %v1548 = vld [vmem:[%s256 + $0x1358] sm:$0xf]
        %v1549 = vld [vmem:[%s256 + $0x135c] sm:$0xf]
        %v1550 = vld [vmem:[%s256 + $0x1360] sm:$0xf]
        %v1551 = vld [vmem:[%s256 + $0x1364] sm:$0xf]
        %v1552 = vld [vmem:[%s256 + $0x1368] sm:$0xf]
        %v1553 = vld [vmem:[%s256 + $0x136c] sm:$0xf]
        %v1554 = vld [vmem:[%s256 + $0x1370] sm:$0xf]
        %v1555 = vld [vmem:[%s256 + $0x1374] sm:$0xf]
        %v1556 = vld [vmem:[%s256 + $0x1378] sm:$0xf]
        %v1557 = vld [vmem:[%s256 + $0x137c] sm:$0xf]
        %v1558 = vld [vmem:[%s256 + $0x1380] sm:$0xf]
        %v1559 = vld [vmem:[%s256 + $0x1384] sm:$0xf]
        %v1560 = vld [vmem:[%s256 + $0x1388] sm:$0xf]
        %v1561 = vld [vmem:[%s256 + $0x138c] sm:$0xf]
        %v1562 = vld [vmem:[%s256 + $0x1390] sm:$0xf]
        %v1563 = vld [vmem:[%s256 + $0x1394] sm:$0xf]
        %v1564 = vld [vmem:[%s256 + $0x1398] sm:$0xf]
        %v1565 = vld [vmem:[%s256 + $0x139c] sm:$0xf]
        %v1566 = vld [vmem:[%s256 + $0x13a0] sm:$0xf]
        %v1567 = vld [vmem:[%s256 + $0x13a4] sm:$0xf]
        %v1568 = vld [vmem:[%s256 + $0x13a8] sm:$0xf]
        %v1569 = vld [vmem:[%s256 + $0x13ac] sm:$0xf]
        %v1570 = vld [vmem:[%s256 + $0x13b0] sm:$0xf]
        %v1571 = vld [vmem:[%s256 + $0x13b4] sm:$0xf]
        %v1572 = vld [vmem:[%s256 + $0x13b8] sm:$0xf]
        %v1573 = vld [vmem:[%s256 + $0x13bc] sm:$0xf]
        %v1574 = vld [vmem:[%s256 + $0x13c0] sm:$0xf]
        %v1575 = vld [vmem:[%s256 + $0x13c4] sm:$0xf]
        %v1576 = vld [vmem:[%s256 + $0x13c8] sm:$0xf]
        %v1577 = vld [vmem:[%s256 + $0x13cc] sm:$0xf]
        %v1578 = vld [vmem:[%s256 + $0x13d0] sm:$0xf]
        %v1579 = vld [vmem:[%s256 + $0x13d4] sm:$0xf]
        %v1580 = vld [vmem:[%s256 + $0x13d8] sm:$0xf]
        %v1581 = vld [vmem:[%s256 + $0x13dc] sm:$0xf]
        %v1582 = vld [vmem:[%s256 + $0x13e0] sm:$0xf]
        %v1583 = vld [vmem:[%s256 + $0x13e4] sm:$0xf]
        %v1584 = vld [vmem:[%s256 + $0x13e8] sm:$0xf]
        %v1585 = vld [vmem:[%s256 + $0x13ec] sm:$0xf]
        %v1586 = vld [vmem:[%s256 + $0x13f0] sm:$0xf]
        %v1587 = vld [vmem:[%s256 + $0x13f4] sm:$0xf]
        %v1588 = vld [vmem:[%s256 + $0x13f8] sm:$0xf]
        %v1589 = vld [vmem:[%s256 + $0x13fc] sm:$0xf]
        %v1590 = vld [vmem:[%s238] sm:$0xff]
        %v1591 = vld [vmem:[%s238 + $0x8] sm:$0xff]
        %v1592 = vld [vmem:[%s238 + $0x10] sm:$0xff]
        %v1593 = vld [vmem:[%s238 + $0x18] sm:$0xff]
        %v1594 = vld [vmem:[%s238 + $0x20] sm:$0xff]
        %v1595 = vld [vmem:[%s238 + $0x28] sm:$0xff]
        %v1596 = vld [vmem:[%s238 + $0x30] sm:$0xff]
        %v1597 = vld [vmem:[%s238 + $0x38] sm:$0xff]
        %v1598 = vld [vmem:[%s238 + $0x40] sm:$0xff]
        %v1599 = vld [vmem:[%s238 + $0x48] sm:$0xff]
        %v1600 = vld [vmem:[%s238 + $0x50] sm:$0xff]
        %v1601 = vld [vmem:[%s238 + $0x58] sm:$0xff]
        %v1602 = vld [vmem:[%s238 + $0x60] sm:$0xff]
        %v1603 = vld [vmem:[%s238 + $0x68] sm:$0xff]
        %v1604 = vld [vmem:[%s238 + $0x70] sm:$0xff]
        %v1605 = vld [vmem:[%s238 + $0x78] sm:$0xff]
        %v1606 = vld [vmem:[%s238 + $0x80] sm:$0xff]
        %v1607 = vld [vmem:[%s238 + $0x88] sm:$0xff]
        %v1608 = vld [vmem:[%s238 + $0x90] sm:$0xff]
        %v1609 = vld [vmem:[%s238 + $0x98] sm:$0xff]
        %v1610 = vld [vmem:[%s238 + $0xa0] sm:$0xff]
        %v1611 = vld [vmem:[%s238 + $0xa8] sm:$0xff]
        %v1612 = vld [vmem:[%s238 + $0xb0] sm:$0xff]
        %v1613 = vld [vmem:[%s238 + $0xb8] sm:$0xff]
        %v1614 = vld [vmem:[%s238 + $0xc0] sm:$0xff]
        %v1615 = vld [vmem:[%s238 + $0xc8] sm:$0xff]
        %v1616 = vld [vmem:[%s238 + $0xd0] sm:$0xff]
        %v1617 = vld [vmem:[%s238 + $0xd8] sm:$0xff]
        %v1618 = vld [vmem:[%s238 + $0xe0] sm:$0xff]
        %v1619 = vld [vmem:[%s238 + $0xe8] sm:$0xff]
        %v1620 = vld [vmem:[%s238 + $0xf0] sm:$0xff]
        %v1621 = vld [vmem:[%s238 + $0xf8] sm:$0xff]
        %v1622 = vld [vmem:[%s238 + $0x100] sm:$0xff]
        %v1623 = vld [vmem:[%s238 + $0x108] sm:$0xff]
        %v1624 = vld [vmem:[%s238 + $0x110] sm:$0xff]
        %v1625 = vld [vmem:[%s238 + $0x118] sm:$0xff]
        %v1626 = vld [vmem:[%s238 + $0x120] sm:$0xff]
        %v1627 = vld [vmem:[%s238 + $0x128] sm:$0xff]
        %v1628 = vld [vmem:[%s238 + $0x130] sm:$0xff]
        %v1629 = vld [vmem:[%s238 + $0x138] sm:$0xff]
        %v1630 = vld [vmem:[%s238 + $0x140] sm:$0xff]
        %v1631 = vld [vmem:[%s238 + $0x148] sm:$0xff]
        %v1632 = vld [vmem:[%s238 + $0x150] sm:$0xff]
        %v1633 = vld [vmem:[%s238 + $0x158] sm:$0xff]
        %v1634 = vld [vmem:[%s238 + $0x160] sm:$0xff]
        %v1635 = vld [vmem:[%s238 + $0x168] sm:$0xff]
        %v1636 = vld [vmem:[%s238 + $0x170] sm:$0xff]
        %v1637 = vld [vmem:[%s238 + $0x178] sm:$0xff]
        %v1638 = vld [vmem:[%s238 + $0x180] sm:$0xff]
        %v1639 = vld [vmem:[%s238 + $0x188] sm:$0xff]
        %v1640 = vld [vmem:[%s238 + $0x190] sm:$0xff]
        %v1641 = vld [vmem:[%s238 + $0x198] sm:$0xff]
        %v1642 = vld [vmem:[%s238 + $0x1a0] sm:$0xff]
        %v1643 = vld [vmem:[%s238 + $0x1a8] sm:$0xff]
        %v1644 = vld [vmem:[%s238 + $0x1b0] sm:$0xff]
        %v1645 = vld [vmem:[%s238 + $0x1b8] sm:$0xff]
        %v1646 = vld [vmem:[%s238 + $0x1c0] sm:$0xff]
        %v1647 = vld [vmem:[%s238 + $0x1c8] sm:$0xff]
        %v1648 = vld [vmem:[%s238 + $0x1d0] sm:$0xff]
        %v1649 = vld [vmem:[%s238 + $0x1d8] sm:$0xff]
        %v1650 = vld [vmem:[%s238 + $0x1e0] sm:$0xff]
        %v1651 = vld [vmem:[%s238 + $0x1e8] sm:$0xff]
        %v1652 = vld [vmem:[%s238 + $0x1f0] sm:$0xff]
        %v1653 = vld [vmem:[%s238 + $0x1f8] sm:$0xff]
        %v1654 = vld [vmem:[%s238 + $0x200] sm:$0xff]
        %v1655 = vld [vmem:[%s238 + $0x208] sm:$0xff]
        %v1656 = vld [vmem:[%s238 + $0x210] sm:$0xff]
        %v1657 = vld [vmem:[%s238 + $0x218] sm:$0xff]
        %v1658 = vld [vmem:[%s238 + $0x220] sm:$0xff]
        %v1659 = vld [vmem:[%s238 + $0x228] sm:$0xff]
        %v1660 = vld [vmem:[%s238 + $0x230] sm:$0xff]
        %v1661 = vld [vmem:[%s238 + $0x238] sm:$0xff]
        %v1662 = vld [vmem:[%s238 + $0x240] sm:$0xff]
        %v1663 = vld [vmem:[%s238 + $0x248] sm:$0xff]
        %v1664 = vld [vmem:[%s238 + $0x250] sm:$0xff]
        %v1665 = vld [vmem:[%s238 + $0x258] sm:$0xff]
        %v1666 = vld [vmem:[%s238 + $0x260] sm:$0xff]
        %v1667 = vld [vmem:[%s238 + $0x268] sm:$0xff]
        %v1668 = vld [vmem:[%s238 + $0x270] sm:$0xff]
        %v1669 = vld [vmem:[%s238 + $0x278] sm:$0xff]
        %v1670 = vpack.c.bf16 %v1590, %v1590
        %v1671 = vpack.c.bf16 %v1591, %v1591
        %v1672 = vpack.c.bf16 %v1592, %v1592
        %v1673 = vpack.c.bf16 %v1593, %v1593
        %v1674 = vpack.c.bf16 %v1594, %v1594
        %v1675 = vpack.c.bf16 %v1595, %v1595
        %v1676 = vpack.c.bf16 %v1596, %v1596
        %v1677 = vpack.c.bf16 %v1597, %v1597
        %v1678 = vpack.c.bf16 %v1598, %v1598
        %v1679 = vpack.c.bf16 %v1599, %v1599
        %v1680 = vpack.c.bf16 %v1600, %v1600
        %v1681 = vpack.c.bf16 %v1601, %v1601
        %v1682 = vpack.c.bf16 %v1602, %v1602
        %v1683 = vpack.c.bf16 %v1603, %v1603
        %v1684 = vpack.c.bf16 %v1604, %v1604
        %v1685 = vpack.c.bf16 %v1605, %v1605
        %v1686 = vpack.c.bf16 %v1606, %v1606
        %v1687 = vpack.c.bf16 %v1607, %v1607
        %v1688 = vpack.c.bf16 %v1608, %v1608
        %v1689 = vpack.c.bf16 %v1609, %v1609
        %v1690 = vpack.c.bf16 %v1610, %v1610
        %v1691 = vpack.c.bf16 %v1611, %v1611
        %v1692 = vpack.c.bf16 %v1612, %v1612
        %v1693 = vpack.c.bf16 %v1613, %v1613
        %v1694 = vpack.c.bf16 %v1614, %v1614
        %v1695 = vpack.c.bf16 %v1615, %v1615
        %v1696 = vpack.c.bf16 %v1616, %v1616
        %v1697 = vpack.c.bf16 %v1617, %v1617
        %v1698 = vpack.c.bf16 %v1618, %v1618
        %v1699 = vpack.c.bf16 %v1619, %v1619
        %v1700 = vpack.c.bf16 %v1620, %v1620
        %v1701 = vpack.c.bf16 %v1621, %v1621
        %v1702 = vpack.c.bf16 %v1622, %v1622
        %v1703 = vpack.c.bf16 %v1623, %v1623
        %v1704 = vpack.c.bf16 %v1624, %v1624
        %v1705 = vpack.c.bf16 %v1625, %v1625
        %v1706 = vpack.c.bf16 %v1626, %v1626
        %v1707 = vpack.c.bf16 %v1627, %v1627
        %v1708 = vpack.c.bf16 %v1628, %v1628
        %v1709 = vpack.c.bf16 %v1629, %v1629
        %v1710 = vpack.c.bf16 %v1630, %v1630
        %v1711 = vpack.c.bf16 %v1631, %v1631
        %v1712 = vpack.c.bf16 %v1632, %v1632
        %v1713 = vpack.c.bf16 %v1633, %v1633
        %v1714 = vpack.c.bf16 %v1634, %v1634
        %v1715 = vpack.c.bf16 %v1635, %v1635
        %v1716 = vpack.c.bf16 %v1636, %v1636
        %v1717 = vpack.c.bf16 %v1637, %v1637
        %v1718 = vpack.c.bf16 %v1638, %v1638
        %v1719 = vpack.c.bf16 %v1639, %v1639
        %v1720 = vpack.c.bf16 %v1640, %v1640
        %v1721 = vpack.c.bf16 %v1641, %v1641
        %v1722 = vpack.c.bf16 %v1642, %v1642
        %v1723 = vpack.c.bf16 %v1643, %v1643
        %v1724 = vpack.c.bf16 %v1644, %v1644
        %v1725 = vpack.c.bf16 %v1645, %v1645
        %v1726 = vpack.c.bf16 %v1646, %v1646
        %v1727 = vpack.c.bf16 %v1647, %v1647
        %v1728 = vpack.c.bf16 %v1648, %v1648
        %v1729 = vpack.c.bf16 %v1649, %v1649
        %v1730 = vpack.c.bf16 %v1650, %v1650
        %v1731 = vpack.c.bf16 %v1651, %v1651
        %v1732 = vpack.c.bf16 %v1652, %v1652
        %v1733 = vpack.c.bf16 %v1653, %v1653
        %v1734 = vpack.c.bf16 %v1654, %v1654
        %v1735 = vpack.c.bf16 %v1655, %v1655
        %v1736 = vpack.c.bf16 %v1656, %v1656
        %v1737 = vpack.c.bf16 %v1657, %v1657
        %v1738 = vpack.c.bf16 %v1658, %v1658
        %v1739 = vpack.c.bf16 %v1659, %v1659
        %v1740 = vpack.c.bf16 %v1660, %v1660
        %v1741 = vpack.c.bf16 %v1661, %v1661
        %v1742 = vpack.c.bf16 %v1662, %v1662
        %v1743 = vpack.c.bf16 %v1663, %v1663
        %v1744 = vpack.c.bf16 %v1664, %v1664
        %v1745 = vpack.c.bf16 %v1665, %v1665
        %v1746 = vpack.c.bf16 %v1666, %v1666
        %v1747 = vpack.c.bf16 %v1667, %v1667
        %v1748 = vpack.c.bf16 %v1668, %v1668
        %v1749 = vpack.c.bf16 %v1669, %v1669
        %v1750 = vld [vmem:[%s247] sm:$0xff]
        %v1751 = vld [vmem:[%s247 + $0x8] sm:$0xff]
        %v1752 = vld [vmem:[%s247 + $0x10] sm:$0xff]
        %v1753 = vld [vmem:[%s247 + $0x18] sm:$0xff]
        %v1754 = vld [vmem:[%s247 + $0x20] sm:$0xff]
        %v1755 = vld [vmem:[%s247 + $0x28] sm:$0xff]
        %v1756 = vld [vmem:[%s247 + $0x30] sm:$0xff]
        %v1757 = vld [vmem:[%s247 + $0x38] sm:$0xff]
        %v1758 = vld [vmem:[%s247 + $0x40] sm:$0xff]
        %v1759 = vld [vmem:[%s247 + $0x48] sm:$0xff]
        %v1760 = vld [vmem:[%s247 + $0x50] sm:$0xff]
        %v1761 = vld [vmem:[%s247 + $0x58] sm:$0xff]
        %v1762 = vld [vmem:[%s247 + $0x60] sm:$0xff]
        %v1763 = vld [vmem:[%s247 + $0x68] sm:$0xff]
        %v1764 = vld [vmem:[%s247 + $0x70] sm:$0xff]
        %v1765 = vld [vmem:[%s247 + $0x78] sm:$0xff]
        %v1766 = vld [vmem:[%s247 + $0x80] sm:$0xff]
        %v1767 = vld [vmem:[%s247 + $0x88] sm:$0xff]
        %v1768 = vld [vmem:[%s247 + $0x90] sm:$0xff]
        %v1769 = vld [vmem:[%s247 + $0x98] sm:$0xff]
        %v1770 = vld [vmem:[%s247 + $0xa0] sm:$0xff]
        %v1771 = vld [vmem:[%s247 + $0xa8] sm:$0xff]
        %v1772 = vld [vmem:[%s247 + $0xb0] sm:$0xff]
        %v1773 = vld [vmem:[%s247 + $0xb8] sm:$0xff]
        %v1774 = vld [vmem:[%s247 + $0xc0] sm:$0xff]
        %v1775 = vld [vmem:[%s247 + $0xc8] sm:$0xff]
        %v1776 = vld [vmem:[%s247 + $0xd0] sm:$0xff]
        %v1777 = vld [vmem:[%s247 + $0xd8] sm:$0xff]
        %v1778 = vld [vmem:[%s247 + $0xe0] sm:$0xff]
        %v1779 = vld [vmem:[%s247 + $0xe8] sm:$0xff]
        %v1780 = vld [vmem:[%s247 + $0xf0] sm:$0xff]
        %v1781 = vld [vmem:[%s247 + $0xf8] sm:$0xff]
        %v1782 = vld [vmem:[%s247 + $0x100] sm:$0xff]
        %v1783 = vld [vmem:[%s247 + $0x108] sm:$0xff]
        %v1784 = vld [vmem:[%s247 + $0x110] sm:$0xff]
        %v1785 = vld [vmem:[%s247 + $0x118] sm:$0xff]
        %v1786 = vld [vmem:[%s247 + $0x120] sm:$0xff]
        %v1787 = vld [vmem:[%s247 + $0x128] sm:$0xff]
        %v1788 = vld [vmem:[%s247 + $0x130] sm:$0xff]
        %v1789 = vld [vmem:[%s247 + $0x138] sm:$0xff]
        %v1790 = vld [vmem:[%s247 + $0x140] sm:$0xff]
        %v1791 = vld [vmem:[%s247 + $0x148] sm:$0xff]
        %v1792 = vld [vmem:[%s247 + $0x150] sm:$0xff]
        %v1793 = vld [vmem:[%s247 + $0x158] sm:$0xff]
        %v1794 = vld [vmem:[%s247 + $0x160] sm:$0xff]
        %v1795 = vld [vmem:[%s247 + $0x168] sm:$0xff]
        %v1796 = vld [vmem:[%s247 + $0x170] sm:$0xff]
        %v1797 = vld [vmem:[%s247 + $0x178] sm:$0xff]
        %v1798 = vld [vmem:[%s247 + $0x180] sm:$0xff]
        %v1799 = vld [vmem:[%s247 + $0x188] sm:$0xff]
        %v1800 = vld [vmem:[%s247 + $0x190] sm:$0xff]
        %v1801 = vld [vmem:[%s247 + $0x198] sm:$0xff]
        %v1802 = vld [vmem:[%s247 + $0x1a0] sm:$0xff]
        %v1803 = vld [vmem:[%s247 + $0x1a8] sm:$0xff]
        %v1804 = vld [vmem:[%s247 + $0x1b0] sm:$0xff]
        %v1805 = vld [vmem:[%s247 + $0x1b8] sm:$0xff]
        %v1806 = vld [vmem:[%s247 + $0x1c0] sm:$0xff]
        %v1807 = vld [vmem:[%s247 + $0x1c8] sm:$0xff]
        %v1808 = vld [vmem:[%s247 + $0x1d0] sm:$0xff]
        %v1809 = vld [vmem:[%s247 + $0x1d8] sm:$0xff]
        %v1810 = vld [vmem:[%s247 + $0x1e0] sm:$0xff]
        %v1811 = vld [vmem:[%s247 + $0x1e8] sm:$0xff]
        %v1812 = vld [vmem:[%s247 + $0x1f0] sm:$0xff]
        %v1813 = vld [vmem:[%s247 + $0x1f8] sm:$0xff]
        %v1814 = vld [vmem:[%s247 + $0x200] sm:$0xff]
        %v1815 = vld [vmem:[%s247 + $0x208] sm:$0xff]
        %v1816 = vld [vmem:[%s247 + $0x210] sm:$0xff]
        %v1817 = vld [vmem:[%s247 + $0x218] sm:$0xff]
        %v1818 = vld [vmem:[%s247 + $0x220] sm:$0xff]
        %v1819 = vld [vmem:[%s247 + $0x228] sm:$0xff]
        %v1820 = vld [vmem:[%s247 + $0x230] sm:$0xff]
        %v1821 = vld [vmem:[%s247 + $0x238] sm:$0xff]
        %v1822 = vld [vmem:[%s247 + $0x240] sm:$0xff]
        %v1823 = vld [vmem:[%s247 + $0x248] sm:$0xff]
        %v1824 = vld [vmem:[%s247 + $0x250] sm:$0xff]
        %v1825 = vld [vmem:[%s247 + $0x258] sm:$0xff]
        %v1826 = vld [vmem:[%s247 + $0x260] sm:$0xff]
        %v1827 = vld [vmem:[%s247 + $0x268] sm:$0xff]
        %v1828 = vld [vmem:[%s247 + $0x270] sm:$0xff]
        %v1829 = vld [vmem:[%s247 + $0x278] sm:$0xff]
        %v1830 = vpack.c.bf16 %v1750, %v1750
        %v1831 = vpack.c.bf16 %v1751, %v1751
        %v1832 = vpack.c.bf16 %v1752, %v1752
        %v1833 = vpack.c.bf16 %v1753, %v1753
        %v1834 = vpack.c.bf16 %v1754, %v1754
        %v1835 = vpack.c.bf16 %v1755, %v1755
        %v1836 = vpack.c.bf16 %v1756, %v1756
        %v1837 = vpack.c.bf16 %v1757, %v1757
        %v1838 = vpack.c.bf16 %v1758, %v1758
        %v1839 = vpack.c.bf16 %v1759, %v1759
        %v1840 = vpack.c.bf16 %v1760, %v1760
        %v1841 = vpack.c.bf16 %v1761, %v1761
        %v1842 = vpack.c.bf16 %v1762, %v1762
        %v1843 = vpack.c.bf16 %v1763, %v1763
        %v1844 = vpack.c.bf16 %v1764, %v1764
        %v1845 = vpack.c.bf16 %v1765, %v1765
        %v1846 = vpack.c.bf16 %v1766, %v1766
        %v1847 = vpack.c.bf16 %v1767, %v1767
        %v1848 = vpack.c.bf16 %v1768, %v1768
        %v1849 = vpack.c.bf16 %v1769, %v1769
        %v1850 = vpack.c.bf16 %v1770, %v1770
        %v1851 = vpack.c.bf16 %v1771, %v1771
        %v1852 = vpack.c.bf16 %v1772, %v1772
        %v1853 = vpack.c.bf16 %v1773, %v1773
        %v1854 = vpack.c.bf16 %v1774, %v1774
        %v1855 = vpack.c.bf16 %v1775, %v1775
        %v1856 = vpack.c.bf16 %v1776, %v1776
        %v1857 = vpack.c.bf16 %v1777, %v1777
        %v1858 = vpack.c.bf16 %v1778, %v1778
        %v1859 = vpack.c.bf16 %v1779, %v1779
        %v1860 = vpack.c.bf16 %v1780, %v1780
        %v1861 = vpack.c.bf16 %v1781, %v1781
        %v1862 = vpack.c.bf16 %v1782, %v1782
        %v1863 = vpack.c.bf16 %v1783, %v1783
        %v1864 = vpack.c.bf16 %v1784, %v1784
        %v1865 = vpack.c.bf16 %v1785, %v1785
        %v1866 = vpack.c.bf16 %v1786, %v1786
        %v1867 = vpack.c.bf16 %v1787, %v1787
        %v1868 = vpack.c.bf16 %v1788, %v1788
        %v1869 = vpack.c.bf16 %v1789, %v1789
        %v1870 = vpack.c.bf16 %v1790, %v1790
        %v1871 = vpack.c.bf16 %v1791, %v1791
        %v1872 = vpack.c.bf16 %v1792, %v1792
        %v1873 = vpack.c.bf16 %v1793, %v1793
        %v1874 = vpack.c.bf16 %v1794, %v1794
        %v1875 = vpack.c.bf16 %v1795, %v1795
        %v1876 = vpack.c.bf16 %v1796, %v1796
        %v1877 = vpack.c.bf16 %v1797, %v1797
        %v1878 = vpack.c.bf16 %v1798, %v1798
        %v1879 = vpack.c.bf16 %v1799, %v1799
        %v1880 = vpack.c.bf16 %v1800, %v1800
        %v1881 = vpack.c.bf16 %v1801, %v1801
        %v1882 = vpack.c.bf16 %v1802, %v1802
        %v1883 = vpack.c.bf16 %v1803, %v1803
        %v1884 = vpack.c.bf16 %v1804, %v1804
        %v1885 = vpack.c.bf16 %v1805, %v1805
        %v1886 = vpack.c.bf16 %v1806, %v1806
        %v1887 = vpack.c.bf16 %v1807, %v1807
        %v1888 = vpack.c.bf16 %v1808, %v1808
        %v1889 = vpack.c.bf16 %v1809, %v1809
        %v1890 = vpack.c.bf16 %v1810, %v1810
        %v1891 = vpack.c.bf16 %v1811, %v1811
        %v1892 = vpack.c.bf16 %v1812, %v1812
        %v1893 = vpack.c.bf16 %v1813, %v1813
        %v1894 = vpack.c.bf16 %v1814, %v1814
        %v1895 = vpack.c.bf16 %v1815, %v1815
        %v1896 = vpack.c.bf16 %v1816, %v1816
        %v1897 = vpack.c.bf16 %v1817, %v1817
        %v1898 = vpack.c.bf16 %v1818, %v1818
        %v1899 = vpack.c.bf16 %v1819, %v1819
        %v1900 = vpack.c.bf16 %v1820, %v1820
        %v1901 = vpack.c.bf16 %v1821, %v1821
        %v1902 = vpack.c.bf16 %v1822, %v1822
        %v1903 = vpack.c.bf16 %v1823, %v1823
        %v1904 = vpack.c.bf16 %v1824, %v1824
        %v1905 = vpack.c.bf16 %v1825, %v1825
        %v1906 = vpack.c.bf16 %v1826, %v1826
        %v1907 = vpack.c.bf16 %v1827, %v1827
        %v1908 = vpack.c.bf16 %v1828, %v1828
        %v1909 = vpack.c.bf16 %v1829, %v1829
        %v1910 = vld [vmem:[%s302] sm:$0xff]
        %v3191 = vunpack.c.l.b16 %v310
        %v3192 = vunpack.c.l.b16 %v311
        %v3193 = vunpack.c.l.b16 %v312
        %v3194 = vunpack.c.l.b16 %v313
        %v3195 = vunpack.c.l.b16 %v314
        %v3196 = vunpack.c.l.b16 %v315
        %v3197 = vunpack.c.l.b16 %v316
        %v3198 = vunpack.c.l.b16 %v317
        %v3199 = vunpack.c.l.b16 %v318
        %v3200 = vunpack.c.l.b16 %v319
        %v3201 = vunpack.c.l.b16 %v320
        %v3202 = vunpack.c.l.b16 %v321
        %v3203 = vunpack.c.l.b16 %v322
        %v3204 = vunpack.c.l.b16 %v323
        %v3205 = vunpack.c.l.b16 %v324
        %v3206 = vunpack.c.l.b16 %v325
        %v3207 = vunpack.c.l.b16 %v326
        %v3208 = vunpack.c.l.b16 %v327
        %v3209 = vunpack.c.l.b16 %v328
        %v3210 = vunpack.c.l.b16 %v329
        %v3211 = vunpack.c.l.b16 %v330
        %v3212 = vunpack.c.l.b16 %v331
        %v3213 = vunpack.c.l.b16 %v332
        %v3214 = vunpack.c.l.b16 %v333
        %v3215 = vunpack.c.l.b16 %v334
        %v3216 = vunpack.c.l.b16 %v335
        %v3217 = vunpack.c.l.b16 %v336
        %v3218 = vunpack.c.l.b16 %v337
        %v3219 = vunpack.c.l.b16 %v338
        %v3220 = vunpack.c.l.b16 %v339
        %v3221 = vunpack.c.l.b16 %v340
        %v3222 = vunpack.c.l.b16 %v341
        %v3223 = vunpack.c.l.b16 %v342
        %v3224 = vunpack.c.l.b16 %v343
        %v3225 = vunpack.c.l.b16 %v344
        %v3226 = vunpack.c.l.b16 %v345
        %v3227 = vunpack.c.l.b16 %v346
        %v3228 = vunpack.c.l.b16 %v347
        %v3229 = vunpack.c.l.b16 %v348
        %v3230 = vunpack.c.l.b16 %v349
        %v3231 = vunpack.c.l.b16 %v350
        %v3232 = vunpack.c.l.b16 %v351
        %v3233 = vunpack.c.l.b16 %v352
        %v3234 = vunpack.c.l.b16 %v353
        %v3235 = vunpack.c.l.b16 %v354
        %v3236 = vunpack.c.l.b16 %v355
        %v3237 = vunpack.c.l.b16 %v356
        %v3238 = vunpack.c.l.b16 %v357
        %v3239 = vunpack.c.l.b16 %v358
        %v3240 = vunpack.c.l.b16 %v359
        %v3241 = vunpack.c.l.b16 %v360
        %v3242 = vunpack.c.l.b16 %v361
        %v3243 = vunpack.c.l.b16 %v362
        %v3244 = vunpack.c.l.b16 %v363
        %v3245 = vunpack.c.l.b16 %v364
        %v3246 = vunpack.c.l.b16 %v365
        %v3247 = vunpack.c.l.b16 %v366
        %v3248 = vunpack.c.l.b16 %v367
        %v3249 = vunpack.c.l.b16 %v368
        %v3250 = vunpack.c.l.b16 %v369
        %v3251 = vunpack.c.l.b16 %v370
        %v3252 = vunpack.c.l.b16 %v371
        %v3253 = vunpack.c.l.b16 %v372
        %v3254 = vunpack.c.l.b16 %v373
        %v3255 = vunpack.c.l.b16 %v374
        %v3256 = vunpack.c.l.b16 %v375
        %v3257 = vunpack.c.l.b16 %v376
        %v3258 = vunpack.c.l.b16 %v377
        %v3259 = vunpack.c.l.b16 %v378
        %v3260 = vunpack.c.l.b16 %v379
        %v3261 = vunpack.c.l.b16 %v380
        %v3262 = vunpack.c.l.b16 %v381
        %v3263 = vunpack.c.l.b16 %v382
        %v3264 = vunpack.c.l.b16 %v383
        %v3265 = vunpack.c.l.b16 %v384
        %v3266 = vunpack.c.l.b16 %v385
        %v3267 = vunpack.c.l.b16 %v386
        %v3268 = vunpack.c.l.b16 %v387
        %v3269 = vunpack.c.l.b16 %v388
        %v3270 = vunpack.c.l.b16 %v389
        %v3271 = vunpack.c.l.b16 %v390
        %v3272 = vunpack.c.l.b16 %v391
        %v3273 = vunpack.c.l.b16 %v392
        %v3274 = vunpack.c.l.b16 %v393
        %v3275 = vunpack.c.l.b16 %v394
        %v3276 = vunpack.c.l.b16 %v395
        %v3277 = vunpack.c.l.b16 %v396
        %v3278 = vunpack.c.l.b16 %v397
        %v3279 = vunpack.c.l.b16 %v398
        %v3280 = vunpack.c.l.b16 %v399
        %v3281 = vunpack.c.l.b16 %v400
        %v3282 = vunpack.c.l.b16 %v401
        %v3283 = vunpack.c.l.b16 %v402
        %v3284 = vunpack.c.l.b16 %v403
        %v3285 = vunpack.c.l.b16 %v404
        %v3286 = vunpack.c.l.b16 %v405
        %v3287 = vunpack.c.l.b16 %v406
        %v3288 = vunpack.c.l.b16 %v407
        %v3289 = vunpack.c.l.b16 %v408
        %v3290 = vunpack.c.l.b16 %v409
        %v3291 = vunpack.c.l.b16 %v410
        %v3292 = vunpack.c.l.b16 %v411
        %v3293 = vunpack.c.l.b16 %v412
        %v3294 = vunpack.c.l.b16 %v413
        %v3295 = vunpack.c.l.b16 %v414
        %v3296 = vunpack.c.l.b16 %v415
        %v3297 = vunpack.c.l.b16 %v416
        %v3298 = vunpack.c.l.b16 %v417
        %v3299 = vunpack.c.l.b16 %v418
        %v3300 = vunpack.c.l.b16 %v419
        %v3301 = vunpack.c.l.b16 %v420
        %v3302 = vunpack.c.l.b16 %v421
        %v3303 = vunpack.c.l.b16 %v422
        %v3304 = vunpack.c.l.b16 %v423
        %v3305 = vunpack.c.l.b16 %v424
        %v3306 = vunpack.c.l.b16 %v425
        %v3307 = vunpack.c.l.b16 %v426
        %v3308 = vunpack.c.l.b16 %v427
        %v3309 = vunpack.c.l.b16 %v428
        %v3310 = vunpack.c.l.b16 %v429
        %v3311 = vunpack.c.l.b16 %v430
        %v3312 = vunpack.c.l.b16 %v431
        %v3313 = vunpack.c.l.b16 %v432
        %v3314 = vunpack.c.l.b16 %v433
        %v3315 = vunpack.c.l.b16 %v434
        %v3316 = vunpack.c.l.b16 %v435
        %v3317 = vunpack.c.l.b16 %v436
        %v3318 = vunpack.c.l.b16 %v437
        %v3319 = vunpack.c.l.b16 %v438
        %v3320 = vunpack.c.l.b16 %v439
        %v3321 = vunpack.c.l.b16 %v440
        %v3322 = vunpack.c.l.b16 %v441
        %v3323 = vunpack.c.l.b16 %v442
        %v3324 = vunpack.c.l.b16 %v443
        %v3325 = vunpack.c.l.b16 %v444
        %v3326 = vunpack.c.l.b16 %v445
        %v3327 = vunpack.c.l.b16 %v446
        %v3328 = vunpack.c.l.b16 %v447
        %v3329 = vunpack.c.l.b16 %v448
        %v3330 = vunpack.c.l.b16 %v449
        %v3331 = vunpack.c.l.b16 %v450
        %v3332 = vunpack.c.l.b16 %v451
        %v3333 = vunpack.c.l.b16 %v452
        %v3334 = vunpack.c.l.b16 %v453
        %v3335 = vunpack.c.l.b16 %v454
        %v3336 = vunpack.c.l.b16 %v455
        %v3337 = vunpack.c.l.b16 %v456
        %v3338 = vunpack.c.l.b16 %v457
        %v3339 = vunpack.c.l.b16 %v458
        %v3340 = vunpack.c.l.b16 %v459
        %v3341 = vunpack.c.l.b16 %v460
        %v3342 = vunpack.c.l.b16 %v461
        %v3343 = vunpack.c.l.b16 %v462
        %v3344 = vunpack.c.l.b16 %v463
        %v3345 = vunpack.c.l.b16 %v464
        %v3346 = vunpack.c.l.b16 %v465
        %v3347 = vunpack.c.l.b16 %v466
        %v3348 = vunpack.c.l.b16 %v467
        %v3349 = vunpack.c.l.b16 %v468
        %v3350 = vunpack.c.l.b16 %v469
        %v3351 = vunpack.c.l.b16 %v470
        %v3352 = vunpack.c.l.b16 %v471
        %v3353 = vunpack.c.l.b16 %v472
        %v3354 = vunpack.c.l.b16 %v473
        %v3355 = vunpack.c.l.b16 %v474
        %v3356 = vunpack.c.l.b16 %v475
        %v3357 = vunpack.c.l.b16 %v476
        %v3358 = vunpack.c.l.b16 %v477
        %v3359 = vunpack.c.l.b16 %v478
        %v3360 = vunpack.c.l.b16 %v479
        %v3361 = vunpack.c.l.b16 %v480
        %v3362 = vunpack.c.l.b16 %v481
        %v3363 = vunpack.c.l.b16 %v482
        %v3364 = vunpack.c.l.b16 %v483
        %v3365 = vunpack.c.l.b16 %v484
        %v3366 = vunpack.c.l.b16 %v485
        %v3367 = vunpack.c.l.b16 %v486
        %v3368 = vunpack.c.l.b16 %v487
        %v3369 = vunpack.c.l.b16 %v488
        %v3370 = vunpack.c.l.b16 %v489
        %v3371 = vunpack.c.l.b16 %v490
        %v3372 = vunpack.c.l.b16 %v491
        %v3373 = vunpack.c.l.b16 %v492
        %v3374 = vunpack.c.l.b16 %v493
        %v3375 = vunpack.c.l.b16 %v494
        %v3376 = vunpack.c.l.b16 %v495
        %v3377 = vunpack.c.l.b16 %v496
        %v3378 = vunpack.c.l.b16 %v497
        %v3379 = vunpack.c.l.b16 %v498
        %v3380 = vunpack.c.l.b16 %v499
        %v3381 = vunpack.c.l.b16 %v500
        %v3382 = vunpack.c.l.b16 %v501
        %v3383 = vunpack.c.l.b16 %v502
        %v3384 = vunpack.c.l.b16 %v503
        %v3385 = vunpack.c.l.b16 %v504
        %v3386 = vunpack.c.l.b16 %v505
        %v3387 = vunpack.c.l.b16 %v506
        %v3388 = vunpack.c.l.b16 %v507
        %v3389 = vunpack.c.l.b16 %v508
        %v3390 = vunpack.c.l.b16 %v509
        %v3391 = vunpack.c.l.b16 %v510
        %v3392 = vunpack.c.l.b16 %v511
        %v3393 = vunpack.c.l.b16 %v512
        %v3394 = vunpack.c.l.b16 %v513
        %v3395 = vunpack.c.l.b16 %v514
        %v3396 = vunpack.c.l.b16 %v515
        %v3397 = vunpack.c.l.b16 %v516
        %v3398 = vunpack.c.l.b16 %v517
        %v3399 = vunpack.c.l.b16 %v518
        %v3400 = vunpack.c.l.b16 %v519
        %v3401 = vunpack.c.l.b16 %v520
        %v3402 = vunpack.c.l.b16 %v521
        %v3403 = vunpack.c.l.b16 %v522
        %v3404 = vunpack.c.l.b16 %v523
        %v3405 = vunpack.c.l.b16 %v524
        %v3406 = vunpack.c.l.b16 %v525
        %v3407 = vunpack.c.l.b16 %v526
        %v3408 = vunpack.c.l.b16 %v527
        %v3409 = vunpack.c.l.b16 %v528
        %v3410 = vunpack.c.l.b16 %v529
        %v3411 = vunpack.c.l.b16 %v530
        %v3412 = vunpack.c.l.b16 %v531
        %v3413 = vunpack.c.l.b16 %v532
        %v3414 = vunpack.c.l.b16 %v533
        %v3415 = vunpack.c.l.b16 %v534
        %v3416 = vunpack.c.l.b16 %v535
        %v3417 = vunpack.c.l.b16 %v536
        %v3418 = vunpack.c.l.b16 %v537
        %v3419 = vunpack.c.l.b16 %v538
        %v3420 = vunpack.c.l.b16 %v539
        %v3421 = vunpack.c.l.b16 %v540
        %v3422 = vunpack.c.l.b16 %v541
        %v3423 = vunpack.c.l.b16 %v542
        %v3424 = vunpack.c.l.b16 %v543
        %v3425 = vunpack.c.l.b16 %v544
        %v3426 = vunpack.c.l.b16 %v545
        %v3427 = vunpack.c.l.b16 %v546
        %v3428 = vunpack.c.l.b16 %v547
        %v3429 = vunpack.c.l.b16 %v548
        %v3430 = vunpack.c.l.b16 %v549
        %v3431 = vunpack.c.l.b16 %v550
        %v3432 = vunpack.c.l.b16 %v551
        %v3433 = vunpack.c.l.b16 %v552
        %v3434 = vunpack.c.l.b16 %v553
        %v3435 = vunpack.c.l.b16 %v554
        %v3436 = vunpack.c.l.b16 %v555
        %v3437 = vunpack.c.l.b16 %v556
        %v3438 = vunpack.c.l.b16 %v557
        %v3439 = vunpack.c.l.b16 %v558
        %v3440 = vunpack.c.l.b16 %v559
        %v3441 = vunpack.c.l.b16 %v560
        %v3442 = vunpack.c.l.b16 %v561
        %v3443 = vunpack.c.l.b16 %v562
        %v3444 = vunpack.c.l.b16 %v563
        %v3445 = vunpack.c.l.b16 %v564
        %v3446 = vunpack.c.l.b16 %v565
        %v3447 = vunpack.c.l.b16 %v566
        %v3448 = vunpack.c.l.b16 %v567
        %v3449 = vunpack.c.l.b16 %v568
        %v3450 = vunpack.c.l.b16 %v569
        %v3451 = vunpack.c.l.b16 %v570
        %v3452 = vunpack.c.l.b16 %v571
        %v3453 = vunpack.c.l.b16 %v572
        %v3454 = vunpack.c.l.b16 %v573
        %v3455 = vunpack.c.l.b16 %v574
        %v3456 = vunpack.c.l.b16 %v575
        %v3457 = vunpack.c.l.b16 %v576
        %v3458 = vunpack.c.l.b16 %v577
        %v3459 = vunpack.c.l.b16 %v578
        %v3460 = vunpack.c.l.b16 %v579
        %v3461 = vunpack.c.l.b16 %v580
        %v3462 = vunpack.c.l.b16 %v581
        %v3463 = vunpack.c.l.b16 %v582
        %v3464 = vunpack.c.l.b16 %v583
        %v3465 = vunpack.c.l.b16 %v584
        %v3466 = vunpack.c.l.b16 %v585
        %v3467 = vunpack.c.l.b16 %v586
        %v3468 = vunpack.c.l.b16 %v587
        %v3469 = vunpack.c.l.b16 %v588
        %v3470 = vunpack.c.l.b16 %v589
        %v3471 = vunpack.c.l.b16 %v590
        %v3472 = vunpack.c.l.b16 %v591
        %v3473 = vunpack.c.l.b16 %v592
        %v3474 = vunpack.c.l.b16 %v593
        %v3475 = vunpack.c.l.b16 %v594
        %v3476 = vunpack.c.l.b16 %v595
        %v3477 = vunpack.c.l.b16 %v596
        %v3478 = vunpack.c.l.b16 %v597
        %v3479 = vunpack.c.l.b16 %v598
        %v3480 = vunpack.c.l.b16 %v599
        %v3481 = vunpack.c.l.b16 %v600
        %v3482 = vunpack.c.l.b16 %v601
        %v3483 = vunpack.c.l.b16 %v602
        %v3484 = vunpack.c.l.b16 %v603
        %v3485 = vunpack.c.l.b16 %v604
        %v3486 = vunpack.c.l.b16 %v605
        %v3487 = vunpack.c.l.b16 %v606
        %v3488 = vunpack.c.l.b16 %v607
        %v3489 = vunpack.c.l.b16 %v608
        %v3490 = vunpack.c.l.b16 %v609
        %v3491 = vunpack.c.l.b16 %v610
        %v3492 = vunpack.c.l.b16 %v611
        %v3493 = vunpack.c.l.b16 %v612
        %v3494 = vunpack.c.l.b16 %v613
        %v3495 = vunpack.c.l.b16 %v614
        %v3496 = vunpack.c.l.b16 %v615
        %v3497 = vunpack.c.l.b16 %v616
        %v3498 = vunpack.c.l.b16 %v617
        %v3499 = vunpack.c.l.b16 %v618
        %v3500 = vunpack.c.l.b16 %v619
        %v3501 = vunpack.c.l.b16 %v620
        %v3502 = vunpack.c.l.b16 %v621
        %v3503 = vunpack.c.l.b16 %v622
        %v3504 = vunpack.c.l.b16 %v623
        %v3505 = vunpack.c.l.b16 %v624
        %v3506 = vunpack.c.l.b16 %v625
        %v3507 = vunpack.c.l.b16 %v626
        %v3508 = vunpack.c.l.b16 %v627
        %v3509 = vunpack.c.l.b16 %v628
        %v3510 = vunpack.c.l.b16 %v629
        %v3511 = vunpack.c.l.b16 %v630
        %v3512 = vunpack.c.l.b16 %v631
        %v3513 = vunpack.c.l.b16 %v632
        %v3514 = vunpack.c.l.b16 %v633
        %v3515 = vunpack.c.l.b16 %v634
        %v3516 = vunpack.c.l.b16 %v635
        %v3517 = vunpack.c.l.b16 %v636
        %v3518 = vunpack.c.l.b16 %v637
        %v3519 = vunpack.c.l.b16 %v638
        %v3520 = vunpack.c.l.b16 %v639
        %v3521 = vunpack.c.l.b16 %v640
        %v3522 = vunpack.c.l.b16 %v641
        %v3523 = vunpack.c.l.b16 %v642
        %v3524 = vunpack.c.l.b16 %v643
        %v3525 = vunpack.c.l.b16 %v644
        %v3526 = vunpack.c.l.b16 %v645
        %v3527 = vunpack.c.l.b16 %v646
        %v3528 = vunpack.c.l.b16 %v647
        %v3529 = vunpack.c.l.b16 %v648
        %v3530 = vunpack.c.l.b16 %v649
        %v3531 = vunpack.c.l.b16 %v650
        %v3532 = vunpack.c.l.b16 %v651
        %v3533 = vunpack.c.l.b16 %v652
        %v3534 = vunpack.c.l.b16 %v653
        %v3535 = vunpack.c.l.b16 %v654
        %v3536 = vunpack.c.l.b16 %v655
        %v3537 = vunpack.c.l.b16 %v656
        %v3538 = vunpack.c.l.b16 %v657
        %v3539 = vunpack.c.l.b16 %v658
        %v3540 = vunpack.c.l.b16 %v659
        %v3541 = vunpack.c.l.b16 %v660
        %v3542 = vunpack.c.l.b16 %v661
        %v3543 = vunpack.c.l.b16 %v662
        %v3544 = vunpack.c.l.b16 %v663
        %v3545 = vunpack.c.l.b16 %v664
        %v3546 = vunpack.c.l.b16 %v665
        %v3547 = vunpack.c.l.b16 %v666
        %v3548 = vunpack.c.l.b16 %v667
        %v3549 = vunpack.c.l.b16 %v668
        %v3550 = vunpack.c.l.b16 %v669
        %v3551 = vunpack.c.l.b16 %v670
        %v3552 = vunpack.c.l.b16 %v671
        %v3553 = vunpack.c.l.b16 %v672
        %v3554 = vunpack.c.l.b16 %v673
        %v3555 = vunpack.c.l.b16 %v674
        %v3556 = vunpack.c.l.b16 %v675
        %v3557 = vunpack.c.l.b16 %v676
        %v3558 = vunpack.c.l.b16 %v677
        %v3559 = vunpack.c.l.b16 %v678
        %v3560 = vunpack.c.l.b16 %v679
        %v3561 = vunpack.c.l.b16 %v680
        %v3562 = vunpack.c.l.b16 %v681
        %v3563 = vunpack.c.l.b16 %v682
        %v3564 = vunpack.c.l.b16 %v683
        %v3565 = vunpack.c.l.b16 %v684
        %v3566 = vunpack.c.l.b16 %v685
        %v3567 = vunpack.c.l.b16 %v686
        %v3568 = vunpack.c.l.b16 %v687
        %v3569 = vunpack.c.l.b16 %v688
        %v3570 = vunpack.c.l.b16 %v689
        %v3571 = vunpack.c.l.b16 %v690
        %v3572 = vunpack.c.l.b16 %v691
        %v3573 = vunpack.c.l.b16 %v692
        %v3574 = vunpack.c.l.b16 %v693
        %v3575 = vunpack.c.l.b16 %v694
        %v3576 = vunpack.c.l.b16 %v695
        %v3577 = vunpack.c.l.b16 %v696
        %v3578 = vunpack.c.l.b16 %v697
        %v3579 = vunpack.c.l.b16 %v698
        %v3580 = vunpack.c.l.b16 %v699
        %v3581 = vunpack.c.l.b16 %v700
        %v3582 = vunpack.c.l.b16 %v701
        %v3583 = vunpack.c.l.b16 %v702
        %v3584 = vunpack.c.l.b16 %v703
        %v3585 = vunpack.c.l.b16 %v704
        %v3586 = vunpack.c.l.b16 %v705
        %v3587 = vunpack.c.l.b16 %v706
        %v3588 = vunpack.c.l.b16 %v707
        %v3589 = vunpack.c.l.b16 %v708
        %v3590 = vunpack.c.l.b16 %v709
        %v3591 = vunpack.c.l.b16 %v710
        %v3592 = vunpack.c.l.b16 %v711
        %v3593 = vunpack.c.l.b16 %v712
        %v3594 = vunpack.c.l.b16 %v713
        %v3595 = vunpack.c.l.b16 %v714
        %v3596 = vunpack.c.l.b16 %v715
        %v3597 = vunpack.c.l.b16 %v716
        %v3598 = vunpack.c.l.b16 %v717
        %v3599 = vunpack.c.l.b16 %v718
        %v3600 = vunpack.c.l.b16 %v719
        %v3601 = vunpack.c.l.b16 %v720
        %v3602 = vunpack.c.l.b16 %v721
        %v3603 = vunpack.c.l.b16 %v722
        %v3604 = vunpack.c.l.b16 %v723
        %v3605 = vunpack.c.l.b16 %v724
        %v3606 = vunpack.c.l.b16 %v725
        %v3607 = vunpack.c.l.b16 %v726
        %v3608 = vunpack.c.l.b16 %v727
        %v3609 = vunpack.c.l.b16 %v728
        %v3610 = vunpack.c.l.b16 %v729
        %v3611 = vunpack.c.l.b16 %v730
        %v3612 = vunpack.c.l.b16 %v731
        %v3613 = vunpack.c.l.b16 %v732
        %v3614 = vunpack.c.l.b16 %v733
        %v3615 = vunpack.c.l.b16 %v734
        %v3616 = vunpack.c.l.b16 %v735
        %v3617 = vunpack.c.l.b16 %v736
        %v3618 = vunpack.c.l.b16 %v737
        %v3619 = vunpack.c.l.b16 %v738
        %v3620 = vunpack.c.l.b16 %v739
        %v3621 = vunpack.c.l.b16 %v740
        %v3622 = vunpack.c.l.b16 %v741
        %v3623 = vunpack.c.l.b16 %v742
        %v3624 = vunpack.c.l.b16 %v743
        %v3625 = vunpack.c.l.b16 %v744
        %v3626 = vunpack.c.l.b16 %v745
        %v3627 = vunpack.c.l.b16 %v746
        %v3628 = vunpack.c.l.b16 %v747
        %v3629 = vunpack.c.l.b16 %v748
        %v3630 = vunpack.c.l.b16 %v749
        %v3631 = vunpack.c.l.b16 %v750
        %v3632 = vunpack.c.l.b16 %v751
        %v3633 = vunpack.c.l.b16 %v752
        %v3634 = vunpack.c.l.b16 %v753
        %v3635 = vunpack.c.l.b16 %v754
        %v3636 = vunpack.c.l.b16 %v755
        %v3637 = vunpack.c.l.b16 %v756
        %v3638 = vunpack.c.l.b16 %v757
        %v3639 = vunpack.c.l.b16 %v758
        %v3640 = vunpack.c.l.b16 %v759
        %v3641 = vunpack.c.l.b16 %v760
        %v3642 = vunpack.c.l.b16 %v761
        %v3643 = vunpack.c.l.b16 %v762
        %v3644 = vunpack.c.l.b16 %v763
        %v3645 = vunpack.c.l.b16 %v764
        %v3646 = vunpack.c.l.b16 %v765
        %v3647 = vunpack.c.l.b16 %v766
        %v3648 = vunpack.c.l.b16 %v767
        %v3649 = vunpack.c.l.b16 %v768
        %v3650 = vunpack.c.l.b16 %v769
        %v3651 = vunpack.c.l.b16 %v770
        %v3652 = vunpack.c.l.b16 %v771
        %v3653 = vunpack.c.l.b16 %v772
        %v3654 = vunpack.c.l.b16 %v773
        %v3655 = vunpack.c.l.b16 %v774
        %v3656 = vunpack.c.l.b16 %v775
        %v3657 = vunpack.c.l.b16 %v776
        %v3658 = vunpack.c.l.b16 %v777
        %v3659 = vunpack.c.l.b16 %v778
        %v3660 = vunpack.c.l.b16 %v779
        %v3661 = vunpack.c.l.b16 %v780
        %v3662 = vunpack.c.l.b16 %v781
        %v3663 = vunpack.c.l.b16 %v782
        %v3664 = vunpack.c.l.b16 %v783
        %v3665 = vunpack.c.l.b16 %v784
        %v3666 = vunpack.c.l.b16 %v785
        %v3667 = vunpack.c.l.b16 %v786
        %v3668 = vunpack.c.l.b16 %v787
        %v3669 = vunpack.c.l.b16 %v788
        %v3670 = vunpack.c.l.b16 %v789
        %v3671 = vunpack.c.l.b16 %v790
        %v3672 = vunpack.c.l.b16 %v791
        %v3673 = vunpack.c.l.b16 %v792
        %v3674 = vunpack.c.l.b16 %v793
        %v3675 = vunpack.c.l.b16 %v794
        %v3676 = vunpack.c.l.b16 %v795
        %v3677 = vunpack.c.l.b16 %v796
        %v3678 = vunpack.c.l.b16 %v797
        %v3679 = vunpack.c.l.b16 %v798
        %v3680 = vunpack.c.l.b16 %v799
        %v3681 = vunpack.c.l.b16 %v800
        %v3682 = vunpack.c.l.b16 %v801
        %v3683 = vunpack.c.l.b16 %v802
        %v3684 = vunpack.c.l.b16 %v803
        %v3685 = vunpack.c.l.b16 %v804
        %v3686 = vunpack.c.l.b16 %v805
        %v3687 = vunpack.c.l.b16 %v806
        %v3688 = vunpack.c.l.b16 %v807
        %v3689 = vunpack.c.l.b16 %v808
        %v3690 = vunpack.c.l.b16 %v809
        %v3691 = vunpack.c.l.b16 %v810
        %v3692 = vunpack.c.l.b16 %v811
        %v3693 = vunpack.c.l.b16 %v812
        %v3694 = vunpack.c.l.b16 %v813
        %v3695 = vunpack.c.l.b16 %v814
        %v3696 = vunpack.c.l.b16 %v815
        %v3697 = vunpack.c.l.b16 %v816
        %v3698 = vunpack.c.l.b16 %v817
        %v3699 = vunpack.c.l.b16 %v818
        %v3700 = vunpack.c.l.b16 %v819
        %v3701 = vunpack.c.l.b16 %v820
        %v3702 = vunpack.c.l.b16 %v821
        %v3703 = vunpack.c.l.b16 %v822
        %v3704 = vunpack.c.l.b16 %v823
        %v3705 = vunpack.c.l.b16 %v824
        %v3706 = vunpack.c.l.b16 %v825
        %v3707 = vunpack.c.l.b16 %v826
        %v3708 = vunpack.c.l.b16 %v827
        %v3709 = vunpack.c.l.b16 %v828
        %v3710 = vunpack.c.l.b16 %v829
        %v3711 = vunpack.c.l.b16 %v830
        %v3712 = vunpack.c.l.b16 %v831
        %v3713 = vunpack.c.l.b16 %v832
        %v3714 = vunpack.c.l.b16 %v833
        %v3715 = vunpack.c.l.b16 %v834
        %v3716 = vunpack.c.l.b16 %v835
        %v3717 = vunpack.c.l.b16 %v836
        %v3718 = vunpack.c.l.b16 %v837
        %v3719 = vunpack.c.l.b16 %v838
        %v3720 = vunpack.c.l.b16 %v839
        %v3721 = vunpack.c.l.b16 %v840
        %v3722 = vunpack.c.l.b16 %v841
        %v3723 = vunpack.c.l.b16 %v842
        %v3724 = vunpack.c.l.b16 %v843
        %v3725 = vunpack.c.l.b16 %v844
        %v3726 = vunpack.c.l.b16 %v845
        %v3727 = vunpack.c.l.b16 %v846
        %v3728 = vunpack.c.l.b16 %v847
        %v3729 = vunpack.c.l.b16 %v848
        %v3730 = vunpack.c.l.b16 %v849
        %v3731 = vunpack.c.l.b16 %v850
        %v3732 = vunpack.c.l.b16 %v851
        %v3733 = vunpack.c.l.b16 %v852
        %v3734 = vunpack.c.l.b16 %v853
        %v3735 = vunpack.c.l.b16 %v854
        %v3736 = vunpack.c.l.b16 %v855
        %v3737 = vunpack.c.l.b16 %v856
        %v3738 = vunpack.c.l.b16 %v857
        %v3739 = vunpack.c.l.b16 %v858
        %v3740 = vunpack.c.l.b16 %v859
        %v3741 = vunpack.c.l.b16 %v860
        %v3742 = vunpack.c.l.b16 %v861
        %v3743 = vunpack.c.l.b16 %v862
        %v3744 = vunpack.c.l.b16 %v863
        %v3745 = vunpack.c.l.b16 %v864
        %v3746 = vunpack.c.l.b16 %v865
        %v3747 = vunpack.c.l.b16 %v866
        %v3748 = vunpack.c.l.b16 %v867
        %v3749 = vunpack.c.l.b16 %v868
        %v3750 = vunpack.c.l.b16 %v869
        %v3751 = vunpack.c.l.b16 %v870
        %v3752 = vunpack.c.l.b16 %v871
        %v3753 = vunpack.c.l.b16 %v872
        %v3754 = vunpack.c.l.b16 %v873
        %v3755 = vunpack.c.l.b16 %v874
        %v3756 = vunpack.c.l.b16 %v875
        %v3757 = vunpack.c.l.b16 %v876
        %v3758 = vunpack.c.l.b16 %v877
        %v3759 = vunpack.c.l.b16 %v878
        %v3760 = vunpack.c.l.b16 %v879
        %v3761 = vunpack.c.l.b16 %v880
        %v3762 = vunpack.c.l.b16 %v881
        %v3763 = vunpack.c.l.b16 %v882
        %v3764 = vunpack.c.l.b16 %v883
        %v3765 = vunpack.c.l.b16 %v884
        %v3766 = vunpack.c.l.b16 %v885
        %v3767 = vunpack.c.l.b16 %v886
        %v3768 = vunpack.c.l.b16 %v887
        %v3769 = vunpack.c.l.b16 %v888
        %v3770 = vunpack.c.l.b16 %v889
        %v3771 = vunpack.c.l.b16 %v890
        %v3772 = vunpack.c.l.b16 %v891
        %v3773 = vunpack.c.l.b16 %v892
        %v3774 = vunpack.c.l.b16 %v893
        %v3775 = vunpack.c.l.b16 %v894
        %v3776 = vunpack.c.l.b16 %v895
        %v3777 = vunpack.c.l.b16 %v896
        %v3778 = vunpack.c.l.b16 %v897
        %v3779 = vunpack.c.l.b16 %v898
        %v3780 = vunpack.c.l.b16 %v899
        %v3781 = vunpack.c.l.b16 %v900
        %v3782 = vunpack.c.l.b16 %v901
        %v3783 = vunpack.c.l.b16 %v902
        %v3784 = vunpack.c.l.b16 %v903
        %v3785 = vunpack.c.l.b16 %v904
        %v3786 = vunpack.c.l.b16 %v905
        %v3787 = vunpack.c.l.b16 %v906
        %v3788 = vunpack.c.l.b16 %v907
        %v3789 = vunpack.c.l.b16 %v908
        %v3790 = vunpack.c.l.b16 %v909
        %v3791 = vunpack.c.l.b16 %v910
        %v3792 = vunpack.c.l.b16 %v911
        %v3793 = vunpack.c.l.b16 %v912
        %v3794 = vunpack.c.l.b16 %v913
        %v3795 = vunpack.c.l.b16 %v914
        %v3796 = vunpack.c.l.b16 %v915
        %v3797 = vunpack.c.l.b16 %v916
        %v3798 = vunpack.c.l.b16 %v917
        %v3799 = vunpack.c.l.b16 %v918
        %v3800 = vunpack.c.l.b16 %v919
        %v3801 = vunpack.c.l.b16 %v920
        %v3802 = vunpack.c.l.b16 %v921
        %v3803 = vunpack.c.l.b16 %v922
        %v3804 = vunpack.c.l.b16 %v923
        %v3805 = vunpack.c.l.b16 %v924
        %v3806 = vunpack.c.l.b16 %v925
        %v3807 = vunpack.c.l.b16 %v926
        %v3808 = vunpack.c.l.b16 %v927
        %v3809 = vunpack.c.l.b16 %v928
        %v3810 = vunpack.c.l.b16 %v929
        %v3811 = vunpack.c.l.b16 %v930
        %v3812 = vunpack.c.l.b16 %v931
        %v3813 = vunpack.c.l.b16 %v932
        %v3814 = vunpack.c.l.b16 %v933
        %v3815 = vunpack.c.l.b16 %v934
        %v3816 = vunpack.c.l.b16 %v935
        %v3817 = vunpack.c.l.b16 %v936
        %v3818 = vunpack.c.l.b16 %v937
        %v3819 = vunpack.c.l.b16 %v938
        %v3820 = vunpack.c.l.b16 %v939
        %v3821 = vunpack.c.l.b16 %v940
        %v3822 = vunpack.c.l.b16 %v941
        %v3823 = vunpack.c.l.b16 %v942
        %v3824 = vunpack.c.l.b16 %v943
        %v3825 = vunpack.c.l.b16 %v944
        %v3826 = vunpack.c.l.b16 %v945
        %v3827 = vunpack.c.l.b16 %v946
        %v3828 = vunpack.c.l.b16 %v947
        %v3829 = vunpack.c.l.b16 %v948
        %v3830 = vunpack.c.l.b16 %v949
        %v3831 = vunpack.c.l.b16 %v950
        %v3832 = vunpack.c.l.b16 %v951
        %v3833 = vunpack.c.l.b16 %v952
        %v3834 = vunpack.c.l.b16 %v953
        %v3835 = vunpack.c.l.b16 %v954
        %v3836 = vunpack.c.l.b16 %v955
        %v3837 = vunpack.c.l.b16 %v956
        %v3838 = vunpack.c.l.b16 %v957
        %v3839 = vunpack.c.l.b16 %v958
        %v3840 = vunpack.c.l.b16 %v959
        %v3841 = vunpack.c.l.b16 %v960
        %v3842 = vunpack.c.l.b16 %v961
        %v3843 = vunpack.c.l.b16 %v962
        %v3844 = vunpack.c.l.b16 %v963
        %v3845 = vunpack.c.l.b16 %v964
        %v3846 = vunpack.c.l.b16 %v965
        %v3847 = vunpack.c.l.b16 %v966
        %v3848 = vunpack.c.l.b16 %v967
        %v3849 = vunpack.c.l.b16 %v968
        %v3850 = vunpack.c.l.b16 %v969
        %v3851 = vunpack.c.l.b16 %v970
        %v3852 = vunpack.c.l.b16 %v971
        %v3853 = vunpack.c.l.b16 %v972
        %v3854 = vunpack.c.l.b16 %v973
        %v3855 = vunpack.c.l.b16 %v974
        %v3856 = vunpack.c.l.b16 %v975
        %v3857 = vunpack.c.l.b16 %v976
        %v3858 = vunpack.c.l.b16 %v977
        %v3859 = vunpack.c.l.b16 %v978
        %v3860 = vunpack.c.l.b16 %v979
        %v3861 = vunpack.c.l.b16 %v980
        %v3862 = vunpack.c.l.b16 %v981
        %v3863 = vunpack.c.l.b16 %v982
        %v3864 = vunpack.c.l.b16 %v983
        %v3865 = vunpack.c.l.b16 %v984
        %v3866 = vunpack.c.l.b16 %v985
        %v3867 = vunpack.c.l.b16 %v986
        %v3868 = vunpack.c.l.b16 %v987
        %v3869 = vunpack.c.l.b16 %v988
        %v3870 = vunpack.c.l.b16 %v989
        %v3871 = vunpack.c.l.b16 %v990
        %v3872 = vunpack.c.l.b16 %v991
        %v3873 = vunpack.c.l.b16 %v992
        %v3874 = vunpack.c.l.b16 %v993
        %v3875 = vunpack.c.l.b16 %v994
        %v3876 = vunpack.c.l.b16 %v995
        %v3877 = vunpack.c.l.b16 %v996
        %v3878 = vunpack.c.l.b16 %v997
        %v3879 = vunpack.c.l.b16 %v998
        %v3880 = vunpack.c.l.b16 %v999
        %v3881 = vunpack.c.l.b16 %v1000
        %v3882 = vunpack.c.l.b16 %v1001
        %v3883 = vunpack.c.l.b16 %v1002
        %v3884 = vunpack.c.l.b16 %v1003
        %v3885 = vunpack.c.l.b16 %v1004
        %v3886 = vunpack.c.l.b16 %v1005
        %v3887 = vunpack.c.l.b16 %v1006
        %v3888 = vunpack.c.l.b16 %v1007
        %v3889 = vunpack.c.l.b16 %v1008
        %v3890 = vunpack.c.l.b16 %v1009
        %v3891 = vunpack.c.l.b16 %v1010
        %v3892 = vunpack.c.l.b16 %v1011
        %v3893 = vunpack.c.l.b16 %v1012
        %v3894 = vunpack.c.l.b16 %v1013
        %v3895 = vunpack.c.l.b16 %v1014
        %v3896 = vunpack.c.l.b16 %v1015
        %v3897 = vunpack.c.l.b16 %v1016
        %v3898 = vunpack.c.l.b16 %v1017
        %v3899 = vunpack.c.l.b16 %v1018
        %v3900 = vunpack.c.l.b16 %v1019
        %v3901 = vunpack.c.l.b16 %v1020
        %v3902 = vunpack.c.l.b16 %v1021
        %v3903 = vunpack.c.l.b16 %v1022
        %v3904 = vunpack.c.l.b16 %v1023
        %v3905 = vunpack.c.l.b16 %v1024
        %v3906 = vunpack.c.l.b16 %v1025
        %v3907 = vunpack.c.l.b16 %v1026
        %v3908 = vunpack.c.l.b16 %v1027
        %v3909 = vunpack.c.l.b16 %v1028
        %v3910 = vunpack.c.l.b16 %v1029
        %v3911 = vunpack.c.l.b16 %v1030
        %v3912 = vunpack.c.l.b16 %v1031
        %v3913 = vunpack.c.l.b16 %v1032
        %v3914 = vunpack.c.l.b16 %v1033
        %v3915 = vunpack.c.l.b16 %v1034
        %v3916 = vunpack.c.l.b16 %v1035
        %v3917 = vunpack.c.l.b16 %v1036
        %v3918 = vunpack.c.l.b16 %v1037
        %v3919 = vunpack.c.l.b16 %v1038
        %v3920 = vunpack.c.l.b16 %v1039
        %v3921 = vunpack.c.l.b16 %v1040
        %v3922 = vunpack.c.l.b16 %v1041
        %v3923 = vunpack.c.l.b16 %v1042
        %v3924 = vunpack.c.l.b16 %v1043
        %v3925 = vunpack.c.l.b16 %v1044
        %v3926 = vunpack.c.l.b16 %v1045
        %v3927 = vunpack.c.l.b16 %v1046
        %v3928 = vunpack.c.l.b16 %v1047
        %v3929 = vunpack.c.l.b16 %v1048
        %v3930 = vunpack.c.l.b16 %v1049
        %v3931 = vunpack.c.l.b16 %v1050
        %v3932 = vunpack.c.l.b16 %v1051
        %v3933 = vunpack.c.l.b16 %v1052
        %v3934 = vunpack.c.l.b16 %v1053
        %v3935 = vunpack.c.l.b16 %v1054
        %v3936 = vunpack.c.l.b16 %v1055
        %v3937 = vunpack.c.l.b16 %v1056
        %v3938 = vunpack.c.l.b16 %v1057
        %v3939 = vunpack.c.l.b16 %v1058
        %v3940 = vunpack.c.l.b16 %v1059
        %v3941 = vunpack.c.l.b16 %v1060
        %v3942 = vunpack.c.l.b16 %v1061
        %v3943 = vunpack.c.l.b16 %v1062
        %v3944 = vunpack.c.l.b16 %v1063
        %v3945 = vunpack.c.l.b16 %v1064
        %v3946 = vunpack.c.l.b16 %v1065
        %v3947 = vunpack.c.l.b16 %v1066
        %v3948 = vunpack.c.l.b16 %v1067
        %v3949 = vunpack.c.l.b16 %v1068
        %v3950 = vunpack.c.l.b16 %v1069
        %v3951 = vunpack.c.l.b16 %v1070
        %v3952 = vunpack.c.l.b16 %v1071
        %v3953 = vunpack.c.l.b16 %v1072
        %v3954 = vunpack.c.l.b16 %v1073
        %v3955 = vunpack.c.l.b16 %v1074
        %v3956 = vunpack.c.l.b16 %v1075
        %v3957 = vunpack.c.l.b16 %v1076
        %v3958 = vunpack.c.l.b16 %v1077
        %v3959 = vunpack.c.l.b16 %v1078
        %v3960 = vunpack.c.l.b16 %v1079
        %v3961 = vunpack.c.l.b16 %v1080
        %v3962 = vunpack.c.l.b16 %v1081
        %v3963 = vunpack.c.l.b16 %v1082
        %v3964 = vunpack.c.l.b16 %v1083
        %v3965 = vunpack.c.l.b16 %v1084
        %v3966 = vunpack.c.l.b16 %v1085
        %v3967 = vunpack.c.l.b16 %v1086
        %v3968 = vunpack.c.l.b16 %v1087
        %v3969 = vunpack.c.l.b16 %v1088
        %v3970 = vunpack.c.l.b16 %v1089
        %v3971 = vunpack.c.l.b16 %v1090
        %v3972 = vunpack.c.l.b16 %v1091
        %v3973 = vunpack.c.l.b16 %v1092
        %v3974 = vunpack.c.l.b16 %v1093
        %v3975 = vunpack.c.l.b16 %v1094
        %v3976 = vunpack.c.l.b16 %v1095
        %v3977 = vunpack.c.l.b16 %v1096
        %v3978 = vunpack.c.l.b16 %v1097
        %v3979 = vunpack.c.l.b16 %v1098
        %v3980 = vunpack.c.l.b16 %v1099
        %v3981 = vunpack.c.l.b16 %v1100
        %v3982 = vunpack.c.l.b16 %v1101
        %v3983 = vunpack.c.l.b16 %v1102
        %v3984 = vunpack.c.l.b16 %v1103
        %v3985 = vunpack.c.l.b16 %v1104
        %v3986 = vunpack.c.l.b16 %v1105
        %v3987 = vunpack.c.l.b16 %v1106
        %v3988 = vunpack.c.l.b16 %v1107
        %v3989 = vunpack.c.l.b16 %v1108
        %v3990 = vunpack.c.l.b16 %v1109
        %v3991 = vunpack.c.l.b16 %v1110
        %v3992 = vunpack.c.l.b16 %v1111
        %v3993 = vunpack.c.l.b16 %v1112
        %v3994 = vunpack.c.l.b16 %v1113
        %v3995 = vunpack.c.l.b16 %v1114
        %v3996 = vunpack.c.l.b16 %v1115
        %v3997 = vunpack.c.l.b16 %v1116
        %v3998 = vunpack.c.l.b16 %v1117
        %v3999 = vunpack.c.l.b16 %v1118
        %v4000 = vunpack.c.l.b16 %v1119
        %v4001 = vunpack.c.l.b16 %v1120
        %v4002 = vunpack.c.l.b16 %v1121
        %v4003 = vunpack.c.l.b16 %v1122
        %v4004 = vunpack.c.l.b16 %v1123
        %v4005 = vunpack.c.l.b16 %v1124
        %v4006 = vunpack.c.l.b16 %v1125
        %v4007 = vunpack.c.l.b16 %v1126
        %v4008 = vunpack.c.l.b16 %v1127
        %v4009 = vunpack.c.l.b16 %v1128
        %v4010 = vunpack.c.l.b16 %v1129
        %v4011 = vunpack.c.l.b16 %v1130
        %v4012 = vunpack.c.l.b16 %v1131
        %v4013 = vunpack.c.l.b16 %v1132
        %v4014 = vunpack.c.l.b16 %v1133
        %v4015 = vunpack.c.l.b16 %v1134
        %v4016 = vunpack.c.l.b16 %v1135
        %v4017 = vunpack.c.l.b16 %v1136
        %v4018 = vunpack.c.l.b16 %v1137
        %v4019 = vunpack.c.l.b16 %v1138
        %v4020 = vunpack.c.l.b16 %v1139
        %v4021 = vunpack.c.l.b16 %v1140
        %v4022 = vunpack.c.l.b16 %v1141
        %v4023 = vunpack.c.l.b16 %v1142
        %v4024 = vunpack.c.l.b16 %v1143
        %v4025 = vunpack.c.l.b16 %v1144
        %v4026 = vunpack.c.l.b16 %v1145
        %v4027 = vunpack.c.l.b16 %v1146
        %v4028 = vunpack.c.l.b16 %v1147
        %v4029 = vunpack.c.l.b16 %v1148
        %v4030 = vunpack.c.l.b16 %v1149
        %v4031 = vunpack.c.l.b16 %v1150
        %v4032 = vunpack.c.l.b16 %v1151
        %v4033 = vunpack.c.l.b16 %v1152
        %v4034 = vunpack.c.l.b16 %v1153
        %v4035 = vunpack.c.l.b16 %v1154
        %v4036 = vunpack.c.l.b16 %v1155
        %v4037 = vunpack.c.l.b16 %v1156
        %v4038 = vunpack.c.l.b16 %v1157
        %v4039 = vunpack.c.l.b16 %v1158
        %v4040 = vunpack.c.l.b16 %v1159
        %v4041 = vunpack.c.l.b16 %v1160
        %v4042 = vunpack.c.l.b16 %v1161
        %v4043 = vunpack.c.l.b16 %v1162
        %v4044 = vunpack.c.l.b16 %v1163
        %v4045 = vunpack.c.l.b16 %v1164
        %v4046 = vunpack.c.l.b16 %v1165
        %v4047 = vunpack.c.l.b16 %v1166
        %v4048 = vunpack.c.l.b16 %v1167
        %v4049 = vunpack.c.l.b16 %v1168
        %v4050 = vunpack.c.l.b16 %v1169
        %v4051 = vunpack.c.l.b16 %v1170
        %v4052 = vunpack.c.l.b16 %v1171
        %v4053 = vunpack.c.l.b16 %v1172
        %v4054 = vunpack.c.l.b16 %v1173
        %v4055 = vunpack.c.l.b16 %v1174
        %v4056 = vunpack.c.l.b16 %v1175
        %v4057 = vunpack.c.l.b16 %v1176
        %v4058 = vunpack.c.l.b16 %v1177
        %v4059 = vunpack.c.l.b16 %v1178
        %v4060 = vunpack.c.l.b16 %v1179
        %v4061 = vunpack.c.l.b16 %v1180
        %v4062 = vunpack.c.l.b16 %v1181
        %v4063 = vunpack.c.l.b16 %v1182
        %v4064 = vunpack.c.l.b16 %v1183
        %v4065 = vunpack.c.l.b16 %v1184
        %v4066 = vunpack.c.l.b16 %v1185
        %v4067 = vunpack.c.l.b16 %v1186
        %v4068 = vunpack.c.l.b16 %v1187
        %v4069 = vunpack.c.l.b16 %v1188
        %v4070 = vunpack.c.l.b16 %v1189
        %v4071 = vunpack.c.l.b16 %v1190
        %v4072 = vunpack.c.l.b16 %v1191
        %v4073 = vunpack.c.l.b16 %v1192
        %v4074 = vunpack.c.l.b16 %v1193
        %v4075 = vunpack.c.l.b16 %v1194
        %v4076 = vunpack.c.l.b16 %v1195
        %v4077 = vunpack.c.l.b16 %v1196
        %v4078 = vunpack.c.l.b16 %v1197
        %v4079 = vunpack.c.l.b16 %v1198
        %v4080 = vunpack.c.l.b16 %v1199
        %v4081 = vunpack.c.l.b16 %v1200
        %v4082 = vunpack.c.l.b16 %v1201
        %v4083 = vunpack.c.l.b16 %v1202
        %v4084 = vunpack.c.l.b16 %v1203
        %v4085 = vunpack.c.l.b16 %v1204
        %v4086 = vunpack.c.l.b16 %v1205
        %v4087 = vunpack.c.l.b16 %v1206
        %v4088 = vunpack.c.l.b16 %v1207
        %v4089 = vunpack.c.l.b16 %v1208
        %v4090 = vunpack.c.l.b16 %v1209
        %v4091 = vunpack.c.l.b16 %v1210
        %v4092 = vunpack.c.l.b16 %v1211
        %v4093 = vunpack.c.l.b16 %v1212
        %v4094 = vunpack.c.l.b16 %v1213
        %v4095 = vunpack.c.l.b16 %v1214
        %v4096 = vunpack.c.l.b16 %v1215
        %v4097 = vunpack.c.l.b16 %v1216
        %v4098 = vunpack.c.l.b16 %v1217
        %v4099 = vunpack.c.l.b16 %v1218
        %v4100 = vunpack.c.l.b16 %v1219
        %v4101 = vunpack.c.l.b16 %v1220
        %v4102 = vunpack.c.l.b16 %v1221
        %v4103 = vunpack.c.l.b16 %v1222
        %v4104 = vunpack.c.l.b16 %v1223
        %v4105 = vunpack.c.l.b16 %v1224
        %v4106 = vunpack.c.l.b16 %v1225
        %v4107 = vunpack.c.l.b16 %v1226
        %v4108 = vunpack.c.l.b16 %v1227
        %v4109 = vunpack.c.l.b16 %v1228
        %v4110 = vunpack.c.l.b16 %v1229
        %v4111 = vunpack.c.l.b16 %v1230
        %v4112 = vunpack.c.l.b16 %v1231
        %v4113 = vunpack.c.l.b16 %v1232
        %v4114 = vunpack.c.l.b16 %v1233
        %v4115 = vunpack.c.l.b16 %v1234
        %v4116 = vunpack.c.l.b16 %v1235
        %v4117 = vunpack.c.l.b16 %v1236
        %v4118 = vunpack.c.l.b16 %v1237
        %v4119 = vunpack.c.l.b16 %v1238
        %v4120 = vunpack.c.l.b16 %v1239
        %v4121 = vunpack.c.l.b16 %v1240
        %v4122 = vunpack.c.l.b16 %v1241
        %v4123 = vunpack.c.l.b16 %v1242
        %v4124 = vunpack.c.l.b16 %v1243
        %v4125 = vunpack.c.l.b16 %v1244
        %v4126 = vunpack.c.l.b16 %v1245
        %v4127 = vunpack.c.l.b16 %v1246
        %v4128 = vunpack.c.l.b16 %v1247
        %v4129 = vunpack.c.l.b16 %v1248
        %v4130 = vunpack.c.l.b16 %v1249
        %v4131 = vunpack.c.l.b16 %v1250
        %v4132 = vunpack.c.l.b16 %v1251
        %v4133 = vunpack.c.l.b16 %v1252
        %v4134 = vunpack.c.l.b16 %v1253
        %v4135 = vunpack.c.l.b16 %v1254
        %v4136 = vunpack.c.l.b16 %v1255
        %v4137 = vunpack.c.l.b16 %v1256
        %v4138 = vunpack.c.l.b16 %v1257
        %v4139 = vunpack.c.l.b16 %v1258
        %v4140 = vunpack.c.l.b16 %v1259
        %v4141 = vunpack.c.l.b16 %v1260
        %v4142 = vunpack.c.l.b16 %v1261
        %v4143 = vunpack.c.l.b16 %v1262
        %v4144 = vunpack.c.l.b16 %v1263
        %v4145 = vunpack.c.l.b16 %v1264
        %v4146 = vunpack.c.l.b16 %v1265
        %v4147 = vunpack.c.l.b16 %v1266
        %v4148 = vunpack.c.l.b16 %v1267
        %v4149 = vunpack.c.l.b16 %v1268
        %v4150 = vunpack.c.l.b16 %v1269
        %v4151 = vunpack.c.l.b16 %v1270
        %v4152 = vunpack.c.l.b16 %v1271
        %v4153 = vunpack.c.l.b16 %v1272
        %v4154 = vunpack.c.l.b16 %v1273
        %v4155 = vunpack.c.l.b16 %v1274
        %v4156 = vunpack.c.l.b16 %v1275
        %v4157 = vunpack.c.l.b16 %v1276
        %v4158 = vunpack.c.l.b16 %v1277
        %v4159 = vunpack.c.l.b16 %v1278
        %v4160 = vunpack.c.l.b16 %v1279
        %v4161 = vunpack.c.l.b16 %v1280
        %v4162 = vunpack.c.l.b16 %v1281
        %v4163 = vunpack.c.l.b16 %v1282
        %v4164 = vunpack.c.l.b16 %v1283
        %v4165 = vunpack.c.l.b16 %v1284
        %v4166 = vunpack.c.l.b16 %v1285
        %v4167 = vunpack.c.l.b16 %v1286
        %v4168 = vunpack.c.l.b16 %v1287
        %v4169 = vunpack.c.l.b16 %v1288
        %v4170 = vunpack.c.l.b16 %v1289
        %v4171 = vunpack.c.l.b16 %v1290
        %v4172 = vunpack.c.l.b16 %v1291
        %v4173 = vunpack.c.l.b16 %v1292
        %v4174 = vunpack.c.l.b16 %v1293
        %v4175 = vunpack.c.l.b16 %v1294
        %v4176 = vunpack.c.l.b16 %v1295
        %v4177 = vunpack.c.l.b16 %v1296
        %v4178 = vunpack.c.l.b16 %v1297
        %v4179 = vunpack.c.l.b16 %v1298
        %v4180 = vunpack.c.l.b16 %v1299
        %v4181 = vunpack.c.l.b16 %v1300
        %v4182 = vunpack.c.l.b16 %v1301
        %v4183 = vunpack.c.l.b16 %v1302
        %v4184 = vunpack.c.l.b16 %v1303
        %v4185 = vunpack.c.l.b16 %v1304
        %v4186 = vunpack.c.l.b16 %v1305
        %v4187 = vunpack.c.l.b16 %v1306
        %v4188 = vunpack.c.l.b16 %v1307
        %v4189 = vunpack.c.l.b16 %v1308
        %v4190 = vunpack.c.l.b16 %v1309
        %v4191 = vunpack.c.l.b16 %v1310
        %v4192 = vunpack.c.l.b16 %v1311
        %v4193 = vunpack.c.l.b16 %v1312
        %v4194 = vunpack.c.l.b16 %v1313
        %v4195 = vunpack.c.l.b16 %v1314
        %v4196 = vunpack.c.l.b16 %v1315
        %v4197 = vunpack.c.l.b16 %v1316
        %v4198 = vunpack.c.l.b16 %v1317
        %v4199 = vunpack.c.l.b16 %v1318
        %v4200 = vunpack.c.l.b16 %v1319
        %v4201 = vunpack.c.l.b16 %v1320
        %v4202 = vunpack.c.l.b16 %v1321
        %v4203 = vunpack.c.l.b16 %v1322
        %v4204 = vunpack.c.l.b16 %v1323
        %v4205 = vunpack.c.l.b16 %v1324
        %v4206 = vunpack.c.l.b16 %v1325
        %v4207 = vunpack.c.l.b16 %v1326
        %v4208 = vunpack.c.l.b16 %v1327
        %v4209 = vunpack.c.l.b16 %v1328
        %v4210 = vunpack.c.l.b16 %v1329
        %v4211 = vunpack.c.l.b16 %v1330
        %v4212 = vunpack.c.l.b16 %v1331
        %v4213 = vunpack.c.l.b16 %v1332
        %v4214 = vunpack.c.l.b16 %v1333
        %v4215 = vunpack.c.l.b16 %v1334
        %v4216 = vunpack.c.l.b16 %v1335
        %v4217 = vunpack.c.l.b16 %v1336
        %v4218 = vunpack.c.l.b16 %v1337
        %v4219 = vunpack.c.l.b16 %v1338
        %v4220 = vunpack.c.l.b16 %v1339
        %v4221 = vunpack.c.l.b16 %v1340
        %v4222 = vunpack.c.l.b16 %v1341
        %v4223 = vunpack.c.l.b16 %v1342
        %v4224 = vunpack.c.l.b16 %v1343
        %v4225 = vunpack.c.l.b16 %v1344
        %v4226 = vunpack.c.l.b16 %v1345
        %v4227 = vunpack.c.l.b16 %v1346
        %v4228 = vunpack.c.l.b16 %v1347
        %v4229 = vunpack.c.l.b16 %v1348
        %v4230 = vunpack.c.l.b16 %v1349
        %v4231 = vunpack.c.l.b16 %v1350
        %v4232 = vunpack.c.l.b16 %v1351
        %v4233 = vunpack.c.l.b16 %v1352
        %v4234 = vunpack.c.l.b16 %v1353
        %v4235 = vunpack.c.l.b16 %v1354
        %v4236 = vunpack.c.l.b16 %v1355
        %v4237 = vunpack.c.l.b16 %v1356
        %v4238 = vunpack.c.l.b16 %v1357
        %v4239 = vunpack.c.l.b16 %v1358
        %v4240 = vunpack.c.l.b16 %v1359
        %v4241 = vunpack.c.l.b16 %v1360
        %v4242 = vunpack.c.l.b16 %v1361
        %v4243 = vunpack.c.l.b16 %v1362
        %v4244 = vunpack.c.l.b16 %v1363
        %v4245 = vunpack.c.l.b16 %v1364
        %v4246 = vunpack.c.l.b16 %v1365
        %v4247 = vunpack.c.l.b16 %v1366
        %v4248 = vunpack.c.l.b16 %v1367
        %v4249 = vunpack.c.l.b16 %v1368
        %v4250 = vunpack.c.l.b16 %v1369
        %v4251 = vunpack.c.l.b16 %v1370
        %v4252 = vunpack.c.l.b16 %v1371
        %v4253 = vunpack.c.l.b16 %v1372
        %v4254 = vunpack.c.l.b16 %v1373
        %v4255 = vunpack.c.l.b16 %v1374
        %v4256 = vunpack.c.l.b16 %v1375
        %v4257 = vunpack.c.l.b16 %v1376
        %v4258 = vunpack.c.l.b16 %v1377
        %v4259 = vunpack.c.l.b16 %v1378
        %v4260 = vunpack.c.l.b16 %v1379
        %v4261 = vunpack.c.l.b16 %v1380
        %v4262 = vunpack.c.l.b16 %v1381
        %v4263 = vunpack.c.l.b16 %v1382
        %v4264 = vunpack.c.l.b16 %v1383
        %v4265 = vunpack.c.l.b16 %v1384
        %v4266 = vunpack.c.l.b16 %v1385
        %v4267 = vunpack.c.l.b16 %v1386
        %v4268 = vunpack.c.l.b16 %v1387
        %v4269 = vunpack.c.l.b16 %v1388
        %v4270 = vunpack.c.l.b16 %v1389
        %v4271 = vunpack.c.l.b16 %v1390
        %v4272 = vunpack.c.l.b16 %v1391
        %v4273 = vunpack.c.l.b16 %v1392
        %v4274 = vunpack.c.l.b16 %v1393
        %v4275 = vunpack.c.l.b16 %v1394
        %v4276 = vunpack.c.l.b16 %v1395
        %v4277 = vunpack.c.l.b16 %v1396
        %v4278 = vunpack.c.l.b16 %v1397
        %v4279 = vunpack.c.l.b16 %v1398
        %v4280 = vunpack.c.l.b16 %v1399
        %v4281 = vunpack.c.l.b16 %v1400
        %v4282 = vunpack.c.l.b16 %v1401
        %v4283 = vunpack.c.l.b16 %v1402
        %v4284 = vunpack.c.l.b16 %v1403
        %v4285 = vunpack.c.l.b16 %v1404
        %v4286 = vunpack.c.l.b16 %v1405
        %v4287 = vunpack.c.l.b16 %v1406
        %v4288 = vunpack.c.l.b16 %v1407
        %v4289 = vunpack.c.l.b16 %v1408
        %v4290 = vunpack.c.l.b16 %v1409
        %v4291 = vunpack.c.l.b16 %v1410
        %v4292 = vunpack.c.l.b16 %v1411
        %v4293 = vunpack.c.l.b16 %v1412
        %v4294 = vunpack.c.l.b16 %v1413
        %v4295 = vunpack.c.l.b16 %v1414
        %v4296 = vunpack.c.l.b16 %v1415
        %v4297 = vunpack.c.l.b16 %v1416
        %v4298 = vunpack.c.l.b16 %v1417
        %v4299 = vunpack.c.l.b16 %v1418
        %v4300 = vunpack.c.l.b16 %v1419
        %v4301 = vunpack.c.l.b16 %v1420
        %v4302 = vunpack.c.l.b16 %v1421
        %v4303 = vunpack.c.l.b16 %v1422
        %v4304 = vunpack.c.l.b16 %v1423
        %v4305 = vunpack.c.l.b16 %v1424
        %v4306 = vunpack.c.l.b16 %v1425
        %v4307 = vunpack.c.l.b16 %v1426
        %v4308 = vunpack.c.l.b16 %v1427
        %v4309 = vunpack.c.l.b16 %v1428
        %v4310 = vunpack.c.l.b16 %v1429
        %v4311 = vunpack.c.l.b16 %v1430
        %v4312 = vunpack.c.l.b16 %v1431
        %v4313 = vunpack.c.l.b16 %v1432
        %v4314 = vunpack.c.l.b16 %v1433
        %v4315 = vunpack.c.l.b16 %v1434
        %v4316 = vunpack.c.l.b16 %v1435
        %v4317 = vunpack.c.l.b16 %v1436
        %v4318 = vunpack.c.l.b16 %v1437
        %v4319 = vunpack.c.l.b16 %v1438
        %v4320 = vunpack.c.l.b16 %v1439
        %v4321 = vunpack.c.l.b16 %v1440
        %v4322 = vunpack.c.l.b16 %v1441
        %v4323 = vunpack.c.l.b16 %v1442
        %v4324 = vunpack.c.l.b16 %v1443
        %v4325 = vunpack.c.l.b16 %v1444
        %v4326 = vunpack.c.l.b16 %v1445
        %v4327 = vunpack.c.l.b16 %v1446
        %v4328 = vunpack.c.l.b16 %v1447
        %v4329 = vunpack.c.l.b16 %v1448
        %v4330 = vunpack.c.l.b16 %v1449
        %v4331 = vunpack.c.l.b16 %v1450
        %v4332 = vunpack.c.l.b16 %v1451
        %v4333 = vunpack.c.l.b16 %v1452
        %v4334 = vunpack.c.l.b16 %v1453
        %v4335 = vunpack.c.l.b16 %v1454
        %v4336 = vunpack.c.l.b16 %v1455
        %v4337 = vunpack.c.l.b16 %v1456
        %v4338 = vunpack.c.l.b16 %v1457
        %v4339 = vunpack.c.l.b16 %v1458
        %v4340 = vunpack.c.l.b16 %v1459
        %v4341 = vunpack.c.l.b16 %v1460
        %v4342 = vunpack.c.l.b16 %v1461
        %v4343 = vunpack.c.l.b16 %v1462
        %v4344 = vunpack.c.l.b16 %v1463
        %v4345 = vunpack.c.l.b16 %v1464
        %v4346 = vunpack.c.l.b16 %v1465
        %v4347 = vunpack.c.l.b16 %v1466
        %v4348 = vunpack.c.l.b16 %v1467
        %v4349 = vunpack.c.l.b16 %v1468
        %v4350 = vunpack.c.l.b16 %v1469
        %v4351 = vunpack.c.l.b16 %v1470
        %v4352 = vunpack.c.l.b16 %v1471
        %v4353 = vunpack.c.l.b16 %v1472
        %v4354 = vunpack.c.l.b16 %v1473
        %v4355 = vunpack.c.l.b16 %v1474
        %v4356 = vunpack.c.l.b16 %v1475
        %v4357 = vunpack.c.l.b16 %v1476
        %v4358 = vunpack.c.l.b16 %v1477
        %v4359 = vunpack.c.l.b16 %v1478
        %v4360 = vunpack.c.l.b16 %v1479
        %v4361 = vunpack.c.l.b16 %v1480
        %v4362 = vunpack.c.l.b16 %v1481
        %v4363 = vunpack.c.l.b16 %v1482
        %v4364 = vunpack.c.l.b16 %v1483
        %v4365 = vunpack.c.l.b16 %v1484
        %v4366 = vunpack.c.l.b16 %v1485
        %v4367 = vunpack.c.l.b16 %v1486
        %v4368 = vunpack.c.l.b16 %v1487
        %v4369 = vunpack.c.l.b16 %v1488
        %v4370 = vunpack.c.l.b16 %v1489
        %v4371 = vunpack.c.l.b16 %v1490
        %v4372 = vunpack.c.l.b16 %v1491
        %v4373 = vunpack.c.l.b16 %v1492
        %v4374 = vunpack.c.l.b16 %v1493
        %v4375 = vunpack.c.l.b16 %v1494
        %v4376 = vunpack.c.l.b16 %v1495
        %v4377 = vunpack.c.l.b16 %v1496
        %v4378 = vunpack.c.l.b16 %v1497
        %v4379 = vunpack.c.l.b16 %v1498
        %v4380 = vunpack.c.l.b16 %v1499
        %v4381 = vunpack.c.l.b16 %v1500
        %v4382 = vunpack.c.l.b16 %v1501
        %v4383 = vunpack.c.l.b16 %v1502
        %v4384 = vunpack.c.l.b16 %v1503
        %v4385 = vunpack.c.l.b16 %v1504
        %v4386 = vunpack.c.l.b16 %v1505
        %v4387 = vunpack.c.l.b16 %v1506
        %v4388 = vunpack.c.l.b16 %v1507
        %v4389 = vunpack.c.l.b16 %v1508
        %v4390 = vunpack.c.l.b16 %v1509
        %v4391 = vunpack.c.l.b16 %v1510
        %v4392 = vunpack.c.l.b16 %v1511
        %v4393 = vunpack.c.l.b16 %v1512
        %v4394 = vunpack.c.l.b16 %v1513
        %v4395 = vunpack.c.l.b16 %v1514
        %v4396 = vunpack.c.l.b16 %v1515
        %v4397 = vunpack.c.l.b16 %v1516
        %v4398 = vunpack.c.l.b16 %v1517
        %v4399 = vunpack.c.l.b16 %v1518
        %v4400 = vunpack.c.l.b16 %v1519
        %v4401 = vunpack.c.l.b16 %v1520
        %v4402 = vunpack.c.l.b16 %v1521
        %v4403 = vunpack.c.l.b16 %v1522
        %v4404 = vunpack.c.l.b16 %v1523
        %v4405 = vunpack.c.l.b16 %v1524
        %v4406 = vunpack.c.l.b16 %v1525
        %v4407 = vunpack.c.l.b16 %v1526
        %v4408 = vunpack.c.l.b16 %v1527
        %v4409 = vunpack.c.l.b16 %v1528
        %v4410 = vunpack.c.l.b16 %v1529
        %v4411 = vunpack.c.l.b16 %v1530
        %v4412 = vunpack.c.l.b16 %v1531
        %v4413 = vunpack.c.l.b16 %v1532
        %v4414 = vunpack.c.l.b16 %v1533
        %v4415 = vunpack.c.l.b16 %v1534
        %v4416 = vunpack.c.l.b16 %v1535
        %v4417 = vunpack.c.l.b16 %v1536
        %v4418 = vunpack.c.l.b16 %v1537
        %v4419 = vunpack.c.l.b16 %v1538
        %v4420 = vunpack.c.l.b16 %v1539
        %v4421 = vunpack.c.l.b16 %v1540
        %v4422 = vunpack.c.l.b16 %v1541
        %v4423 = vunpack.c.l.b16 %v1542
        %v4424 = vunpack.c.l.b16 %v1543
        %v4425 = vunpack.c.l.b16 %v1544
        %v4426 = vunpack.c.l.b16 %v1545
        %v4427 = vunpack.c.l.b16 %v1546
        %v4428 = vunpack.c.l.b16 %v1547
        %v4429 = vunpack.c.l.b16 %v1548
        %v4430 = vunpack.c.l.b16 %v1549
        %v4431 = vunpack.c.l.b16 %v1550
        %v4432 = vunpack.c.l.b16 %v1551
        %v4433 = vunpack.c.l.b16 %v1552
        %v4434 = vunpack.c.l.b16 %v1553
        %v4435 = vunpack.c.l.b16 %v1554
        %v4436 = vunpack.c.l.b16 %v1555
        %v4437 = vunpack.c.l.b16 %v1556
        %v4438 = vunpack.c.l.b16 %v1557
        %v4439 = vunpack.c.l.b16 %v1558
        %v4440 = vunpack.c.l.b16 %v1559
        %v4441 = vunpack.c.l.b16 %v1560
        %v4442 = vunpack.c.l.b16 %v1561
        %v4443 = vunpack.c.l.b16 %v1562
        %v4444 = vunpack.c.l.b16 %v1563
        %v4445 = vunpack.c.l.b16 %v1564
        %v4446 = vunpack.c.l.b16 %v1565
        %v4447 = vunpack.c.l.b16 %v1566
        %v4448 = vunpack.c.l.b16 %v1567
        %v4449 = vunpack.c.l.b16 %v1568
        %v4450 = vunpack.c.l.b16 %v1569
        %v4451 = vunpack.c.l.b16 %v1570
        %v4452 = vunpack.c.l.b16 %v1571
        %v4453 = vunpack.c.l.b16 %v1572
        %v4454 = vunpack.c.l.b16 %v1573
        %v4455 = vunpack.c.l.b16 %v1574
        %v4456 = vunpack.c.l.b16 %v1575
        %v4457 = vunpack.c.l.b16 %v1576
        %v4458 = vunpack.c.l.b16 %v1577
        %v4459 = vunpack.c.l.b16 %v1578
        %v4460 = vunpack.c.l.b16 %v1579
        %v4461 = vunpack.c.l.b16 %v1580
        %v4462 = vunpack.c.l.b16 %v1581
        %v4463 = vunpack.c.l.b16 %v1582
        %v4464 = vunpack.c.l.b16 %v1583
        %v4465 = vunpack.c.l.b16 %v1584
        %v4466 = vunpack.c.l.b16 %v1585
        %v4467 = vunpack.c.l.b16 %v1586
        %v4468 = vunpack.c.l.b16 %v1587
        %v4469 = vunpack.c.l.b16 %v1588
        %v4470 = vunpack.c.l.b16 %v1589
        %v4471 = vpack.c.b16 %v3192, %v3191
        %v4472 = vpack.c.b16 %v3194, %v3193
        %v4473 = vpack.c.b16 %v3196, %v3195
        %v4474 = vpack.c.b16 %v3198, %v3197
        %v4475 = vpack.c.b16 %v3200, %v3199
        %v4476 = vpack.c.b16 %v3202, %v3201
        %v4477 = vpack.c.b16 %v3204, %v3203
        %v4478 = vpack.c.b16 %v3206, %v3205
        %v4479 = vpack.c.b16 %v3208, %v3207
        %v4480 = vpack.c.b16 %v3210, %v3209
        %v4481 = vpack.c.b16 %v3212, %v3211
        %v4482 = vpack.c.b16 %v3214, %v3213
        %v4483 = vpack.c.b16 %v3216, %v3215
        %v4484 = vpack.c.b16 %v3218, %v3217
        %v4485 = vpack.c.b16 %v3220, %v3219
        %v4486 = vpack.c.b16 %v3222, %v3221
        %v4487 = vpack.c.b16 %v3224, %v3223
        %v4488 = vpack.c.b16 %v3226, %v3225
        %v4489 = vpack.c.b16 %v3228, %v3227
        %v4490 = vpack.c.b16 %v3230, %v3229
        %v4491 = vpack.c.b16 %v3232, %v3231
        %v4492 = vpack.c.b16 %v3234, %v3233
        %v4493 = vpack.c.b16 %v3236, %v3235
        %v4494 = vpack.c.b16 %v3238, %v3237
        %v4495 = vpack.c.b16 %v3240, %v3239
        %v4496 = vpack.c.b16 %v3242, %v3241
        %v4497 = vpack.c.b16 %v3244, %v3243
        %v4498 = vpack.c.b16 %v3246, %v3245
        %v4499 = vpack.c.b16 %v3248, %v3247
        %v4500 = vpack.c.b16 %v3250, %v3249
        %v4501 = vpack.c.b16 %v3252, %v3251
        %v4502 = vpack.c.b16 %v3254, %v3253
        %v4503 = vpack.c.b16 %v3256, %v3255
        %v4504 = vpack.c.b16 %v3258, %v3257
        %v4505 = vpack.c.b16 %v3260, %v3259
        %v4506 = vpack.c.b16 %v3262, %v3261
        %v4507 = vpack.c.b16 %v3264, %v3263
        %v4508 = vpack.c.b16 %v3266, %v3265
        %v4509 = vpack.c.b16 %v3268, %v3267
        %v4510 = vpack.c.b16 %v3270, %v3269
        %v4511 = vpack.c.b16 %v3272, %v3271
        %v4512 = vpack.c.b16 %v3274, %v3273
        %v4513 = vpack.c.b16 %v3276, %v3275
        %v4514 = vpack.c.b16 %v3278, %v3277
        %v4515 = vpack.c.b16 %v3280, %v3279
        %v4516 = vpack.c.b16 %v3282, %v3281
        %v4517 = vpack.c.b16 %v3284, %v3283
        %v4518 = vpack.c.b16 %v3286, %v3285
        %v4519 = vpack.c.b16 %v3288, %v3287
        %v4520 = vpack.c.b16 %v3290, %v3289
        %v4521 = vpack.c.b16 %v3292, %v3291
        %v4522 = vpack.c.b16 %v3294, %v3293
        %v4523 = vpack.c.b16 %v3296, %v3295
        %v4524 = vpack.c.b16 %v3298, %v3297
        %v4525 = vpack.c.b16 %v3300, %v3299
        %v4526 = vpack.c.b16 %v3302, %v3301
        %v4527 = vpack.c.b16 %v3304, %v3303
        %v4528 = vpack.c.b16 %v3306, %v3305
        %v4529 = vpack.c.b16 %v3308, %v3307
        %v4530 = vpack.c.b16 %v3310, %v3309
        %v4531 = vpack.c.b16 %v3312, %v3311
        %v4532 = vpack.c.b16 %v3314, %v3313
        %v4533 = vpack.c.b16 %v3316, %v3315
        %v4534 = vpack.c.b16 %v3318, %v3317
        %v4535 = vpack.c.b16 %v3320, %v3319
        %v4536 = vpack.c.b16 %v3322, %v3321
        %v4537 = vpack.c.b16 %v3324, %v3323
        %v4538 = vpack.c.b16 %v3326, %v3325
        %v4539 = vpack.c.b16 %v3328, %v3327
        %v4540 = vpack.c.b16 %v3330, %v3329
        %v4541 = vpack.c.b16 %v3332, %v3331
        %v4542 = vpack.c.b16 %v3334, %v3333
        %v4543 = vpack.c.b16 %v3336, %v3335
        %v4544 = vpack.c.b16 %v3338, %v3337
        %v4545 = vpack.c.b16 %v3340, %v3339
        %v4546 = vpack.c.b16 %v3342, %v3341
        %v4547 = vpack.c.b16 %v3344, %v3343
        %v4548 = vpack.c.b16 %v3346, %v3345
        %v4549 = vpack.c.b16 %v3348, %v3347
        %v4550 = vpack.c.b16 %v3350, %v3349
        %v4551 = vpack.c.b16 %v3352, %v3351
        %v4552 = vpack.c.b16 %v3354, %v3353
        %v4553 = vpack.c.b16 %v3356, %v3355
        %v4554 = vpack.c.b16 %v3358, %v3357
        %v4555 = vpack.c.b16 %v3360, %v3359
        %v4556 = vpack.c.b16 %v3362, %v3361
        %v4557 = vpack.c.b16 %v3364, %v3363
        %v4558 = vpack.c.b16 %v3366, %v3365
        %v4559 = vpack.c.b16 %v3368, %v3367
        %v4560 = vpack.c.b16 %v3370, %v3369
        %v4561 = vpack.c.b16 %v3372, %v3371
        %v4562 = vpack.c.b16 %v3374, %v3373
        %v4563 = vpack.c.b16 %v3376, %v3375
        %v4564 = vpack.c.b16 %v3378, %v3377
        %v4565 = vpack.c.b16 %v3380, %v3379
        %v4566 = vpack.c.b16 %v3382, %v3381
        %v4567 = vpack.c.b16 %v3384, %v3383
        %v4568 = vpack.c.b16 %v3386, %v3385
        %v4569 = vpack.c.b16 %v3388, %v3387
        %v4570 = vpack.c.b16 %v3390, %v3389
        %v4571 = vpack.c.b16 %v3392, %v3391
        %v4572 = vpack.c.b16 %v3394, %v3393
        %v4573 = vpack.c.b16 %v3396, %v3395
        %v4574 = vpack.c.b16 %v3398, %v3397
        %v4575 = vpack.c.b16 %v3400, %v3399
        %v4576 = vpack.c.b16 %v3402, %v3401
        %v4577 = vpack.c.b16 %v3404, %v3403
        %v4578 = vpack.c.b16 %v3406, %v3405
        %v4579 = vpack.c.b16 %v3408, %v3407
        %v4580 = vpack.c.b16 %v3410, %v3409
        %v4581 = vpack.c.b16 %v3412, %v3411
        %v4582 = vpack.c.b16 %v3414, %v3413
        %v4583 = vpack.c.b16 %v3416, %v3415
        %v4584 = vpack.c.b16 %v3418, %v3417
        %v4585 = vpack.c.b16 %v3420, %v3419
        %v4586 = vpack.c.b16 %v3422, %v3421
        %v4587 = vpack.c.b16 %v3424, %v3423
        %v4588 = vpack.c.b16 %v3426, %v3425
        %v4589 = vpack.c.b16 %v3428, %v3427
        %v4590 = vpack.c.b16 %v3430, %v3429
        %v4591 = vpack.c.b16 %v3432, %v3431
        %v4592 = vpack.c.b16 %v3434, %v3433
        %v4593 = vpack.c.b16 %v3436, %v3435
        %v4594 = vpack.c.b16 %v3438, %v3437
        %v4595 = vpack.c.b16 %v3440, %v3439
        %v4596 = vpack.c.b16 %v3442, %v3441
        %v4597 = vpack.c.b16 %v3444, %v3443
        %v4598 = vpack.c.b16 %v3446, %v3445
        %v4599 = vpack.c.b16 %v3448, %v3447
        %v4600 = vpack.c.b16 %v3450, %v3449
        %v4601 = vpack.c.b16 %v3452, %v3451
        %v4602 = vpack.c.b16 %v3454, %v3453
        %v4603 = vpack.c.b16 %v3456, %v3455
        %v4604 = vpack.c.b16 %v3458, %v3457
        %v4605 = vpack.c.b16 %v3460, %v3459
        %v4606 = vpack.c.b16 %v3462, %v3461
        %v4607 = vpack.c.b16 %v3464, %v3463
        %v4608 = vpack.c.b16 %v3466, %v3465
        %v4609 = vpack.c.b16 %v3468, %v3467
        %v4610 = vpack.c.b16 %v3470, %v3469
        %v4611 = vpack.c.b16 %v3472, %v3471
        %v4612 = vpack.c.b16 %v3474, %v3473
        %v4613 = vpack.c.b16 %v3476, %v3475
        %v4614 = vpack.c.b16 %v3478, %v3477
        %v4615 = vpack.c.b16 %v3480, %v3479
        %v4616 = vpack.c.b16 %v3482, %v3481
        %v4617 = vpack.c.b16 %v3484, %v3483
        %v4618 = vpack.c.b16 %v3486, %v3485
        %v4619 = vpack.c.b16 %v3488, %v3487
        %v4620 = vpack.c.b16 %v3490, %v3489
        %v4621 = vpack.c.b16 %v3492, %v3491
        %v4622 = vpack.c.b16 %v3494, %v3493
        %v4623 = vpack.c.b16 %v3496, %v3495
        %v4624 = vpack.c.b16 %v3498, %v3497
        %v4625 = vpack.c.b16 %v3500, %v3499
        %v4626 = vpack.c.b16 %v3502, %v3501
        %v4627 = vpack.c.b16 %v3504, %v3503
        %v4628 = vpack.c.b16 %v3506, %v3505
        %v4629 = vpack.c.b16 %v3508, %v3507
        %v4630 = vpack.c.b16 %v3510, %v3509
        %v4631 = vpack.c.b16 %v3512, %v3511
        %v4632 = vpack.c.b16 %v3514, %v3513
        %v4633 = vpack.c.b16 %v3516, %v3515
        %v4634 = vpack.c.b16 %v3518, %v3517
        %v4635 = vpack.c.b16 %v3520, %v3519
        %v4636 = vpack.c.b16 %v3522, %v3521
        %v4637 = vpack.c.b16 %v3524, %v3523
        %v4638 = vpack.c.b16 %v3526, %v3525
        %v4639 = vpack.c.b16 %v3528, %v3527
        %v4640 = vpack.c.b16 %v3530, %v3529
        %v4641 = vpack.c.b16 %v3532, %v3531
        %v4642 = vpack.c.b16 %v3534, %v3533
        %v4643 = vpack.c.b16 %v3536, %v3535
        %v4644 = vpack.c.b16 %v3538, %v3537
        %v4645 = vpack.c.b16 %v3540, %v3539
        %v4646 = vpack.c.b16 %v3542, %v3541
        %v4647 = vpack.c.b16 %v3544, %v3543
        %v4648 = vpack.c.b16 %v3546, %v3545
        %v4649 = vpack.c.b16 %v3548, %v3547
        %v4650 = vpack.c.b16 %v3550, %v3549
        %v4651 = vpack.c.b16 %v3552, %v3551
        %v4652 = vpack.c.b16 %v3554, %v3553
        %v4653 = vpack.c.b16 %v3556, %v3555
        %v4654 = vpack.c.b16 %v3558, %v3557
        %v4655 = vpack.c.b16 %v3560, %v3559
        %v4656 = vpack.c.b16 %v3562, %v3561
        %v4657 = vpack.c.b16 %v3564, %v3563
        %v4658 = vpack.c.b16 %v3566, %v3565
        %v4659 = vpack.c.b16 %v3568, %v3567
        %v4660 = vpack.c.b16 %v3570, %v3569
        %v4661 = vpack.c.b16 %v3572, %v3571
        %v4662 = vpack.c.b16 %v3574, %v3573
        %v4663 = vpack.c.b16 %v3576, %v3575
        %v4664 = vpack.c.b16 %v3578, %v3577
        %v4665 = vpack.c.b16 %v3580, %v3579
        %v4666 = vpack.c.b16 %v3582, %v3581
        %v4667 = vpack.c.b16 %v3584, %v3583
        %v4668 = vpack.c.b16 %v3586, %v3585
        %v4669 = vpack.c.b16 %v3588, %v3587
        %v4670 = vpack.c.b16 %v3590, %v3589
        %v4671 = vpack.c.b16 %v3592, %v3591
        %v4672 = vpack.c.b16 %v3594, %v3593
        %v4673 = vpack.c.b16 %v3596, %v3595
        %v4674 = vpack.c.b16 %v3598, %v3597
        %v4675 = vpack.c.b16 %v3600, %v3599
        %v4676 = vpack.c.b16 %v3602, %v3601
        %v4677 = vpack.c.b16 %v3604, %v3603
        %v4678 = vpack.c.b16 %v3606, %v3605
        %v4679 = vpack.c.b16 %v3608, %v3607
        %v4680 = vpack.c.b16 %v3610, %v3609
        %v4681 = vpack.c.b16 %v3612, %v3611
        %v4682 = vpack.c.b16 %v3614, %v3613
        %v4683 = vpack.c.b16 %v3616, %v3615
        %v4684 = vpack.c.b16 %v3618, %v3617
        %v4685 = vpack.c.b16 %v3620, %v3619
        %v4686 = vpack.c.b16 %v3622, %v3621
        %v4687 = vpack.c.b16 %v3624, %v3623
        %v4688 = vpack.c.b16 %v3626, %v3625
        %v4689 = vpack.c.b16 %v3628, %v3627
        %v4690 = vpack.c.b16 %v3630, %v3629
        %v4691 = vpack.c.b16 %v3632, %v3631
        %v4692 = vpack.c.b16 %v3634, %v3633
        %v4693 = vpack.c.b16 %v3636, %v3635
        %v4694 = vpack.c.b16 %v3638, %v3637
        %v4695 = vpack.c.b16 %v3640, %v3639
        %v4696 = vpack.c.b16 %v3642, %v3641
        %v4697 = vpack.c.b16 %v3644, %v3643
        %v4698 = vpack.c.b16 %v3646, %v3645
        %v4699 = vpack.c.b16 %v3648, %v3647
        %v4700 = vpack.c.b16 %v3650, %v3649
        %v4701 = vpack.c.b16 %v3652, %v3651
        %v4702 = vpack.c.b16 %v3654, %v3653
        %v4703 = vpack.c.b16 %v3656, %v3655
        %v4704 = vpack.c.b16 %v3658, %v3657
        %v4705 = vpack.c.b16 %v3660, %v3659
        %v4706 = vpack.c.b16 %v3662, %v3661
        %v4707 = vpack.c.b16 %v3664, %v3663
        %v4708 = vpack.c.b16 %v3666, %v3665
        %v4709 = vpack.c.b16 %v3668, %v3667
        %v4710 = vpack.c.b16 %v3670, %v3669
        %v4711 = vpack.c.b16 %v3672, %v3671
        %v4712 = vpack.c.b16 %v3674, %v3673
        %v4713 = vpack.c.b16 %v3676, %v3675
        %v4714 = vpack.c.b16 %v3678, %v3677
        %v4715 = vpack.c.b16 %v3680, %v3679
        %v4716 = vpack.c.b16 %v3682, %v3681
        %v4717 = vpack.c.b16 %v3684, %v3683
        %v4718 = vpack.c.b16 %v3686, %v3685
        %v4719 = vpack.c.b16 %v3688, %v3687
        %v4720 = vpack.c.b16 %v3690, %v3689
        %v4721 = vpack.c.b16 %v3692, %v3691
        %v4722 = vpack.c.b16 %v3694, %v3693
        %v4723 = vpack.c.b16 %v3696, %v3695
        %v4724 = vpack.c.b16 %v3698, %v3697
        %v4725 = vpack.c.b16 %v3700, %v3699
        %v4726 = vpack.c.b16 %v3702, %v3701
        %v4727 = vpack.c.b16 %v3704, %v3703
        %v4728 = vpack.c.b16 %v3706, %v3705
        %v4729 = vpack.c.b16 %v3708, %v3707
        %v4730 = vpack.c.b16 %v3710, %v3709
        %v4731 = vpack.c.b16 %v3712, %v3711
        %v4732 = vpack.c.b16 %v3714, %v3713
        %v4733 = vpack.c.b16 %v3716, %v3715
        %v4734 = vpack.c.b16 %v3718, %v3717
        %v4735 = vpack.c.b16 %v3720, %v3719
        %v4736 = vpack.c.b16 %v3722, %v3721
        %v4737 = vpack.c.b16 %v3724, %v3723
        %v4738 = vpack.c.b16 %v3726, %v3725
        %v4739 = vpack.c.b16 %v3728, %v3727
        %v4740 = vpack.c.b16 %v3730, %v3729
        %v4741 = vpack.c.b16 %v3732, %v3731
        %v4742 = vpack.c.b16 %v3734, %v3733
        %v4743 = vpack.c.b16 %v3736, %v3735
        %v4744 = vpack.c.b16 %v3738, %v3737
        %v4745 = vpack.c.b16 %v3740, %v3739
        %v4746 = vpack.c.b16 %v3742, %v3741
        %v4747 = vpack.c.b16 %v3744, %v3743
        %v4748 = vpack.c.b16 %v3746, %v3745
        %v4749 = vpack.c.b16 %v3748, %v3747
        %v4750 = vpack.c.b16 %v3750, %v3749
        %v4751 = vpack.c.b16 %v3752, %v3751
        %v4752 = vpack.c.b16 %v3754, %v3753
        %v4753 = vpack.c.b16 %v3756, %v3755
        %v4754 = vpack.c.b16 %v3758, %v3757
        %v4755 = vpack.c.b16 %v3760, %v3759
        %v4756 = vpack.c.b16 %v3762, %v3761
        %v4757 = vpack.c.b16 %v3764, %v3763
        %v4758 = vpack.c.b16 %v3766, %v3765
        %v4759 = vpack.c.b16 %v3768, %v3767
        %v4760 = vpack.c.b16 %v3770, %v3769
        %v4761 = vpack.c.b16 %v3772, %v3771
        %v4762 = vpack.c.b16 %v3774, %v3773
        %v4763 = vpack.c.b16 %v3776, %v3775
        %v4764 = vpack.c.b16 %v3778, %v3777
        %v4765 = vpack.c.b16 %v3780, %v3779
        %v4766 = vpack.c.b16 %v3782, %v3781
        %v4767 = vpack.c.b16 %v3784, %v3783
        %v4768 = vpack.c.b16 %v3786, %v3785
        %v4769 = vpack.c.b16 %v3788, %v3787
        %v4770 = vpack.c.b16 %v3790, %v3789
        %v4771 = vpack.c.b16 %v3792, %v3791
        %v4772 = vpack.c.b16 %v3794, %v3793
        %v4773 = vpack.c.b16 %v3796, %v3795
        %v4774 = vpack.c.b16 %v3798, %v3797
        %v4775 = vpack.c.b16 %v3800, %v3799
        %v4776 = vpack.c.b16 %v3802, %v3801
        %v4777 = vpack.c.b16 %v3804, %v3803
        %v4778 = vpack.c.b16 %v3806, %v3805
        %v4779 = vpack.c.b16 %v3808, %v3807
        %v4780 = vpack.c.b16 %v3810, %v3809
        %v4781 = vpack.c.b16 %v3812, %v3811
        %v4782 = vpack.c.b16 %v3814, %v3813
        %v4783 = vpack.c.b16 %v3816, %v3815
        %v4784 = vpack.c.b16 %v3818, %v3817
        %v4785 = vpack.c.b16 %v3820, %v3819
        %v4786 = vpack.c.b16 %v3822, %v3821
        %v4787 = vpack.c.b16 %v3824, %v3823
        %v4788 = vpack.c.b16 %v3826, %v3825
        %v4789 = vpack.c.b16 %v3828, %v3827
        %v4790 = vpack.c.b16 %v3830, %v3829
        %v4791 = vpack.c.b16 %v3832, %v3831
        %v4792 = vpack.c.b16 %v3834, %v3833
        %v4793 = vpack.c.b16 %v3836, %v3835
        %v4794 = vpack.c.b16 %v3838, %v3837
        %v4795 = vpack.c.b16 %v3840, %v3839
        %v4796 = vpack.c.b16 %v3842, %v3841
        %v4797 = vpack.c.b16 %v3844, %v3843
        %v4798 = vpack.c.b16 %v3846, %v3845
        %v4799 = vpack.c.b16 %v3848, %v3847
        %v4800 = vpack.c.b16 %v3850, %v3849
        %v4801 = vpack.c.b16 %v3852, %v3851
        %v4802 = vpack.c.b16 %v3854, %v3853
        %v4803 = vpack.c.b16 %v3856, %v3855
        %v4804 = vpack.c.b16 %v3858, %v3857
        %v4805 = vpack.c.b16 %v3860, %v3859
        %v4806 = vpack.c.b16 %v3862, %v3861
        %v4807 = vpack.c.b16 %v3864, %v3863
        %v4808 = vpack.c.b16 %v3866, %v3865
        %v4809 = vpack.c.b16 %v3868, %v3867
        %v4810 = vpack.c.b16 %v3870, %v3869
        %v4811 = vpack.c.b16 %v3872, %v3871
        %v4812 = vpack.c.b16 %v3874, %v3873
        %v4813 = vpack.c.b16 %v3876, %v3875
        %v4814 = vpack.c.b16 %v3878, %v3877
        %v4815 = vpack.c.b16 %v3880, %v3879
        %v4816 = vpack.c.b16 %v3882, %v3881
        %v4817 = vpack.c.b16 %v3884, %v3883
        %v4818 = vpack.c.b16 %v3886, %v3885
        %v4819 = vpack.c.b16 %v3888, %v3887
        %v4820 = vpack.c.b16 %v3890, %v3889
        %v4821 = vpack.c.b16 %v3892, %v3891
        %v4822 = vpack.c.b16 %v3894, %v3893
        %v4823 = vpack.c.b16 %v3896, %v3895
        %v4824 = vpack.c.b16 %v3898, %v3897
        %v4825 = vpack.c.b16 %v3900, %v3899
        %v4826 = vpack.c.b16 %v3902, %v3901
        %v4827 = vpack.c.b16 %v3904, %v3903
        %v4828 = vpack.c.b16 %v3906, %v3905
        %v4829 = vpack.c.b16 %v3908, %v3907
        %v4830 = vpack.c.b16 %v3910, %v3909
        %v4831 = vpack.c.b16 %v3912, %v3911
        %v4832 = vpack.c.b16 %v3914, %v3913
        %v4833 = vpack.c.b16 %v3916, %v3915
        %v4834 = vpack.c.b16 %v3918, %v3917
        %v4835 = vpack.c.b16 %v3920, %v3919
        %v4836 = vpack.c.b16 %v3922, %v3921
        %v4837 = vpack.c.b16 %v3924, %v3923
        %v4838 = vpack.c.b16 %v3926, %v3925
        %v4839 = vpack.c.b16 %v3928, %v3927
        %v4840 = vpack.c.b16 %v3930, %v3929
        %v4841 = vpack.c.b16 %v3932, %v3931
        %v4842 = vpack.c.b16 %v3934, %v3933
        %v4843 = vpack.c.b16 %v3936, %v3935
        %v4844 = vpack.c.b16 %v3938, %v3937
        %v4845 = vpack.c.b16 %v3940, %v3939
        %v4846 = vpack.c.b16 %v3942, %v3941
        %v4847 = vpack.c.b16 %v3944, %v3943
        %v4848 = vpack.c.b16 %v3946, %v3945
        %v4849 = vpack.c.b16 %v3948, %v3947
        %v4850 = vpack.c.b16 %v3950, %v3949
        %v4851 = vpack.c.b16 %v3952, %v3951
        %v4852 = vpack.c.b16 %v3954, %v3953
        %v4853 = vpack.c.b16 %v3956, %v3955
        %v4854 = vpack.c.b16 %v3958, %v3957
        %v4855 = vpack.c.b16 %v3960, %v3959
        %v4856 = vpack.c.b16 %v3962, %v3961
        %v4857 = vpack.c.b16 %v3964, %v3963
        %v4858 = vpack.c.b16 %v3966, %v3965
        %v4859 = vpack.c.b16 %v3968, %v3967
        %v4860 = vpack.c.b16 %v3970, %v3969
        %v4861 = vpack.c.b16 %v3972, %v3971
        %v4862 = vpack.c.b16 %v3974, %v3973
        %v4863 = vpack.c.b16 %v3976, %v3975
        %v4864 = vpack.c.b16 %v3978, %v3977
        %v4865 = vpack.c.b16 %v3980, %v3979
        %v4866 = vpack.c.b16 %v3982, %v3981
        %v4867 = vpack.c.b16 %v3984, %v3983
        %v4868 = vpack.c.b16 %v3986, %v3985
        %v4869 = vpack.c.b16 %v3988, %v3987
        %v4870 = vpack.c.b16 %v3990, %v3989
        %v4871 = vpack.c.b16 %v3992, %v3991
        %v4872 = vpack.c.b16 %v3994, %v3993
        %v4873 = vpack.c.b16 %v3996, %v3995
        %v4874 = vpack.c.b16 %v3998, %v3997
        %v4875 = vpack.c.b16 %v4000, %v3999
        %v4876 = vpack.c.b16 %v4002, %v4001
        %v4877 = vpack.c.b16 %v4004, %v4003
        %v4878 = vpack.c.b16 %v4006, %v4005
        %v4879 = vpack.c.b16 %v4008, %v4007
        %v4880 = vpack.c.b16 %v4010, %v4009
        %v4881 = vpack.c.b16 %v4012, %v4011
        %v4882 = vpack.c.b16 %v4014, %v4013
        %v4883 = vpack.c.b16 %v4016, %v4015
        %v4884 = vpack.c.b16 %v4018, %v4017
        %v4885 = vpack.c.b16 %v4020, %v4019
        %v4886 = vpack.c.b16 %v4022, %v4021
        %v4887 = vpack.c.b16 %v4024, %v4023
        %v4888 = vpack.c.b16 %v4026, %v4025
        %v4889 = vpack.c.b16 %v4028, %v4027
        %v4890 = vpack.c.b16 %v4030, %v4029
        %v4891 = vpack.c.b16 %v4032, %v4031
        %v4892 = vpack.c.b16 %v4034, %v4033
        %v4893 = vpack.c.b16 %v4036, %v4035
        %v4894 = vpack.c.b16 %v4038, %v4037
        %v4895 = vpack.c.b16 %v4040, %v4039
        %v4896 = vpack.c.b16 %v4042, %v4041
        %v4897 = vpack.c.b16 %v4044, %v4043
        %v4898 = vpack.c.b16 %v4046, %v4045
        %v4899 = vpack.c.b16 %v4048, %v4047
        %v4900 = vpack.c.b16 %v4050, %v4049
        %v4901 = vpack.c.b16 %v4052, %v4051
        %v4902 = vpack.c.b16 %v4054, %v4053
        %v4903 = vpack.c.b16 %v4056, %v4055
        %v4904 = vpack.c.b16 %v4058, %v4057
        %v4905 = vpack.c.b16 %v4060, %v4059
        %v4906 = vpack.c.b16 %v4062, %v4061
        %v4907 = vpack.c.b16 %v4064, %v4063
        %v4908 = vpack.c.b16 %v4066, %v4065
        %v4909 = vpack.c.b16 %v4068, %v4067
        %v4910 = vpack.c.b16 %v4070, %v4069
        %v4911 = vpack.c.b16 %v4072, %v4071
        %v4912 = vpack.c.b16 %v4074, %v4073
        %v4913 = vpack.c.b16 %v4076, %v4075
        %v4914 = vpack.c.b16 %v4078, %v4077
        %v4915 = vpack.c.b16 %v4080, %v4079
        %v4916 = vpack.c.b16 %v4082, %v4081
        %v4917 = vpack.c.b16 %v4084, %v4083
        %v4918 = vpack.c.b16 %v4086, %v4085
        %v4919 = vpack.c.b16 %v4088, %v4087
        %v4920 = vpack.c.b16 %v4090, %v4089
        %v4921 = vpack.c.b16 %v4092, %v4091
        %v4922 = vpack.c.b16 %v4094, %v4093
        %v4923 = vpack.c.b16 %v4096, %v4095
        %v4924 = vpack.c.b16 %v4098, %v4097
        %v4925 = vpack.c.b16 %v4100, %v4099
        %v4926 = vpack.c.b16 %v4102, %v4101
        %v4927 = vpack.c.b16 %v4104, %v4103
        %v4928 = vpack.c.b16 %v4106, %v4105
        %v4929 = vpack.c.b16 %v4108, %v4107
        %v4930 = vpack.c.b16 %v4110, %v4109
        %v4931 = vpack.c.b16 %v4112, %v4111
        %v4932 = vpack.c.b16 %v4114, %v4113
        %v4933 = vpack.c.b16 %v4116, %v4115
        %v4934 = vpack.c.b16 %v4118, %v4117
        %v4935 = vpack.c.b16 %v4120, %v4119
        %v4936 = vpack.c.b16 %v4122, %v4121
        %v4937 = vpack.c.b16 %v4124, %v4123
        %v4938 = vpack.c.b16 %v4126, %v4125
        %v4939 = vpack.c.b16 %v4128, %v4127
        %v4940 = vpack.c.b16 %v4130, %v4129
        %v4941 = vpack.c.b16 %v4132, %v4131
        %v4942 = vpack.c.b16 %v4134, %v4133
        %v4943 = vpack.c.b16 %v4136, %v4135
        %v4944 = vpack.c.b16 %v4138, %v4137
        %v4945 = vpack.c.b16 %v4140, %v4139
        %v4946 = vpack.c.b16 %v4142, %v4141
        %v4947 = vpack.c.b16 %v4144, %v4143
        %v4948 = vpack.c.b16 %v4146, %v4145
        %v4949 = vpack.c.b16 %v4148, %v4147
        %v4950 = vpack.c.b16 %v4150, %v4149
        %v4951 = vpack.c.b16 %v4152, %v4151
        %v4952 = vpack.c.b16 %v4154, %v4153
        %v4953 = vpack.c.b16 %v4156, %v4155
        %v4954 = vpack.c.b16 %v4158, %v4157
        %v4955 = vpack.c.b16 %v4160, %v4159
        %v4956 = vpack.c.b16 %v4162, %v4161
        %v4957 = vpack.c.b16 %v4164, %v4163
        %v4958 = vpack.c.b16 %v4166, %v4165
        %v4959 = vpack.c.b16 %v4168, %v4167
        %v4960 = vpack.c.b16 %v4170, %v4169
        %v4961 = vpack.c.b16 %v4172, %v4171
        %v4962 = vpack.c.b16 %v4174, %v4173
        %v4963 = vpack.c.b16 %v4176, %v4175
        %v4964 = vpack.c.b16 %v4178, %v4177
        %v4965 = vpack.c.b16 %v4180, %v4179
        %v4966 = vpack.c.b16 %v4182, %v4181
        %v4967 = vpack.c.b16 %v4184, %v4183
        %v4968 = vpack.c.b16 %v4186, %v4185
        %v4969 = vpack.c.b16 %v4188, %v4187
        %v4970 = vpack.c.b16 %v4190, %v4189
        %v4971 = vpack.c.b16 %v4192, %v4191
        %v4972 = vpack.c.b16 %v4194, %v4193
        %v4973 = vpack.c.b16 %v4196, %v4195
        %v4974 = vpack.c.b16 %v4198, %v4197
        %v4975 = vpack.c.b16 %v4200, %v4199
        %v4976 = vpack.c.b16 %v4202, %v4201
        %v4977 = vpack.c.b16 %v4204, %v4203
        %v4978 = vpack.c.b16 %v4206, %v4205
        %v4979 = vpack.c.b16 %v4208, %v4207
        %v4980 = vpack.c.b16 %v4210, %v4209
        %v4981 = vpack.c.b16 %v4212, %v4211
        %v4982 = vpack.c.b16 %v4214, %v4213
        %v4983 = vpack.c.b16 %v4216, %v4215
        %v4984 = vpack.c.b16 %v4218, %v4217
        %v4985 = vpack.c.b16 %v4220, %v4219
        %v4986 = vpack.c.b16 %v4222, %v4221
        %v4987 = vpack.c.b16 %v4224, %v4223
        %v4988 = vpack.c.b16 %v4226, %v4225
        %v4989 = vpack.c.b16 %v4228, %v4227
        %v4990 = vpack.c.b16 %v4230, %v4229
        %v4991 = vpack.c.b16 %v4232, %v4231
        %v4992 = vpack.c.b16 %v4234, %v4233
        %v4993 = vpack.c.b16 %v4236, %v4235
        %v4994 = vpack.c.b16 %v4238, %v4237
        %v4995 = vpack.c.b16 %v4240, %v4239
        %v4996 = vpack.c.b16 %v4242, %v4241
        %v4997 = vpack.c.b16 %v4244, %v4243
        %v4998 = vpack.c.b16 %v4246, %v4245
        %v4999 = vpack.c.b16 %v4248, %v4247
        %v5000 = vpack.c.b16 %v4250, %v4249
        %v5001 = vpack.c.b16 %v4252, %v4251
        %v5002 = vpack.c.b16 %v4254, %v4253
        %v5003 = vpack.c.b16 %v4256, %v4255
        %v5004 = vpack.c.b16 %v4258, %v4257
        %v5005 = vpack.c.b16 %v4260, %v4259
        %v5006 = vpack.c.b16 %v4262, %v4261
        %v5007 = vpack.c.b16 %v4264, %v4263
        %v5008 = vpack.c.b16 %v4266, %v4265
        %v5009 = vpack.c.b16 %v4268, %v4267
        %v5010 = vpack.c.b16 %v4270, %v4269
        %v5011 = vpack.c.b16 %v4272, %v4271
        %v5012 = vpack.c.b16 %v4274, %v4273
        %v5013 = vpack.c.b16 %v4276, %v4275
        %v5014 = vpack.c.b16 %v4278, %v4277
        %v5015 = vpack.c.b16 %v4280, %v4279
        %v5016 = vpack.c.b16 %v4282, %v4281
        %v5017 = vpack.c.b16 %v4284, %v4283
        %v5018 = vpack.c.b16 %v4286, %v4285
        %v5019 = vpack.c.b16 %v4288, %v4287
        %v5020 = vpack.c.b16 %v4290, %v4289
        %v5021 = vpack.c.b16 %v4292, %v4291
        %v5022 = vpack.c.b16 %v4294, %v4293
        %v5023 = vpack.c.b16 %v4296, %v4295
        %v5024 = vpack.c.b16 %v4298, %v4297
        %v5025 = vpack.c.b16 %v4300, %v4299
        %v5026 = vpack.c.b16 %v4302, %v4301
        %v5027 = vpack.c.b16 %v4304, %v4303
        %v5028 = vpack.c.b16 %v4306, %v4305
        %v5029 = vpack.c.b16 %v4308, %v4307
        %v5030 = vpack.c.b16 %v4310, %v4309
        %v5031 = vpack.c.b16 %v4312, %v4311
        %v5032 = vpack.c.b16 %v4314, %v4313
        %v5033 = vpack.c.b16 %v4316, %v4315
        %v5034 = vpack.c.b16 %v4318, %v4317
        %v5035 = vpack.c.b16 %v4320, %v4319
        %v5036 = vpack.c.b16 %v4322, %v4321
        %v5037 = vpack.c.b16 %v4324, %v4323
        %v5038 = vpack.c.b16 %v4326, %v4325
        %v5039 = vpack.c.b16 %v4328, %v4327
        %v5040 = vpack.c.b16 %v4330, %v4329
        %v5041 = vpack.c.b16 %v4332, %v4331
        %v5042 = vpack.c.b16 %v4334, %v4333
        %v5043 = vpack.c.b16 %v4336, %v4335
        %v5044 = vpack.c.b16 %v4338, %v4337
        %v5045 = vpack.c.b16 %v4340, %v4339
        %v5046 = vpack.c.b16 %v4342, %v4341
        %v5047 = vpack.c.b16 %v4344, %v4343
        %v5048 = vpack.c.b16 %v4346, %v4345
        %v5049 = vpack.c.b16 %v4348, %v4347
        %v5050 = vpack.c.b16 %v4350, %v4349
        %v5051 = vpack.c.b16 %v4352, %v4351
        %v5052 = vpack.c.b16 %v4354, %v4353
        %v5053 = vpack.c.b16 %v4356, %v4355
        %v5054 = vpack.c.b16 %v4358, %v4357
        %v5055 = vpack.c.b16 %v4360, %v4359
        %v5056 = vpack.c.b16 %v4362, %v4361
        %v5057 = vpack.c.b16 %v4364, %v4363
        %v5058 = vpack.c.b16 %v4366, %v4365
        %v5059 = vpack.c.b16 %v4368, %v4367
        %v5060 = vpack.c.b16 %v4370, %v4369
        %v5061 = vpack.c.b16 %v4372, %v4371
        %v5062 = vpack.c.b16 %v4374, %v4373
        %v5063 = vpack.c.b16 %v4376, %v4375
        %v5064 = vpack.c.b16 %v4378, %v4377
        %v5065 = vpack.c.b16 %v4380, %v4379
        %v5066 = vpack.c.b16 %v4382, %v4381
        %v5067 = vpack.c.b16 %v4384, %v4383
        %v5068 = vpack.c.b16 %v4386, %v4385
        %v5069 = vpack.c.b16 %v4388, %v4387
        %v5070 = vpack.c.b16 %v4390, %v4389
        %v5071 = vpack.c.b16 %v4392, %v4391
        %v5072 = vpack.c.b16 %v4394, %v4393
        %v5073 = vpack.c.b16 %v4396, %v4395
        %v5074 = vpack.c.b16 %v4398, %v4397
        %v5075 = vpack.c.b16 %v4400, %v4399
        %v5076 = vpack.c.b16 %v4402, %v4401
        %v5077 = vpack.c.b16 %v4404, %v4403
        %v5078 = vpack.c.b16 %v4406, %v4405
        %v5079 = vpack.c.b16 %v4408, %v4407
        %v5080 = vpack.c.b16 %v4410, %v4409
        %v5081 = vpack.c.b16 %v4412, %v4411
        %v5082 = vpack.c.b16 %v4414, %v4413
        %v5083 = vpack.c.b16 %v4416, %v4415
        %v5084 = vpack.c.b16 %v4418, %v4417
        %v5085 = vpack.c.b16 %v4420, %v4419
        %v5086 = vpack.c.b16 %v4422, %v4421
        %v5087 = vpack.c.b16 %v4424, %v4423
        %v5088 = vpack.c.b16 %v4426, %v4425
        %v5089 = vpack.c.b16 %v4428, %v4427
        %v5090 = vpack.c.b16 %v4430, %v4429
        %v5091 = vpack.c.b16 %v4432, %v4431
        %v5092 = vpack.c.b16 %v4434, %v4433
        %v5093 = vpack.c.b16 %v4436, %v4435
        %v5094 = vpack.c.b16 %v4438, %v4437
        %v5095 = vpack.c.b16 %v4440, %v4439
        %v5096 = vpack.c.b16 %v4442, %v4441
        %v5097 = vpack.c.b16 %v4444, %v4443
        %v5098 = vpack.c.b16 %v4446, %v4445
        %v5099 = vpack.c.b16 %v4448, %v4447
        %v5100 = vpack.c.b16 %v4450, %v4449
        %v5101 = vpack.c.b16 %v4452, %v4451
        %v5102 = vpack.c.b16 %v4454, %v4453
        %v5103 = vpack.c.b16 %v4456, %v4455
        %v5104 = vpack.c.b16 %v4458, %v4457
        %v5105 = vpack.c.b16 %v4460, %v4459
        %v5106 = vpack.c.b16 %v4462, %v4461
        %v5107 = vpack.c.b16 %v4464, %v4463
        %v5108 = vpack.c.b16 %v4466, %v4465
        %v5109 = vpack.c.b16 %v4468, %v4467
        %v5110 = vpack.c.b16 %v4470, %v4469
        %5751 = vmatprep.subr.bf16.mxu0 0
        %5752 = vmatpush1.bf16.msra.mxu0 %v4471
        %5753 = vmatprep.subr.bf16.mxu0 0
        %5754 = vmatpush1.bf16.msra.mxu0 %v4472
        %5755 = vmatprep.subr.bf16.mxu0 0
        %5756 = vmatpush1.bf16.msra.mxu0 %v4473
        %5757 = vmatprep.subr.bf16.mxu0 0
        %5758 = vmatpush1.bf16.msra.mxu0 %v4474
        %5759 = vmatprep.subr.bf16.mxu0 0
        %5760 = vmatpush1.bf16.msra.mxu0 %v4475
        %5761 = vmatprep.subr.bf16.mxu0 0
        %5762 = vmatpush1.bf16.msra.mxu0 %v4476
        %5763 = vmatprep.subr.bf16.mxu0 0
        %5764 = vmatpush1.bf16.msra.mxu0 %v4477
        %5765 = vmatprep.subr.bf16.mxu0 0
        %5766 = vmatpush1.bf16.msra.mxu0 %v4478
        %5767 = vmatprep.subr.bf16.mxu0 0
        %5768 = vmatpush1.bf16.msra.mxu0 %v4479
        %5769 = vmatprep.subr.bf16.mxu0 0
        %5770 = vmatpush1.bf16.msra.mxu0 %v4480
        %5771 = vmatprep.subr.bf16.mxu0 0
        %5772 = vmatpush1.bf16.msra.mxu0 %v4481
        %5773 = vmatprep.subr.bf16.mxu0 0
        %5774 = vmatpush1.bf16.msra.mxu0 %v4482
        %5775 = vmatprep.subr.bf16.mxu0 0
        %5776 = vmatpush1.bf16.msra.mxu0 %v4483
        %5777 = vmatprep.subr.bf16.mxu0 0
        %5778 = vmatpush1.bf16.msra.mxu0 %v4484
        %5779 = vmatprep.subr.bf16.mxu0 0
        %5780 = vmatpush1.bf16.msra.mxu0 %v4485
        %5781 = vmatprep.subr.bf16.mxu0 0
        %5782 = vmatpush1.bf16.msra.mxu0 %v4486
        %5783 = vmatprep.mubr.bf16.mxu0 %v1671
        %5784 = vmatmul.mubr.bf16.gmra.mrb[0].mxu0 %v1670
        %v5785 = vpop.f32.mrb[0].mxu0
        %v5786 = vadd.f32 0.0, %v5785
        %v5787 = vpop.f32.mrb[0].mxu0
        %v5788 = vpop.f32.mrb[0].mxu0
        %v5789 = vpop.f32.mrb[0].mxu0
        %5790 = vdwg.mxu0
        %5791 = vmatprep.subr.bf16.mxu0 0
        %5792 = vmatpush1.bf16.msra.mxu0 %v4487
        %5793 = vmatprep.subr.bf16.mxu0 0
        %5794 = vmatpush1.bf16.msra.mxu0 %v4488
        %5795 = vmatprep.subr.bf16.mxu0 0
        %5796 = vmatpush1.bf16.msra.mxu0 %v4489
        %5797 = vmatprep.subr.bf16.mxu0 0
        %5798 = vmatpush1.bf16.msra.mxu0 %v4490
        %5799 = vmatprep.subr.bf16.mxu0 0
        %5800 = vmatpush1.bf16.msra.mxu0 %v4491
        %5801 = vmatprep.subr.bf16.mxu0 0
        %5802 = vmatpush1.bf16.msra.mxu0 %v4492
        %5803 = vmatprep.subr.bf16.mxu0 0
        %5804 = vmatpush1.bf16.msra.mxu0 %v4493
        %5805 = vmatprep.subr.bf16.mxu0 0
        %5806 = vmatpush1.bf16.msra.mxu0 %v4494
        %5807 = vmatprep.subr.bf16.mxu0 0
        %5808 = vmatpush1.bf16.msra.mxu0 %v4495
        %5809 = vmatprep.subr.bf16.mxu0 0
        %5810 = vmatpush1.bf16.msra.mxu0 %v4496
        %5811 = vmatprep.subr.bf16.mxu0 0
        %5812 = vmatpush1.bf16.msra.mxu0 %v4497
        %5813 = vmatprep.subr.bf16.mxu0 0
        %5814 = vmatpush1.bf16.msra.mxu0 %v4498
        %5815 = vmatprep.subr.bf16.mxu0 0
        %5816 = vmatpush1.bf16.msra.mxu0 %v4499
        %5817 = vmatprep.subr.bf16.mxu0 0
        %5818 = vmatpush1.bf16.msra.mxu0 %v4500
        %5819 = vmatprep.subr.bf16.mxu0 0
        %5820 = vmatpush1.bf16.msra.mxu0 %v4501
        %5821 = vmatprep.subr.bf16.mxu0 0
        %5822 = vmatpush1.bf16.msra.mxu0 %v4502
        %5823 = vmatprep.mubr.bf16.mxu0 %v1673
        %5824 = vmatmul.mubr.bf16.gmra.mrb[0].mxu0 %v1672
        %v5825 = vpop.f32.mrb[0].mxu0
        %v5826 = vadd.f32 %v5786, %v5825
        %v5827 = vpop.f32.mrb[0].mxu0
        %v5828 = vpop.f32.mrb[0].mxu0
        %v5829 = vpop.f32.mrb[0].mxu0
        %5830 = vdwg.mxu0
        %5831 = vmatprep.subr.bf16.mxu0 0
        %5832 = vmatpush1.bf16.msra.mxu0 %v4503
        %5833 = vmatprep.subr.bf16.mxu0 0
        %5834 = vmatpush1.bf16.msra.mxu0 %v4504
        %5835 = vmatprep.subr.bf16.mxu0 0
        %5836 = vmatpush1.bf16.msra.mxu0 %v4505
        %5837 = vmatprep.subr.bf16.mxu0 0
        %5838 = vmatpush1.bf16.msra.mxu0 %v4506
        %5839 = vmatprep.subr.bf16.mxu0 0
        %5840 = vmatpush1.bf16.msra.mxu0 %v4507
        %5841 = vmatprep.subr.bf16.mxu0 0
        %5842 = vmatpush1.bf16.msra.mxu0 %v4508
        %5843 = vmatprep.subr.bf16.mxu0 0
        %5844 = vmatpush1.bf16.msra.mxu0 %v4509
        %5845 = vmatprep.subr.bf16.mxu0 0
        %5846 = vmatpush1.bf16.msra.mxu0 %v4510
        %5847 = vmatprep.subr.bf16.mxu0 0
        %5848 = vmatpush1.bf16.msra.mxu0 %v4511
        %5849 = vmatprep.subr.bf16.mxu0 0
        %5850 = vmatpush1.bf16.msra.mxu0 %v4512
        %5851 = vmatprep.subr.bf16.mxu0 0
        %5852 = vmatpush1.bf16.msra.mxu0 %v4513
        %5853 = vmatprep.subr.bf16.mxu0 0
        %5854 = vmatpush1.bf16.msra.mxu0 %v4514
        %5855 = vmatprep.subr.bf16.mxu0 0
        %5856 = vmatpush1.bf16.msra.mxu0 %v4515
        %5857 = vmatprep.subr.bf16.mxu0 0
        %5858 = vmatpush1.bf16.msra.mxu0 %v4516
        %5859 = vmatprep.subr.bf16.mxu0 0
        %5860 = vmatpush1.bf16.msra.mxu0 %v4517
        %5861 = vmatprep.subr.bf16.mxu0 0
        %5862 = vmatpush1.bf16.msra.mxu0 %v4518
        %5863 = vmatprep.mubr.bf16.mxu0 %v1675
        %5864 = vmatmul.mubr.bf16.gmra.mrb[0].mxu0 %v1674
        %v5865 = vpop.f32.mrb[0].mxu0
        %v5866 = vadd.f32 %v5826, %v5865
        %v5867 = vpop.f32.mrb[0].mxu0
        %v5868 = vpop.f32.mrb[0].mxu0
        %v5869 = vpop.f32.mrb[0].mxu0
        %5870 = vdwg.mxu0
        %5871 = vmatprep.subr.bf16.mxu0 0
        %5872 = vmatpush1.bf16.msra.mxu0 %v4519
        %5873 = vmatprep.subr.bf16.mxu0 0
        %5874 = vmatpush1.bf16.msra.mxu0 %v4520
        %5875 = vmatprep.subr.bf16.mxu0 0
        %5876 = vmatpush1.bf16.msra.mxu0 %v4521
        %5877 = vmatprep.subr.bf16.mxu0 0
        %5878 = vmatpush1.bf16.msra.mxu0 %v4522
        %5879 = vmatprep.subr.bf16.mxu0 0
        %5880 = vmatpush1.bf16.msra.mxu0 %v4523
        %5881 = vmatprep.subr.bf16.mxu0 0
        %5882 = vmatpush1.bf16.msra.mxu0 %v4524
        %5883 = vmatprep.subr.bf16.mxu0 0
        %5884 = vmatpush1.bf16.msra.mxu0 %v4525
        %5885 = vmatprep.subr.bf16.mxu0 0
        %5886 = vmatpush1.bf16.msra.mxu0 %v4526
        %5887 = vmatprep.subr.bf16.mxu0 0
        %5888 = vmatpush1.bf16.msra.mxu0 %v4527
        %5889 = vmatprep.subr.bf16.mxu0 0
        %5890 = vmatpush1.bf16.msra.mxu0 %v4528
        %5891 = vmatprep.subr.bf16.mxu0 0
        %5892 = vmatpush1.bf16.msra.mxu0 %v4529
        %5893 = vmatprep.subr.bf16.mxu0 0
        %5894 = vmatpush1.bf16.msra.mxu0 %v4530
        %5895 = vmatprep.subr.bf16.mxu0 0
        %5896 = vmatpush1.bf16.msra.mxu0 %v4531
        %5897 = vmatprep.subr.bf16.mxu0 0
        %5898 = vmatpush1.bf16.msra.mxu0 %v4532
        %5899 = vmatprep.subr.bf16.mxu0 0
        %5900 = vmatpush1.bf16.msra.mxu0 %v4533
        %5901 = vmatprep.subr.bf16.mxu0 0
        %5902 = vmatpush1.bf16.msra.mxu0 %v4534
        %5903 = vmatprep.mubr.bf16.mxu0 %v1677
        %5904 = vmatmul.mubr.bf16.gmra.mrb[0].mxu0 %v1676
        %v5905 = vpop.f32.mrb[0].mxu0
        %v5906 = vadd.f32 %v5866, %v5905
        %v5907 = vpop.f32.mrb[0].mxu0
        %v5908 = vpop.f32.mrb[0].mxu0
        %v5909 = vpop.f32.mrb[0].mxu0
        %5910 = vdwg.mxu0
        %5911 = vmatprep.subr.bf16.mxu0 0
        %5912 = vmatpush1.bf16.msra.mxu0 %v4535
        %5913 = vmatprep.subr.bf16.mxu0 0
        %5914 = vmatpush1.bf16.msra.mxu0 %v4536
        %5915 = vmatprep.subr.bf16.mxu0 0
        %5916 = vmatpush1.bf16.msra.mxu0 %v4537
        %5917 = vmatprep.subr.bf16.mxu0 0
        %5918 = vmatpush1.bf16.msra.mxu0 %v4538
        %5919 = vmatprep.subr.bf16.mxu0 0
        %5920 = vmatpush1.bf16.msra.mxu0 %v4539
        %5921 = vmatprep.subr.bf16.mxu0 0
        %5922 = vmatpush1.bf16.msra.mxu0 %v4540
        %5923 = vmatprep.subr.bf16.mxu0 0
        %5924 = vmatpush1.bf16.msra.mxu0 %v4541
        %5925 = vmatprep.subr.bf16.mxu0 0
        %5926 = vmatpush1.bf16.msra.mxu0 %v4542
        %5927 = vmatprep.subr.bf16.mxu0 0
        %5928 = vmatpush1.bf16.msra.mxu0 %v4543
        %5929 = vmatprep.subr.bf16.mxu0 0
        %5930 = vmatpush1.bf16.msra.mxu0 %v4544
        %5931 = vmatprep.subr.bf16.mxu0 0
        %5932 = vmatpush1.bf16.msra.mxu0 %v4545
        %5933 = vmatprep.subr.bf16.mxu0 0
        %5934 = vmatpush1.bf16.msra.mxu0 %v4546
        %5935 = vmatprep.subr.bf16.mxu0 0
        %5936 = vmatpush1.bf16.msra.mxu0 %v4547
        %5937 = vmatprep.subr.bf16.mxu0 0
        %5938 = vmatpush1.bf16.msra.mxu0 %v4548
        %5939 = vmatprep.subr.bf16.mxu0 0
        %5940 = vmatpush1.bf16.msra.mxu0 %v4549
        %5941 = vmatprep.subr.bf16.mxu0 0
        %5942 = vmatpush1.bf16.msra.mxu0 %v4550
        %5943 = vmatprep.mubr.bf16.mxu0 %v1679
        %5944 = vmatmul.mubr.bf16.gmra.mrb[0].mxu0 %v1678
        %v5945 = vpop.f32.mrb[0].mxu0
        %v5946 = vadd.f32 %v5906, %v5945
        %v5947 = vpop.f32.mrb[0].mxu0
        %v5948 = vpop.f32.mrb[0].mxu0
        %v5949 = vpop.f32.mrb[0].mxu0
        %5950 = vdwg.mxu0
        %5951 = vmatprep.subr.bf16.mxu0 0
        %5952 = vmatpush1.bf16.msra.mxu0 %v4551
        %5953 = vmatprep.subr.bf16.mxu0 0
        %5954 = vmatpush1.bf16.msra.mxu0 %v4552
        %5955 = vmatprep.subr.bf16.mxu0 0
        %5956 = vmatpush1.bf16.msra.mxu0 %v4553
        %5957 = vmatprep.subr.bf16.mxu0 0
        %5958 = vmatpush1.bf16.msra.mxu0 %v4554
        %5959 = vmatprep.subr.bf16.mxu0 0
        %5960 = vmatpush1.bf16.msra.mxu0 %v4555
        %5961 = vmatprep.subr.bf16.mxu0 0
        %5962 = vmatpush1.bf16.msra.mxu0 %v4556
        %5963 = vmatprep.subr.bf16.mxu0 0
        %5964 = vmatpush1.bf16.msra.mxu0 %v4557
        %5965 = vmatprep.subr.bf16.mxu0 0
        %5966 = vmatpush1.bf16.msra.mxu0 %v4558
        %5967 = vmatprep.subr.bf16.mxu0 0
        %5968 = vmatpush1.bf16.msra.mxu0 %v4559
        %5969 = vmatprep.subr.bf16.mxu0 0
        %5970 = vmatpush1.bf16.msra.mxu0 %v4560
        %5971 = vmatprep.subr.bf16.mxu0 0
        %5972 = vmatpush1.bf16.msra.mxu0 %v4561
        %5973 = vmatprep.subr.bf16.mxu0 0
        %5974 = vmatpush1.bf16.msra.mxu0 %v4562
        %5975 = vmatprep.subr.bf16.mxu0 0
        %5976 = vmatpush1.bf16.msra.mxu0 %v4563
        %5977 = vmatprep.subr.bf16.mxu0 0
        %5978 = vmatpush1.bf16.msra.mxu0 %v4564
        %5979 = vmatprep.subr.bf16.mxu0 0
        %5980 = vmatpush1.bf16.msra.mxu0 %v4565
        %5981 = vmatprep.subr.bf16.mxu0 0
        %5982 = vmatpush1.bf16.msra.mxu0 %v4566
        %5983 = vmatprep.mubr.bf16.mxu0 %v1681
        %5984 = vmatmul.mubr.bf16.gmra.mrb[0].mxu0 %v1680
        %v5985 = vpop.f32.mrb[0].mxu0
        %v5986 = vadd.f32 %v5946, %v5985
        %v5987 = vpop.f32.mrb[0].mxu0
        %v5988 = vpop.f32.mrb[0].mxu0
        %v5989 = vpop.f32.mrb[0].mxu0
        %5990 = vdwg.mxu0
        %5991 = vmatprep.subr.bf16.mxu0 0
        %5992 = vmatpush1.bf16.msra.mxu0 %v4567
        %5993 = vmatprep.subr.bf16.mxu0 0
        %5994 = vmatpush1.bf16.msra.mxu0 %v4568
        %5995 = vmatprep.subr.bf16.mxu0 0
        %5996 = vmatpush1.bf16.msra.mxu0 %v4569
        %5997 = vmatprep.subr.bf16.mxu0 0
        %5998 = vmatpush1.bf16.msra.mxu0 %v4570
        %5999 = vmatprep.subr.bf16.mxu0 0
        %6000 = vmatpush1.bf16.msra.mxu0 %v4571
        %6001 = vmatprep.subr.bf16.mxu0 0
        %6002 = vmatpush1.bf16.msra.mxu0 %v4572
        %6003 = vmatprep.subr.bf16.mxu0 0
        %6004 = vmatpush1.bf16.msra.mxu0 %v4573
        %6005 = vmatprep.subr.bf16.mxu0 0
        %6006 = vmatpush1.bf16.msra.mxu0 %v4574
        %6007 = vmatprep.subr.bf16.mxu0 0
        %6008 = vmatpush1.bf16.msra.mxu0 %v4575
        %6009 = vmatprep.subr.bf16.mxu0 0
        %6010 = vmatpush1.bf16.msra.mxu0 %v4576
        %6011 = vmatprep.subr.bf16.mxu0 0
        %6012 = vmatpush1.bf16.msra.mxu0 %v4577
        %6013 = vmatprep.subr.bf16.mxu0 0
        %6014 = vmatpush1.bf16.msra.mxu0 %v4578
        %6015 = vmatprep.subr.bf16.mxu0 0
        %6016 = vmatpush1.bf16.msra.mxu0 %v4579
        %6017 = vmatprep.subr.bf16.mxu0 0
        %6018 = vmatpush1.bf16.msra.mxu0 %v4580
        %6019 = vmatprep.subr.bf16.mxu0 0
        %6020 = vmatpush1.bf16.msra.mxu0 %v4581
        %6021 = vmatprep.subr.bf16.mxu0 0
        %6022 = vmatpush1.bf16.msra.mxu0 %v4582
        %6023 = vmatprep.mubr.bf16.mxu0 %v1683
        %6024 = vmatmul.mubr.bf16.gmra.mrb[0].mxu0 %v1682
        %v6025 = vpop.f32.mrb[0].mxu0
        %v6026 = vadd.f32 %v5986, %v6025
        %v6027 = vpop.f32.mrb[0].mxu0
        %v6028 = vpop.f32.mrb[0].mxu0
        %v6029 = vpop.f32.mrb[0].mxu0
        %6030 = vdwg.mxu0
        %6031 = vmatprep.subr.bf16.mxu0 0
        %6032 = vmatpush1.bf16.msra.mxu0 %v4583
        %6033 = vmatprep.subr.bf16.mxu0 0
        %6034 = vmatpush1.bf16.msra.mxu0 %v4584
        %6035 = vmatprep.subr.bf16.mxu0 0
        %6036 = vmatpush1.bf16.msra.mxu0 %v4585
        %6037 = vmatprep.subr.bf16.mxu0 0
        %6038 = vmatpush1.bf16.msra.mxu0 %v4586
        %6039 = vmatprep.subr.bf16.mxu0 0
        %6040 = vmatpush1.bf16.msra.mxu0 %v4587
        %6041 = vmatprep.subr.bf16.mxu0 0
        %6042 = vmatpush1.bf16.msra.mxu0 %v4588
        %6043 = vmatprep.subr.bf16.mxu0 0
        %6044 = vmatpush1.bf16.msra.mxu0 %v4589
        %6045 = vmatprep.subr.bf16.mxu0 0
        %6046 = vmatpush1.bf16.msra.mxu0 %v4590
        %6047 = vmatprep.subr.bf16.mxu0 0
        %6048 = vmatpush1.bf16.msra.mxu0 %v4591
        %6049 = vmatprep.subr.bf16.mxu0 0
        %6050 = vmatpush1.bf16.msra.mxu0 %v4592
        %6051 = vmatprep.subr.bf16.mxu0 0
        %6052 = vmatpush1.bf16.msra.mxu0 %v4593
        %6053 = vmatprep.subr.bf16.mxu0 0
        %6054 = vmatpush1.bf16.msra.mxu0 %v4594
        %6055 = vmatprep.subr.bf16.mxu0 0
        %6056 = vmatpush1.bf16.msra.mxu0 %v4595
        %6057 = vmatprep.subr.bf16.mxu0 0
        %6058 = vmatpush1.bf16.msra.mxu0 %v4596
        %6059 = vmatprep.subr.bf16.mxu0 0
        %6060 = vmatpush1.bf16.msra.mxu0 %v4597
        %6061 = vmatprep.subr.bf16.mxu0 0
        %6062 = vmatpush1.bf16.msra.mxu0 %v4598
        %6063 = vmatprep.mubr.bf16.mxu0 %v1685
        %6064 = vmatmul.mubr.bf16.gmra.mrb[0].mxu0 %v1684
        %v6065 = vpop.f32.mrb[0].mxu0
        %v6066 = vadd.f32 %v6026, %v6065
        %v6067 = vpop.f32.mrb[0].mxu0
        %v6068 = vpop.f32.mrb[0].mxu0
        %v6069 = vpop.f32.mrb[0].mxu0
        %6070 = vdwg.mxu0
        %6071 = vmatprep.subr.bf16.mxu0 0
        %6072 = vmatpush1.bf16.msra.mxu0 %v4599
        %6073 = vmatprep.subr.bf16.mxu0 0
        %6074 = vmatpush1.bf16.msra.mxu0 %v4600
        %6075 = vmatprep.subr.bf16.mxu0 0
        %6076 = vmatpush1.bf16.msra.mxu0 %v4601
        %6077 = vmatprep.subr.bf16.mxu0 0
        %6078 = vmatpush1.bf16.msra.mxu0 %v4602
        %6079 = vmatprep.subr.bf16.mxu0 0
        %6080 = vmatpush1.bf16.msra.mxu0 %v4603
        %6081 = vmatprep.subr.bf16.mxu0 0
        %6082 = vmatpush1.bf16.msra.mxu0 %v4604
        %6083 = vmatprep.subr.bf16.mxu0 0
        %6084 = vmatpush1.bf16.msra.mxu0 %v4605
        %6085 = vmatprep.subr.bf16.mxu0 0
        %6086 = vmatpush1.bf16.msra.mxu0 %v4606
        %6087 = vmatprep.subr.bf16.mxu0 0
        %6088 = vmatpush1.bf16.msra.mxu0 %v4607
        %6089 = vmatprep.subr.bf16.mxu0 0
        %6090 = vmatpush1.bf16.msra.mxu0 %v4608
        %6091 = vmatprep.subr.bf16.mxu0 0
        %6092 = vmatpush1.bf16.msra.mxu0 %v4609
        %6093 = vmatprep.subr.bf16.mxu0 0
        %6094 = vmatpush1.bf16.msra.mxu0 %v4610
        %6095 = vmatprep.subr.bf16.mxu0 0
        %6096 = vmatpush1.bf16.msra.mxu0 %v4611
        %6097 = vmatprep.subr.bf16.mxu0 0
        %6098 = vmatpush1.bf16.msra.mxu0 %v4612
        %6099 = vmatprep.subr.bf16.mxu0 0
        %6100 = vmatpush1.bf16.msra.mxu0 %v4613
        %6101 = vmatprep.subr.bf16.mxu0 0
        %6102 = vmatpush1.bf16.msra.mxu0 %v4614
        %6103 = vmatprep.mubr.bf16.mxu0 %v1687
        %6104 = vmatmul.mubr.bf16.gmra.mrb[0].mxu0 %v1686
        %v6105 = vpop.f32.mrb[0].mxu0
        %v6106 = vadd.f32 %v6066, %v6105
        %v6107 = vpop.f32.mrb[0].mxu0
        %v6108 = vpop.f32.mrb[0].mxu0
        %v6109 = vpop.f32.mrb[0].mxu0
        %6110 = vdwg.mxu0
        %6111 = vmatprep.subr.bf16.mxu0 0
        %6112 = vmatpush1.bf16.msra.mxu0 %v4615
        %6113 = vmatprep.subr.bf16.mxu0 0
        %6114 = vmatpush1.bf16.msra.mxu0 %v4616
        %6115 = vmatprep.subr.bf16.mxu0 0
        %6116 = vmatpush1.bf16.msra.mxu0 %v4617
        %6117 = vmatprep.subr.bf16.mxu0 0
        %6118 = vmatpush1.bf16.msra.mxu0 %v4618
        %6119 = vmatprep.subr.bf16.mxu0 0
        %6120 = vmatpush1.bf16.msra.mxu0 %v4619
        %6121 = vmatprep.subr.bf16.mxu0 0
        %6122 = vmatpush1.bf16.msra.mxu0 %v4620
        %6123 = vmatprep.subr.bf16.mxu0 0
        %6124 = vmatpush1.bf16.msra.mxu0 %v4621
        %6125 = vmatprep.subr.bf16.mxu0 0
        %6126 = vmatpush1.bf16.msra.mxu0 %v4622
        %6127 = vmatprep.subr.bf16.mxu0 0
        %6128 = vmatpush1.bf16.msra.mxu0 %v4623
        %6129 = vmatprep.subr.bf16.mxu0 0
        %6130 = vmatpush1.bf16.msra.mxu0 %v4624
        %6131 = vmatprep.subr.bf16.mxu0 0
        %6132 = vmatpush1.bf16.msra.mxu0 %v4625
        %6133 = vmatprep.subr.bf16.mxu0 0
        %6134 = vmatpush1.bf16.msra.mxu0 %v4626
        %6135 = vmatprep.subr.bf16.mxu0 0
        %6136 = vmatpush1.bf16.msra.mxu0 %v4627
        %6137 = vmatprep.subr.bf16.mxu0 0
        %6138 = vmatpush1.bf16.msra.mxu0 %v4628
        %6139 = vmatprep.subr.bf16.mxu0 0
        %6140 = vmatpush1.bf16.msra.mxu0 %v4629
        %6141 = vmatprep.subr.bf16.mxu0 0
        %6142 = vmatpush1.bf16.msra.mxu0 %v4630
        %6143 = vmatprep.mubr.bf16.mxu0 %v1689
        %6144 = vmatmul.mubr.bf16.gmra.mrb[0].mxu0 %v1688
        %v6145 = vpop.f32.mrb[0].mxu0
        %v6146 = vadd.f32 %v6106, %v6145
        %v6147 = vpop.f32.mrb[0].mxu0
        %v6148 = vpop.f32.mrb[0].mxu0
        %v6149 = vpop.f32.mrb[0].mxu0
        %6150 = vdwg.mxu0
        %6151 = vmatprep.subr.bf16.mxu0 0
        %6152 = vmatpush1.bf16.msra.mxu0 %v4631
        %6153 = vmatprep.subr.bf16.mxu0 0
        %6154 = vmatpush1.bf16.msra.mxu0 %v4632
        %6155 = vmatprep.subr.bf16.mxu0 0
        %6156 = vmatpush1.bf16.msra.mxu0 %v4633
        %6157 = vmatprep.subr.bf16.mxu0 0
        %6158 = vmatpush1.bf16.msra.mxu0 %v4634
        %6159 = vmatprep.subr.bf16.mxu0 0
        %6160 = vmatpush1.bf16.msra.mxu0 %v4635
        %6161 = vmatprep.subr.bf16.mxu0 0
        %6162 = vmatpush1.bf16.msra.mxu0 %v4636
        %6163 = vmatprep.subr.bf16.mxu0 0
        %6164 = vmatpush1.bf16.msra.mxu0 %v4637
        %6165 = vmatprep.subr.bf16.mxu0 0
        %6166 = vmatpush1.bf16.msra.mxu0 %v4638
        %6167 = vmatprep.subr.bf16.mxu0 0
        %6168 = vmatpush1.bf16.msra.mxu0 %v4639
        %6169 = vmatprep.subr.bf16.mxu0 0
        %6170 = vmatpush1.bf16.msra.mxu0 %v4640
        %6171 = vmatprep.subr.bf16.mxu0 0
        %6172 = vmatpush1.bf16.msra.mxu0 %v4641
        %6173 = vmatprep.subr.bf16.mxu0 0
        %6174 = vmatpush1.bf16.msra.mxu0 %v4642
        %6175 = vmatprep.subr.bf16.mxu0 0
        %6176 = vmatpush1.bf16.msra.mxu0 %v4643
        %6177 = vmatprep.subr.bf16.mxu0 0
        %6178 = vmatpush1.bf16.msra.mxu0 %v4644
        %6179 = vmatprep.subr.bf16.mxu0 0
        %6180 = vmatpush1.bf16.msra.mxu0 %v4645
        %6181 = vmatprep.subr.bf16.mxu0 0
        %6182 = vmatpush1.bf16.msra.mxu0 %v4646
        %6183 = vmatprep.mubr.bf16.mxu0 %v1691
        %6184 = vmatmul.mubr.bf16.gmra.mrb[0].mxu0 %v1690
        %v6185 = vpop.f32.mrb[0].mxu0
        %v6186 = vadd.f32 %v6146, %v6185
        %v6187 = vpop.f32.mrb[0].mxu0
        %v6188 = vpop.f32.mrb[0].mxu0
        %v6189 = vpop.f32.mrb[0].mxu0
        %6190 = vdwg.mxu0
        %6191 = vmatprep.subr.bf16.mxu0 0
        %6192 = vmatpush1.bf16.msra.mxu0 %v4647
        %6193 = vmatprep.subr.bf16.mxu0 0
        %6194 = vmatpush1.bf16.msra.mxu0 %v4648
        %6195 = vmatprep.subr.bf16.mxu0 0
        %6196 = vmatpush1.bf16.msra.mxu0 %v4649
        %6197 = vmatprep.subr.bf16.mxu0 0
        %6198 = vmatpush1.bf16.msra.mxu0 %v4650
        %6199 = vmatprep.subr.bf16.mxu0 0
        %6200 = vmatpush1.bf16.msra.mxu0 %v4651
        %6201 = vmatprep.subr.bf16.mxu0 0
        %6202 = vmatpush1.bf16.msra.mxu0 %v4652
        %6203 = vmatprep.subr.bf16.mxu0 0
        %6204 = vmatpush1.bf16.msra.mxu0 %v4653
        %6205 = vmatprep.subr.bf16.mxu0 0
        %6206 = vmatpush1.bf16.msra.mxu0 %v4654
        %6207 = vmatprep.subr.bf16.mxu0 0
        %6208 = vmatpush1.bf16.msra.mxu0 %v4655
        %6209 = vmatprep.subr.bf16.mxu0 0
        %6210 = vmatpush1.bf16.msra.mxu0 %v4656
        %6211 = vmatprep.subr.bf16.mxu0 0
        %6212 = vmatpush1.bf16.msra.mxu0 %v4657
        %6213 = vmatprep.subr.bf16.mxu0 0
        %6214 = vmatpush1.bf16.msra.mxu0 %v4658
        %6215 = vmatprep.subr.bf16.mxu0 0
        %6216 = vmatpush1.bf16.msra.mxu0 %v4659
        %6217 = vmatprep.subr.bf16.mxu0 0
        %6218 = vmatpush1.bf16.msra.mxu0 %v4660
        %6219 = vmatprep.subr.bf16.mxu0 0
        %6220 = vmatpush1.bf16.msra.mxu0 %v4661
        %6221 = vmatprep.subr.bf16.mxu0 0
        %6222 = vmatpush1.bf16.msra.mxu0 %v4662
        %6223 = vmatprep.mubr.bf16.mxu0 %v1693
        %6224 = vmatmul.mubr.bf16.gmra.mrb[0].mxu0 %v1692
        %v6225 = vpop.f32.mrb[0].mxu0
        %v6226 = vadd.f32 %v6186, %v6225
        %v6227 = vpop.f32.mrb[0].mxu0
        %v6228 = vpop.f32.mrb[0].mxu0
        %v6229 = vpop.f32.mrb[0].mxu0
        %6230 = vdwg.mxu0
        %6231 = vmatprep.subr.bf16.mxu0 0
        %6232 = vmatpush1.bf16.msra.mxu0 %v4663
        %6233 = vmatprep.subr.bf16.mxu0 0
        %6234 = vmatpush1.bf16.msra.mxu0 %v4664
        %6235 = vmatprep.subr.bf16.mxu0 0
        %6236 = vmatpush1.bf16.msra.mxu0 %v4665
        %6237 = vmatprep.subr.bf16.mxu0 0
        %6238 = vmatpush1.bf16.msra.mxu0 %v4666
        %6239 = vmatprep.subr.bf16.mxu0 0
        %6240 = vmatpush1.bf16.msra.mxu0 %v4667
        %6241 = vmatprep.subr.bf16.mxu0 0
        %6242 = vmatpush1.bf16.msra.mxu0 %v4668
        %6243 = vmatprep.subr.bf16.mxu0 0
        %6244 = vmatpush1.bf16.msra.mxu0 %v4669
        %6245 = vmatprep.subr.bf16.mxu0 0
        %6246 = vmatpush1.bf16.msra.mxu0 %v4670
        %6247 = vmatprep.subr.bf16.mxu0 0
        %6248 = vmatpush1.bf16.msra.mxu0 %v4671
        %6249 = vmatprep.subr.bf16.mxu0 0
        %6250 = vmatpush1.bf16.msra.mxu0 %v4672
        %6251 = vmatprep.subr.bf16.mxu0 0
        %6252 = vmatpush1.bf16.msra.mxu0 %v4673
        %6253 = vmatprep.subr.bf16.mxu0 0
        %6254 = vmatpush1.bf16.msra.mxu0 %v4674
        %6255 = vmatprep.subr.bf16.mxu0 0
        %6256 = vmatpush1.bf16.msra.mxu0 %v4675
        %6257 = vmatprep.subr.bf16.mxu0 0
        %6258 = vmatpush1.bf16.msra.mxu0 %v4676
        %6259 = vmatprep.subr.bf16.mxu0 0
        %6260 = vmatpush1.bf16.msra.mxu0 %v4677
        %6261 = vmatprep.subr.bf16.mxu0 0
        %6262 = vmatpush1.bf16.msra.mxu0 %v4678
        %6263 = vmatprep.mubr.bf16.mxu0 %v1695
        %6264 = vmatmul.mubr.bf16.gmra.mrb[0].mxu0 %v1694
        %v6265 = vpop.f32.mrb[0].mxu0
        %v6266 = vadd.f32 %v6226, %v6265
        %v6267 = vpop.f32.mrb[0].mxu0
        %v6268 = vpop.f32.mrb[0].mxu0
        %v6269 = vpop.f32.mrb[0].mxu0
        %6270 = vdwg.mxu0
        %6271 = vmatprep.subr.bf16.mxu0 0
        %6272 = vmatpush1.bf16.msra.mxu0 %v4679
        %6273 = vmatprep.subr.bf16.mxu0 0
        %6274 = vmatpush1.bf16.msra.mxu0 %v4680
        %6275 = vmatprep.subr.bf16.mxu0 0
        %6276 = vmatpush1.bf16.msra.mxu0 %v4681
        %6277 = vmatprep.subr.bf16.mxu0 0
        %6278 = vmatpush1.bf16.msra.mxu0 %v4682
        %6279 = vmatprep.subr.bf16.mxu0 0
        %6280 = vmatpush1.bf16.msra.mxu0 %v4683
        %6281 = vmatprep.subr.bf16.mxu0 0
        %6282 = vmatpush1.bf16.msra.mxu0 %v4684
        %6283 = vmatprep.subr.bf16.mxu0 0
        %6284 = vmatpush1.bf16.msra.mxu0 %v4685
        %6285 = vmatprep.subr.bf16.mxu0 0
        %6286 = vmatpush1.bf16.msra.mxu0 %v4686
        %6287 = vmatprep.subr.bf16.mxu0 0
        %6288 = vmatpush1.bf16.msra.mxu0 %v4687
        %6289 = vmatprep.subr.bf16.mxu0 0
        %6290 = vmatpush1.bf16.msra.mxu0 %v4688
        %6291 = vmatprep.subr.bf16.mxu0 0
        %6292 = vmatpush1.bf16.msra.mxu0 %v4689
        %6293 = vmatprep.subr.bf16.mxu0 0
        %6294 = vmatpush1.bf16.msra.mxu0 %v4690
        %6295 = vmatprep.subr.bf16.mxu0 0
        %6296 = vmatpush1.bf16.msra.mxu0 %v4691
        %6297 = vmatprep.subr.bf16.mxu0 0
        %6298 = vmatpush1.bf16.msra.mxu0 %v4692
        %6299 = vmatprep.subr.bf16.mxu0 0
        %6300 = vmatpush1.bf16.msra.mxu0 %v4693
        %6301 = vmatprep.subr.bf16.mxu0 0
        %6302 = vmatpush1.bf16.msra.mxu0 %v4694
        %6303 = vmatprep.mubr.bf16.mxu0 %v1697
        %6304 = vmatmul.mubr.bf16.gmra.mrb[0].mxu0 %v1696
        %v6305 = vpop.f32.mrb[0].mxu0
        %v6306 = vadd.f32 %v6266, %v6305
        %v6307 = vpop.f32.mrb[0].mxu0
        %v6308 = vpop.f32.mrb[0].mxu0
        %v6309 = vpop.f32.mrb[0].mxu0
        %6310 = vdwg.mxu0
        %6311 = vmatprep.subr.bf16.mxu0 0
        %6312 = vmatpush1.bf16.msra.mxu0 %v4695
        %6313 = vmatprep.subr.bf16.mxu0 0
        %6314 = vmatpush1.bf16.msra.mxu0 %v4696
        %6315 = vmatprep.subr.bf16.mxu0 0
        %6316 = vmatpush1.bf16.msra.mxu0 %v4697
        %6317 = vmatprep.subr.bf16.mxu0 0
        %6318 = vmatpush1.bf16.msra.mxu0 %v4698
        %6319 = vmatprep.subr.bf16.mxu0 0
        %6320 = vmatpush1.bf16.msra.mxu0 %v4699
        %6321 = vmatprep.subr.bf16.mxu0 0
        %6322 = vmatpush1.bf16.msra.mxu0 %v4700
        %6323 = vmatprep.subr.bf16.mxu0 0
        %6324 = vmatpush1.bf16.msra.mxu0 %v4701
        %6325 = vmatprep.subr.bf16.mxu0 0
        %6326 = vmatpush1.bf16.msra.mxu0 %v4702
        %6327 = vmatprep.subr.bf16.mxu0 0
        %6328 = vmatpush1.bf16.msra.mxu0 %v4703
        %6329 = vmatprep.subr.bf16.mxu0 0
        %6330 = vmatpush1.bf16.msra.mxu0 %v4704
        %6331 = vmatprep.subr.bf16.mxu0 0
        %6332 = vmatpush1.bf16.msra.mxu0 %v4705
        %6333 = vmatprep.subr.bf16.mxu0 0
        %6334 = vmatpush1.bf16.msra.mxu0 %v4706
        %6335 = vmatprep.subr.bf16.mxu0 0
        %6336 = vmatpush1.bf16.msra.mxu0 %v4707
        %6337 = vmatprep.subr.bf16.mxu0 0
        %6338 = vmatpush1.bf16.msra.mxu0 %v4708
        %6339 = vmatprep.subr.bf16.mxu0 0
        %6340 = vmatpush1.bf16.msra.mxu0 %v4709
        %6341 = vmatprep.subr.bf16.mxu0 0
        %6342 = vmatpush1.bf16.msra.mxu0 %v4710
        %6343 = vmatprep.mubr.bf16.mxu0 %v1699
        %6344 = vmatmul.mubr.bf16.gmra.mrb[0].mxu0 %v1698
        %v6345 = vpop.f32.mrb[0].mxu0
        %v6346 = vadd.f32 %v6306, %v6345
        %v6347 = vpop.f32.mrb[0].mxu0
        %v6348 = vpop.f32.mrb[0].mxu0
        %v6349 = vpop.f32.mrb[0].mxu0
        %6350 = vdwg.mxu0
        %6351 = vmatprep.subr.bf16.mxu0 0
        %6352 = vmatpush1.bf16.msra.mxu0 %v4711
        %6353 = vmatprep.subr.bf16.mxu0 0
        %6354 = vmatpush1.bf16.msra.mxu0 %v4712
        %6355 = vmatprep.subr.bf16.mxu0 0
        %6356 = vmatpush1.bf16.msra.mxu0 %v4713
        %6357 = vmatprep.subr.bf16.mxu0 0
        %6358 = vmatpush1.bf16.msra.mxu0 %v4714
        %6359 = vmatprep.subr.bf16.mxu0 0
        %6360 = vmatpush1.bf16.msra.mxu0 %v4715
        %6361 = vmatprep.subr.bf16.mxu0 0
        %6362 = vmatpush1.bf16.msra.mxu0 %v4716
        %6363 = vmatprep.subr.bf16.mxu0 0
        %6364 = vmatpush1.bf16.msra.mxu0 %v4717
        %6365 = vmatprep.subr.bf16.mxu0 0
        %6366 = vmatpush1.bf16.msra.mxu0 %v4718
        %6367 = vmatprep.subr.bf16.mxu0 0
        %6368 = vmatpush1.bf16.msra.mxu0 %v4719
        %6369 = vmatprep.subr.bf16.mxu0 0
        %6370 = vmatpush1.bf16.msra.mxu0 %v4720
        %6371 = vmatprep.subr.bf16.mxu0 0
        %6372 = vmatpush1.bf16.msra.mxu0 %v4721
        %6373 = vmatprep.subr.bf16.mxu0 0
        %6374 = vmatpush1.bf16.msra.mxu0 %v4722
        %6375 = vmatprep.subr.bf16.mxu0 0
        %6376 = vmatpush1.bf16.msra.mxu0 %v4723
        %6377 = vmatprep.subr.bf16.mxu0 0
        %6378 = vmatpush1.bf16.msra.mxu0 %v4724
        %6379 = vmatprep.subr.bf16.mxu0 0
        %6380 = vmatpush1.bf16.msra.mxu0 %v4725
        %6381 = vmatprep.subr.bf16.mxu0 0
        %6382 = vmatpush1.bf16.msra.mxu0 %v4726
        %6383 = vmatprep.mubr.bf16.mxu0 %v1701
        %6384 = vmatmul.mubr.bf16.gmra.mrb[0].mxu0 %v1700
        %v6385 = vpop.f32.mrb[0].mxu0
        %v6386 = vadd.f32 %v6346, %v6385
        %v6387 = vpop.f32.mrb[0].mxu0
        %v6388 = vpop.f32.mrb[0].mxu0
        %v6389 = vpop.f32.mrb[0].mxu0
        %6390 = vdwg.mxu0
        %6391 = vmatprep.subr.bf16.mxu0 0
        %6392 = vmatpush1.bf16.msra.mxu0 %v4727
        %6393 = vmatprep.subr.bf16.mxu0 0
        %6394 = vmatpush1.bf16.msra.mxu0 %v4728
        %6395 = vmatprep.subr.bf16.mxu0 0
        %6396 = vmatpush1.bf16.msra.mxu0 %v4729
        %6397 = vmatprep.subr.bf16.mxu0 0
        %6398 = vmatpush1.bf16.msra.mxu0 %v4730
        %6399 = vmatprep.subr.bf16.mxu0 0
        %6400 = vmatpush1.bf16.msra.mxu0 %v4731
        %6401 = vmatprep.subr.bf16.mxu0 0
        %6402 = vmatpush1.bf16.msra.mxu0 %v4732
        %6403 = vmatprep.subr.bf16.mxu0 0
        %6404 = vmatpush1.bf16.msra.mxu0 %v4733
        %6405 = vmatprep.subr.bf16.mxu0 0
        %6406 = vmatpush1.bf16.msra.mxu0 %v4734
        %6407 = vmatprep.subr.bf16.mxu0 0
        %6408 = vmatpush1.bf16.msra.mxu0 %v4735
        %6409 = vmatprep.subr.bf16.mxu0 0
        %6410 = vmatpush1.bf16.msra.mxu0 %v4736
        %6411 = vmatprep.subr.bf16.mxu0 0
        %6412 = vmatpush1.bf16.msra.mxu0 %v4737
        %6413 = vmatprep.subr.bf16.mxu0 0
        %6414 = vmatpush1.bf16.msra.mxu0 %v4738
        %6415 = vmatprep.subr.bf16.mxu0 0
        %6416 = vmatpush1.bf16.msra.mxu0 %v4739
        %6417 = vmatprep.subr.bf16.mxu0 0
        %6418 = vmatpush1.bf16.msra.mxu0 %v4740
        %6419 = vmatprep.subr.bf16.mxu0 0
        %6420 = vmatpush1.bf16.msra.mxu0 %v4741
        %6421 = vmatprep.subr.bf16.mxu0 0
        %6422 = vmatpush1.bf16.msra.mxu0 %v4742
        %6423 = vmatprep.mubr.bf16.mxu0 %v1703
        %6424 = vmatmul.mubr.bf16.gmra.mrb[0].mxu0 %v1702
        %v6425 = vpop.f32.mrb[0].mxu0
        %v6426 = vadd.f32 %v6386, %v6425
        %v6427 = vpop.f32.mrb[0].mxu0
        %v6428 = vpop.f32.mrb[0].mxu0
        %v6429 = vpop.f32.mrb[0].mxu0
        %6430 = vdwg.mxu0
        %6431 = vmatprep.subr.bf16.mxu0 0
        %6432 = vmatpush1.bf16.msra.mxu0 %v4743
        %6433 = vmatprep.subr.bf16.mxu0 0
        %6434 = vmatpush1.bf16.msra.mxu0 %v4744
        %6435 = vmatprep.subr.bf16.mxu0 0
        %6436 = vmatpush1.bf16.msra.mxu0 %v4745
        %6437 = vmatprep.subr.bf16.mxu0 0
        %6438 = vmatpush1.bf16.msra.mxu0 %v4746
        %6439 = vmatprep.subr.bf16.mxu0 0
        %6440 = vmatpush1.bf16.msra.mxu0 %v4747
        %6441 = vmatprep.subr.bf16.mxu0 0
        %6442 = vmatpush1.bf16.msra.mxu0 %v4748
        %6443 = vmatprep.subr.bf16.mxu0 0
        %6444 = vmatpush1.bf16.msra.mxu0 %v4749
        %6445 = vmatprep.subr.bf16.mxu0 0
        %6446 = vmatpush1.bf16.msra.mxu0 %v4750
        %6447 = vmatprep.subr.bf16.mxu0 0
        %6448 = vmatpush1.bf16.msra.mxu0 %v4751
        %6449 = vmatprep.subr.bf16.mxu0 0
        %6450 = vmatpush1.bf16.msra.mxu0 %v4752
        %6451 = vmatprep.subr.bf16.mxu0 0
        %6452 = vmatpush1.bf16.msra.mxu0 %v4753
        %6453 = vmatprep.subr.bf16.mxu0 0
        %6454 = vmatpush1.bf16.msra.mxu0 %v4754
        %6455 = vmatprep.subr.bf16.mxu0 0
        %6456 = vmatpush1.bf16.msra.mxu0 %v4755
        %6457 = vmatprep.subr.bf16.mxu0 0
        %6458 = vmatpush1.bf16.msra.mxu0 %v4756
        %6459 = vmatprep.subr.bf16.mxu0 0
        %6460 = vmatpush1.bf16.msra.mxu0 %v4757
        %6461 = vmatprep.subr.bf16.mxu0 0
        %6462 = vmatpush1.bf16.msra.mxu0 %v4758
        %6463 = vmatprep.mubr.bf16.mxu0 %v1705
        %6464 = vmatmul.mubr.bf16.gmra.mrb[0].mxu0 %v1704
        %v6465 = vpop.f32.mrb[0].mxu0
        %v6466 = vadd.f32 %v6426, %v6465
        %v6467 = vpop.f32.mrb[0].mxu0
        %v6468 = vpop.f32.mrb[0].mxu0
        %v6469 = vpop.f32.mrb[0].mxu0
        %6470 = vdwg.mxu0
        %6471 = vmatprep.subr.bf16.mxu0 0
        %6472 = vmatpush1.bf16.msra.mxu0 %v4759
        %6473 = vmatprep.subr.bf16.mxu0 0
        %6474 = vmatpush1.bf16.msra.mxu0 %v4760
        %6475 = vmatprep.subr.bf16.mxu0 0
        %6476 = vmatpush1.bf16.msra.mxu0 %v4761
        %6477 = vmatprep.subr.bf16.mxu0 0
        %6478 = vmatpush1.bf16.msra.mxu0 %v4762
        %6479 = vmatprep.subr.bf16.mxu0 0
        %6480 = vmatpush1.bf16.msra.mxu0 %v4763
        %6481 = vmatprep.subr.bf16.mxu0 0
        %6482 = vmatpush1.bf16.msra.mxu0 %v4764
        %6483 = vmatprep.subr.bf16.mxu0 0
        %6484 = vmatpush1.bf16.msra.mxu0 %v4765
        %6485 = vmatprep.subr.bf16.mxu0 0
        %6486 = vmatpush1.bf16.msra.mxu0 %v4766
        %6487 = vmatprep.subr.bf16.mxu0 0
        %6488 = vmatpush1.bf16.msra.mxu0 %v4767
        %6489 = vmatprep.subr.bf16.mxu0 0
        %6490 = vmatpush1.bf16.msra.mxu0 %v4768
        %6491 = vmatprep.subr.bf16.mxu0 0
        %6492 = vmatpush1.bf16.msra.mxu0 %v4769
        %6493 = vmatprep.subr.bf16.mxu0 0
        %6494 = vmatpush1.bf16.msra.mxu0 %v4770
        %6495 = vmatprep.subr.bf16.mxu0 0
        %6496 = vmatpush1.bf16.msra.mxu0 %v4771
        %6497 = vmatprep.subr.bf16.mxu0 0
        %6498 = vmatpush1.bf16.msra.mxu0 %v4772
        %6499 = vmatprep.subr.bf16.mxu0 0
        %6500 = vmatpush1.bf16.msra.mxu0 %v4773
        %6501 = vmatprep.subr.bf16.mxu0 0
        %6502 = vmatpush1.bf16.msra.mxu0 %v4774
        %6503 = vmatprep.mubr.bf16.mxu0 %v1707
        %6504 = vmatmul.mubr.bf16.gmra.mrb[0].mxu0 %v1706
        %v6505 = vpop.f32.mrb[0].mxu0
        %v6506 = vadd.f32 %v6466, %v6505
        %v6507 = vpop.f32.mrb[0].mxu0
        %v6508 = vpop.f32.mrb[0].mxu0
        %v6509 = vpop.f32.mrb[0].mxu0
        %6510 = vdwg.mxu0
        %6511 = vmatprep.subr.bf16.mxu0 0
        %6512 = vmatpush1.bf16.msra.mxu0 %v4775
        %6513 = vmatprep.subr.bf16.mxu0 0
        %6514 = vmatpush1.bf16.msra.mxu0 %v4776
        %6515 = vmatprep.subr.bf16.mxu0 0
        %6516 = vmatpush1.bf16.msra.mxu0 %v4777
        %6517 = vmatprep.subr.bf16.mxu0 0
        %6518 = vmatpush1.bf16.msra.mxu0 %v4778
        %6519 = vmatprep.subr.bf16.mxu0 0
        %6520 = vmatpush1.bf16.msra.mxu0 %v4779
        %6521 = vmatprep.subr.bf16.mxu0 0
        %6522 = vmatpush1.bf16.msra.mxu0 %v4780
        %6523 = vmatprep.subr.bf16.mxu0 0
        %6524 = vmatpush1.bf16.msra.mxu0 %v4781
        %6525 = vmatprep.subr.bf16.mxu0 0
        %6526 = vmatpush1.bf16.msra.mxu0 %v4782
        %6527 = vmatprep.subr.bf16.mxu0 0
        %6528 = vmatpush1.bf16.msra.mxu0 %v4783
        %6529 = vmatprep.subr.bf16.mxu0 0
        %6530 = vmatpush1.bf16.msra.mxu0 %v4784
        %6531 = vmatprep.subr.bf16.mxu0 0
        %6532 = vmatpush1.bf16.msra.mxu0 %v4785
        %6533 = vmatprep.subr.bf16.mxu0 0
        %6534 = vmatpush1.bf16.msra.mxu0 %v4786
        %6535 = vmatprep.subr.bf16.mxu0 0
        %6536 = vmatpush1.bf16.msra.mxu0 %v4787
        %6537 = vmatprep.subr.bf16.mxu0 0
        %6538 = vmatpush1.bf16.msra.mxu0 %v4788
        %6539 = vmatprep.subr.bf16.mxu0 0
        %6540 = vmatpush1.bf16.msra.mxu0 %v4789
        %6541 = vmatprep.subr.bf16.mxu0 0
        %6542 = vmatpush1.bf16.msra.mxu0 %v4790
        %6543 = vmatprep.mubr.bf16.mxu0 %v1709
        %6544 = vmatmul.mubr.bf16.gmra.mrb[0].mxu0 %v1708
        %v6545 = vpop.f32.mrb[0].mxu0
        %v6546 = vadd.f32 %v6506, %v6545
        %v6547 = vpop.f32.mrb[0].mxu0
        %v6548 = vpop.f32.mrb[0].mxu0
        %v6549 = vpop.f32.mrb[0].mxu0
        %6550 = vdwg.mxu0
        %6551 = vmatprep.subr.bf16.mxu0 0
        %6552 = vmatpush1.bf16.msra.mxu0 %v4791
        %6553 = vmatprep.subr.bf16.mxu0 0
        %6554 = vmatpush1.bf16.msra.mxu0 %v4792
        %6555 = vmatprep.subr.bf16.mxu0 0
        %6556 = vmatpush1.bf16.msra.mxu0 %v4793
        %6557 = vmatprep.subr.bf16.mxu0 0
        %6558 = vmatpush1.bf16.msra.mxu0 %v4794
        %6559 = vmatprep.subr.bf16.mxu0 0
        %6560 = vmatpush1.bf16.msra.mxu0 %v4795
        %6561 = vmatprep.subr.bf16.mxu0 0
        %6562 = vmatpush1.bf16.msra.mxu0 %v4796
        %6563 = vmatprep.subr.bf16.mxu0 0
        %6564 = vmatpush1.bf16.msra.mxu0 %v4797
        %6565 = vmatprep.subr.bf16.mxu0 0
        %6566 = vmatpush1.bf16.msra.mxu0 %v4798
        %6567 = vmatprep.subr.bf16.mxu0 0
        %6568 = vmatpush1.bf16.msra.mxu0 %v4799
        %6569 = vmatprep.subr.bf16.mxu0 0
        %6570 = vmatpush1.bf16.msra.mxu0 %v4800
        %6571 = vmatprep.subr.bf16.mxu0 0
        %6572 = vmatpush1.bf16.msra.mxu0 %v4801
        %6573 = vmatprep.subr.bf16.mxu0 0
        %6574 = vmatpush1.bf16.msra.mxu0 %v4802
        %6575 = vmatprep.subr.bf16.mxu0 0
        %6576 = vmatpush1.bf16.msra.mxu0 %v4803
        %6577 = vmatprep.subr.bf16.mxu0 0
        %6578 = vmatpush1.bf16.msra.mxu0 %v4804
        %6579 = vmatprep.subr.bf16.mxu0 0
        %6580 = vmatpush1.bf16.msra.mxu0 %v4805
        %6581 = vmatprep.subr.bf16.mxu0 0
        %6582 = vmatpush1.bf16.msra.mxu0 %v4806
        %6583 = vmatprep.mubr.bf16.mxu0 %v1711
        %6584 = vmatmul.mubr.bf16.gmra.mrb[0].mxu0 %v1710
        %v6585 = vpop.f32.mrb[0].mxu0
        %v6586 = vadd.f32 %v6546, %v6585
        %v6587 = vpop.f32.mrb[0].mxu0
        %v6588 = vpop.f32.mrb[0].mxu0
        %v6589 = vpop.f32.mrb[0].mxu0
        %6590 = vdwg.mxu0
        %6591 = vmatprep.subr.bf16.mxu0 0
        %6592 = vmatpush1.bf16.msra.mxu0 %v4807
        %6593 = vmatprep.subr.bf16.mxu0 0
        %6594 = vmatpush1.bf16.msra.mxu0 %v4808
        %6595 = vmatprep.subr.bf16.mxu0 0
        %6596 = vmatpush1.bf16.msra.mxu0 %v4809
        %6597 = vmatprep.subr.bf16.mxu0 0
        %6598 = vmatpush1.bf16.msra.mxu0 %v4810
        %6599 = vmatprep.subr.bf16.mxu0 0
        %6600 = vmatpush1.bf16.msra.mxu0 %v4811
        %6601 = vmatprep.subr.bf16.mxu0 0
        %6602 = vmatpush1.bf16.msra.mxu0 %v4812
        %6603 = vmatprep.subr.bf16.mxu0 0
        %6604 = vmatpush1.bf16.msra.mxu0 %v4813
        %6605 = vmatprep.subr.bf16.mxu0 0
        %6606 = vmatpush1.bf16.msra.mxu0 %v4814
        %6607 = vmatprep.subr.bf16.mxu0 0
        %6608 = vmatpush1.bf16.msra.mxu0 %v4815
        %6609 = vmatprep.subr.bf16.mxu0 0
        %6610 = vmatpush1.bf16.msra.mxu0 %v4816
        %6611 = vmatprep.subr.bf16.mxu0 0
        %6612 = vmatpush1.bf16.msra.mxu0 %v4817
        %6613 = vmatprep.subr.bf16.mxu0 0
        %6614 = vmatpush1.bf16.msra.mxu0 %v4818
        %6615 = vmatprep.subr.bf16.mxu0 0
        %6616 = vmatpush1.bf16.msra.mxu0 %v4819
        %6617 = vmatprep.subr.bf16.mxu0 0
        %6618 = vmatpush1.bf16.msra.mxu0 %v4820
        %6619 = vmatprep.subr.bf16.mxu0 0
        %6620 = vmatpush1.bf16.msra.mxu0 %v4821
        %6621 = vmatprep.subr.bf16.mxu0 0
        %6622 = vmatpush1.bf16.msra.mxu0 %v4822
        %6623 = vmatprep.mubr.bf16.mxu0 %v1713
        %6624 = vmatmul.mubr.bf16.gmra.mrb[0].mxu0 %v1712
        %v6625 = vpop.f32.mrb[0].mxu0
        %v6626 = vadd.f32 %v6586, %v6625
        %v6627 = vpop.f32.mrb[0].mxu0
        %v6628 = vpop.f32.mrb[0].mxu0
        %v6629 = vpop.f32.mrb[0].mxu0
        %6630 = vdwg.mxu0
        %6631 = vmatprep.subr.bf16.mxu0 0
        %6632 = vmatpush1.bf16.msra.mxu0 %v4823
        %6633 = vmatprep.subr.bf16.mxu0 0
        %6634 = vmatpush1.bf16.msra.mxu0 %v4824
        %6635 = vmatprep.subr.bf16.mxu0 0
        %6636 = vmatpush1.bf16.msra.mxu0 %v4825
        %6637 = vmatprep.subr.bf16.mxu0 0
        %6638 = vmatpush1.bf16.msra.mxu0 %v4826
        %6639 = vmatprep.subr.bf16.mxu0 0
        %6640 = vmatpush1.bf16.msra.mxu0 %v4827
        %6641 = vmatprep.subr.bf16.mxu0 0
        %6642 = vmatpush1.bf16.msra.mxu0 %v4828
        %6643 = vmatprep.subr.bf16.mxu0 0
        %6644 = vmatpush1.bf16.msra.mxu0 %v4829
        %6645 = vmatprep.subr.bf16.mxu0 0
        %6646 = vmatpush1.bf16.msra.mxu0 %v4830
        %6647 = vmatprep.subr.bf16.mxu0 0
        %6648 = vmatpush1.bf16.msra.mxu0 %v4831
        %6649 = vmatprep.subr.bf16.mxu0 0
        %6650 = vmatpush1.bf16.msra.mxu0 %v4832
        %6651 = vmatprep.subr.bf16.mxu0 0
        %6652 = vmatpush1.bf16.msra.mxu0 %v4833
        %6653 = vmatprep.subr.bf16.mxu0 0
        %6654 = vmatpush1.bf16.msra.mxu0 %v4834
        %6655 = vmatprep.subr.bf16.mxu0 0
        %6656 = vmatpush1.bf16.msra.mxu0 %v4835
        %6657 = vmatprep.subr.bf16.mxu0 0
        %6658 = vmatpush1.bf16.msra.mxu0 %v4836
        %6659 = vmatprep.subr.bf16.mxu0 0
        %6660 = vmatpush1.bf16.msra.mxu0 %v4837
        %6661 = vmatprep.subr.bf16.mxu0 0
        %6662 = vmatpush1.bf16.msra.mxu0 %v4838
        %6663 = vmatprep.mubr.bf16.mxu0 %v1715
        %6664 = vmatmul.mubr.bf16.gmra.mrb[0].mxu0 %v1714
        %v6665 = vpop.f32.mrb[0].mxu0
        %v6666 = vadd.f32 %v6626, %v6665
        %v6667 = vpop.f32.mrb[0].mxu0
        %v6668 = vpop.f32.mrb[0].mxu0
        %v6669 = vpop.f32.mrb[0].mxu0
        %6670 = vdwg.mxu0
        %6671 = vmatprep.subr.bf16.mxu0 0
        %6672 = vmatpush1.bf16.msra.mxu0 %v4839
        %6673 = vmatprep.subr.bf16.mxu0 0
        %6674 = vmatpush1.bf16.msra.mxu0 %v4840
        %6675 = vmatprep.subr.bf16.mxu0 0
        %6676 = vmatpush1.bf16.msra.mxu0 %v4841
        %6677 = vmatprep.subr.bf16.mxu0 0
        %6678 = vmatpush1.bf16.msra.mxu0 %v4842
        %6679 = vmatprep.subr.bf16.mxu0 0
        %6680 = vmatpush1.bf16.msra.mxu0 %v4843
        %6681 = vmatprep.subr.bf16.mxu0 0
        %6682 = vmatpush1.bf16.msra.mxu0 %v4844
        %6683 = vmatprep.subr.bf16.mxu0 0
        %6684 = vmatpush1.bf16.msra.mxu0 %v4845
        %6685 = vmatprep.subr.bf16.mxu0 0
        %6686 = vmatpush1.bf16.msra.mxu0 %v4846
        %6687 = vmatprep.subr.bf16.mxu0 0
        %6688 = vmatpush1.bf16.msra.mxu0 %v4847
        %6689 = vmatprep.subr.bf16.mxu0 0
        %6690 = vmatpush1.bf16.msra.mxu0 %v4848
        %6691 = vmatprep.subr.bf16.mxu0 0
        %6692 = vmatpush1.bf16.msra.mxu0 %v4849
        %6693 = vmatprep.subr.bf16.mxu0 0
        %6694 = vmatpush1.bf16.msra.mxu0 %v4850
        %6695 = vmatprep.subr.bf16.mxu0 0
        %6696 = vmatpush1.bf16.msra.mxu0 %v4851
        %6697 = vmatprep.subr.bf16.mxu0 0
        %6698 = vmatpush1.bf16.msra.mxu0 %v4852
        %6699 = vmatprep.subr.bf16.mxu0 0
        %6700 = vmatpush1.bf16.msra.mxu0 %v4853
        %6701 = vmatprep.subr.bf16.mxu0 0
        %6702 = vmatpush1.bf16.msra.mxu0 %v4854
        %6703 = vmatprep.mubr.bf16.mxu0 %v1717
        %6704 = vmatmul.mubr.bf16.gmra.mrb[0].mxu0 %v1716
        %v6705 = vpop.f32.mrb[0].mxu0
        %v6706 = vadd.f32 %v6666, %v6705
        %v6707 = vpop.f32.mrb[0].mxu0
        %v6708 = vpop.f32.mrb[0].mxu0
        %v6709 = vpop.f32.mrb[0].mxu0
        %6710 = vdwg.mxu0
        %6711 = vmatprep.subr.bf16.mxu0 0
        %6712 = vmatpush1.bf16.msra.mxu0 %v4855
        %6713 = vmatprep.subr.bf16.mxu0 0
        %6714 = vmatpush1.bf16.msra.mxu0 %v4856
        %6715 = vmatprep.subr.bf16.mxu0 0
        %6716 = vmatpush1.bf16.msra.mxu0 %v4857
        %6717 = vmatprep.subr.bf16.mxu0 0
        %6718 = vmatpush1.bf16.msra.mxu0 %v4858
        %6719 = vmatprep.subr.bf16.mxu0 0
        %6720 = vmatpush1.bf16.msra.mxu0 %v4859
        %6721 = vmatprep.subr.bf16.mxu0 0
        %6722 = vmatpush1.bf16.msra.mxu0 %v4860
        %6723 = vmatprep.subr.bf16.mxu0 0
        %6724 = vmatpush1.bf16.msra.mxu0 %v4861
        %6725 = vmatprep.subr.bf16.mxu0 0
        %6726 = vmatpush1.bf16.msra.mxu0 %v4862
        %6727 = vmatprep.subr.bf16.mxu0 0
        %6728 = vmatpush1.bf16.msra.mxu0 %v4863
        %6729 = vmatprep.subr.bf16.mxu0 0
        %6730 = vmatpush1.bf16.msra.mxu0 %v4864
        %6731 = vmatprep.subr.bf16.mxu0 0
        %6732 = vmatpush1.bf16.msra.mxu0 %v4865
        %6733 = vmatprep.subr.bf16.mxu0 0
        %6734 = vmatpush1.bf16.msra.mxu0 %v4866
        %6735 = vmatprep.subr.bf16.mxu0 0
        %6736 = vmatpush1.bf16.msra.mxu0 %v4867
        %6737 = vmatprep.subr.bf16.mxu0 0
        %6738 = vmatpush1.bf16.msra.mxu0 %v4868
        %6739 = vmatprep.subr.bf16.mxu0 0
        %6740 = vmatpush1.bf16.msra.mxu0 %v4869
        %6741 = vmatprep.subr.bf16.mxu0 0
        %6742 = vmatpush1.bf16.msra.mxu0 %v4870
        %6743 = vmatprep.mubr.bf16.mxu0 %v1719
        %6744 = vmatmul.mubr.bf16.gmra.mrb[0].mxu0 %v1718
        %v6745 = vpop.f32.mrb[0].mxu0
        %v6746 = vadd.f32 %v6706, %v6745
        %v6747 = vpop.f32.mrb[0].mxu0
        %v6748 = vpop.f32.mrb[0].mxu0
        %v6749 = vpop.f32.mrb[0].mxu0
        %6750 = vdwg.mxu0
        %6751 = vmatprep.subr.bf16.mxu0 0
        %6752 = vmatpush1.bf16.msra.mxu0 %v4871
        %6753 = vmatprep.subr.bf16.mxu0 0
        %6754 = vmatpush1.bf16.msra.mxu0 %v4872
        %6755 = vmatprep.subr.bf16.mxu0 0
        %6756 = vmatpush1.bf16.msra.mxu0 %v4873
        %6757 = vmatprep.subr.bf16.mxu0 0
        %6758 = vmatpush1.bf16.msra.mxu0 %v4874
        %6759 = vmatprep.subr.bf16.mxu0 0
        %6760 = vmatpush1.bf16.msra.mxu0 %v4875
        %6761 = vmatprep.subr.bf16.mxu0 0
        %6762 = vmatpush1.bf16.msra.mxu0 %v4876
        %6763 = vmatprep.subr.bf16.mxu0 0
        %6764 = vmatpush1.bf16.msra.mxu0 %v4877
        %6765 = vmatprep.subr.bf16.mxu0 0
        %6766 = vmatpush1.bf16.msra.mxu0 %v4878
        %6767 = vmatprep.subr.bf16.mxu0 0
        %6768 = vmatpush1.bf16.msra.mxu0 %v4879
        %6769 = vmatprep.subr.bf16.mxu0 0
        %6770 = vmatpush1.bf16.msra.mxu0 %v4880
        %6771 = vmatprep.subr.bf16.mxu0 0
        %6772 = vmatpush1.bf16.msra.mxu0 %v4881
        %6773 = vmatprep.subr.bf16.mxu0 0
        %6774 = vmatpush1.bf16.msra.mxu0 %v4882
        %6775 = vmatprep.subr.bf16.mxu0 0
        %6776 = vmatpush1.bf16.msra.mxu0 %v4883
        %6777 = vmatprep.subr.bf16.mxu0 0
        %6778 = vmatpush1.bf16.msra.mxu0 %v4884
        %6779 = vmatprep.subr.bf16.mxu0 0
        %6780 = vmatpush1.bf16.msra.mxu0 %v4885
        %6781 = vmatprep.subr.bf16.mxu0 0
        %6782 = vmatpush1.bf16.msra.mxu0 %v4886
        %6783 = vmatprep.mubr.bf16.mxu0 %v1721
        %6784 = vmatmul.mubr.bf16.gmra.mrb[0].mxu0 %v1720
        %v6785 = vpop.f32.mrb[0].mxu0
        %v6786 = vadd.f32 %v6746, %v6785
        %v6787 = vpop.f32.mrb[0].mxu0
        %v6788 = vpop.f32.mrb[0].mxu0
        %v6789 = vpop.f32.mrb[0].mxu0
        %6790 = vdwg.mxu0
        %6791 = vmatprep.subr.bf16.mxu0 0
        %6792 = vmatpush1.bf16.msra.mxu0 %v4887
        %6793 = vmatprep.subr.bf16.mxu0 0
        %6794 = vmatpush1.bf16.msra.mxu0 %v4888
        %6795 = vmatprep.subr.bf16.mxu0 0
        %6796 = vmatpush1.bf16.msra.mxu0 %v4889
        %6797 = vmatprep.subr.bf16.mxu0 0
        %6798 = vmatpush1.bf16.msra.mxu0 %v4890
        %6799 = vmatprep.subr.bf16.mxu0 0
        %6800 = vmatpush1.bf16.msra.mxu0 %v4891
        %6801 = vmatprep.subr.bf16.mxu0 0
        %6802 = vmatpush1.bf16.msra.mxu0 %v4892
        %6803 = vmatprep.subr.bf16.mxu0 0
        %6804 = vmatpush1.bf16.msra.mxu0 %v4893
        %6805 = vmatprep.subr.bf16.mxu0 0
        %6806 = vmatpush1.bf16.msra.mxu0 %v4894
        %6807 = vmatprep.subr.bf16.mxu0 0
        %6808 = vmatpush1.bf16.msra.mxu0 %v4895
        %6809 = vmatprep.subr.bf16.mxu0 0
        %6810 = vmatpush1.bf16.msra.mxu0 %v4896
        %6811 = vmatprep.subr.bf16.mxu0 0
        %6812 = vmatpush1.bf16.msra.mxu0 %v4897
        %6813 = vmatprep.subr.bf16.mxu0 0
        %6814 = vmatpush1.bf16.msra.mxu0 %v4898
        %6815 = vmatprep.subr.bf16.mxu0 0
        %6816 = vmatpush1.bf16.msra.mxu0 %v4899
        %6817 = vmatprep.subr.bf16.mxu0 0
        %6818 = vmatpush1.bf16.msra.mxu0 %v4900
        %6819 = vmatprep.subr.bf16.mxu0 0
        %6820 = vmatpush1.bf16.msra.mxu0 %v4901
        %6821 = vmatprep.subr.bf16.mxu0 0
        %6822 = vmatpush1.bf16.msra.mxu0 %v4902
        %6823 = vmatprep.mubr.bf16.mxu0 %v1723
        %6824 = vmatmul.mubr.bf16.gmra.mrb[0].mxu0 %v1722
        %v6825 = vpop.f32.mrb[0].mxu0
        %v6826 = vadd.f32 %v6786, %v6825
        %v6827 = vpop.f32.mrb[0].mxu0
        %v6828 = vpop.f32.mrb[0].mxu0
        %v6829 = vpop.f32.mrb[0].mxu0
        %6830 = vdwg.mxu0
        %6831 = vmatprep.subr.bf16.mxu0 0
        %6832 = vmatpush1.bf16.msra.mxu0 %v4903
        %6833 = vmatprep.subr.bf16.mxu0 0
        %6834 = vmatpush1.bf16.msra.mxu0 %v4904
        %6835 = vmatprep.subr.bf16.mxu0 0
        %6836 = vmatpush1.bf16.msra.mxu0 %v4905
        %6837 = vmatprep.subr.bf16.mxu0 0
        %6838 = vmatpush1.bf16.msra.mxu0 %v4906
        %6839 = vmatprep.subr.bf16.mxu0 0
        %6840 = vmatpush1.bf16.msra.mxu0 %v4907
        %6841 = vmatprep.subr.bf16.mxu0 0
        %6842 = vmatpush1.bf16.msra.mxu0 %v4908
        %6843 = vmatprep.subr.bf16.mxu0 0
        %6844 = vmatpush1.bf16.msra.mxu0 %v4909
        %6845 = vmatprep.subr.bf16.mxu0 0
        %6846 = vmatpush1.bf16.msra.mxu0 %v4910
        %6847 = vmatprep.subr.bf16.mxu0 0
        %6848 = vmatpush1.bf16.msra.mxu0 %v4911
        %6849 = vmatprep.subr.bf16.mxu0 0
        %6850 = vmatpush1.bf16.msra.mxu0 %v4912
        %6851 = vmatprep.subr.bf16.mxu0 0
        %6852 = vmatpush1.bf16.msra.mxu0 %v4913
        %6853 = vmatprep.subr.bf16.mxu0 0
        %6854 = vmatpush1.bf16.msra.mxu0 %v4914
        %6855 = vmatprep.subr.bf16.mxu0 0
        %6856 = vmatpush1.bf16.msra.mxu0 %v4915
        %6857 = vmatprep.subr.bf16.mxu0 0
        %6858 = vmatpush1.bf16.msra.mxu0 %v4916
        %6859 = vmatprep.subr.bf16.mxu0 0
        %6860 = vmatpush1.bf16.msra.mxu0 %v4917
        %6861 = vmatprep.subr.bf16.mxu0 0
        %6862 = vmatpush1.bf16.msra.mxu0 %v4918
        %6863 = vmatprep.mubr.bf16.mxu0 %v1725
        %6864 = vmatmul.mubr.bf16.gmra.mrb[0].mxu0 %v1724
        %v6865 = vpop.f32.mrb[0].mxu0
        %v6866 = vadd.f32 %v6826, %v6865
        %v6867 = vpop.f32.mrb[0].mxu0
        %v6868 = vpop.f32.mrb[0].mxu0
        %v6869 = vpop.f32.mrb[0].mxu0
        %6870 = vdwg.mxu0
        %6871 = vmatprep.subr.bf16.mxu0 0
        %6872 = vmatpush1.bf16.msra.mxu0 %v4919
        %6873 = vmatprep.subr.bf16.mxu0 0
        %6874 = vmatpush1.bf16.msra.mxu0 %v4920
        %6875 = vmatprep.subr.bf16.mxu0 0
        %6876 = vmatpush1.bf16.msra.mxu0 %v4921
        %6877 = vmatprep.subr.bf16.mxu0 0
        %6878 = vmatpush1.bf16.msra.mxu0 %v4922
        %6879 = vmatprep.subr.bf16.mxu0 0
        %6880 = vmatpush1.bf16.msra.mxu0 %v4923
        %6881 = vmatprep.subr.bf16.mxu0 0
        %6882 = vmatpush1.bf16.msra.mxu0 %v4924
        %6883 = vmatprep.subr.bf16.mxu0 0
        %6884 = vmatpush1.bf16.msra.mxu0 %v4925
        %6885 = vmatprep.subr.bf16.mxu0 0
        %6886 = vmatpush1.bf16.msra.mxu0 %v4926
        %6887 = vmatprep.subr.bf16.mxu0 0
        %6888 = vmatpush1.bf16.msra.mxu0 %v4927
        %6889 = vmatprep.subr.bf16.mxu0 0
        %6890 = vmatpush1.bf16.msra.mxu0 %v4928
        %6891 = vmatprep.subr.bf16.mxu0 0
        %6892 = vmatpush1.bf16.msra.mxu0 %v4929
        %6893 = vmatprep.subr.bf16.mxu0 0
        %6894 = vmatpush1.bf16.msra.mxu0 %v4930
        %6895 = vmatprep.subr.bf16.mxu0 0
        %6896 = vmatpush1.bf16.msra.mxu0 %v4931
        %6897 = vmatprep.subr.bf16.mxu0 0
        %6898 = vmatpush1.bf16.msra.mxu0 %v4932
        %6899 = vmatprep.subr.bf16.mxu0 0
        %6900 = vmatpush1.bf16.msra.mxu0 %v4933
        %6901 = vmatprep.subr.bf16.mxu0 0
        %6902 = vmatpush1.bf16.msra.mxu0 %v4934
        %6903 = vmatprep.mubr.bf16.mxu0 %v1727
        %6904 = vmatmul.mubr.bf16.gmra.mrb[0].mxu0 %v1726
        %v6905 = vpop.f32.mrb[0].mxu0
        %v6906 = vadd.f32 %v6866, %v6905
        %v6907 = vpop.f32.mrb[0].mxu0
        %v6908 = vpop.f32.mrb[0].mxu0
        %v6909 = vpop.f32.mrb[0].mxu0
        %6910 = vdwg.mxu0
        %6911 = vmatprep.subr.bf16.mxu0 0
        %6912 = vmatpush1.bf16.msra.mxu0 %v4935
        %6913 = vmatprep.subr.bf16.mxu0 0
        %6914 = vmatpush1.bf16.msra.mxu0 %v4936
        %6915 = vmatprep.subr.bf16.mxu0 0
        %6916 = vmatpush1.bf16.msra.mxu0 %v4937
        %6917 = vmatprep.subr.bf16.mxu0 0
        %6918 = vmatpush1.bf16.msra.mxu0 %v4938
        %6919 = vmatprep.subr.bf16.mxu0 0
        %6920 = vmatpush1.bf16.msra.mxu0 %v4939
        %6921 = vmatprep.subr.bf16.mxu0 0
        %6922 = vmatpush1.bf16.msra.mxu0 %v4940
        %6923 = vmatprep.subr.bf16.mxu0 0
        %6924 = vmatpush1.bf16.msra.mxu0 %v4941
        %6925 = vmatprep.subr.bf16.mxu0 0
        %6926 = vmatpush1.bf16.msra.mxu0 %v4942
        %6927 = vmatprep.subr.bf16.mxu0 0
        %6928 = vmatpush1.bf16.msra.mxu0 %v4943
        %6929 = vmatprep.subr.bf16.mxu0 0
        %6930 = vmatpush1.bf16.msra.mxu0 %v4944
        %6931 = vmatprep.subr.bf16.mxu0 0
        %6932 = vmatpush1.bf16.msra.mxu0 %v4945
        %6933 = vmatprep.subr.bf16.mxu0 0
        %6934 = vmatpush1.bf16.msra.mxu0 %v4946
        %6935 = vmatprep.subr.bf16.mxu0 0
        %6936 = vmatpush1.bf16.msra.mxu0 %v4947
        %6937 = vmatprep.subr.bf16.mxu0 0
        %6938 = vmatpush1.bf16.msra.mxu0 %v4948
        %6939 = vmatprep.subr.bf16.mxu0 0
        %6940 = vmatpush1.bf16.msra.mxu0 %v4949
        %6941 = vmatprep.subr.bf16.mxu0 0
        %6942 = vmatpush1.bf16.msra.mxu0 %v4950
        %6943 = vmatprep.mubr.bf16.mxu0 %v1729
        %6944 = vmatmul.mubr.bf16.gmra.mrb[0].mxu0 %v1728
        %v6945 = vpop.f32.mrb[0].mxu0
        %v6946 = vadd.f32 %v6906, %v6945
        %v6947 = vpop.f32.mrb[0].mxu0
        %v6948 = vpop.f32.mrb[0].mxu0
        %v6949 = vpop.f32.mrb[0].mxu0
        %6950 = vdwg.mxu0
        %6951 = vmatprep.subr.bf16.mxu0 0
        %6952 = vmatpush1.bf16.msra.mxu0 %v4951
        %6953 = vmatprep.subr.bf16.mxu0 0
        %6954 = vmatpush1.bf16.msra.mxu0 %v4952
        %6955 = vmatprep.subr.bf16.mxu0 0
        %6956 = vmatpush1.bf16.msra.mxu0 %v4953
        %6957 = vmatprep.subr.bf16.mxu0 0
        %6958 = vmatpush1.bf16.msra.mxu0 %v4954
        %6959 = vmatprep.subr.bf16.mxu0 0
        %6960 = vmatpush1.bf16.msra.mxu0 %v4955
        %6961 = vmatprep.subr.bf16.mxu0 0
        %6962 = vmatpush1.bf16.msra.mxu0 %v4956
        %6963 = vmatprep.subr.bf16.mxu0 0
        %6964 = vmatpush1.bf16.msra.mxu0 %v4957
        %6965 = vmatprep.subr.bf16.mxu0 0
        %6966 = vmatpush1.bf16.msra.mxu0 %v4958
        %6967 = vmatprep.subr.bf16.mxu0 0
        %6968 = vmatpush1.bf16.msra.mxu0 %v4959
        %6969 = vmatprep.subr.bf16.mxu0 0
        %6970 = vmatpush1.bf16.msra.mxu0 %v4960
        %6971 = vmatprep.subr.bf16.mxu0 0
        %6972 = vmatpush1.bf16.msra.mxu0 %v4961
        %6973 = vmatprep.subr.bf16.mxu0 0
        %6974 = vmatpush1.bf16.msra.mxu0 %v4962
        %6975 = vmatprep.subr.bf16.mxu0 0
        %6976 = vmatpush1.bf16.msra.mxu0 %v4963
        %6977 = vmatprep.subr.bf16.mxu0 0
        %6978 = vmatpush1.bf16.msra.mxu0 %v4964
        %6979 = vmatprep.subr.bf16.mxu0 0
        %6980 = vmatpush1.bf16.msra.mxu0 %v4965
        %6981 = vmatprep.subr.bf16.mxu0 0
        %6982 = vmatpush1.bf16.msra.mxu0 %v4966
        %6983 = vmatprep.mubr.bf16.mxu0 %v1731
        %6984 = vmatmul.mubr.bf16.gmra.mrb[0].mxu0 %v1730
        %v6985 = vpop.f32.mrb[0].mxu0
        %v6986 = vadd.f32 %v6946, %v6985
        %v6987 = vpop.f32.mrb[0].mxu0
        %v6988 = vpop.f32.mrb[0].mxu0
        %v6989 = vpop.f32.mrb[0].mxu0
        %6990 = vdwg.mxu0
        %6991 = vmatprep.subr.bf16.mxu0 0
        %6992 = vmatpush1.bf16.msra.mxu0 %v4967
        %6993 = vmatprep.subr.bf16.mxu0 0
        %6994 = vmatpush1.bf16.msra.mxu0 %v4968
        %6995 = vmatprep.subr.bf16.mxu0 0
        %6996 = vmatpush1.bf16.msra.mxu0 %v4969
        %6997 = vmatprep.subr.bf16.mxu0 0
        %6998 = vmatpush1.bf16.msra.mxu0 %v4970
        %6999 = vmatprep.subr.bf16.mxu0 0
        %7000 = vmatpush1.bf16.msra.mxu0 %v4971
        %7001 = vmatprep.subr.bf16.mxu0 0
        %7002 = vmatpush1.bf16.msra.mxu0 %v4972
        %7003 = vmatprep.subr.bf16.mxu0 0
        %7004 = vmatpush1.bf16.msra.mxu0 %v4973
        %7005 = vmatprep.subr.bf16.mxu0 0
        %7006 = vmatpush1.bf16.msra.mxu0 %v4974
        %7007 = vmatprep.subr.bf16.mxu0 0
        %7008 = vmatpush1.bf16.msra.mxu0 %v4975
        %7009 = vmatprep.subr.bf16.mxu0 0
        %7010 = vmatpush1.bf16.msra.mxu0 %v4976
        %7011 = vmatprep.subr.bf16.mxu0 0
        %7012 = vmatpush1.bf16.msra.mxu0 %v4977
        %7013 = vmatprep.subr.bf16.mxu0 0
        %7014 = vmatpush1.bf16.msra.mxu0 %v4978
        %7015 = vmatprep.subr.bf16.mxu0 0
        %7016 = vmatpush1.bf16.msra.mxu0 %v4979
        %7017 = vmatprep.subr.bf16.mxu0 0
        %7018 = vmatpush1.bf16.msra.mxu0 %v4980
        %7019 = vmatprep.subr.bf16.mxu0 0
        %7020 = vmatpush1.bf16.msra.mxu0 %v4981
        %7021 = vmatprep.subr.bf16.mxu0 0
        %7022 = vmatpush1.bf16.msra.mxu0 %v4982
        %7023 = vmatprep.mubr.bf16.mxu0 %v1733
        %7024 = vmatmul.mubr.bf16.gmra.mrb[0].mxu0 %v1732
        %v7025 = vpop.f32.mrb[0].mxu0
        %v7026 = vadd.f32 %v6986, %v7025
        %v7027 = vpop.f32.mrb[0].mxu0
        %v7028 = vpop.f32.mrb[0].mxu0
        %v7029 = vpop.f32.mrb[0].mxu0
        %7030 = vdwg.mxu0
        %7031 = vmatprep.subr.bf16.mxu0 0
        %7032 = vmatpush1.bf16.msra.mxu0 %v4983
        %7033 = vmatprep.subr.bf16.mxu0 0
        %7034 = vmatpush1.bf16.msra.mxu0 %v4984
        %7035 = vmatprep.subr.bf16.mxu0 0
        %7036 = vmatpush1.bf16.msra.mxu0 %v4985
        %7037 = vmatprep.subr.bf16.mxu0 0
        %7038 = vmatpush1.bf16.msra.mxu0 %v4986
        %7039 = vmatprep.subr.bf16.mxu0 0
        %7040 = vmatpush1.bf16.msra.mxu0 %v4987
        %7041 = vmatprep.subr.bf16.mxu0 0
        %7042 = vmatpush1.bf16.msra.mxu0 %v4988
        %7043 = vmatprep.subr.bf16.mxu0 0
        %7044 = vmatpush1.bf16.msra.mxu0 %v4989
        %7045 = vmatprep.subr.bf16.mxu0 0
        %7046 = vmatpush1.bf16.msra.mxu0 %v4990
        %7047 = vmatprep.subr.bf16.mxu0 0
        %7048 = vmatpush1.bf16.msra.mxu0 %v4991
        %7049 = vmatprep.subr.bf16.mxu0 0
        %7050 = vmatpush1.bf16.msra.mxu0 %v4992
        %7051 = vmatprep.subr.bf16.mxu0 0
        %7052 = vmatpush1.bf16.msra.mxu0 %v4993
        %7053 = vmatprep.subr.bf16.mxu0 0
        %7054 = vmatpush1.bf16.msra.mxu0 %v4994
        %7055 = vmatprep.subr.bf16.mxu0 0
        %7056 = vmatpush1.bf16.msra.mxu0 %v4995
        %7057 = vmatprep.subr.bf16.mxu0 0
        %7058 = vmatpush1.bf16.msra.mxu0 %v4996
        %7059 = vmatprep.subr.bf16.mxu0 0
        %7060 = vmatpush1.bf16.msra.mxu0 %v4997
        %7061 = vmatprep.subr.bf16.mxu0 0
        %7062 = vmatpush1.bf16.msra.mxu0 %v4998
        %7063 = vmatprep.mubr.bf16.mxu0 %v1735
        %7064 = vmatmul.mubr.bf16.gmra.mrb[0].mxu0 %v1734
        %v7065 = vpop.f32.mrb[0].mxu0
        %v7066 = vadd.f32 %v7026, %v7065
        %v7067 = vpop.f32.mrb[0].mxu0
        %v7068 = vpop.f32.mrb[0].mxu0
        %v7069 = vpop.f32.mrb[0].mxu0
        %7070 = vdwg.mxu0
        %7071 = vmatprep.subr.bf16.mxu0 0
        %7072 = vmatpush1.bf16.msra.mxu0 %v4999
        %7073 = vmatprep.subr.bf16.mxu0 0
        %7074 = vmatpush1.bf16.msra.mxu0 %v5000
        %7075 = vmatprep.subr.bf16.mxu0 0
        %7076 = vmatpush1.bf16.msra.mxu0 %v5001
        %7077 = vmatprep.subr.bf16.mxu0 0
        %7078 = vmatpush1.bf16.msra.mxu0 %v5002
        %7079 = vmatprep.subr.bf16.mxu0 0
        %7080 = vmatpush1.bf16.msra.mxu0 %v5003
        %7081 = vmatprep.subr.bf16.mxu0 0
        %7082 = vmatpush1.bf16.msra.mxu0 %v5004
        %7083 = vmatprep.subr.bf16.mxu0 0
        %7084 = vmatpush1.bf16.msra.mxu0 %v5005
        %7085 = vmatprep.subr.bf16.mxu0 0
        %7086 = vmatpush1.bf16.msra.mxu0 %v5006
        %7087 = vmatprep.subr.bf16.mxu0 0
        %7088 = vmatpush1.bf16.msra.mxu0 %v5007
        %7089 = vmatprep.subr.bf16.mxu0 0
        %7090 = vmatpush1.bf16.msra.mxu0 %v5008
        %7091 = vmatprep.subr.bf16.mxu0 0
        %7092 = vmatpush1.bf16.msra.mxu0 %v5009
        %7093 = vmatprep.subr.bf16.mxu0 0
        %7094 = vmatpush1.bf16.msra.mxu0 %v5010
        %7095 = vmatprep.subr.bf16.mxu0 0
        %7096 = vmatpush1.bf16.msra.mxu0 %v5011
        %7097 = vmatprep.subr.bf16.mxu0 0
        %7098 = vmatpush1.bf16.msra.mxu0 %v5012
        %7099 = vmatprep.subr.bf16.mxu0 0
        %7100 = vmatpush1.bf16.msra.mxu0 %v5013
        %7101 = vmatprep.subr.bf16.mxu0 0
        %7102 = vmatpush1.bf16.msra.mxu0 %v5014
        %7103 = vmatprep.mubr.bf16.mxu0 %v1737
        %7104 = vmatmul.mubr.bf16.gmra.mrb[0].mxu0 %v1736
        %v7105 = vpop.f32.mrb[0].mxu0
        %v7106 = vadd.f32 %v7066, %v7105
        %v7107 = vpop.f32.mrb[0].mxu0
        %v7108 = vpop.f32.mrb[0].mxu0
        %v7109 = vpop.f32.mrb[0].mxu0
        %7110 = vdwg.mxu0
        %7111 = vmatprep.subr.bf16.mxu0 0
        %7112 = vmatpush1.bf16.msra.mxu0 %v5015
        %7113 = vmatprep.subr.bf16.mxu0 0
        %7114 = vmatpush1.bf16.msra.mxu0 %v5016
        %7115 = vmatprep.subr.bf16.mxu0 0
        %7116 = vmatpush1.bf16.msra.mxu0 %v5017
        %7117 = vmatprep.subr.bf16.mxu0 0
        %7118 = vmatpush1.bf16.msra.mxu0 %v5018
        %7119 = vmatprep.subr.bf16.mxu0 0
        %7120 = vmatpush1.bf16.msra.mxu0 %v5019
        %7121 = vmatprep.subr.bf16.mxu0 0
        %7122 = vmatpush1.bf16.msra.mxu0 %v5020
        %7123 = vmatprep.subr.bf16.mxu0 0
        %7124 = vmatpush1.bf16.msra.mxu0 %v5021
        %7125 = vmatprep.subr.bf16.mxu0 0
        %7126 = vmatpush1.bf16.msra.mxu0 %v5022
        %7127 = vmatprep.subr.bf16.mxu0 0
        %7128 = vmatpush1.bf16.msra.mxu0 %v5023
        %7129 = vmatprep.subr.bf16.mxu0 0
        %7130 = vmatpush1.bf16.msra.mxu0 %v5024
        %7131 = vmatprep.subr.bf16.mxu0 0
        %7132 = vmatpush1.bf16.msra.mxu0 %v5025
        %7133 = vmatprep.subr.bf16.mxu0 0
        %7134 = vmatpush1.bf16.msra.mxu0 %v5026
        %7135 = vmatprep.subr.bf16.mxu0 0
        %7136 = vmatpush1.bf16.msra.mxu0 %v5027
        %7137 = vmatprep.subr.bf16.mxu0 0
        %7138 = vmatpush1.bf16.msra.mxu0 %v5028
        %7139 = vmatprep.subr.bf16.mxu0 0
        %7140 = vmatpush1.bf16.msra.mxu0 %v5029
        %7141 = vmatprep.subr.bf16.mxu0 0
        %7142 = vmatpush1.bf16.msra.mxu0 %v5030
        %7143 = vmatprep.mubr.bf16.mxu0 %v1739
        %7144 = vmatmul.mubr.bf16.gmra.mrb[0].mxu0 %v1738
        %v7145 = vpop.f32.mrb[0].mxu0
        %v7146 = vadd.f32 %v7106, %v7145
        %v7147 = vpop.f32.mrb[0].mxu0
        %v7148 = vpop.f32.mrb[0].mxu0
        %v7149 = vpop.f32.mrb[0].mxu0
        %7150 = vdwg.mxu0
        %7151 = vmatprep.subr.bf16.mxu0 0
        %7152 = vmatpush1.bf16.msra.mxu0 %v5031
        %7153 = vmatprep.subr.bf16.mxu0 0
        %7154 = vmatpush1.bf16.msra.mxu0 %v5032
        %7155 = vmatprep.subr.bf16.mxu0 0
        %7156 = vmatpush1.bf16.msra.mxu0 %v5033
        %7157 = vmatprep.subr.bf16.mxu0 0
        %7158 = vmatpush1.bf16.msra.mxu0 %v5034
        %7159 = vmatprep.subr.bf16.mxu0 0
        %7160 = vmatpush1.bf16.msra.mxu0 %v5035
        %7161 = vmatprep.subr.bf16.mxu0 0
        %7162 = vmatpush1.bf16.msra.mxu0 %v5036
        %7163 = vmatprep.subr.bf16.mxu0 0
        %7164 = vmatpush1.bf16.msra.mxu0 %v5037
        %7165 = vmatprep.subr.bf16.mxu0 0
        %7166 = vmatpush1.bf16.msra.mxu0 %v5038
        %7167 = vmatprep.subr.bf16.mxu0 0
        %7168 = vmatpush1.bf16.msra.mxu0 %v5039
        %7169 = vmatprep.subr.bf16.mxu0 0
        %7170 = vmatpush1.bf16.msra.mxu0 %v5040
        %7171 = vmatprep.subr.bf16.mxu0 0
        %7172 = vmatpush1.bf16.msra.mxu0 %v5041
        %7173 = vmatprep.subr.bf16.mxu0 0
        %7174 = vmatpush1.bf16.msra.mxu0 %v5042
        %7175 = vmatprep.subr.bf16.mxu0 0
        %7176 = vmatpush1.bf16.msra.mxu0 %v5043
        %7177 = vmatprep.subr.bf16.mxu0 0
        %7178 = vmatpush1.bf16.msra.mxu0 %v5044
        %7179 = vmatprep.subr.bf16.mxu0 0
        %7180 = vmatpush1.bf16.msra.mxu0 %v5045
        %7181 = vmatprep.subr.bf16.mxu0 0
        %7182 = vmatpush1.bf16.msra.mxu0 %v5046
        %7183 = vmatprep.mubr.bf16.mxu0 %v1741
        %7184 = vmatmul.mubr.bf16.gmra.mrb[0].mxu0 %v1740
        %v7185 = vpop.f32.mrb[0].mxu0
        %v7186 = vadd.f32 %v7146, %v7185
        %v7187 = vpop.f32.mrb[0].mxu0
        %v7188 = vpop.f32.mrb[0].mxu0
        %v7189 = vpop.f32.mrb[0].mxu0
        %7190 = vdwg.mxu0
        %7191 = vmatprep.subr.bf16.mxu0 0
        %7192 = vmatpush1.bf16.msra.mxu0 %v5047
        %7193 = vmatprep.subr.bf16.mxu0 0
        %7194 = vmatpush1.bf16.msra.mxu0 %v5048
        %7195 = vmatprep.subr.bf16.mxu0 0
        %7196 = vmatpush1.bf16.msra.mxu0 %v5049
        %7197 = vmatprep.subr.bf16.mxu0 0
        %7198 = vmatpush1.bf16.msra.mxu0 %v5050
        %7199 = vmatprep.subr.bf16.mxu0 0
        %7200 = vmatpush1.bf16.msra.mxu0 %v5051
        %7201 = vmatprep.subr.bf16.mxu0 0
        %7202 = vmatpush1.bf16.msra.mxu0 %v5052
        %7203 = vmatprep.subr.bf16.mxu0 0
        %7204 = vmatpush1.bf16.msra.mxu0 %v5053
        %7205 = vmatprep.subr.bf16.mxu0 0
        %7206 = vmatpush1.bf16.msra.mxu0 %v5054
        %7207 = vmatprep.subr.bf16.mxu0 0
        %7208 = vmatpush1.bf16.msra.mxu0 %v5055
        %7209 = vmatprep.subr.bf16.mxu0 0
        %7210 = vmatpush1.bf16.msra.mxu0 %v5056
        %7211 = vmatprep.subr.bf16.mxu0 0
        %7212 = vmatpush1.bf16.msra.mxu0 %v5057
        %7213 = vmatprep.subr.bf16.mxu0 0
        %7214 = vmatpush1.bf16.msra.mxu0 %v5058
        %7215 = vmatprep.subr.bf16.mxu0 0
        %7216 = vmatpush1.bf16.msra.mxu0 %v5059
        %7217 = vmatprep.subr.bf16.mxu0 0
        %7218 = vmatpush1.bf16.msra.mxu0 %v5060
        %7219 = vmatprep.subr.bf16.mxu0 0
        %7220 = vmatpush1.bf16.msra.mxu0 %v5061
        %7221 = vmatprep.subr.bf16.mxu0 0
        %7222 = vmatpush1.bf16.msra.mxu0 %v5062
        %7223 = vmatprep.mubr.bf16.mxu0 %v1743
        %7224 = vmatmul.mubr.bf16.gmra.mrb[0].mxu0 %v1742
        %v7225 = vpop.f32.mrb[0].mxu0
        %v7226 = vadd.f32 %v7186, %v7225
        %v7227 = vpop.f32.mrb[0].mxu0
        %v7228 = vpop.f32.mrb[0].mxu0
        %v7229 = vpop.f32.mrb[0].mxu0
        %7230 = vdwg.mxu0
        %7231 = vmatprep.subr.bf16.mxu0 0
        %7232 = vmatpush1.bf16.msra.mxu0 %v5063
        %7233 = vmatprep.subr.bf16.mxu0 0
        %7234 = vmatpush1.bf16.msra.mxu0 %v5064
        %7235 = vmatprep.subr.bf16.mxu0 0
        %7236 = vmatpush1.bf16.msra.mxu0 %v5065
        %7237 = vmatprep.subr.bf16.mxu0 0
        %7238 = vmatpush1.bf16.msra.mxu0 %v5066
        %7239 = vmatprep.subr.bf16.mxu0 0
        %7240 = vmatpush1.bf16.msra.mxu0 %v5067
        %7241 = vmatprep.subr.bf16.mxu0 0
        %7242 = vmatpush1.bf16.msra.mxu0 %v5068
        %7243 = vmatprep.subr.bf16.mxu0 0
        %7244 = vmatpush1.bf16.msra.mxu0 %v5069
        %7245 = vmatprep.subr.bf16.mxu0 0
        %7246 = vmatpush1.bf16.msra.mxu0 %v5070
        %7247 = vmatprep.subr.bf16.mxu0 0
        %7248 = vmatpush1.bf16.msra.mxu0 %v5071
        %7249 = vmatprep.subr.bf16.mxu0 0
        %7250 = vmatpush1.bf16.msra.mxu0 %v5072
        %7251 = vmatprep.subr.bf16.mxu0 0
        %7252 = vmatpush1.bf16.msra.mxu0 %v5073
        %7253 = vmatprep.subr.bf16.mxu0 0
        %7254 = vmatpush1.bf16.msra.mxu0 %v5074
        %7255 = vmatprep.subr.bf16.mxu0 0
        %7256 = vmatpush1.bf16.msra.mxu0 %v5075
        %7257 = vmatprep.subr.bf16.mxu0 0
        %7258 = vmatpush1.bf16.msra.mxu0 %v5076
        %7259 = vmatprep.subr.bf16.mxu0 0
        %7260 = vmatpush1.bf16.msra.mxu0 %v5077
        %7261 = vmatprep.subr.bf16.mxu0 0
        %7262 = vmatpush1.bf16.msra.mxu0 %v5078
        %7263 = vmatprep.mubr.bf16.mxu0 %v1745
        %7264 = vmatmul.mubr.bf16.gmra.mrb[0].mxu0 %v1744
        %v7265 = vpop.f32.mrb[0].mxu0
        %v7266 = vadd.f32 %v7226, %v7265
        %v7267 = vpop.f32.mrb[0].mxu0
        %v7268 = vpop.f32.mrb[0].mxu0
        %v7269 = vpop.f32.mrb[0].mxu0
        %7270 = vdwg.mxu0
        %7271 = vmatprep.subr.bf16.mxu0 0
        %7272 = vmatpush1.bf16.msra.mxu0 %v5079
        %7273 = vmatprep.subr.bf16.mxu0 0
        %7274 = vmatpush1.bf16.msra.mxu0 %v5080
        %7275 = vmatprep.subr.bf16.mxu0 0
        %7276 = vmatpush1.bf16.msra.mxu0 %v5081
        %7277 = vmatprep.subr.bf16.mxu0 0
        %7278 = vmatpush1.bf16.msra.mxu0 %v5082
        %7279 = vmatprep.subr.bf16.mxu0 0
        %7280 = vmatpush1.bf16.msra.mxu0 %v5083
        %7281 = vmatprep.subr.bf16.mxu0 0
        %7282 = vmatpush1.bf16.msra.mxu0 %v5084
        %7283 = vmatprep.subr.bf16.mxu0 0
        %7284 = vmatpush1.bf16.msra.mxu0 %v5085
        %7285 = vmatprep.subr.bf16.mxu0 0
        %7286 = vmatpush1.bf16.msra.mxu0 %v5086
        %7287 = vmatprep.subr.bf16.mxu0 0
        %7288 = vmatpush1.bf16.msra.mxu0 %v5087
        %7289 = vmatprep.subr.bf16.mxu0 0
        %7290 = vmatpush1.bf16.msra.mxu0 %v5088
        %7291 = vmatprep.subr.bf16.mxu0 0
        %7292 = vmatpush1.bf16.msra.mxu0 %v5089
        %7293 = vmatprep.subr.bf16.mxu0 0
        %7294 = vmatpush1.bf16.msra.mxu0 %v5090
        %7295 = vmatprep.subr.bf16.mxu0 0
        %7296 = vmatpush1.bf16.msra.mxu0 %v5091
        %7297 = vmatprep.subr.bf16.mxu0 0
        %7298 = vmatpush1.bf16.msra.mxu0 %v5092
        %7299 = vmatprep.subr.bf16.mxu0 0
        %7300 = vmatpush1.bf16.msra.mxu0 %v5093
        %7301 = vmatprep.subr.bf16.mxu0 0
        %7302 = vmatpush1.bf16.msra.mxu0 %v5094
        %7303 = vmatprep.mubr.bf16.mxu0 %v1747
        %7304 = vmatmul.mubr.bf16.gmra.mrb[0].mxu0 %v1746
        %v7305 = vpop.f32.mrb[0].mxu0
        %v7306 = vadd.f32 %v7266, %v7305
        %v7307 = vpop.f32.mrb[0].mxu0
        %v7308 = vpop.f32.mrb[0].mxu0
        %v7309 = vpop.f32.mrb[0].mxu0
        %7310 = vdwg.mxu0
        %7311 = vmatprep.subr.bf16.mxu0 0
        %7312 = vmatpush1.bf16.msra.mxu0 %v5095
        %7313 = vmatprep.subr.bf16.mxu0 0
        %7314 = vmatpush1.bf16.msra.mxu0 %v5096
        %7315 = vmatprep.subr.bf16.mxu0 0
        %7316 = vmatpush1.bf16.msra.mxu0 %v5097
        %7317 = vmatprep.subr.bf16.mxu0 0
        %7318 = vmatpush1.bf16.msra.mxu0 %v5098
        %7319 = vmatprep.subr.bf16.mxu0 0
        %7320 = vmatpush1.bf16.msra.mxu0 %v5099
        %7321 = vmatprep.subr.bf16.mxu0 0
        %7322 = vmatpush1.bf16.msra.mxu0 %v5100
        %7323 = vmatprep.subr.bf16.mxu0 0
        %7324 = vmatpush1.bf16.msra.mxu0 %v5101
        %7325 = vmatprep.subr.bf16.mxu0 0
        %7326 = vmatpush1.bf16.msra.mxu0 %v5102
        %7327 = vmatprep.subr.bf16.mxu0 0
        %7328 = vmatpush1.bf16.msra.mxu0 %v5103
        %7329 = vmatprep.subr.bf16.mxu0 0
        %7330 = vmatpush1.bf16.msra.mxu0 %v5104
        %7331 = vmatprep.subr.bf16.mxu0 0
        %7332 = vmatpush1.bf16.msra.mxu0 %v5105
        %7333 = vmatprep.subr.bf16.mxu0 0
        %7334 = vmatpush1.bf16.msra.mxu0 %v5106
        %7335 = vmatprep.subr.bf16.mxu0 0
        %7336 = vmatpush1.bf16.msra.mxu0 %v5107
        %7337 = vmatprep.subr.bf16.mxu0 0
        %7338 = vmatpush1.bf16.msra.mxu0 %v5108
        %7339 = vmatprep.subr.bf16.mxu0 0
        %7340 = vmatpush1.bf16.msra.mxu0 %v5109
        %7341 = vmatprep.subr.bf16.mxu0 0
        %7342 = vmatpush1.bf16.msra.mxu0 %v5110
        %7343 = vmatprep.mubr.bf16.mxu0 %v1749
        %7344 = vmatmul.mubr.bf16.gmra.mrb[0].mxu0 %v1748
        %v7345 = vpop.f32.mrb[0].mxu0
        %v7346 = vadd.f32 %v7306, %v7345
        %v7347 = vpop.f32.mrb[0].mxu0
        %v7348 = vpop.f32.mrb[0].mxu0
        %v7349 = vpop.f32.mrb[0].mxu0
        %7350 = vdwg.mxu0
        %v7351 = vadd.f32 %v1910, %v7346
        %7352 = vst [vmem:[%s302] sm:$0xff] %v7351
        %s7353 = scalar_lea.vmem %s302, 8
        %v7354 = vld [vmem:[%s7353] sm:$0xff]
        %7355 = vmatprep.subr.bf16.mxu0 0
        %7356 = vmatpush1.bf16.msra.mxu0 %v4471
        %7357 = vmatprep.subr.bf16.mxu0 0
        %7358 = vmatpush1.bf16.msra.mxu0 %v4472
        %7359 = vmatprep.subr.bf16.mxu0 0
        %7360 = vmatpush1.bf16.msra.mxu0 %v4473
        %7361 = vmatprep.subr.bf16.mxu0 0
        %7362 = vmatpush1.bf16.msra.mxu0 %v4474
        %7363 = vmatprep.subr.bf16.mxu0 0
        %7364 = vmatpush1.bf16.msra.mxu0 %v4475
        %7365 = vmatprep.subr.bf16.mxu0 0
        %7366 = vmatpush1.bf16.msra.mxu0 %v4476
        %7367 = vmatprep.subr.bf16.mxu0 0
        %7368 = vmatpush1.bf16.msra.mxu0 %v4477
        %7369 = vmatprep.subr.bf16.mxu0 0
        %7370 = vmatpush1.bf16.msra.mxu0 %v4478
        %7371 = vmatprep.subr.bf16.mxu0 0
        %7372 = vmatpush1.bf16.msra.mxu0 %v4479
        %7373 = vmatprep.subr.bf16.mxu0 0
        %7374 = vmatpush1.bf16.msra.mxu0 %v4480
        %7375 = vmatprep.subr.bf16.mxu0 0
        %7376 = vmatpush1.bf16.msra.mxu0 %v4481
        %7377 = vmatprep.subr.bf16.mxu0 0
        %7378 = vmatpush1.bf16.msra.mxu0 %v4482
        %7379 = vmatprep.subr.bf16.mxu0 0
        %7380 = vmatpush1.bf16.msra.mxu0 %v4483
        %7381 = vmatprep.subr.bf16.mxu0 0
        %7382 = vmatpush1.bf16.msra.mxu0 %v4484
        %7383 = vmatprep.subr.bf16.mxu0 0
        %7384 = vmatpush1.bf16.msra.mxu0 %v4485
        %7385 = vmatprep.subr.bf16.mxu0 0
        %7386 = vmatpush1.bf16.msra.mxu0 %v4486
        %7387 = vmatprep.mubr.bf16.mxu0 %v1831
        %7388 = vmatmul.mubr.bf16.gmra.mrb[0].mxu0 %v1830
        %v7389 = vpop.f32.mrb[0].mxu0
        %v7390 = vadd.f32 0.0, %v7389
        %v7391 = vpop.f32.mrb[0].mxu0
        %v7392 = vpop.f32.mrb[0].mxu0
        %v7393 = vpop.f32.mrb[0].mxu0
        %7394 = vdwg.mxu0
        %7395 = vmatprep.subr.bf16.mxu0 0
        %7396 = vmatpush1.bf16.msra.mxu0 %v4487
        %7397 = vmatprep.subr.bf16.mxu0 0
        %7398 = vmatpush1.bf16.msra.mxu0 %v4488
        %7399 = vmatprep.subr.bf16.mxu0 0
        %7400 = vmatpush1.bf16.msra.mxu0 %v4489
        %7401 = vmatprep.subr.bf16.mxu0 0
        %7402 = vmatpush1.bf16.msra.mxu0 %v4490
        %7403 = vmatprep.subr.bf16.mxu0 0
        %7404 = vmatpush1.bf16.msra.mxu0 %v4491
        %7405 = vmatprep.subr.bf16.mxu0 0
        %7406 = vmatpush1.bf16.msra.mxu0 %v4492
        %7407 = vmatprep.subr.bf16.mxu0 0
        %7408 = vmatpush1.bf16.msra.mxu0 %v4493
        %7409 = vmatprep.subr.bf16.mxu0 0
        %7410 = vmatpush1.bf16.msra.mxu0 %v4494
        %7411 = vmatprep.subr.bf16.mxu0 0
        %7412 = vmatpush1.bf16.msra.mxu0 %v4495
        %7413 = vmatprep.subr.bf16.mxu0 0
        %7414 = vmatpush1.bf16.msra.mxu0 %v4496
        %7415 = vmatprep.subr.bf16.mxu0 0
        %7416 = vmatpush1.bf16.msra.mxu0 %v4497
        %7417 = vmatprep.subr.bf16.mxu0 0
        %7418 = vmatpush1.bf16.msra.mxu0 %v4498
        %7419 = vmatprep.subr.bf16.mxu0 0
        %7420 = vmatpush1.bf16.msra.mxu0 %v4499
        %7421 = vmatprep.subr.bf16.mxu0 0
        %7422 = vmatpush1.bf16.msra.mxu0 %v4500
        %7423 = vmatprep.subr.bf16.mxu0 0
        %7424 = vmatpush1.bf16.msra.mxu0 %v4501
        %7425 = vmatprep.subr.bf16.mxu0 0
        %7426 = vmatpush1.bf16.msra.mxu0 %v4502
        %7427 = vmatprep.mubr.bf16.mxu0 %v1833
        %7428 = vmatmul.mubr.bf16.gmra.mrb[0].mxu0 %v1832
        %v7429 = vpop.f32.mrb[0].mxu0
        %v7430 = vadd.f32 %v7390, %v7429
        %v7431 = vpop.f32.mrb[0].mxu0
        %v7432 = vpop.f32.mrb[0].mxu0
        %v7433 = vpop.f32.mrb[0].mxu0
        %7434 = vdwg.mxu0
        %7435 = vmatprep.subr.bf16.mxu0 0
        %7436 = vmatpush1.bf16.msra.mxu0 %v4503
        %7437 = vmatprep.subr.bf16.mxu0 0
        %7438 = vmatpush1.bf16.msra.mxu0 %v4504
        %7439 = vmatprep.subr.bf16.mxu0 0
        %7440 = vmatpush1.bf16.msra.mxu0 %v4505
        %7441 = vmatprep.subr.bf16.mxu0 0
        %7442 = vmatpush1.bf16.msra.mxu0 %v4506
        %7443 = vmatprep.subr.bf16.mxu0 0
        %7444 = vmatpush1.bf16.msra.mxu0 %v4507
        %7445 = vmatprep.subr.bf16.mxu0 0
        %7446 = vmatpush1.bf16.msra.mxu0 %v4508
        %7447 = vmatprep.subr.bf16.mxu0 0
        %7448 = vmatpush1.bf16.msra.mxu0 %v4509
        %7449 = vmatprep.subr.bf16.mxu0 0
        %7450 = vmatpush1.bf16.msra.mxu0 %v4510
        %7451 = vmatprep.subr.bf16.mxu0 0
        %7452 = vmatpush1.bf16.msra.mxu0 %v4511
        %7453 = vmatprep.subr.bf16.mxu0 0
        %7454 = vmatpush1.bf16.msra.mxu0 %v4512
        %7455 = vmatprep.subr.bf16.mxu0 0
        %7456 = vmatpush1.bf16.msra.mxu0 %v4513
        %7457 = vmatprep.subr.bf16.mxu0 0
        %7458 = vmatpush1.bf16.msra.mxu0 %v4514
        %7459 = vmatprep.subr.bf16.mxu0 0
        %7460 = vmatpush1.bf16.msra.mxu0 %v4515
        %7461 = vmatprep.subr.bf16.mxu0 0
        %7462 = vmatpush1.bf16.msra.mxu0 %v4516
        %7463 = vmatprep.subr.bf16.mxu0 0
        %7464 = vmatpush1.bf16.msra.mxu0 %v4517
        %7465 = vmatprep.subr.bf16.mxu0 0
        %7466 = vmatpush1.bf16.msra.mxu0 %v4518
        %7467 = vmatprep.mubr.bf16.mxu0 %v1835
        %7468 = vmatmul.mubr.bf16.gmra.mrb[0].mxu0 %v1834
        %v7469 = vpop.f32.mrb[0].mxu0
        %v7470 = vadd.f32 %v7430, %v7469
        %v7471 = vpop.f32.mrb[0].mxu0
        %v7472 = vpop.f32.mrb[0].mxu0
        %v7473 = vpop.f32.mrb[0].mxu0
        %7474 = vdwg.mxu0
        %7475 = vmatprep.subr.bf16.mxu0 0
        %7476 = vmatpush1.bf16.msra.mxu0 %v4519
        %7477 = vmatprep.subr.bf16.mxu0 0
        %7478 = vmatpush1.bf16.msra.mxu0 %v4520
        %7479 = vmatprep.subr.bf16.mxu0 0
        %7480 = vmatpush1.bf16.msra.mxu0 %v4521
        %7481 = vmatprep.subr.bf16.mxu0 0
        %7482 = vmatpush1.bf16.msra.mxu0 %v4522
        %7483 = vmatprep.subr.bf16.mxu0 0
        %7484 = vmatpush1.bf16.msra.mxu0 %v4523
        %7485 = vmatprep.subr.bf16.mxu0 0
        %7486 = vmatpush1.bf16.msra.mxu0 %v4524
        %7487 = vmatprep.subr.bf16.mxu0 0
        %7488 = vmatpush1.bf16.msra.mxu0 %v4525
        %7489 = vmatprep.subr.bf16.mxu0 0
        %7490 = vmatpush1.bf16.msra.mxu0 %v4526
        %7491 = vmatprep.subr.bf16.mxu0 0
        %7492 = vmatpush1.bf16.msra.mxu0 %v4527
        %7493 = vmatprep.subr.bf16.mxu0 0
        %7494 = vmatpush1.bf16.msra.mxu0 %v4528
        %7495 = vmatprep.subr.bf16.mxu0 0
        %7496 = vmatpush1.bf16.msra.mxu0 %v4529
        %7497 = vmatprep.subr.bf16.mxu0 0
        %7498 = vmatpush1.bf16.msra.mxu0 %v4530
        %7499 = vmatprep.subr.bf16.mxu0 0
        %7500 = vmatpush1.bf16.msra.mxu0 %v4531
        %7501 = vmatprep.subr.bf16.mxu0 0
        %7502 = vmatpush1.bf16.msra.mxu0 %v4532
        %7503 = vmatprep.subr.bf16.mxu0 0
        %7504 = vmatpush1.bf16.msra.mxu0 %v4533
        %7505 = vmatprep.subr.bf16.mxu0 0
        %7506 = vmatpush1.bf16.msra.mxu0 %v4534
        %7507 = vmatprep.mubr.bf16.mxu0 %v1837
        %7508 = vmatmul.mubr.bf16.gmra.mrb[0].mxu0 %v1836
        %v7509 = vpop.f32.mrb[0].mxu0
        %v7510 = vadd.f32 %v7470, %v7509
        %v7511 = vpop.f32.mrb[0].mxu0
        %v7512 = vpop.f32.mrb[0].mxu0
        %v7513 = vpop.f32.mrb[0].mxu0
        %7514 = vdwg.mxu0
        %7515 = vmatprep.subr.bf16.mxu0 0
        %7516 = vmatpush1.bf16.msra.mxu0 %v4535
        %7517 = vmatprep.subr.bf16.mxu0 0
        %7518 = vmatpush1.bf16.msra.mxu0 %v4536
        %7519 = vmatprep.subr.bf16.mxu0 0
        %7520 = vmatpush1.bf16.msra.mxu0 %v4537
        %7521 = vmatprep.subr.bf16.mxu0 0
        %7522 = vmatpush1.bf16.msra.mxu0 %v4538
        %7523 = vmatprep.subr.bf16.mxu0 0
        %7524 = vmatpush1.bf16.msra.mxu0 %v4539
        %7525 = vmatprep.subr.bf16.mxu0 0
        %7526 = vmatpush1.bf16.msra.mxu0 %v4540
        %7527 = vmatprep.subr.bf16.mxu0 0
        %7528 = vmatpush1.bf16.msra.mxu0 %v4541
        %7529 = vmatprep.subr.bf16.mxu0 0
        %7530 = vmatpush1.bf16.msra.mxu0 %v4542
        %7531 = vmatprep.subr.bf16.mxu0 0
        %7532 = vmatpush1.bf16.msra.mxu0 %v4543
        %7533 = vmatprep.subr.bf16.mxu0 0
        %7534 = vmatpush1.bf16.msra.mxu0 %v4544
        %7535 = vmatprep.subr.bf16.mxu0 0
        %7536 = vmatpush1.bf16.msra.mxu0 %v4545
        %7537 = vmatprep.subr.bf16.mxu0 0
        %7538 = vmatpush1.bf16.msra.mxu0 %v4546
        %7539 = vmatprep.subr.bf16.mxu0 0
        %7540 = vmatpush1.bf16.msra.mxu0 %v4547
        %7541 = vmatprep.subr.bf16.mxu0 0
        %7542 = vmatpush1.bf16.msra.mxu0 %v4548
        %7543 = vmatprep.subr.bf16.mxu0 0
        %7544 = vmatpush1.bf16.msra.mxu0 %v4549
        %7545 = vmatprep.subr.bf16.mxu0 0
        %7546 = vmatpush1.bf16.msra.mxu0 %v4550
        %7547 = vmatprep.mubr.bf16.mxu0 %v1839
        %7548 = vmatmul.mubr.bf16.gmra.mrb[0].mxu0 %v1838
        %v7549 = vpop.f32.mrb[0].mxu0
        %v7550 = vadd.f32 %v7510, %v7549
        %v7551 = vpop.f32.mrb[0].mxu0
        %v7552 = vpop.f32.mrb[0].mxu0
        %v7553 = vpop.f32.mrb[0].mxu0
        %7554 = vdwg.mxu0
        %7555 = vmatprep.subr.bf16.mxu0 0
        %7556 = vmatpush1.bf16.msra.mxu0 %v4551
        %7557 = vmatprep.subr.bf16.mxu0 0
        %7558 = vmatpush1.bf16.msra.mxu0 %v4552
        %7559 = vmatprep.subr.bf16.mxu0 0
        %7560 = vmatpush1.bf16.msra.mxu0 %v4553
        %7561 = vmatprep.subr.bf16.mxu0 0
        %7562 = vmatpush1.bf16.msra.mxu0 %v4554
        %7563 = vmatprep.subr.bf16.mxu0 0
        %7564 = vmatpush1.bf16.msra.mxu0 %v4555
        %7565 = vmatprep.subr.bf16.mxu0 0
        %7566 = vmatpush1.bf16.msra.mxu0 %v4556
        %7567 = vmatprep.subr.bf16.mxu0 0
        %7568 = vmatpush1.bf16.msra.mxu0 %v4557
        %7569 = vmatprep.subr.bf16.mxu0 0
        %7570 = vmatpush1.bf16.msra.mxu0 %v4558
        %7571 = vmatprep.subr.bf16.mxu0 0
        %7572 = vmatpush1.bf16.msra.mxu0 %v4559
        %7573 = vmatprep.subr.bf16.mxu0 0
        %7574 = vmatpush1.bf16.msra.mxu0 %v4560
        %7575 = vmatprep.subr.bf16.mxu0 0
        %7576 = vmatpush1.bf16.msra.mxu0 %v4561
        %7577 = vmatprep.subr.bf16.mxu0 0
        %7578 = vmatpush1.bf16.msra.mxu0 %v4562
        %7579 = vmatprep.subr.bf16.mxu0 0
        %7580 = vmatpush1.bf16.msra.mxu0 %v4563
        %7581 = vmatprep.subr.bf16.mxu0 0
        %7582 = vmatpush1.bf16.msra.mxu0 %v4564
        %7583 = vmatprep.subr.bf16.mxu0 0
        %7584 = vmatpush1.bf16.msra.mxu0 %v4565
        %7585 = vmatprep.subr.bf16.mxu0 0
        %7586 = vmatpush1.bf16.msra.mxu0 %v4566
        %7587 = vmatprep.mubr.bf16.mxu0 %v1841
        %7588 = vmatmul.mubr.bf16.gmra.mrb[0].mxu0 %v1840
        %v7589 = vpop.f32.mrb[0].mxu0
        %v7590 = vadd.f32 %v7550, %v7589
        %v7591 = vpop.f32.mrb[0].mxu0
        %v7592 = vpop.f32.mrb[0].mxu0
        %v7593 = vpop.f32.mrb[0].mxu0
        %7594 = vdwg.mxu0
        %7595 = vmatprep.subr.bf16.mxu0 0
        %7596 = vmatpush1.bf16.msra.mxu0 %v4567
        %7597 = vmatprep.subr.bf16.mxu0 0
        %7598 = vmatpush1.bf16.msra.mxu0 %v4568
        %7599 = vmatprep.subr.bf16.mxu0 0
        %7600 = vmatpush1.bf16.msra.mxu0 %v4569
        %7601 = vmatprep.subr.bf16.mxu0 0
        %7602 = vmatpush1.bf16.msra.mxu0 %v4570
        %7603 = vmatprep.subr.bf16.mxu0 0
        %7604 = vmatpush1.bf16.msra.mxu0 %v4571
        %7605 = vmatprep.subr.bf16.mxu0 0
        %7606 = vmatpush1.bf16.msra.mxu0 %v4572
        %7607 = vmatprep.subr.bf16.mxu0 0
        %7608 = vmatpush1.bf16.msra.mxu0 %v4573
        %7609 = vmatprep.subr.bf16.mxu0 0
        %7610 = vmatpush1.bf16.msra.mxu0 %v4574
        %7611 = vmatprep.subr.bf16.mxu0 0
        %7612 = vmatpush1.bf16.msra.mxu0 %v4575
        %7613 = vmatprep.subr.bf16.mxu0 0
        %7614 = vmatpush1.bf16.msra.mxu0 %v4576
        %7615 = vmatprep.subr.bf16.mxu0 0
        %7616 = vmatpush1.bf16.msra.mxu0 %v4577
        %7617 = vmatprep.subr.bf16.mxu0 0
        %7618 = vmatpush1.bf16.msra.mxu0 %v4578
        %7619 = vmatprep.subr.bf16.mxu0 0
        %7620 = vmatpush1.bf16.msra.mxu0 %v4579
        %7621 = vmatprep.subr.bf16.mxu0 0
        %7622 = vmatpush1.bf16.msra.mxu0 %v4580
        %7623 = vmatprep.subr.bf16.mxu0 0
        %7624 = vmatpush1.bf16.msra.mxu0 %v4581
        %7625 = vmatprep.subr.bf16.mxu0 0
        %7626 = vmatpush1.bf16.msra.mxu0 %v4582
        %7627 = vmatprep.mubr.bf16.mxu0 %v1843
        %7628 = vmatmul.mubr.bf16.gmra.mrb[0].mxu0 %v1842
        %v7629 = vpop.f32.mrb[0].mxu0
        %v7630 = vadd.f32 %v7590, %v7629
        %v7631 = vpop.f32.mrb[0].mxu0
        %v7632 = vpop.f32.mrb[0].mxu0
        %v7633 = vpop.f32.mrb[0].mxu0
        %7634 = vdwg.mxu0
        %7635 = vmatprep.subr.bf16.mxu0 0
        %7636 = vmatpush1.bf16.msra.mxu0 %v4583
        %7637 = vmatprep.subr.bf16.mxu0 0
        %7638 = vmatpush1.bf16.msra.mxu0 %v4584
        %7639 = vmatprep.subr.bf16.mxu0 0
        %7640 = vmatpush1.bf16.msra.mxu0 %v4585
        %7641 = vmatprep.subr.bf16.mxu0 0
        %7642 = vmatpush1.bf16.msra.mxu0 %v4586
        %7643 = vmatprep.subr.bf16.mxu0 0
        %7644 = vmatpush1.bf16.msra.mxu0 %v4587
        %7645 = vmatprep.subr.bf16.mxu0 0
        %7646 = vmatpush1.bf16.msra.mxu0 %v4588
        %7647 = vmatprep.subr.bf16.mxu0 0
        %7648 = vmatpush1.bf16.msra.mxu0 %v4589
        %7649 = vmatprep.subr.bf16.mxu0 0
        %7650 = vmatpush1.bf16.msra.mxu0 %v4590
        %7651 = vmatprep.subr.bf16.mxu0 0
        %7652 = vmatpush1.bf16.msra.mxu0 %v4591
        %7653 = vmatprep.subr.bf16.mxu0 0
        %7654 = vmatpush1.bf16.msra.mxu0 %v4592
        %7655 = vmatprep.subr.bf16.mxu0 0
        %7656 = vmatpush1.bf16.msra.mxu0 %v4593
        %7657 = vmatprep.subr.bf16.mxu0 0
        %7658 = vmatpush1.bf16.msra.mxu0 %v4594
        %7659 = vmatprep.subr.bf16.mxu0 0
        %7660 = vmatpush1.bf16.msra.mxu0 %v4595
        %7661 = vmatprep.subr.bf16.mxu0 0
        %7662 = vmatpush1.bf16.msra.mxu0 %v4596
        %7663 = vmatprep.subr.bf16.mxu0 0
        %7664 = vmatpush1.bf16.msra.mxu0 %v4597
        %7665 = vmatprep.subr.bf16.mxu0 0
        %7666 = vmatpush1.bf16.msra.mxu0 %v4598
        %7667 = vmatprep.mubr.bf16.mxu0 %v1845
        %7668 = vmatmul.mubr.bf16.gmra.mrb[0].mxu0 %v1844
        %v7669 = vpop.f32.mrb[0].mxu0
        %v7670 = vadd.f32 %v7630, %v7669
        %v7671 = vpop.f32.mrb[0].mxu0
        %v7672 = vpop.f32.mrb[0].mxu0
        %v7673 = vpop.f32.mrb[0].mxu0
        %7674 = vdwg.mxu0
        %7675 = vmatprep.subr.bf16.mxu0 0
        %7676 = vmatpush1.bf16.msra.mxu0 %v4599
        %7677 = vmatprep.subr.bf16.mxu0 0
        %7678 = vmatpush1.bf16.msra.mxu0 %v4600
        %7679 = vmatprep.subr.bf16.mxu0 0
        %7680 = vmatpush1.bf16.msra.mxu0 %v4601
        %7681 = vmatprep.subr.bf16.mxu0 0
        %7682 = vmatpush1.bf16.msra.mxu0 %v4602
        %7683 = vmatprep.subr.bf16.mxu0 0
        %7684 = vmatpush1.bf16.msra.mxu0 %v4603
        %7685 = vmatprep.subr.bf16.mxu0 0
        %7686 = vmatpush1.bf16.msra.mxu0 %v4604
        %7687 = vmatprep.subr.bf16.mxu0 0
        %7688 = vmatpush1.bf16.msra.mxu0 %v4605
        %7689 = vmatprep.subr.bf16.mxu0 0
        %7690 = vmatpush1.bf16.msra.mxu0 %v4606
        %7691 = vmatprep.subr.bf16.mxu0 0
        %7692 = vmatpush1.bf16.msra.mxu0 %v4607
        %7693 = vmatprep.subr.bf16.mxu0 0
        %7694 = vmatpush1.bf16.msra.mxu0 %v4608
        %7695 = vmatprep.subr.bf16.mxu0 0
        %7696 = vmatpush1.bf16.msra.mxu0 %v4609
        %7697 = vmatprep.subr.bf16.mxu0 0
        %7698 = vmatpush1.bf16.msra.mxu0 %v4610
        %7699 = vmatprep.subr.bf16.mxu0 0
        %7700 = vmatpush1.bf16.msra.mxu0 %v4611
        %7701 = vmatprep.subr.bf16.mxu0 0
        %7702 = vmatpush1.bf16.msra.mxu0 %v4612
        %7703 = vmatprep.subr.bf16.mxu0 0
        %7704 = vmatpush1.bf16.msra.mxu0 %v4613
        %7705 = vmatprep.subr.bf16.mxu0 0
        %7706 = vmatpush1.bf16.msra.mxu0 %v4614
        %7707 = vmatprep.mubr.bf16.mxu0 %v1847
        %7708 = vmatmul.mubr.bf16.gmra.mrb[0].mxu0 %v1846
        %v7709 = vpop.f32.mrb[0].mxu0
        %v7710 = vadd.f32 %v7670, %v7709
        %v7711 = vpop.f32.mrb[0].mxu0
        %v7712 = vpop.f32.mrb[0].mxu0
        %v7713 = vpop.f32.mrb[0].mxu0
        %7714 = vdwg.mxu0
        %7715 = vmatprep.subr.bf16.mxu0 0
        %7716 = vmatpush1.bf16.msra.mxu0 %v4615
        %7717 = vmatprep.subr.bf16.mxu0 0
        %7718 = vmatpush1.bf16.msra.mxu0 %v4616
        %7719 = vmatprep.subr.bf16.mxu0 0
        %7720 = vmatpush1.bf16.msra.mxu0 %v4617
        %7721 = vmatprep.subr.bf16.mxu0 0
        %7722 = vmatpush1.bf16.msra.mxu0 %v4618
        %7723 = vmatprep.subr.bf16.mxu0 0
        %7724 = vmatpush1.bf16.msra.mxu0 %v4619
        %7725 = vmatprep.subr.bf16.mxu0 0
        %7726 = vmatpush1.bf16.msra.mxu0 %v4620
        %7727 = vmatprep.subr.bf16.mxu0 0
        %7728 = vmatpush1.bf16.msra.mxu0 %v4621
        %7729 = vmatprep.subr.bf16.mxu0 0
        %7730 = vmatpush1.bf16.msra.mxu0 %v4622
        %7731 = vmatprep.subr.bf16.mxu0 0
        %7732 = vmatpush1.bf16.msra.mxu0 %v4623
        %7733 = vmatprep.subr.bf16.mxu0 0
        %7734 = vmatpush1.bf16.msra.mxu0 %v4624
        %7735 = vmatprep.subr.bf16.mxu0 0
        %7736 = vmatpush1.bf16.msra.mxu0 %v4625
        %7737 = vmatprep.subr.bf16.mxu0 0
        %7738 = vmatpush1.bf16.msra.mxu0 %v4626
        %7739 = vmatprep.subr.bf16.mxu0 0
        %7740 = vmatpush1.bf16.msra.mxu0 %v4627
        %7741 = vmatprep.subr.bf16.mxu0 0
        %7742 = vmatpush1.bf16.msra.mxu0 %v4628
        %7743 = vmatprep.subr.bf16.mxu0 0
        %7744 = vmatpush1.bf16.msra.mxu0 %v4629
        %7745 = vmatprep.subr.bf16.mxu0 0
        %7746 = vmatpush1.bf16.msra.mxu0 %v4630
        %7747 = vmatprep.mubr.bf16.mxu0 %v1849
        %7748 = vmatmul.mubr.bf16.gmra.mrb[0].mxu0 %v1848
        %v7749 = vpop.f32.mrb[0].mxu0
        %v7750 = vadd.f32 %v7710, %v7749
        %v7751 = vpop.f32.mrb[0].mxu0
        %v7752 = vpop.f32.mrb[0].mxu0
        %v7753 = vpop.f32.mrb[0].mxu0
        %7754 = vdwg.mxu0
        %7755 = vmatprep.subr.bf16.mxu0 0
        %7756 = vmatpush1.bf16.msra.mxu0 %v4631
        %7757 = vmatprep.subr.bf16.mxu0 0
        %7758 = vmatpush1.bf16.msra.mxu0 %v4632
        %7759 = vmatprep.subr.bf16.mxu0 0
        %7760 = vmatpush1.bf16.msra.mxu0 %v4633
        %7761 = vmatprep.subr.bf16.mxu0 0
        %7762 = vmatpush1.bf16.msra.mxu0 %v4634
        %7763 = vmatprep.subr.bf16.mxu0 0
        %7764 = vmatpush1.bf16.msra.mxu0 %v4635
        %7765 = vmatprep.subr.bf16.mxu0 0
        %7766 = vmatpush1.bf16.msra.mxu0 %v4636
        %7767 = vmatprep.subr.bf16.mxu0 0
        %7768 = vmatpush1.bf16.msra.mxu0 %v4637
        %7769 = vmatprep.subr.bf16.mxu0 0
        %7770 = vmatpush1.bf16.msra.mxu0 %v4638
        %7771 = vmatprep.subr.bf16.mxu0 0
        %7772 = vmatpush1.bf16.msra.mxu0 %v4639
        %7773 = vmatprep.subr.bf16.mxu0 0
        %7774 = vmatpush1.bf16.msra.mxu0 %v4640
        %7775 = vmatprep.subr.bf16.mxu0 0
        %7776 = vmatpush1.bf16.msra.mxu0 %v4641
        %7777 = vmatprep.subr.bf16.mxu0 0
        %7778 = vmatpush1.bf16.msra.mxu0 %v4642
        %7779 = vmatprep.subr.bf16.mxu0 0
        %7780 = vmatpush1.bf16.msra.mxu0 %v4643
        %7781 = vmatprep.subr.bf16.mxu0 0
        %7782 = vmatpush1.bf16.msra.mxu0 %v4644
        %7783 = vmatprep.subr.bf16.mxu0 0
        %7784 = vmatpush1.bf16.msra.mxu0 %v4645
        %7785 = vmatprep.subr.bf16.mxu0 0
        %7786 = vmatpush1.bf16.msra.mxu0 %v4646
        %7787 = vmatprep.mubr.bf16.mxu0 %v1851
        %7788 = vmatmul.mubr.bf16.gmra.mrb[0].mxu0 %v1850
        %v7789 = vpop.f32.mrb[0].mxu0
        %v7790 = vadd.f32 %v7750, %v7789
        %v7791 = vpop.f32.mrb[0].mxu0
        %v7792 = vpop.f32.mrb[0].mxu0
        %v7793 = vpop.f32.mrb[0].mxu0
        %7794 = vdwg.mxu0
        %7795 = vmatprep.subr.bf16.mxu0 0
        %7796 = vmatpush1.bf16.msra.mxu0 %v4647
        %7797 = vmatprep.subr.bf16.mxu0 0
        %7798 = vmatpush1.bf16.msra.mxu0 %v4648
        %7799 = vmatprep.subr.bf16.mxu0 0
        %7800 = vmatpush1.bf16.msra.mxu0 %v4649
        %7801 = vmatprep.subr.bf16.mxu0 0
        %7802 = vmatpush1.bf16.msra.mxu0 %v4650
        %7803 = vmatprep.subr.bf16.mxu0 0
        %7804 = vmatpush1.bf16.msra.mxu0 %v4651
        %7805 = vmatprep.subr.bf16.mxu0 0
        %7806 = vmatpush1.bf16.msra.mxu0 %v4652
        %7807 = vmatprep.subr.bf16.mxu0 0
        %7808 = vmatpush1.bf16.msra.mxu0 %v4653
        %7809 = vmatprep.subr.bf16.mxu0 0
        %7810 = vmatpush1.bf16.msra.mxu0 %v4654
        %7811 = vmatprep.subr.bf16.mxu0 0
        %7812 = vmatpush1.bf16.msra.mxu0 %v4655
        %7813 = vmatprep.subr.bf16.mxu0 0
        %7814 = vmatpush1.bf16.msra.mxu0 %v4656
        %7815 = vmatprep.subr.bf16.mxu0 0
        %7816 = vmatpush1.bf16.msra.mxu0 %v4657
        %7817 = vmatprep.subr.bf16.mxu0 0
        %7818 = vmatpush1.bf16.msra.mxu0 %v4658
        %7819 = vmatprep.subr.bf16.mxu0 0
        %7820 = vmatpush1.bf16.msra.mxu0 %v4659
        %7821 = vmatprep.subr.bf16.mxu0 0
        %7822 = vmatpush1.bf16.msra.mxu0 %v4660
        %7823 = vmatprep.subr.bf16.mxu0 0
        %7824 = vmatpush1.bf16.msra.mxu0 %v4661
        %7825 = vmatprep.subr.bf16.mxu0 0
        %7826 = vmatpush1.bf16.msra.mxu0 %v4662
        %7827 = vmatprep.mubr.bf16.mxu0 %v1853
        %7828 = vmatmul.mubr.bf16.gmra.mrb[0].mxu0 %v1852
        %v7829 = vpop.f32.mrb[0].mxu0
        %v7830 = vadd.f32 %v7790, %v7829
        %v7831 = vpop.f32.mrb[0].mxu0
        %v7832 = vpop.f32.mrb[0].mxu0
        %v7833 = vpop.f32.mrb[0].mxu0
        %7834 = vdwg.mxu0
        %7835 = vmatprep.subr.bf16.mxu0 0
        %7836 = vmatpush1.bf16.msra.mxu0 %v4663
        %7837 = vmatprep.subr.bf16.mxu0 0
        %7838 = vmatpush1.bf16.msra.mxu0 %v4664
        %7839 = vmatprep.subr.bf16.mxu0 0
        %7840 = vmatpush1.bf16.msra.mxu0 %v4665
        %7841 = vmatprep.subr.bf16.mxu0 0
        %7842 = vmatpush1.bf16.msra.mxu0 %v4666
        %7843 = vmatprep.subr.bf16.mxu0 0
        %7844 = vmatpush1.bf16.msra.mxu0 %v4667
        %7845 = vmatprep.subr.bf16.mxu0 0
        %7846 = vmatpush1.bf16.msra.mxu0 %v4668
        %7847 = vmatprep.subr.bf16.mxu0 0
        %7848 = vmatpush1.bf16.msra.mxu0 %v4669
        %7849 = vmatprep.subr.bf16.mxu0 0
        %7850 = vmatpush1.bf16.msra.mxu0 %v4670
        %7851 = vmatprep.subr.bf16.mxu0 0
        %7852 = vmatpush1.bf16.msra.mxu0 %v4671
        %7853 = vmatprep.subr.bf16.mxu0 0
        %7854 = vmatpush1.bf16.msra.mxu0 %v4672
        %7855 = vmatprep.subr.bf16.mxu0 0
        %7856 = vmatpush1.bf16.msra.mxu0 %v4673
        %7857 = vmatprep.subr.bf16.mxu0 0
        %7858 = vmatpush1.bf16.msra.mxu0 %v4674
        %7859 = vmatprep.subr.bf16.mxu0 0
        %7860 = vmatpush1.bf16.msra.mxu0 %v4675
        %7861 = vmatprep.subr.bf16.mxu0 0
        %7862 = vmatpush1.bf16.msra.mxu0 %v4676
        %7863 = vmatprep.subr.bf16.mxu0 0
        %7864 = vmatpush1.bf16.msra.mxu0 %v4677
        %7865 = vmatprep.subr.bf16.mxu0 0
        %7866 = vmatpush1.bf16.msra.mxu0 %v4678
        %7867 = vmatprep.mubr.bf16.mxu0 %v1855
        %7868 = vmatmul.mubr.bf16.gmra.mrb[0].mxu0 %v1854
        %v7869 = vpop.f32.mrb[0].mxu0
        %v7870 = vadd.f32 %v7830, %v7869
        %v7871 = vpop.f32.mrb[0].mxu0
        %v7872 = vpop.f32.mrb[0].mxu0
        %v7873 = vpop.f32.mrb[0].mxu0
        %7874 = vdwg.mxu0
        %7875 = vmatprep.subr.bf16.mxu0 0
        %7876 = vmatpush1.bf16.msra.mxu0 %v4679
        %7877 = vmatprep.subr.bf16.mxu0 0
        %7878 = vmatpush1.bf16.msra.mxu0 %v4680
        %7879 = vmatprep.subr.bf16.mxu0 0
        %7880 = vmatpush1.bf16.msra.mxu0 %v4681
        %7881 = vmatprep.subr.bf16.mxu0 0
        %7882 = vmatpush1.bf16.msra.mxu0 %v4682
        %7883 = vmatprep.subr.bf16.mxu0 0
        %7884 = vmatpush1.bf16.msra.mxu0 %v4683
        %7885 = vmatprep.subr.bf16.mxu0 0
        %7886 = vmatpush1.bf16.msra.mxu0 %v4684
        %7887 = vmatprep.subr.bf16.mxu0 0
        %7888 = vmatpush1.bf16.msra.mxu0 %v4685
        %7889 = vmatprep.subr.bf16.mxu0 0
        %7890 = vmatpush1.bf16.msra.mxu0 %v4686
        %7891 = vmatprep.subr.bf16.mxu0 0
        %7892 = vmatpush1.bf16.msra.mxu0 %v4687
        %7893 = vmatprep.subr.bf16.mxu0 0
        %7894 = vmatpush1.bf16.msra.mxu0 %v4688
        %7895 = vmatprep.subr.bf16.mxu0 0
        %7896 = vmatpush1.bf16.msra.mxu0 %v4689
        %7897 = vmatprep.subr.bf16.mxu0 0
        %7898 = vmatpush1.bf16.msra.mxu0 %v4690
        %7899 = vmatprep.subr.bf16.mxu0 0
        %7900 = vmatpush1.bf16.msra.mxu0 %v4691
        %7901 = vmatprep.subr.bf16.mxu0 0
        %7902 = vmatpush1.bf16.msra.mxu0 %v4692
        %7903 = vmatprep.subr.bf16.mxu0 0
        %7904 = vmatpush1.bf16.msra.mxu0 %v4693
        %7905 = vmatprep.subr.bf16.mxu0 0
        %7906 = vmatpush1.bf16.msra.mxu0 %v4694
        %7907 = vmatprep.mubr.bf16.mxu0 %v1857
        %7908 = vmatmul.mubr.bf16.gmra.mrb[0].mxu0 %v1856
        %v7909 = vpop.f32.mrb[0].mxu0
        %v7910 = vadd.f32 %v7870, %v7909
        %v7911 = vpop.f32.mrb[0].mxu0
        %v7912 = vpop.f32.mrb[0].mxu0
        %v7913 = vpop.f32.mrb[0].mxu0
        %7914 = vdwg.mxu0
        %7915 = vmatprep.subr.bf16.mxu0 0
        %7916 = vmatpush1.bf16.msra.mxu0 %v4695
        %7917 = vmatprep.subr.bf16.mxu0 0
        %7918 = vmatpush1.bf16.msra.mxu0 %v4696
        %7919 = vmatprep.subr.bf16.mxu0 0
        %7920 = vmatpush1.bf16.msra.mxu0 %v4697
        %7921 = vmatprep.subr.bf16.mxu0 0
        %7922 = vmatpush1.bf16.msra.mxu0 %v4698
        %7923 = vmatprep.subr.bf16.mxu0 0
        %7924 = vmatpush1.bf16.msra.mxu0 %v4699
        %7925 = vmatprep.subr.bf16.mxu0 0
        %7926 = vmatpush1.bf16.msra.mxu0 %v4700
        %7927 = vmatprep.subr.bf16.mxu0 0
        %7928 = vmatpush1.bf16.msra.mxu0 %v4701
        %7929 = vmatprep.subr.bf16.mxu0 0
        %7930 = vmatpush1.bf16.msra.mxu0 %v4702
        %7931 = vmatprep.subr.bf16.mxu0 0
        %7932 = vmatpush1.bf16.msra.mxu0 %v4703
        %7933 = vmatprep.subr.bf16.mxu0 0
        %7934 = vmatpush1.bf16.msra.mxu0 %v4704
        %7935 = vmatprep.subr.bf16.mxu0 0
        %7936 = vmatpush1.bf16.msra.mxu0 %v4705
        %7937 = vmatprep.subr.bf16.mxu0 0
        %7938 = vmatpush1.bf16.msra.mxu0 %v4706
        %7939 = vmatprep.subr.bf16.mxu0 0
        %7940 = vmatpush1.bf16.msra.mxu0 %v4707
        %7941 = vmatprep.subr.bf16.mxu0 0
        %7942 = vmatpush1.bf16.msra.mxu0 %v4708
        %7943 = vmatprep.subr.bf16.mxu0 0
        %7944 = vmatpush1.bf16.msra.mxu0 %v4709
        %7945 = vmatprep.subr.bf16.mxu0 0
        %7946 = vmatpush1.bf16.msra.mxu0 %v4710
        %7947 = vmatprep.mubr.bf16.mxu0 %v1859
        %7948 = vmatmul.mubr.bf16.gmra.mrb[0].mxu0 %v1858
        %v7949 = vpop.f32.mrb[0].mxu0
        %v7950 = vadd.f32 %v7910, %v7949
        %v7951 = vpop.f32.mrb[0].mxu0
        %v7952 = vpop.f32.mrb[0].mxu0
        %v7953 = vpop.f32.mrb[0].mxu0
        %7954 = vdwg.mxu0
        %7955 = vmatprep.subr.bf16.mxu0 0
        %7956 = vmatpush1.bf16.msra.mxu0 %v4711
        %7957 = vmatprep.subr.bf16.mxu0 0
        %7958 = vmatpush1.bf16.msra.mxu0 %v4712
        %7959 = vmatprep.subr.bf16.mxu0 0
        %7960 = vmatpush1.bf16.msra.mxu0 %v4713
        %7961 = vmatprep.subr.bf16.mxu0 0
        %7962 = vmatpush1.bf16.msra.mxu0 %v4714
        %7963 = vmatprep.subr.bf16.mxu0 0
        %7964 = vmatpush1.bf16.msra.mxu0 %v4715
        %7965 = vmatprep.subr.bf16.mxu0 0
        %7966 = vmatpush1.bf16.msra.mxu0 %v4716
        %7967 = vmatprep.subr.bf16.mxu0 0
        %7968 = vmatpush1.bf16.msra.mxu0 %v4717
        %7969 = vmatprep.subr.bf16.mxu0 0
        %7970 = vmatpush1.bf16.msra.mxu0 %v4718
        %7971 = vmatprep.subr.bf16.mxu0 0
        %7972 = vmatpush1.bf16.msra.mxu0 %v4719
        %7973 = vmatprep.subr.bf16.mxu0 0
        %7974 = vmatpush1.bf16.msra.mxu0 %v4720
        %7975 = vmatprep.subr.bf16.mxu0 0
        %7976 = vmatpush1.bf16.msra.mxu0 %v4721
        %7977 = vmatprep.subr.bf16.mxu0 0
        %7978 = vmatpush1.bf16.msra.mxu0 %v4722
        %7979 = vmatprep.subr.bf16.mxu0 0
        %7980 = vmatpush1.bf16.msra.mxu0 %v4723
        %7981 = vmatprep.subr.bf16.mxu0 0
        %7982 = vmatpush1.bf16.msra.mxu0 %v4724
        %7983 = vmatprep.subr.bf16.mxu0 0
        %7984 = vmatpush1.bf16.msra.mxu0 %v4725
        %7985 = vmatprep.subr.bf16.mxu0 0
        %7986 = vmatpush1.bf16.msra.mxu0 %v4726
        %7987 = vmatprep.mubr.bf16.mxu0 %v1861
        %7988 = vmatmul.mubr.bf16.gmra.mrb[0].mxu0 %v1860
        %v7989 = vpop.f32.mrb[0].mxu0
        %v7990 = vadd.f32 %v7950, %v7989
        %v7991 = vpop.f32.mrb[0].mxu0
        %v7992 = vpop.f32.mrb[0].mxu0
        %v7993 = vpop.f32.mrb[0].mxu0
        %7994 = vdwg.mxu0
        %7995 = vmatprep.subr.bf16.mxu0 0
        %7996 = vmatpush1.bf16.msra.mxu0 %v4727
        %7997 = vmatprep.subr.bf16.mxu0 0
        %7998 = vmatpush1.bf16.msra.mxu0 %v4728
        %7999 = vmatprep.subr.bf16.mxu0 0
        %8000 = vmatpush1.bf16.msra.mxu0 %v4729
        %8001 = vmatprep.subr.bf16.mxu0 0
        %8002 = vmatpush1.bf16.msra.mxu0 %v4730
        %8003 = vmatprep.subr.bf16.mxu0 0
        %8004 = vmatpush1.bf16.msra.mxu0 %v4731
        %8005 = vmatprep.subr.bf16.mxu0 0
        %8006 = vmatpush1.bf16.msra.mxu0 %v4732
        %8007 = vmatprep.subr.bf16.mxu0 0
        %8008 = vmatpush1.bf16.msra.mxu0 %v4733
        %8009 = vmatprep.subr.bf16.mxu0 0
        %8010 = vmatpush1.bf16.msra.mxu0 %v4734
        %8011 = vmatprep.subr.bf16.mxu0 0
        %8012 = vmatpush1.bf16.msra.mxu0 %v4735
        %8013 = vmatprep.subr.bf16.mxu0 0
        %8014 = vmatpush1.bf16.msra.mxu0 %v4736
        %8015 = vmatprep.subr.bf16.mxu0 0
        %8016 = vmatpush1.bf16.msra.mxu0 %v4737
        %8017 = vmatprep.subr.bf16.mxu0 0
        %8018 = vmatpush1.bf16.msra.mxu0 %v4738
        %8019 = vmatprep.subr.bf16.mxu0 0
        %8020 = vmatpush1.bf16.msra.mxu0 %v4739
        %8021 = vmatprep.subr.bf16.mxu0 0
        %8022 = vmatpush1.bf16.msra.mxu0 %v4740
        %8023 = vmatprep.subr.bf16.mxu0 0
        %8024 = vmatpush1.bf16.msra.mxu0 %v4741
        %8025 = vmatprep.subr.bf16.mxu0 0
        %8026 = vmatpush1.bf16.msra.mxu0 %v4742
        %8027 = vmatprep.mubr.bf16.mxu0 %v1863
        %8028 = vmatmul.mubr.bf16.gmra.mrb[0].mxu0 %v1862
        %v8029 = vpop.f32.mrb[0].mxu0
        %v8030 = vadd.f32 %v7990, %v8029
        %v8031 = vpop.f32.mrb[0].mxu0
        %v8032 = vpop.f32.mrb[0].mxu0
        %v8033 = vpop.f32.mrb[0].mxu0
        %8034 = vdwg.mxu0
        %8035 = vmatprep.subr.bf16.mxu0 0
        %8036 = vmatpush1.bf16.msra.mxu0 %v4743
        %8037 = vmatprep.subr.bf16.mxu0 0
        %8038 = vmatpush1.bf16.msra.mxu0 %v4744
        %8039 = vmatprep.subr.bf16.mxu0 0
        %8040 = vmatpush1.bf16.msra.mxu0 %v4745
        %8041 = vmatprep.subr.bf16.mxu0 0
        %8042 = vmatpush1.bf16.msra.mxu0 %v4746
        %8043 = vmatprep.subr.bf16.mxu0 0
        %8044 = vmatpush1.bf16.msra.mxu0 %v4747
        %8045 = vmatprep.subr.bf16.mxu0 0
        %8046 = vmatpush1.bf16.msra.mxu0 %v4748
        %8047 = vmatprep.subr.bf16.mxu0 0
        %8048 = vmatpush1.bf16.msra.mxu0 %v4749
        %8049 = vmatprep.subr.bf16.mxu0 0
        %8050 = vmatpush1.bf16.msra.mxu0 %v4750
        %8051 = vmatprep.subr.bf16.mxu0 0
        %8052 = vmatpush1.bf16.msra.mxu0 %v4751
        %8053 = vmatprep.subr.bf16.mxu0 0
        %8054 = vmatpush1.bf16.msra.mxu0 %v4752
        %8055 = vmatprep.subr.bf16.mxu0 0
        %8056 = vmatpush1.bf16.msra.mxu0 %v4753
        %8057 = vmatprep.subr.bf16.mxu0 0
        %8058 = vmatpush1.bf16.msra.mxu0 %v4754
        %8059 = vmatprep.subr.bf16.mxu0 0
        %8060 = vmatpush1.bf16.msra.mxu0 %v4755
        %8061 = vmatprep.subr.bf16.mxu0 0
        %8062 = vmatpush1.bf16.msra.mxu0 %v4756
        %8063 = vmatprep.subr.bf16.mxu0 0
        %8064 = vmatpush1.bf16.msra.mxu0 %v4757
        %8065 = vmatprep.subr.bf16.mxu0 0
        %8066 = vmatpush1.bf16.msra.mxu0 %v4758
        %8067 = vmatprep.mubr.bf16.mxu0 %v1865
        %8068 = vmatmul.mubr.bf16.gmra.mrb[0].mxu0 %v1864
        %v8069 = vpop.f32.mrb[0].mxu0
        %v8070 = vadd.f32 %v8030, %v8069
        %v8071 = vpop.f32.mrb[0].mxu0
        %v8072 = vpop.f32.mrb[0].mxu0
        %v8073 = vpop.f32.mrb[0].mxu0
        %8074 = vdwg.mxu0
        %8075 = vmatprep.subr.bf16.mxu0 0
        %8076 = vmatpush1.bf16.msra.mxu0 %v4759
        %8077 = vmatprep.subr.bf16.mxu0 0
        %8078 = vmatpush1.bf16.msra.mxu0 %v4760
        %8079 = vmatprep.subr.bf16.mxu0 0
        %8080 = vmatpush1.bf16.msra.mxu0 %v4761
        %8081 = vmatprep.subr.bf16.mxu0 0
        %8082 = vmatpush1.bf16.msra.mxu0 %v4762
        %8083 = vmatprep.subr.bf16.mxu0 0
        %8084 = vmatpush1.bf16.msra.mxu0 %v4763
        %8085 = vmatprep.subr.bf16.mxu0 0
        %8086 = vmatpush1.bf16.msra.mxu0 %v4764
        %8087 = vmatprep.subr.bf16.mxu0 0
        %8088 = vmatpush1.bf16.msra.mxu0 %v4765
        %8089 = vmatprep.subr.bf16.mxu0 0
        %8090 = vmatpush1.bf16.msra.mxu0 %v4766
        %8091 = vmatprep.subr.bf16.mxu0 0
        %8092 = vmatpush1.bf16.msra.mxu0 %v4767
        %8093 = vmatprep.subr.bf16.mxu0 0
        %8094 = vmatpush1.bf16.msra.mxu0 %v4768
        %8095 = vmatprep.subr.bf16.mxu0 0
        %8096 = vmatpush1.bf16.msra.mxu0 %v4769
        %8097 = vmatprep.subr.bf16.mxu0 0
        %8098 = vmatpush1.bf16.msra.mxu0 %v4770
        %8099 = vmatprep.subr.bf16.mxu0 0
        %8100 = vmatpush1.bf16.msra.mxu0 %v4771
        %8101 = vmatprep.subr.bf16.mxu0 0
        %8102 = vmatpush1.bf16.msra.mxu0 %v4772
        %8103 = vmatprep.subr.bf16.mxu0 0
        %8104 = vmatpush1.bf16.msra.mxu0 %v4773
        %8105 = vmatprep.subr.bf16.mxu0 0
        %8106 = vmatpush1.bf16.msra.mxu0 %v4774
        %8107 = vmatprep.mubr.bf16.mxu0 %v1867
        %8108 = vmatmul.mubr.bf16.gmra.mrb[0].mxu0 %v1866
        %v8109 = vpop.f32.mrb[0].mxu0
        %v8110 = vadd.f32 %v8070, %v8109
        %v8111 = vpop.f32.mrb[0].mxu0
        %v8112 = vpop.f32.mrb[0].mxu0
        %v8113 = vpop.f32.mrb[0].mxu0
        %8114 = vdwg.mxu0
        %8115 = vmatprep.subr.bf16.mxu0 0
        %8116 = vmatpush1.bf16.msra.mxu0 %v4775
        %8117 = vmatprep.subr.bf16.mxu0 0
        %8118 = vmatpush1.bf16.msra.mxu0 %v4776
        %8119 = vmatprep.subr.bf16.mxu0 0
        %8120 = vmatpush1.bf16.msra.mxu0 %v4777
        %8121 = vmatprep.subr.bf16.mxu0 0
        %8122 = vmatpush1.bf16.msra.mxu0 %v4778
        %8123 = vmatprep.subr.bf16.mxu0 0
        %8124 = vmatpush1.bf16.msra.mxu0 %v4779
        %8125 = vmatprep.subr.bf16.mxu0 0
        %8126 = vmatpush1.bf16.msra.mxu0 %v4780
        %8127 = vmatprep.subr.bf16.mxu0 0
        %8128 = vmatpush1.bf16.msra.mxu0 %v4781
        %8129 = vmatprep.subr.bf16.mxu0 0
        %8130 = vmatpush1.bf16.msra.mxu0 %v4782
        %8131 = vmatprep.subr.bf16.mxu0 0
        %8132 = vmatpush1.bf16.msra.mxu0 %v4783
        %8133 = vmatprep.subr.bf16.mxu0 0
        %8134 = vmatpush1.bf16.msra.mxu0 %v4784
        %8135 = vmatprep.subr.bf16.mxu0 0
        %8136 = vmatpush1.bf16.msra.mxu0 %v4785
        %8137 = vmatprep.subr.bf16.mxu0 0
        %8138 = vmatpush1.bf16.msra.mxu0 %v4786
        %8139 = vmatprep.subr.bf16.mxu0 0
        %8140 = vmatpush1.bf16.msra.mxu0 %v4787
        %8141 = vmatprep.subr.bf16.mxu0 0
        %8142 = vmatpush1.bf16.msra.mxu0 %v4788
        %8143 = vmatprep.subr.bf16.mxu0 0
        %8144 = vmatpush1.bf16.msra.mxu0 %v4789
        %8145 = vmatprep.subr.bf16.mxu0 0
        %8146 = vmatpush1.bf16.msra.mxu0 %v4790
        %8147 = vmatprep.mubr.bf16.mxu0 %v1869
        %8148 = vmatmul.mubr.bf16.gmra.mrb[0].mxu0 %v1868
        %v8149 = vpop.f32.mrb[0].mxu0
        %v8150 = vadd.f32 %v8110, %v8149
        %v8151 = vpop.f32.mrb[0].mxu0
        %v8152 = vpop.f32.mrb[0].mxu0
        %v8153 = vpop.f32.mrb[0].mxu0
        %8154 = vdwg.mxu0
        %8155 = vmatprep.subr.bf16.mxu0 0
        %8156 = vmatpush1.bf16.msra.mxu0 %v4791
        %8157 = vmatprep.subr.bf16.mxu0 0
        %8158 = vmatpush1.bf16.msra.mxu0 %v4792
        %8159 = vmatprep.subr.bf16.mxu0 0
        %8160 = vmatpush1.bf16.msra.mxu0 %v4793
        %8161 = vmatprep.subr.bf16.mxu0 0
        %8162 = vmatpush1.bf16.msra.mxu0 %v4794
        %8163 = vmatprep.subr.bf16.mxu0 0
        %8164 = vmatpush1.bf16.msra.mxu0 %v4795
        %8165 = vmatprep.subr.bf16.mxu0 0
        %8166 = vmatpush1.bf16.msra.mxu0 %v4796
        %8167 = vmatprep.subr.bf16.mxu0 0
        %8168 = vmatpush1.bf16.msra.mxu0 %v4797
        %8169 = vmatprep.subr.bf16.mxu0 0
        %8170 = vmatpush1.bf16.msra.mxu0 %v4798
        %8171 = vmatprep.subr.bf16.mxu0 0
        %8172 = vmatpush1.bf16.msra.mxu0 %v4799
        %8173 = vmatprep.subr.bf16.mxu0 0
        %8174 = vmatpush1.bf16.msra.mxu0 %v4800
        %8175 = vmatprep.subr.bf16.mxu0 0
        %8176 = vmatpush1.bf16.msra.mxu0 %v4801
        %8177 = vmatprep.subr.bf16.mxu0 0
        %8178 = vmatpush1.bf16.msra.mxu0 %v4802
        %8179 = vmatprep.subr.bf16.mxu0 0
        %8180 = vmatpush1.bf16.msra.mxu0 %v4803
        %8181 = vmatprep.subr.bf16.mxu0 0
        %8182 = vmatpush1.bf16.msra.mxu0 %v4804
        %8183 = vmatprep.subr.bf16.mxu0 0
        %8184 = vmatpush1.bf16.msra.mxu0 %v4805
        %8185 = vmatprep.subr.bf16.mxu0 0
        %8186 = vmatpush1.bf16.msra.mxu0 %v4806
        %8187 = vmatprep.mubr.bf16.mxu0 %v1871
        %8188 = vmatmul.mubr.bf16.gmra.mrb[0].mxu0 %v1870
        %v8189 = vpop.f32.mrb[0].mxu0
        %v8190 = vadd.f32 %v8150, %v8189
        %v8191 = vpop.f32.mrb[0].mxu0
        %v8192 = vpop.f32.mrb[0].mxu0
        %v8193 = vpop.f32.mrb[0].mxu0
        %8194 = vdwg.mxu0
        %8195 = vmatprep.subr.bf16.mxu0 0
        %8196 = vmatpush1.bf16.msra.mxu0 %v4807
        %8197 = vmatprep.subr.bf16.mxu0 0
        %8198 = vmatpush1.bf16.msra.mxu0 %v4808
        %8199 = vmatprep.subr.bf16.mxu0 0
        %8200 = vmatpush1.bf16.msra.mxu0 %v4809
        %8201 = vmatprep.subr.bf16.mxu0 0
        %8202 = vmatpush1.bf16.msra.mxu0 %v4810
        %8203 = vmatprep.subr.bf16.mxu0 0
        %8204 = vmatpush1.bf16.msra.mxu0 %v4811
        %8205 = vmatprep.subr.bf16.mxu0 0
        %8206 = vmatpush1.bf16.msra.mxu0 %v4812
        %8207 = vmatprep.subr.bf16.mxu0 0
        %8208 = vmatpush1.bf16.msra.mxu0 %v4813
        %8209 = vmatprep.subr.bf16.mxu0 0
        %8210 = vmatpush1.bf16.msra.mxu0 %v4814
        %8211 = vmatprep.subr.bf16.mxu0 0
        %8212 = vmatpush1.bf16.msra.mxu0 %v4815
        %8213 = vmatprep.subr.bf16.mxu0 0
        %8214 = vmatpush1.bf16.msra.mxu0 %v4816
        %8215 = vmatprep.subr.bf16.mxu0 0
        %8216 = vmatpush1.bf16.msra.mxu0 %v4817
        %8217 = vmatprep.subr.bf16.mxu0 0
        %8218 = vmatpush1.bf16.msra.mxu0 %v4818
        %8219 = vmatprep.subr.bf16.mxu0 0
        %8220 = vmatpush1.bf16.msra.mxu0 %v4819
        %8221 = vmatprep.subr.bf16.mxu0 0
        %8222 = vmatpush1.bf16.msra.mxu0 %v4820
        %8223 = vmatprep.subr.bf16.mxu0 0
        %8224 = vmatpush1.bf16.msra.mxu0 %v4821
        %8225 = vmatprep.subr.bf16.mxu0 0
        %8226 = vmatpush1.bf16.msra.mxu0 %v4822
        %8227 = vmatprep.mubr.bf16.mxu0 %v1873
        %8228 = vmatmul.mubr.bf16.gmra.mrb[0].mxu0 %v1872
        %v8229 = vpop.f32.mrb[0].mxu0
        %v8230 = vadd.f32 %v8190, %v8229
        %v8231 = vpop.f32.mrb[0].mxu0
        %v8232 = vpop.f32.mrb[0].mxu0
        %v8233 = vpop.f32.mrb[0].mxu0
        %8234 = vdwg.mxu0
        %8235 = vmatprep.subr.bf16.mxu0 0
        %8236 = vmatpush1.bf16.msra.mxu0 %v4823
        %8237 = vmatprep.subr.bf16.mxu0 0
        %8238 = vmatpush1.bf16.msra.mxu0 %v4824
        %8239 = vmatprep.subr.bf16.mxu0 0
        %8240 = vmatpush1.bf16.msra.mxu0 %v4825
        %8241 = vmatprep.subr.bf16.mxu0 0
        %8242 = vmatpush1.bf16.msra.mxu0 %v4826
        %8243 = vmatprep.subr.bf16.mxu0 0
        %8244 = vmatpush1.bf16.msra.mxu0 %v4827
        %8245 = vmatprep.subr.bf16.mxu0 0
        %8246 = vmatpush1.bf16.msra.mxu0 %v4828
        %8247 = vmatprep.subr.bf16.mxu0 0
        %8248 = vmatpush1.bf16.msra.mxu0 %v4829
        %8249 = vmatprep.subr.bf16.mxu0 0
        %8250 = vmatpush1.bf16.msra.mxu0 %v4830
        %8251 = vmatprep.subr.bf16.mxu0 0
        %8252 = vmatpush1.bf16.msra.mxu0 %v4831
        %8253 = vmatprep.subr.bf16.mxu0 0
        %8254 = vmatpush1.bf16.msra.mxu0 %v4832
        %8255 = vmatprep.subr.bf16.mxu0 0
        %8256 = vmatpush1.bf16.msra.mxu0 %v4833
        %8257 = vmatprep.subr.bf16.mxu0 0
        %8258 = vmatpush1.bf16.msra.mxu0 %v4834
        %8259 = vmatprep.subr.bf16.mxu0 0
        %8260 = vmatpush1.bf16.msra.mxu0 %v4835
        %8261 = vmatprep.subr.bf16.mxu0 0
        %8262 = vmatpush1.bf16.msra.mxu0 %v4836
        %8263 = vmatprep.subr.bf16.mxu0 0
        %8264 = vmatpush1.bf16.msra.mxu0 %v4837
        %8265 = vmatprep.subr.bf16.mxu0 0
        %8266 = vmatpush1.bf16.msra.mxu0 %v4838
        %8267 = vmatprep.mubr.bf16.mxu0 %v1875
        %8268 = vmatmul.mubr.bf16.gmra.mrb[0].mxu0 %v1874
        %v8269 = vpop.f32.mrb[0].mxu0
        %v8270 = vadd.f32 %v8230, %v8269
        %v8271 = vpop.f32.mrb[0].mxu0
        %v8272 = vpop.f32.mrb[0].mxu0
        %v8273 = vpop.f32.mrb[0].mxu0
        %8274 = vdwg.mxu0
        %8275 = vmatprep.subr.bf16.mxu0 0
        %8276 = vmatpush1.bf16.msra.mxu0 %v4839
        %8277 = vmatprep.subr.bf16.mxu0 0
        %8278 = vmatpush1.bf16.msra.mxu0 %v4840
        %8279 = vmatprep.subr.bf16.mxu0 0
        %8280 = vmatpush1.bf16.msra.mxu0 %v4841
        %8281 = vmatprep.subr.bf16.mxu0 0
        %8282 = vmatpush1.bf16.msra.mxu0 %v4842
        %8283 = vmatprep.subr.bf16.mxu0 0
        %8284 = vmatpush1.bf16.msra.mxu0 %v4843
        %8285 = vmatprep.subr.bf16.mxu0 0
        %8286 = vmatpush1.bf16.msra.mxu0 %v4844
        %8287 = vmatprep.subr.bf16.mxu0 0
        %8288 = vmatpush1.bf16.msra.mxu0 %v4845
        %8289 = vmatprep.subr.bf16.mxu0 0
        %8290 = vmatpush1.bf16.msra.mxu0 %v4846
        %8291 = vmatprep.subr.bf16.mxu0 0
        %8292 = vmatpush1.bf16.msra.mxu0 %v4847
        %8293 = vmatprep.subr.bf16.mxu0 0
        %8294 = vmatpush1.bf16.msra.mxu0 %v4848
        %8295 = vmatprep.subr.bf16.mxu0 0
        %8296 = vmatpush1.bf16.msra.mxu0 %v4849
        %8297 = vmatprep.subr.bf16.mxu0 0
        %8298 = vmatpush1.bf16.msra.mxu0 %v4850
        %8299 = vmatprep.subr.bf16.mxu0 0
        %8300 = vmatpush1.bf16.msra.mxu0 %v4851
        %8301 = vmatprep.subr.bf16.mxu0 0
        %8302 = vmatpush1.bf16.msra.mxu0 %v4852
        %8303 = vmatprep.subr.bf16.mxu0 0
        %8304 = vmatpush1.bf16.msra.mxu0 %v4853
        %8305 = vmatprep.subr.bf16.mxu0 0
        %8306 = vmatpush1.bf16.msra.mxu0 %v4854
        %8307 = vmatprep.mubr.bf16.mxu0 %v1877
        %8308 = vmatmul.mubr.bf16.gmra.mrb[0].mxu0 %v1876
        %v8309 = vpop.f32.mrb[0].mxu0
        %v8310 = vadd.f32 %v8270, %v8309
        %v8311 = vpop.f32.mrb[0].mxu0
        %v8312 = vpop.f32.mrb[0].mxu0
        %v8313 = vpop.f32.mrb[0].mxu0
        %8314 = vdwg.mxu0
        %8315 = vmatprep.subr.bf16.mxu0 0
        %8316 = vmatpush1.bf16.msra.mxu0 %v4855
        %8317 = vmatprep.subr.bf16.mxu0 0
        %8318 = vmatpush1.bf16.msra.mxu0 %v4856
        %8319 = vmatprep.subr.bf16.mxu0 0
        %8320 = vmatpush1.bf16.msra.mxu0 %v4857
        %8321 = vmatprep.subr.bf16.mxu0 0
        %8322 = vmatpush1.bf16.msra.mxu0 %v4858
        %8323 = vmatprep.subr.bf16.mxu0 0
        %8324 = vmatpush1.bf16.msra.mxu0 %v4859
        %8325 = vmatprep.subr.bf16.mxu0 0
        %8326 = vmatpush1.bf16.msra.mxu0 %v4860
        %8327 = vmatprep.subr.bf16.mxu0 0
        %8328 = vmatpush1.bf16.msra.mxu0 %v4861
        %8329 = vmatprep.subr.bf16.mxu0 0
        %8330 = vmatpush1.bf16.msra.mxu0 %v4862
        %8331 = vmatprep.subr.bf16.mxu0 0
        %8332 = vmatpush1.bf16.msra.mxu0 %v4863
        %8333 = vmatprep.subr.bf16.mxu0 0
        %8334 = vmatpush1.bf16.msra.mxu0 %v4864
        %8335 = vmatprep.subr.bf16.mxu0 0
        %8336 = vmatpush1.bf16.msra.mxu0 %v4865
        %8337 = vmatprep.subr.bf16.mxu0 0
        %8338 = vmatpush1.bf16.msra.mxu0 %v4866
        %8339 = vmatprep.subr.bf16.mxu0 0
        %8340 = vmatpush1.bf16.msra.mxu0 %v4867
        %8341 = vmatprep.subr.bf16.mxu0 0
        %8342 = vmatpush1.bf16.msra.mxu0 %v4868
        %8343 = vmatprep.subr.bf16.mxu0 0
        %8344 = vmatpush1.bf16.msra.mxu0 %v4869
        %8345 = vmatprep.subr.bf16.mxu0 0
        %8346 = vmatpush1.bf16.msra.mxu0 %v4870
        %8347 = vmatprep.mubr.bf16.mxu0 %v1879
        %8348 = vmatmul.mubr.bf16.gmra.mrb[0].mxu0 %v1878
        %v8349 = vpop.f32.mrb[0].mxu0
        %v8350 = vadd.f32 %v8310, %v8349
        %v8351 = vpop.f32.mrb[0].mxu0
        %v8352 = vpop.f32.mrb[0].mxu0
        %v8353 = vpop.f32.mrb[0].mxu0
        %8354 = vdwg.mxu0
        %8355 = vmatprep.subr.bf16.mxu0 0
        %8356 = vmatpush1.bf16.msra.mxu0 %v4871
        %8357 = vmatprep.subr.bf16.mxu0 0
        %8358 = vmatpush1.bf16.msra.mxu0 %v4872
        %8359 = vmatprep.subr.bf16.mxu0 0
        %8360 = vmatpush1.bf16.msra.mxu0 %v4873
        %8361 = vmatprep.subr.bf16.mxu0 0
        %8362 = vmatpush1.bf16.msra.mxu0 %v4874
        %8363 = vmatprep.subr.bf16.mxu0 0
        %8364 = vmatpush1.bf16.msra.mxu0 %v4875
        %8365 = vmatprep.subr.bf16.mxu0 0
        %8366 = vmatpush1.bf16.msra.mxu0 %v4876
        %8367 = vmatprep.subr.bf16.mxu0 0
        %8368 = vmatpush1.bf16.msra.mxu0 %v4877
        %8369 = vmatprep.subr.bf16.mxu0 0
        %8370 = vmatpush1.bf16.msra.mxu0 %v4878
        %8371 = vmatprep.subr.bf16.mxu0 0
        %8372 = vmatpush1.bf16.msra.mxu0 %v4879
        %8373 = vmatprep.subr.bf16.mxu0 0
        %8374 = vmatpush1.bf16.msra.mxu0 %v4880
        %8375 = vmatprep.subr.bf16.mxu0 0
        %8376 = vmatpush1.bf16.msra.mxu0 %v4881
        %8377 = vmatprep.subr.bf16.mxu0 0
        %8378 = vmatpush1.bf16.msra.mxu0 %v4882
        %8379 = vmatprep.subr.bf16.mxu0 0
        %8380 = vmatpush1.bf16.msra.mxu0 %v4883
        %8381 = vmatprep.subr.bf16.mxu0 0
        %8382 = vmatpush1.bf16.msra.mxu0 %v4884
        %8383 = vmatprep.subr.bf16.mxu0 0
        %8384 = vmatpush1.bf16.msra.mxu0 %v4885
        %8385 = vmatprep.subr.bf16.mxu0 0
        %8386 = vmatpush1.bf16.msra.mxu0 %v4886
        %8387 = vmatprep.mubr.bf16.mxu0 %v1881
        %8388 = vmatmul.mubr.bf16.gmra.mrb[0].mxu0 %v1880
        %v8389 = vpop.f32.mrb[0].mxu0
        %v8390 = vadd.f32 %v8350, %v8389
        %v8391 = vpop.f32.mrb[0].mxu0
        %v8392 = vpop.f32.mrb[0].mxu0
        %v8393 = vpop.f32.mrb[0].mxu0
        %8394 = vdwg.mxu0
        %8395 = vmatprep.subr.bf16.mxu0 0
        %8396 = vmatpush1.bf16.msra.mxu0 %v4887
        %8397 = vmatprep.subr.bf16.mxu0 0
        %8398 = vmatpush1.bf16.msra.mxu0 %v4888
        %8399 = vmatprep.subr.bf16.mxu0 0
        %8400 = vmatpush1.bf16.msra.mxu0 %v4889
        %8401 = vmatprep.subr.bf16.mxu0 0
        %8402 = vmatpush1.bf16.msra.mxu0 %v4890
        %8403 = vmatprep.subr.bf16.mxu0 0
        %8404 = vmatpush1.bf16.msra.mxu0 %v4891
        %8405 = vmatprep.subr.bf16.mxu0 0
        %8406 = vmatpush1.bf16.msra.mxu0 %v4892
        %8407 = vmatprep.subr.bf16.mxu0 0
        %8408 = vmatpush1.bf16.msra.mxu0 %v4893
        %8409 = vmatprep.subr.bf16.mxu0 0
        %8410 = vmatpush1.bf16.msra.mxu0 %v4894
        %8411 = vmatprep.subr.bf16.mxu0 0
        %8412 = vmatpush1.bf16.msra.mxu0 %v4895
        %8413 = vmatprep.subr.bf16.mxu0 0
        %8414 = vmatpush1.bf16.msra.mxu0 %v4896
        %8415 = vmatprep.subr.bf16.mxu0 0
        %8416 = vmatpush1.bf16.msra.mxu0 %v4897
        %8417 = vmatprep.subr.bf16.mxu0 0
        %8418 = vmatpush1.bf16.msra.mxu0 %v4898
        %8419 = vmatprep.subr.bf16.mxu0 0
        %8420 = vmatpush1.bf16.msra.mxu0 %v4899
        %8421 = vmatprep.subr.bf16.mxu0 0
        %8422 = vmatpush1.bf16.msra.mxu0 %v4900
        %8423 = vmatprep.subr.bf16.mxu0 0
        %8424 = vmatpush1.bf16.msra.mxu0 %v4901
        %8425 = vmatprep.subr.bf16.mxu0 0
        %8426 = vmatpush1.bf16.msra.mxu0 %v4902
        %8427 = vmatprep.mubr.bf16.mxu0 %v1883
        %8428 = vmatmul.mubr.bf16.gmra.mrb[0].mxu0 %v1882
        %v8429 = vpop.f32.mrb[0].mxu0
        %v8430 = vadd.f32 %v8390, %v8429
        %v8431 = vpop.f32.mrb[0].mxu0
        %v8432 = vpop.f32.mrb[0].mxu0
        %v8433 = vpop.f32.mrb[0].mxu0
        %8434 = vdwg.mxu0
        %8435 = vmatprep.subr.bf16.mxu0 0
        %8436 = vmatpush1.bf16.msra.mxu0 %v4903
        %8437 = vmatprep.subr.bf16.mxu0 0
        %8438 = vmatpush1.bf16.msra.mxu0 %v4904
        %8439 = vmatprep.subr.bf16.mxu0 0
        %8440 = vmatpush1.bf16.msra.mxu0 %v4905
        %8441 = vmatprep.subr.bf16.mxu0 0
        %8442 = vmatpush1.bf16.msra.mxu0 %v4906
        %8443 = vmatprep.subr.bf16.mxu0 0
        %8444 = vmatpush1.bf16.msra.mxu0 %v4907
        %8445 = vmatprep.subr.bf16.mxu0 0
        %8446 = vmatpush1.bf16.msra.mxu0 %v4908
        %8447 = vmatprep.subr.bf16.mxu0 0
        %8448 = vmatpush1.bf16.msra.mxu0 %v4909
        %8449 = vmatprep.subr.bf16.mxu0 0
        %8450 = vmatpush1.bf16.msra.mxu0 %v4910
        %8451 = vmatprep.subr.bf16.mxu0 0
        %8452 = vmatpush1.bf16.msra.mxu0 %v4911
        %8453 = vmatprep.subr.bf16.mxu0 0
        %8454 = vmatpush1.bf16.msra.mxu0 %v4912
        %8455 = vmatprep.subr.bf16.mxu0 0
        %8456 = vmatpush1.bf16.msra.mxu0 %v4913
        %8457 = vmatprep.subr.bf16.mxu0 0
        %8458 = vmatpush1.bf16.msra.mxu0 %v4914
        %8459 = vmatprep.subr.bf16.mxu0 0
        %8460 = vmatpush1.bf16.msra.mxu0 %v4915
        %8461 = vmatprep.subr.bf16.mxu0 0
        %8462 = vmatpush1.bf16.msra.mxu0 %v4916
        %8463 = vmatprep.subr.bf16.mxu0 0
        %8464 = vmatpush1.bf16.msra.mxu0 %v4917
        %8465 = vmatprep.subr.bf16.mxu0 0
        %8466 = vmatpush1.bf16.msra.mxu0 %v4918
        %8467 = vmatprep.mubr.bf16.mxu0 %v1885
        %8468 = vmatmul.mubr.bf16.gmra.mrb[0].mxu0 %v1884
        %v8469 = vpop.f32.mrb[0].mxu0
        %v8470 = vadd.f32 %v8430, %v8469
        %v8471 = vpop.f32.mrb[0].mxu0
        %v8472 = vpop.f32.mrb[0].mxu0
        %v8473 = vpop.f32.mrb[0].mxu0
        %8474 = vdwg.mxu0
        %8475 = vmatprep.subr.bf16.mxu0 0
        %8476 = vmatpush1.bf16.msra.mxu0 %v4919
        %8477 = vmatprep.subr.bf16.mxu0 0
        %8478 = vmatpush1.bf16.msra.mxu0 %v4920
        %8479 = vmatprep.subr.bf16.mxu0 0
        %8480 = vmatpush1.bf16.msra.mxu0 %v4921
        %8481 = vmatprep.subr.bf16.mxu0 0
        %8482 = vmatpush1.bf16.msra.mxu0 %v4922
        %8483 = vmatprep.subr.bf16.mxu0 0
        %8484 = vmatpush1.bf16.msra.mxu0 %v4923
        %8485 = vmatprep.subr.bf16.mxu0 0
        %8486 = vmatpush1.bf16.msra.mxu0 %v4924
        %8487 = vmatprep.subr.bf16.mxu0 0
        %8488 = vmatpush1.bf16.msra.mxu0 %v4925
        %8489 = vmatprep.subr.bf16.mxu0 0
        %8490 = vmatpush1.bf16.msra.mxu0 %v4926
        %8491 = vmatprep.subr.bf16.mxu0 0
        %8492 = vmatpush1.bf16.msra.mxu0 %v4927
        %8493 = vmatprep.subr.bf16.mxu0 0
        %8494 = vmatpush1.bf16.msra.mxu0 %v4928
        %8495 = vmatprep.subr.bf16.mxu0 0
        %8496 = vmatpush1.bf16.msra.mxu0 %v4929
        %8497 = vmatprep.subr.bf16.mxu0 0
        %8498 = vmatpush1.bf16.msra.mxu0 %v4930
        %8499 = vmatprep.subr.bf16.mxu0 0
        %8500 = vmatpush1.bf16.msra.mxu0 %v4931
        %8501 = vmatprep.subr.bf16.mxu0 0
        %8502 = vmatpush1.bf16.msra.mxu0 %v4932
        %8503 = vmatprep.subr.bf16.mxu0 0
        %8504 = vmatpush1.bf16.msra.mxu0 %v4933
        %8505 = vmatprep.subr.bf16.mxu0 0
        %8506 = vmatpush1.bf16.msra.mxu0 %v4934
        %8507 = vmatprep.mubr.bf16.mxu0 %v1887
        %8508 = vmatmul.mubr.bf16.gmra.mrb[0].mxu0 %v1886
        %v8509 = vpop.f32.mrb[0].mxu0
        %v8510 = vadd.f32 %v8470, %v8509
        %v8511 = vpop.f32.mrb[0].mxu0
        %v8512 = vpop.f32.mrb[0].mxu0
        %v8513 = vpop.f32.mrb[0].mxu0
        %8514 = vdwg.mxu0
        %8515 = vmatprep.subr.bf16.mxu0 0
        %8516 = vmatpush1.bf16.msra.mxu0 %v4935
        %8517 = vmatprep.subr.bf16.mxu0 0
        %8518 = vmatpush1.bf16.msra.mxu0 %v4936
        %8519 = vmatprep.subr.bf16.mxu0 0
        %8520 = vmatpush1.bf16.msra.mxu0 %v4937
        %8521 = vmatprep.subr.bf16.mxu0 0
        %8522 = vmatpush1.bf16.msra.mxu0 %v4938
        %8523 = vmatprep.subr.bf16.mxu0 0
        %8524 = vmatpush1.bf16.msra.mxu0 %v4939
        %8525 = vmatprep.subr.bf16.mxu0 0
        %8526 = vmatpush1.bf16.msra.mxu0 %v4940
        %8527 = vmatprep.subr.bf16.mxu0 0
        %8528 = vmatpush1.bf16.msra.mxu0 %v4941
        %8529 = vmatprep.subr.bf16.mxu0 0
        %8530 = vmatpush1.bf16.msra.mxu0 %v4942
        %8531 = vmatprep.subr.bf16.mxu0 0
        %8532 = vmatpush1.bf16.msra.mxu0 %v4943
        %8533 = vmatprep.subr.bf16.mxu0 0
        %8534 = vmatpush1.bf16.msra.mxu0 %v4944
        %8535 = vmatprep.subr.bf16.mxu0 0
        %8536 = vmatpush1.bf16.msra.mxu0 %v4945
        %8537 = vmatprep.subr.bf16.mxu0 0
        %8538 = vmatpush1.bf16.msra.mxu0 %v4946
        %8539 = vmatprep.subr.bf16.mxu0 0
        %8540 = vmatpush1.bf16.msra.mxu0 %v4947
        %8541 = vmatprep.subr.bf16.mxu0 0
        %8542 = vmatpush1.bf16.msra.mxu0 %v4948
        %8543 = vmatprep.subr.bf16.mxu0 0
        %8544 = vmatpush1.bf16.msra.mxu0 %v4949
        %8545 = vmatprep.subr.bf16.mxu0 0
        %8546 = vmatpush1.bf16.msra.mxu0 %v4950
        %8547 = vmatprep.mubr.bf16.mxu0 %v1889
        %8548 = vmatmul.mubr.bf16.gmra.mrb[0].mxu0 %v1888
        %v8549 = vpop.f32.mrb[0].mxu0
        %v8550 = vadd.f32 %v8510, %v8549
        %v8551 = vpop.f32.mrb[0].mxu0
        %v8552 = vpop.f32.mrb[0].mxu0
        %v8553 = vpop.f32.mrb[0].mxu0
        %8554 = vdwg.mxu0
        %8555 = vmatprep.subr.bf16.mxu0 0
        %8556 = vmatpush1.bf16.msra.mxu0 %v4951
        %8557 = vmatprep.subr.bf16.mxu0 0
        %8558 = vmatpush1.bf16.msra.mxu0 %v4952
        %8559 = vmatprep.subr.bf16.mxu0 0
        %8560 = vmatpush1.bf16.msra.mxu0 %v4953
        %8561 = vmatprep.subr.bf16.mxu0 0
        %8562 = vmatpush1.bf16.msra.mxu0 %v4954
        %8563 = vmatprep.subr.bf16.mxu0 0
        %8564 = vmatpush1.bf16.msra.mxu0 %v4955
        %8565 = vmatprep.subr.bf16.mxu0 0
        %8566 = vmatpush1.bf16.msra.mxu0 %v4956
        %8567 = vmatprep.subr.bf16.mxu0 0
        %8568 = vmatpush1.bf16.msra.mxu0 %v4957
        %8569 = vmatprep.subr.bf16.mxu0 0
        %8570 = vmatpush1.bf16.msra.mxu0 %v4958
        %8571 = vmatprep.subr.bf16.mxu0 0
        %8572 = vmatpush1.bf16.msra.mxu0 %v4959
        %8573 = vmatprep.subr.bf16.mxu0 0
        %8574 = vmatpush1.bf16.msra.mxu0 %v4960
        %8575 = vmatprep.subr.bf16.mxu0 0
        %8576 = vmatpush1.bf16.msra.mxu0 %v4961
        %8577 = vmatprep.subr.bf16.mxu0 0
        %8578 = vmatpush1.bf16.msra.mxu0 %v4962
        %8579 = vmatprep.subr.bf16.mxu0 0
        %8580 = vmatpush1.bf16.msra.mxu0 %v4963
        %8581 = vmatprep.subr.bf16.mxu0 0
        %8582 = vmatpush1.bf16.msra.mxu0 %v4964
        %8583 = vmatprep.subr.bf16.mxu0 0
        %8584 = vmatpush1.bf16.msra.mxu0 %v4965
        %8585 = vmatprep.subr.bf16.mxu0 0
        %8586 = vmatpush1.bf16.msra.mxu0 %v4966
        %8587 = vmatprep.mubr.bf16.mxu0 %v1891
        %8588 = vmatmul.mubr.bf16.gmra.mrb[0].mxu0 %v1890
        %v8589 = vpop.f32.mrb[0].mxu0
        %v8590 = vadd.f32 %v8550, %v8589
        %v8591 = vpop.f32.mrb[0].mxu0
        %v8592 = vpop.f32.mrb[0].mxu0
        %v8593 = vpop.f32.mrb[0].mxu0
        %8594 = vdwg.mxu0
        %8595 = vmatprep.subr.bf16.mxu0 0
        %8596 = vmatpush1.bf16.msra.mxu0 %v4967
        %8597 = vmatprep.subr.bf16.mxu0 0
        %8598 = vmatpush1.bf16.msra.mxu0 %v4968
        %8599 = vmatprep.subr.bf16.mxu0 0
        %8600 = vmatpush1.bf16.msra.mxu0 %v4969
        %8601 = vmatprep.subr.bf16.mxu0 0
        %8602 = vmatpush1.bf16.msra.mxu0 %v4970
        %8603 = vmatprep.subr.bf16.mxu0 0
        %8604 = vmatpush1.bf16.msra.mxu0 %v4971
        %8605 = vmatprep.subr.bf16.mxu0 0
        %8606 = vmatpush1.bf16.msra.mxu0 %v4972
        %8607 = vmatprep.subr.bf16.mxu0 0
        %8608 = vmatpush1.bf16.msra.mxu0 %v4973
        %8609 = vmatprep.subr.bf16.mxu0 0
        %8610 = vmatpush1.bf16.msra.mxu0 %v4974
        %8611 = vmatprep.subr.bf16.mxu0 0
        %8612 = vmatpush1.bf16.msra.mxu0 %v4975
        %8613 = vmatprep.subr.bf16.mxu0 0
        %8614 = vmatpush1.bf16.msra.mxu0 %v4976
        %8615 = vmatprep.subr.bf16.mxu0 0
        %8616 = vmatpush1.bf16.msra.mxu0 %v4977
        %8617 = vmatprep.subr.bf16.mxu0 0
        %8618 = vmatpush1.bf16.msra.mxu0 %v4978
        %8619 = vmatprep.subr.bf16.mxu0 0
        %8620 = vmatpush1.bf16.msra.mxu0 %v4979
        %8621 = vmatprep.subr.bf16.mxu0 0
        %8622 = vmatpush1.bf16.msra.mxu0 %v4980
        %8623 = vmatprep.subr.bf16.mxu0 0
        %8624 = vmatpush1.bf16.msra.mxu0 %v4981
        %8625 = vmatprep.subr.bf16.mxu0 0
        %8626 = vmatpush1.bf16.msra.mxu0 %v4982
        %8627 = vmatprep.mubr.bf16.mxu0 %v1893
        %8628 = vmatmul.mubr.bf16.gmra.mrb[0].mxu0 %v1892
        %v8629 = vpop.f32.mrb[0].mxu0
        %v8630 = vadd.f32 %v8590, %v8629
        %v8631 = vpop.f32.mrb[0].mxu0
        %v8632 = vpop.f32.mrb[0].mxu0
        %v8633 = vpop.f32.mrb[0].mxu0
        %8634 = vdwg.mxu0
        %8635 = vmatprep.subr.bf16.mxu0 0
        %8636 = vmatpush1.bf16.msra.mxu0 %v4983
        %8637 = vmatprep.subr.bf16.mxu0 0
        %8638 = vmatpush1.bf16.msra.mxu0 %v4984
        %8639 = vmatprep.subr.bf16.mxu0 0
        %8640 = vmatpush1.bf16.msra.mxu0 %v4985
        %8641 = vmatprep.subr.bf16.mxu0 0
        %8642 = vmatpush1.bf16.msra.mxu0 %v4986
        %8643 = vmatprep.subr.bf16.mxu0 0
        %8644 = vmatpush1.bf16.msra.mxu0 %v4987
        %8645 = vmatprep.subr.bf16.mxu0 0
        %8646 = vmatpush1.bf16.msra.mxu0 %v4988
        %8647 = vmatprep.subr.bf16.mxu0 0
        %8648 = vmatpush1.bf16.msra.mxu0 %v4989
        %8649 = vmatprep.subr.bf16.mxu0 0
        %8650 = vmatpush1.bf16.msra.mxu0 %v4990
        %8651 = vmatprep.subr.bf16.mxu0 0
        %8652 = vmatpush1.bf16.msra.mxu0 %v4991
        %8653 = vmatprep.subr.bf16.mxu0 0
        %8654 = vmatpush1.bf16.msra.mxu0 %v4992
        %8655 = vmatprep.subr.bf16.mxu0 0
        %8656 = vmatpush1.bf16.msra.mxu0 %v4993
        %8657 = vmatprep.subr.bf16.mxu0 0
        %8658 = vmatpush1.bf16.msra.mxu0 %v4994
        %8659 = vmatprep.subr.bf16.mxu0 0
        %8660 = vmatpush1.bf16.msra.mxu0 %v4995
        %8661 = vmatprep.subr.bf16.mxu0 0
        %8662 = vmatpush1.bf16.msra.mxu0 %v4996
        %8663 = vmatprep.subr.bf16.mxu0 0
        %8664 = vmatpush1.bf16.msra.mxu0 %v4997
        %8665 = vmatprep.subr.bf16.mxu0 0
        %8666 = vmatpush1.bf16.msra.mxu0 %v4998
        %8667 = vmatprep.mubr.bf16.mxu0 %v1895
        %8668 = vmatmul.mubr.bf16.gmra.mrb[0].mxu0 %v1894
        %v8669 = vpop.f32.mrb[0].mxu0
        %v8670 = vadd.f32 %v8630, %v8669
        %v8671 = vpop.f32.mrb[0].mxu0
        %v8672 = vpop.f32.mrb[0].mxu0
        %v8673 = vpop.f32.mrb[0].mxu0
        %8674 = vdwg.mxu0
        %8675 = vmatprep.subr.bf16.mxu0 0
        %8676 = vmatpush1.bf16.msra.mxu0 %v4999
        %8677 = vmatprep.subr.bf16.mxu0 0
        %8678 = vmatpush1.bf16.msra.mxu0 %v5000
        %8679 = vmatprep.subr.bf16.mxu0 0
        %8680 = vmatpush1.bf16.msra.mxu0 %v5001
        %8681 = vmatprep.subr.bf16.mxu0 0
        %8682 = vmatpush1.bf16.msra.mxu0 %v5002
        %8683 = vmatprep.subr.bf16.mxu0 0
        %8684 = vmatpush1.bf16.msra.mxu0 %v5003
        %8685 = vmatprep.subr.bf16.mxu0 0
        %8686 = vmatpush1.bf16.msra.mxu0 %v5004
        %8687 = vmatprep.subr.bf16.mxu0 0
        %8688 = vmatpush1.bf16.msra.mxu0 %v5005
        %8689 = vmatprep.subr.bf16.mxu0 0
        %8690 = vmatpush1.bf16.msra.mxu0 %v5006
        %8691 = vmatprep.subr.bf16.mxu0 0
        %8692 = vmatpush1.bf16.msra.mxu0 %v5007
        %8693 = vmatprep.subr.bf16.mxu0 0
        %8694 = vmatpush1.bf16.msra.mxu0 %v5008
        %8695 = vmatprep.subr.bf16.mxu0 0
        %8696 = vmatpush1.bf16.msra.mxu0 %v5009
        %8697 = vmatprep.subr.bf16.mxu0 0
        %8698 = vmatpush1.bf16.msra.mxu0 %v5010
        %8699 = vmatprep.subr.bf16.mxu0 0
        %8700 = vmatpush1.bf16.msra.mxu0 %v5011
        %8701 = vmatprep.subr.bf16.mxu0 0
        %8702 = vmatpush1.bf16.msra.mxu0 %v5012
        %8703 = vmatprep.subr.bf16.mxu0 0
        %8704 = vmatpush1.bf16.msra.mxu0 %v5013
        %8705 = vmatprep.subr.bf16.mxu0 0
        %8706 = vmatpush1.bf16.msra.mxu0 %v5014
        %8707 = vmatprep.mubr.bf16.mxu0 %v1897
        %8708 = vmatmul.mubr.bf16.gmra.mrb[0].mxu0 %v1896
        %v8709 = vpop.f32.mrb[0].mxu0
        %v8710 = vadd.f32 %v8670, %v8709
        %v8711 = vpop.f32.mrb[0].mxu0
        %v8712 = vpop.f32.mrb[0].mxu0
        %v8713 = vpop.f32.mrb[0].mxu0
        %8714 = vdwg.mxu0
        %8715 = vmatprep.subr.bf16.mxu0 0
        %8716 = vmatpush1.bf16.msra.mxu0 %v5015
        %8717 = vmatprep.subr.bf16.mxu0 0
        %8718 = vmatpush1.bf16.msra.mxu0 %v5016
        %8719 = vmatprep.subr.bf16.mxu0 0
        %8720 = vmatpush1.bf16.msra.mxu0 %v5017
        %8721 = vmatprep.subr.bf16.mxu0 0
        %8722 = vmatpush1.bf16.msra.mxu0 %v5018
        %8723 = vmatprep.subr.bf16.mxu0 0
        %8724 = vmatpush1.bf16.msra.mxu0 %v5019
        %8725 = vmatprep.subr.bf16.mxu0 0
        %8726 = vmatpush1.bf16.msra.mxu0 %v5020
        %8727 = vmatprep.subr.bf16.mxu0 0
        %8728 = vmatpush1.bf16.msra.mxu0 %v5021
        %8729 = vmatprep.subr.bf16.mxu0 0
        %8730 = vmatpush1.bf16.msra.mxu0 %v5022
        %8731 = vmatprep.subr.bf16.mxu0 0
        %8732 = vmatpush1.bf16.msra.mxu0 %v5023
        %8733 = vmatprep.subr.bf16.mxu0 0
        %8734 = vmatpush1.bf16.msra.mxu0 %v5024
        %8735 = vmatprep.subr.bf16.mxu0 0
        %8736 = vmatpush1.bf16.msra.mxu0 %v5025
        %8737 = vmatprep.subr.bf16.mxu0 0
        %8738 = vmatpush1.bf16.msra.mxu0 %v5026
        %8739 = vmatprep.subr.bf16.mxu0 0
        %8740 = vmatpush1.bf16.msra.mxu0 %v5027
        %8741 = vmatprep.subr.bf16.mxu0 0
        %8742 = vmatpush1.bf16.msra.mxu0 %v5028
        %8743 = vmatprep.subr.bf16.mxu0 0
        %8744 = vmatpush1.bf16.msra.mxu0 %v5029
        %8745 = vmatprep.subr.bf16.mxu0 0
        %8746 = vmatpush1.bf16.msra.mxu0 %v5030
        %8747 = vmatprep.mubr.bf16.mxu0 %v1899
        %8748 = vmatmul.mubr.bf16.gmra.mrb[0].mxu0 %v1898
        %v8749 = vpop.f32.mrb[0].mxu0
        %v8750 = vadd.f32 %v8710, %v8749
        %v8751 = vpop.f32.mrb[0].mxu0
        %v8752 = vpop.f32.mrb[0].mxu0
        %v8753 = vpop.f32.mrb[0].mxu0
        %8754 = vdwg.mxu0
        %8755 = vmatprep.subr.bf16.mxu0 0
        %8756 = vmatpush1.bf16.msra.mxu0 %v5031
        %8757 = vmatprep.subr.bf16.mxu0 0
        %8758 = vmatpush1.bf16.msra.mxu0 %v5032
        %8759 = vmatprep.subr.bf16.mxu0 0
        %8760 = vmatpush1.bf16.msra.mxu0 %v5033
        %8761 = vmatprep.subr.bf16.mxu0 0
        %8762 = vmatpush1.bf16.msra.mxu0 %v5034
        %8763 = vmatprep.subr.bf16.mxu0 0
        %8764 = vmatpush1.bf16.msra.mxu0 %v5035
        %8765 = vmatprep.subr.bf16.mxu0 0
        %8766 = vmatpush1.bf16.msra.mxu0 %v5036
        %8767 = vmatprep.subr.bf16.mxu0 0
        %8768 = vmatpush1.bf16.msra.mxu0 %v5037
        %8769 = vmatprep.subr.bf16.mxu0 0
        %8770 = vmatpush1.bf16.msra.mxu0 %v5038
        %8771 = vmatprep.subr.bf16.mxu0 0
        %8772 = vmatpush1.bf16.msra.mxu0 %v5039
        %8773 = vmatprep.subr.bf16.mxu0 0
        %8774 = vmatpush1.bf16.msra.mxu0 %v5040
        %8775 = vmatprep.subr.bf16.mxu0 0
        %8776 = vmatpush1.bf16.msra.mxu0 %v5041
        %8777 = vmatprep.subr.bf16.mxu0 0
        %8778 = vmatpush1.bf16.msra.mxu0 %v5042
        %8779 = vmatprep.subr.bf16.mxu0 0
        %8780 = vmatpush1.bf16.msra.mxu0 %v5043
        %8781 = vmatprep.subr.bf16.mxu0 0
        %8782 = vmatpush1.bf16.msra.mxu0 %v5044
        %8783 = vmatprep.subr.bf16.mxu0 0
        %8784 = vmatpush1.bf16.msra.mxu0 %v5045
        %8785 = vmatprep.subr.bf16.mxu0 0
        %8786 = vmatpush1.bf16.msra.mxu0 %v5046
        %8787 = vmatprep.mubr.bf16.mxu0 %v1901
        %8788 = vmatmul.mubr.bf16.gmra.mrb[0].mxu0 %v1900
        %v8789 = vpop.f32.mrb[0].mxu0
        %v8790 = vadd.f32 %v8750, %v8789
        %v8791 = vpop.f32.mrb[0].mxu0
        %v8792 = vpop.f32.mrb[0].mxu0
        %v8793 = vpop.f32.mrb[0].mxu0
        %8794 = vdwg.mxu0
        %8795 = vmatprep.subr.bf16.mxu0 0
        %8796 = vmatpush1.bf16.msra.mxu0 %v5047
        %8797 = vmatprep.subr.bf16.mxu0 0
        %8798 = vmatpush1.bf16.msra.mxu0 %v5048
        %8799 = vmatprep.subr.bf16.mxu0 0
        %8800 = vmatpush1.bf16.msra.mxu0 %v5049
        %8801 = vmatprep.subr.bf16.mxu0 0
        %8802 = vmatpush1.bf16.msra.mxu0 %v5050
        %8803 = vmatprep.subr.bf16.mxu0 0
        %8804 = vmatpush1.bf16.msra.mxu0 %v5051
        %8805 = vmatprep.subr.bf16.mxu0 0
        %8806 = vmatpush1.bf16.msra.mxu0 %v5052
        %8807 = vmatprep.subr.bf16.mxu0 0
        %8808 = vmatpush1.bf16.msra.mxu0 %v5053
        %8809 = vmatprep.subr.bf16.mxu0 0
        %8810 = vmatpush1.bf16.msra.mxu0 %v5054
        %8811 = vmatprep.subr.bf16.mxu0 0
        %8812 = vmatpush1.bf16.msra.mxu0 %v5055
        %8813 = vmatprep.subr.bf16.mxu0 0
        %8814 = vmatpush1.bf16.msra.mxu0 %v5056
        %8815 = vmatprep.subr.bf16.mxu0 0
        %8816 = vmatpush1.bf16.msra.mxu0 %v5057
        %8817 = vmatprep.subr.bf16.mxu0 0
        %8818 = vmatpush1.bf16.msra.mxu0 %v5058
        %8819 = vmatprep.subr.bf16.mxu0 0
        %8820 = vmatpush1.bf16.msra.mxu0 %v5059
        %8821 = vmatprep.subr.bf16.mxu0 0
        %8822 = vmatpush1.bf16.msra.mxu0 %v5060
        %8823 = vmatprep.subr.bf16.mxu0 0
        %8824 = vmatpush1.bf16.msra.mxu0 %v5061
        %8825 = vmatprep.subr.bf16.mxu0 0
        %8826 = vmatpush1.bf16.msra.mxu0 %v5062
        %8827 = vmatprep.mubr.bf16.mxu0 %v1903
        %8828 = vmatmul.mubr.bf16.gmra.mrb[0].mxu0 %v1902
        %v8829 = vpop.f32.mrb[0].mxu0
        %v8830 = vadd.f32 %v8790, %v8829
        %v8831 = vpop.f32.mrb[0].mxu0
        %v8832 = vpop.f32.mrb[0].mxu0
        %v8833 = vpop.f32.mrb[0].mxu0
        %8834 = vdwg.mxu0
        %8835 = vmatprep.subr.bf16.mxu0 0
        %8836 = vmatpush1.bf16.msra.mxu0 %v5063
        %8837 = vmatprep.subr.bf16.mxu0 0
        %8838 = vmatpush1.bf16.msra.mxu0 %v5064
        %8839 = vmatprep.subr.bf16.mxu0 0
        %8840 = vmatpush1.bf16.msra.mxu0 %v5065
        %8841 = vmatprep.subr.bf16.mxu0 0
        %8842 = vmatpush1.bf16.msra.mxu0 %v5066
        %8843 = vmatprep.subr.bf16.mxu0 0
        %8844 = vmatpush1.bf16.msra.mxu0 %v5067
        %8845 = vmatprep.subr.bf16.mxu0 0
        %8846 = vmatpush1.bf16.msra.mxu0 %v5068
        %8847 = vmatprep.subr.bf16.mxu0 0
        %8848 = vmatpush1.bf16.msra.mxu0 %v5069
        %8849 = vmatprep.subr.bf16.mxu0 0
        %8850 = vmatpush1.bf16.msra.mxu0 %v5070
        %8851 = vmatprep.subr.bf16.mxu0 0
        %8852 = vmatpush1.bf16.msra.mxu0 %v5071
        %8853 = vmatprep.subr.bf16.mxu0 0
        %8854 = vmatpush1.bf16.msra.mxu0 %v5072
        %8855 = vmatprep.subr.bf16.mxu0 0
        %8856 = vmatpush1.bf16.msra.mxu0 %v5073
        %8857 = vmatprep.subr.bf16.mxu0 0
        %8858 = vmatpush1.bf16.msra.mxu0 %v5074
        %8859 = vmatprep.subr.bf16.mxu0 0
        %8860 = vmatpush1.bf16.msra.mxu0 %v5075
        %8861 = vmatprep.subr.bf16.mxu0 0
        %8862 = vmatpush1.bf16.msra.mxu0 %v5076
        %8863 = vmatprep.subr.bf16.mxu0 0
        %8864 = vmatpush1.bf16.msra.mxu0 %v5077
        %8865 = vmatprep.subr.bf16.mxu0 0
        %8866 = vmatpush1.bf16.msra.mxu0 %v5078
        %8867 = vmatprep.mubr.bf16.mxu0 %v1905
        %8868 = vmatmul.mubr.bf16.gmra.mrb[0].mxu0 %v1904
        %v8869 = vpop.f32.mrb[0].mxu0
        %v8870 = vadd.f32 %v8830, %v8869
        %v8871 = vpop.f32.mrb[0].mxu0
        %v8872 = vpop.f32.mrb[0].mxu0
        %v8873 = vpop.f32.mrb[0].mxu0
        %8874 = vdwg.mxu0
        %8875 = vmatprep.subr.bf16.mxu0 0
        %8876 = vmatpush1.bf16.msra.mxu0 %v5079
        %8877 = vmatprep.subr.bf16.mxu0 0
        %8878 = vmatpush1.bf16.msra.mxu0 %v5080
        %8879 = vmatprep.subr.bf16.mxu0 0
        %8880 = vmatpush1.bf16.msra.mxu0 %v5081
        %8881 = vmatprep.subr.bf16.mxu0 0
        %8882 = vmatpush1.bf16.msra.mxu0 %v5082
        %8883 = vmatprep.subr.bf16.mxu0 0
        %8884 = vmatpush1.bf16.msra.mxu0 %v5083
        %8885 = vmatprep.subr.bf16.mxu0 0
        %8886 = vmatpush1.bf16.msra.mxu0 %v5084
        %8887 = vmatprep.subr.bf16.mxu0 0
        %8888 = vmatpush1.bf16.msra.mxu0 %v5085
        %8889 = vmatprep.subr.bf16.mxu0 0
        %8890 = vmatpush1.bf16.msra.mxu0 %v5086
        %8891 = vmatprep.subr.bf16.mxu0 0
        %8892 = vmatpush1.bf16.msra.mxu0 %v5087
        %8893 = vmatprep.subr.bf16.mxu0 0
        %8894 = vmatpush1.bf16.msra.mxu0 %v5088
        %8895 = vmatprep.subr.bf16.mxu0 0
        %8896 = vmatpush1.bf16.msra.mxu0 %v5089
        %8897 = vmatprep.subr.bf16.mxu0 0
        %8898 = vmatpush1.bf16.msra.mxu0 %v5090
        %8899 = vmatprep.subr.bf16.mxu0 0
        %8900 = vmatpush1.bf16.msra.mxu0 %v5091
        %8901 = vmatprep.subr.bf16.mxu0 0
        %8902 = vmatpush1.bf16.msra.mxu0 %v5092
        %8903 = vmatprep.subr.bf16.mxu0 0
        %8904 = vmatpush1.bf16.msra.mxu0 %v5093
        %8905 = vmatprep.subr.bf16.mxu0 0
        %8906 = vmatpush1.bf16.msra.mxu0 %v5094
        %8907 = vmatprep.mubr.bf16.mxu0 %v1907
        %8908 = vmatmul.mubr.bf16.gmra.mrb[0].mxu0 %v1906
        %v8909 = vpop.f32.mrb[0].mxu0
        %v8910 = vadd.f32 %v8870, %v8909
        %v8911 = vpop.f32.mrb[0].mxu0
        %v8912 = vpop.f32.mrb[0].mxu0
        %v8913 = vpop.f32.mrb[0].mxu0
        %8914 = vdwg.mxu0
        %8915 = vmatprep.subr.bf16.mxu0 0
        %8916 = vmatpush1.bf16.msra.mxu0 %v5095
        %8917 = vmatprep.subr.bf16.mxu0 0
        %8918 = vmatpush1.bf16.msra.mxu0 %v5096
        %8919 = vmatprep.subr.bf16.mxu0 0
        %8920 = vmatpush1.bf16.msra.mxu0 %v5097
        %8921 = vmatprep.subr.bf16.mxu0 0
        %8922 = vmatpush1.bf16.msra.mxu0 %v5098
        %8923 = vmatprep.subr.bf16.mxu0 0
        %8924 = vmatpush1.bf16.msra.mxu0 %v5099
        %8925 = vmatprep.subr.bf16.mxu0 0
        %8926 = vmatpush1.bf16.msra.mxu0 %v5100
        %8927 = vmatprep.subr.bf16.mxu0 0
        %8928 = vmatpush1.bf16.msra.mxu0 %v5101
        %8929 = vmatprep.subr.bf16.mxu0 0
        %8930 = vmatpush1.bf16.msra.mxu0 %v5102
        %8931 = vmatprep.subr.bf16.mxu0 0
        %8932 = vmatpush1.bf16.msra.mxu0 %v5103
        %8933 = vmatprep.subr.bf16.mxu0 0
        %8934 = vmatpush1.bf16.msra.mxu0 %v5104
        %8935 = vmatprep.subr.bf16.mxu0 0
        %8936 = vmatpush1.bf16.msra.mxu0 %v5105
        %8937 = vmatprep.subr.bf16.mxu0 0
        %8938 = vmatpush1.bf16.msra.mxu0 %v5106
        %8939 = vmatprep.subr.bf16.mxu0 0
        %8940 = vmatpush1.bf16.msra.mxu0 %v5107
        %8941 = vmatprep.subr.bf16.mxu0 0
        %8942 = vmatpush1.bf16.msra.mxu0 %v5108
        %8943 = vmatprep.subr.bf16.mxu0 0
        %8944 = vmatpush1.bf16.msra.mxu0 %v5109
        %8945 = vmatprep.subr.bf16.mxu0 0
        %8946 = vmatpush1.bf16.msra.mxu0 %v5110
        %8947 = vmatprep.mubr.bf16.mxu0 %v1909
        %8948 = vmatmul.mubr.bf16.gmra.mrb[0].mxu0 %v1908
        %v8949 = vpop.f32.mrb[0].mxu0
        %v8950 = vadd.f32 %v8910, %v8949
        %v8951 = vpop.f32.mrb[0].mxu0
        %v8952 = vpop.f32.mrb[0].mxu0
        %v8953 = vpop.f32.mrb[0].mxu0
        %8954 = vdwg.mxu0
        %v8955 = vadd.f32 %v7354, %v8950
        %8956 = vst [vmem:[%s7353] sm:$0xff] %v8955
        %p8957 = scmp.lt.s32.totalorder %s24, 1
        %s8958 = scalar_select %p8957, %s24, 1
        %s8959 = smul.addr %s8958, 2
        %s8960 = smul.addr %s8959, 8
        %s8961 = scalar_lea.vmem %s3, %s8960
        // Predicated region
        $region49: #{net_forward.2} parent=31 // pred_check
          %p8962 = pneg %p140
        $region50: #{net_forward.2} parent=31 // pred_check_branch
          %8964 = sbr.rel (%p8962) target = $region52
        $region51: #{net_forward.2} parent=31 // pred_region
          _
        $region52: #{net_forward.2} parent=31 // pred_fallthru
          _
      $region32: #{net_forward.2} parent=5 // pred_fallthru
        _
      %p8965 = scmp.le.s32.totalorder 2, %s15
      // Predicated region
      $region53: #{net_forward.2} parent=5 // pred_check
        %p8966 = pneg %p8965
      $region54: #{net_forward.2} parent=5 // pred_check_branch
        %8968 = sbr.rel (%p8966) target = $region56
      $region55: #{net_forward.2} parent=5 // pred_region
        %s8969 = ssub.s32 %s15, 2
        // Predicated region
        $region57: #{net_forward.2} parent=55 // pred_check
          %p8970 = pneg %p146
        $region58: #{net_forward.2} parent=55 // pred_check_branch
          %8972 = sbr.rel (%p8970) target = $region60
        $region59: #{net_forward.2} parent=55 // pred_region
          %p8973 = scmp.lt.s32.totalorder %s26, 1
          %s8974 = scalar_select %p8973, %s26, 1
          %s8975 = smul.addr %s8974, 2
          %s8976 = smul.addr %s8975, 8
          %s8977 = scalar_lea.vmem %s3, %s8976
        $region60: #{net_forward.2} parent=55 // pred_fallthru
          _
      $region56: #{net_forward.2} parent=5 // pred_fallthru
        _
    $region6: #{net_forward.2} parent=1 // loop_footer
      %s19 = sadd.s32 1, %s15
    $region7: #{net_forward.2} parent=1 // loop_footer_branch
      %14 = sbr.rel target = $region3
    $region8: #{net_forward.2} parent=1 // loop_exit
      _
    %8978 = vsyncpa [#allocation3], 1
    %s8979 = scalar_lea.sflag [#allocation3], 1
    %8980 = vsyncpa %s8979, 1
    %8981 = vsyncpa [#allocation5], 1
    %s8982 = scalar_lea.sflag [#allocation5], 1
    %8983 = vsyncpa %s8982, 1

</llo_original>
